<compile_context>
chip_gen: v7x
topology: tpu7x:2x2x1
jax: 0.10.0
libtpu: 0.0.40
codegen_flags: <defaults>
</compile_context>

<pallas_src>
import functools
from typing import NamedTuple

import jax
import jax.numpy as jnp
import numpy as np
from jax.experimental import pallas as pl
from jax.experimental.pallas import tpu as pltpu

LANE = 128
BSUB = 16  # bf16 packs 2 rows/sublane -> 16-row packed tile


def _round_up(v, m):
    return -(-v // m) * m


def _tensorcores_per_chip():
    """Best-effort detection of TensorCores per chip (megacore / v7x => 2, v5e/v6e => 1)."""
    try:
        d = jax.devices()[0]
        if d.platform != "tpu":
            return 1
        kind = d.device_kind.lower()
    except Exception:
        return 1
    if "lite" in kind or "v5e" in kind or "v6" in kind:
        return 1
    if "v7" in kind or "7x" in kind or "v4" in kind or "v5p" in kind:
        return 2
    return 1


def _sigmoid(x):
    # sigmoid(x) = 0.5*tanh(0.5*x) + 0.5 : one EUP op per gate slab (instead of exp+recip);
    # matters on v5e's single non-bf16 EUP, harmless elsewhere (identical to within ~1e-7).
    return 0.5 * jnp.tanh(0.5 * x) + 0.5


class PackedLSTMParams(NamedTuple):
    w_ih: jax.Array    # (I, 4*Hp) bf16, gate-lane-aligned (4 blocks of Hp lanes)
    w_hh: jax.Array    # (Hp, 4*Hp) bf16
    bias: jax.Array    # (1, 4*Hp) f32, b_ih + b_hh
    input_size: int
    hidden_size: int


def pack_encoder_lstm_params(w_ih, w_hh, b_ih, b_hh):
    """One-time weight repack (do this at model init, NOT per forward call).

    w_ih: (4H, I), w_hh: (4H, H), b_ih/b_hh: (4H,)  — PyTorch nn.LSTM layout, gates [i,f,g,o].
    """
    four_h, I = w_ih.shape
    H = four_h // 4
    Hp = _round_up(H, LANE)
    f32, bf16 = jnp.float32, jnp.bfloat16

    wih_t = jnp.asarray(w_ih, f32).T.reshape(I, 4, H)           # (I, 4, H)
    whh_t = jnp.asarray(w_hh, f32).T.reshape(H, 4, H)           # (H, 4, H)
    wih_p = jnp.pad(wih_t, ((0, 0), (0, 0), (0, Hp - H))).reshape(I, 4 * Hp).astype(bf16)
    whh_p = jnp.pad(whh_t, ((0, Hp - H), (0, 0), (0, Hp - H))).reshape(Hp, 4 * Hp).astype(bf16)

    bias = (jnp.asarray(b_ih, f32) + jnp.asarray(b_hh, f32)).reshape(4, H)
    bias = jnp.pad(bias, ((0, 0), (0, Hp - H))).reshape(1, 4 * Hp)
    return PackedLSTMParams(wih_p, whh_p, bias, I, H)


def _lstm_kernel(x_ref, h0_ref, c0_ref, wih_ref, whh_ref, b_ref,
                 out_ref, hn_ref, cn_ref,
                 h_sc, c_sc, xg_sc,
                 *, seq_len, time_chunk, unroll):
    """One grid step = one batch block x one chunk of `time_chunk` timesteps.

    x_ref:   (Tc*BB, I)  bf16     out_ref: (Tc*BB, Hp)
    h0/c0:   (BB, Hp)    f32      hn/cn:   (BB, Hp)
    weights: W_ih (I,4Hp) bf16, W_hh (Hp,4Hp) bf16, bias (1,4Hp) f32
    scratch: h_sc/c_sc (BB,Hp) f32 carry, xg_sc (Tc*BB, 4Hp) f32 per-chunk input projection.
    """
    c_idx = pl.program_id(1)            # time-chunk index (sequential / "arbitrary")
    bb, hp = h_sc.shape

    # Load the initial state into the carried scratch at the first chunk of each batch block.
    @pl.when(c_idx == 0)
    def _():
        h_sc[...] = h0_ref[...].astype(jnp.float32)
        c_sc[...] = c0_ref[...].astype(jnp.float32)

    # Chunk-level input projection (+ bias): ONE MXU call at M = Tc*BB instead of Tc calls at
    # M = BB.  Folding the bias here removes a per-step VPU add from the serial critical path.
    xg_sc[...] = (
        jnp.dot(x_ref[...], wih_ref[...], preferred_element_type=jnp.float32) + b_ref[...])

    exact = (seq_len % time_chunk) == 0   # compile-time: do we need tail masking?

    def step(t, carry):
        h = h_sc[...]                     # (BB, Hp) f32 carry
        c = c_sc[...]
        row = pl.multiple_of(t * bb, BSUB)

        # Recurrent projection only: K = Hp, same (Hp, 4Hp) RHS every step (stays in VMEM).
        gates = (jnp.dot(h.astype(jnp.bfloat16), whh_ref[...],
                         preferred_element_type=jnp.float32)
                 + xg_sc[pl.ds(row, bb), :])

        # Lane-aligned gate slices (Hp is a multiple of 128) — no per-step lane shuffles.
        i_g = _sigmoid(gates[:, 0 * hp:1 * hp])
        f_g = _sigmoid(gates[:, 1 * hp:2 * hp])
        g_g = jnp.tanh(gates[:, 2 * hp:3 * hp])
        o_g = _sigmoid(gates[:, 3 * hp:4 * hp])

        c_new = f_g * c + i_g * g_g
        h_new = o_g * jnp.tanh(c_new)

        # Lane-dense store (last dim Hp = multiple of 128), sublane-aligned dynamic row slice.
        out_ref[pl.ds(row, bb), :] = h_new.astype(out_ref.dtype)

        if exact:
            h_sc[...] = h_new
            c_sc[...] = c_new
        else:
            # Tail chunk: freeze the state once past the true sequence length.
            valid = (c_idx * time_chunk + t) < seq_len
            h_sc[...] = jnp.where(valid, h_new, h)
            c_sc[...] = jnp.where(valid, c_new, c)
        return carry

    jax.lax.fori_loop(0, time_chunk, step, 0, unroll=unroll)

    @pl.when(c_idx == pl.num_programs(1) - 1)
    def _():
        hn_ref[...] = h_sc[...].astype(hn_ref.dtype)
        cn_ref[...] = c_sc[...].astype(cn_ref.dtype)


def encoder_lstm_forward(x, h0, c0, params: PackedLSTMParams, *, time_chunk=32, unroll=8):
    """Pallas implementation of EncoderLSTM.forward (num_layers=1, unidirectional).

    x: (T, B, I);  h0, c0: (1, B, H);  params from pack_encoder_lstm_params().
    Returns (output (T,B,H), h_n (1,B,H), c_n (1,B,H)).  Requires T >= 1.
    """
    T, B, I = x.shape
    H = params.hidden_size
    assert I == params.input_size, "input feature size mismatch with packed weights"
    assert h0.shape == (1, B, H) and c0.shape == (1, B, H)
    assert T >= 1, "EncoderLSTM Pallas kernel requires a non-empty sequence"

    Hp = params.w_hh.shape[0]
    f32, bf16 = jnp.float32, jnp.bfloat16

    # Batch padding / generation-gated 2-way batch split (only where it maps to 2 TensorCores).
    two_tc = _tensorcores_per_chip() >= 2
    if two_tc and B > BSUB:
        n_b = 2
        Bp = _round_up(B, 2 * BSUB)
    else:
        n_b = 1
        Bp = _round_up(B, BSUB)
    BB = Bp // n_b

    # Time chunking: n_chunks = ceil(T / time_chunk), then rebalance Tc so padding < n_chunks.
    n_chunks = -(-T // max(1, time_chunk))
    Tc = -(-T // n_chunks)
    T_pad = n_chunks * Tc
    unroll = max(1, min(unroll, Tc))

    # ---- Glue (plain JAX, outside the kernel): activation padding / batch-block flattening. ----
    # x keeps its TRUE feature width in HBM (no 128-lane padding) and is flattened per batch
    # block so the chunk projection needs no in-kernel reshape.  Zero pads are exactly neutral.
    x_p = jnp.pad(jnp.asarray(x), ((0, T_pad - T), (0, Bp - B), (0, 0))).astype(bf16)
    x_r = (x_p.reshape(T_pad, n_b, BB, I)
               .transpose(1, 0, 2, 3)
               .reshape(n_b, T_pad * BB, I))
    h0_r = jnp.pad(jnp.asarray(h0, f32), ((0, 0), (0, Bp - B), (0, Hp - H))).reshape(n_b, BB, Hp)
    c0_r = jnp.pad(jnp.asarray(c0, f32), ((0, 0), (0, Bp - B), (0, Hp - H))).reshape(n_b, BB, Hp)

    kernel = functools.partial(_lstm_kernel, seq_len=T, time_chunk=Tc, unroll=unroll)

    out_shapes = (
        jax.ShapeDtypeStruct((n_b, T_pad * BB, Hp), x.dtype),
        jax.ShapeDtypeStruct((n_b, BB, Hp), h0.dtype),
        jax.ShapeDtypeStruct((n_b, BB, Hp), c0.dtype),
    )

    out_specs = [
        pl.BlockSpec((None, Tc * BB, Hp), lambda b, c: (b, c, 0)),   # output chunk
        pl.BlockSpec((None, BB, Hp), lambda b, c: (b, 0, 0)),        # h_n
        pl.BlockSpec((None, BB, Hp), lambda b, c: (b, 0, 0)),        # c_n
    ]

    scratch_shapes = [
        pltpu.VMEM((BB, Hp), f32),             # carried h (f32)
        pltpu.VMEM((BB, Hp), f32),             # carried c (f32)
        pltpu.VMEM((Tc * BB, 4 * Hp), f32),    # per-chunk input projection (+bias)
    ]

    def make_in_specs(single_buffer_consts):
        # Constant-index-map (resident) blocks: request single buffering to halve their VMEM.
        const = {"pipeline_mode": pl.Buffered(1)} if single_buffer_consts else {}
        return [
            pl.BlockSpec((None, Tc * BB, I), lambda b, c: (b, c, 0)),   # x chunk
            pl.BlockSpec((None, BB, Hp), lambda b, c: (b, 0, 0)),       # h0
            pl.BlockSpec((None, BB, Hp), lambda b, c: (b, 0, 0)),       # c0
            pl.BlockSpec((I, 4 * Hp), lambda b, c: (0, 0), **const),    # W_ih (resident)
            pl.BlockSpec((Hp, 4 * Hp), lambda b, c: (0, 0), **const),   # W_hh (resident)
            pl.BlockSpec((1, 4 * Hp), lambda b, c: (0, 0), **const),    # bias (resident)
        ]

    # VMEM budget estimate (conservative: assumes double-buffered weights); raise the scoped
    # limit only when needed (matters for large H on v7x's 64 MiB physical VMEM).
    out_bytes = jnp.dtype(x.dtype).itemsize
    est = (2 * Tc * BB * I * 2                       # x chunk, 2 buffers, bf16
           + 2 * Tc * BB * Hp * out_bytes            # out chunk, 2 buffers
           + 2 * ((I + Hp) * 4 * Hp * 2 + 4 * Hp * 4)  # weights + bias
           + 4 * BB * Hp * 4 + 4 * BB * Hp * out_bytes  # h0/c0 blocks, hn/cn blocks
           + (2 * BB * Hp + Tc * BB * 4 * Hp) * 4)   # scratch
    vmem_limit = None
    if est > 24 * 1024 * 1024:
        vmem_limit = min(int(est * 1.5), 128 * 1024 * 1024)

    compiler_params = pltpu.CompilerParams(
        dimension_semantics=("parallel", "arbitrary"),
        vmem_limit_bytes=vmem_limit)

    def run(single_buffer_consts):
        grid_spec = pltpu.PrefetchScalarGridSpec(
            num_scalar_prefetch=0,
            grid=(n_b, n_chunks),                     # time axis innermost (carries h/c scratch)
            in_specs=make_in_specs(single_buffer_consts),
            out_specs=out_specs,
            scratch_shapes=scratch_shapes,
        )
        return pl.pallas_call(
            kernel,
            out_shape=out_shapes,
            grid_spec=grid_spec,
            compiler_params=compiler_params,
        )(x_r, h0_r, c0_r, params.w_ih, params.w_hh, params.bias)

    try:
        out_p, hn_p, cn_p = run(True)
    except Exception:
        # Fallback for JAX versions where pl.Buffered(1) is not accepted for TPU inputs.
        out_p, hn_p, cn_p = run(False)

    out = (out_p.reshape(n_b, T_pad, BB, Hp)
                .transpose(1, 0, 2, 3)
                .reshape(T_pad, Bp, Hp)[:T, :B, :H])
    h_n = hn_p.reshape(1, Bp, Hp)[:, :B, :H]
    c_n = cn_p.reshape(1, Bp, Hp)[:, :B, :H]
    return out, h_n, c_n


def _reference_lstm(x, h0, c0, w_ih, w_hh, b_ih, b_hh):
    """Pure-JAX reference with the same precision policy as the kernel:
    bf16 matmul operands, f32 accumulation, f32 gate math and state carry."""
    H = h0.shape[-1]
    bf16 = jnp.bfloat16
    wih_t = jnp.asarray(w_ih, jnp.float32).T.astype(bf16)
    whh_t = jnp.asarray(w_hh, jnp.float32).T.astype(bf16)
    b = jnp.asarray(b_ih, jnp.float32) + jnp.asarray(b_hh, jnp.float32)

    def step(carry, xt):
        h, c = carry
        gates = (jnp.dot(xt.astype(bf16), wih_t, preferred_element_type=jnp.float32)
                 + jnp.dot(h.astype(bf16), whh_t, preferred_element_type=jnp.float32)
                 + b)
        i = jax.nn.sigmoid(gates[:, 0 * H:1 * H])
        f = jax.nn.sigmoid(gates[:, 1 * H:2 * H])
        g = jnp.tanh(gates[:, 2 * H:3 * H])
        o = jax.nn.sigmoid(gates[:, 3 * H:4 * H])
        c_new = f * c + i * g
        h_new = o * jnp.tanh(c_new)
        return (h_new, c_new), h_new

    (h_n, c_n), out = jax.lax.scan(
        step,
        (jnp.asarray(h0[0], jnp.float32), jnp.asarray(c0[0], jnp.float32)),
        jnp.asarray(x, jnp.float32))
    return out.astype(x.dtype), h_n[None].astype(h0.dtype), c_n[None].astype(c0.dtype)


def _run_case(T, B, I, H, case_idx, **fwd_kwargs):
    key = jax.random.fold_in(jax.random.PRNGKey(0), case_idx)
    kx, kh, kc, k1, k2, k3, k4 = jax.random.split(key, 7)

    x = jax.random.normal(kx, (T, B, I), jnp.float32)
    h0 = jax.random.normal(kh, (1, B, H), jnp.float32)
    c0 = jax.random.normal(kc, (1, B, H), jnp.float32)

    bound = 1.0 / np.sqrt(H)
    w_ih = jax.random.uniform(k1, (4 * H, I), jnp.float32, -bound, bound)
    w_hh = jax.random.uniform(k2, (4 * H, H), jnp.float32, -bound, bound)
    b_ih = jax.random.uniform(k3, (4 * H,), jnp.float32, -bound, bound)
    b_hh = jax.random.uniform(k4, (4 * H,), jnp.float32, -bound, bound)

    # One-time weight repack (would live at model init in a real model).
    params = pack_encoder_lstm_params(w_ih, w_hh, b_ih, b_hh)

    out, h_n, c_n = encoder_lstm_forward(x, h0, c0, params, **fwd_kwargs)
    jax.block_until_ready((out, h_n, c_n))

    ref_out, ref_h, ref_c = _reference_lstm(x, h0, c0, w_ih, w_hh, b_ih, b_hh)
    np.testing.assert_allclose(np.asarray(out), np.asarray(ref_out), atol=2e-3, rtol=2e-3)
    np.testing.assert_allclose(np.asarray(h_n), np.asarray(ref_h), atol=2e-3, rtol=2e-3)
    np.testing.assert_allclose(np.asarray(c_n), np.asarray(ref_c), atol=2e-3, rtol=2e-3)


if __name__ == "__main__":
    # Small shapes implied by the module: seq=8, batch=2, input=16, hidden=32.
    _run_case(T=8, B=2, I=16, H=32, case_idx=0)
    # Exercise tail masking (T not a multiple of the chunk), multi-chunk time grid, partial
    # unroll, batch padding, and B > 16 (2-way batch block split if running on a 2-TC chip).
    _run_case(T=11, B=20, I=16, H=32, case_idx=1, time_chunk=8, unroll=4)
    print("KERNEL_OK")
</pallas_src>

<mosaic_0001>
module attributes {stable_mosaic.version = 11 : i64} {
  func.func @_lstm_kernel(%arg0: i32, %arg1: i32, %arg2: memref<1x128x16xbf16, #tpu.memory_space<vmem>>, %arg3: memref<1x16x128xf32, #tpu.memory_space<vmem>>, %arg4: memref<1x16x128xf32, #tpu.memory_space<vmem>>, %arg5: memref<16x512xbf16, #tpu.memory_space<vmem>>, %arg6: memref<128x512xbf16, #tpu.memory_space<vmem>>, %arg7: memref<1x512xf32, #tpu.memory_space<vmem>>, %arg8: memref<1x128x128xf32, #tpu.memory_space<vmem>>, %arg9: memref<1x16x128xf32, #tpu.memory_space<vmem>>, %arg10: memref<1x16x128xf32, #tpu.memory_space<vmem>>, %arg11: memref<16x128xf32, #tpu.memory_space<vmem>>, %arg12: memref<16x128xf32, #tpu.memory_space<vmem>>, %arg13: memref<128x512xf32, #tpu.memory_space<vmem>>) attributes {dimension_semantics = [#tpu.dimension_semantics<parallel>, #tpu.dimension_semantics<arbitrary>], iteration_bounds = array<i64: 1, 1>, scalar_prefetch = 0 : i64, scratch_operands = 3 : i64, tpu.core_type = #tpu.core_type<tc>, window_params = [{transform_indices = @transform_0, window_bounds = array<i64: 1, 128, 16>}, {transform_indices = @transform_1, window_bounds = array<i64: 1, 16, 128>}, {transform_indices = @transform_2, window_bounds = array<i64: 1, 16, 128>}, {pipeline_mode = #tpu.pipeline_mode<synchronous>, transform_indices = @transform_3, window_bounds = array<i64: 16, 512>}, {pipeline_mode = #tpu.pipeline_mode<synchronous>, transform_indices = @transform_4, window_bounds = array<i64: 128, 512>}, {pipeline_mode = #tpu.pipeline_mode<synchronous>, transform_indices = @transform_5, window_bounds = array<i64: 1, 512>}, {transform_indices = @transform_6, window_bounds = array<i64: 1, 128, 128>}, {transform_indices = @transform_7, window_bounds = array<i64: 1, 16, 128>}, {transform_indices = @transform_8, window_bounds = array<i64: 1, 16, 128>}]} {
    %c0_i32 = arith.constant 0 : i32
    %0 = arith.cmpi eq, %arg1, %c0_i32 : i32
    %1 = arith.extui %0 : i1 to i32
    %c0_i32_0 = arith.constant 0 : i32
    %2 = arith.cmpi ne, %1, %c0_i32_0 : i32
    scf.if %2 {
      %c0_203 = arith.constant 0 : index
      %c0_204 = arith.constant 0 : index
      %c0_205 = arith.constant 0 : index
      %390 = vector.load %arg3[%c0_203, %c0_204, %c0_205] : memref<1x16x128xf32, #tpu.memory_space<vmem>>, vector<1x16x128xf32>
      %391 = vector.shape_cast %390 : vector<1x16x128xf32> to vector<16x128xf32>
      %c0_206 = arith.constant 0 : index
      %c0_207 = arith.constant 0 : index
      %392 = vector.load %arg11[%c0_206, %c0_207] : memref<16x128xf32, #tpu.memory_space<vmem>>, vector<16x128xf32>
      tpu.vector_store %arg11[%c0_206, %c0_207], %391 {strides = array<i32>} : memref<16x128xf32, #tpu.memory_space<vmem>>, vector<16x128xf32>,
      %c0_208 = arith.constant 0 : index
      %c0_209 = arith.constant 0 : index
      %c0_210 = arith.constant 0 : index
      %393 = vector.load %arg4[%c0_208, %c0_209, %c0_210] : memref<1x16x128xf32, #tpu.memory_space<vmem>>, vector<1x16x128xf32>
      %394 = vector.shape_cast %393 : vector<1x16x128xf32> to vector<16x128xf32>
      %c0_211 = arith.constant 0 : index
      %c0_212 = arith.constant 0 : index
      %395 = vector.load %arg12[%c0_211, %c0_212] : memref<16x128xf32, #tpu.memory_space<vmem>>, vector<16x128xf32>
      tpu.vector_store %arg12[%c0_211, %c0_212], %394 {strides = array<i32>} : memref<16x128xf32, #tpu.memory_space<vmem>>, vector<16x128xf32>,
    } else {
    }
    %c0 = arith.constant 0 : index
    %c0_1 = arith.constant 0 : index
    %c0_2 = arith.constant 0 : index
    %3 = vector.load %arg2[%c0, %c0_1, %c0_2] : memref<1x128x16xbf16, #tpu.memory_space<vmem>>, vector<1x128x16xbf16>
    %4 = vector.shape_cast %3 : vector<1x128x16xbf16> to vector<128x16xbf16>
    %c0_3 = arith.constant 0 : index
    %c0_4 = arith.constant 0 : index
    %5 = vector.load %arg5[%c0_3, %c0_4] : memref<16x512xbf16, #tpu.memory_space<vmem>>, vector<16x512xbf16>
    %cst = arith.constant dense<0.000000e+00> : vector<128x512xf32>
    %6 = tpu.matmul %4, %5, %cst {dimension_numbers = #tpu.dot_dimension_numbers<[1], [0], [0], [1], [0, 0, 1, 1], [], []>} : vector<128x16xbf16>, vector<16x512xbf16>, vector<128x512xf32> -> vector<128x512xf32>
    %c0_5 = arith.constant 0 : index
    %c0_6 = arith.constant 0 : index
    %7 = vector.load %arg7[%c0_5, %c0_6] : memref<1x512xf32, #tpu.memory_space<vmem>>, vector<1x512xf32>
    %8 = vector.broadcast %7 : vector<1x512xf32> to vector<128x512xf32>
    %9 = arith.addf %6, %8 : vector<128x512xf32>
    %c0_7 = arith.constant 0 : index
    %c0_8 = arith.constant 0 : index
    %10 = vector.load %arg13[%c0_7, %c0_8] : memref<128x512xf32, #tpu.memory_space<vmem>>, vector<128x512xf32>
    tpu.vector_store %arg13[%c0_7, %c0_8], %9 {strides = array<i32>} : memref<128x512xf32, #tpu.memory_space<vmem>>, vector<128x512xf32>,
    %c0_i32_9 = arith.constant 0 : i32
    %c0_10 = arith.constant 0 : index
    %c0_11 = arith.constant 0 : index
    %11 = vector.load %arg11[%c0_10, %c0_11] : memref<16x128xf32, #tpu.memory_space<vmem>>, vector<16x128xf32>
    %c0_12 = arith.constant 0 : index
    %c0_13 = arith.constant 0 : index
    %12 = vector.load %arg12[%c0_12, %c0_13] : memref<16x128xf32, #tpu.memory_space<vmem>>, vector<16x128xf32>
    %c16_i32 = arith.constant 16 : i32
    %13 = arith.muli %c0_i32_9, %c16_i32 : i32
    %14 = tpu.assume_multiple %13, 16 : i32
    %15 = arith.truncf %11 : vector<16x128xf32> to vector<16x128xbf16>
    %c0_14 = arith.constant 0 : index
    %c0_15 = arith.constant 0 : index
    %16 = vector.load %arg6[%c0_14, %c0_15] : memref<128x512xbf16, #tpu.memory_space<vmem>>, vector<128x512xbf16>
    %cst_16 = arith.constant dense<0.000000e+00> : vector<16x512xf32>
    %17 = tpu.matmul %15, %16, %cst_16 {dimension_numbers = #tpu.dot_dimension_numbers<[1], [0], [0], [1], [0, 0, 1, 1], [], []>} : vector<16x128xbf16>, vector<128x512xbf16>, vector<16x512xf32> -> vector<16x512xf32>
    %18 = arith.index_cast %14 : i32 to index
    %c0_17 = arith.constant 0 : index
    %19 = vector.load %arg13[%18, %c0_17] : memref<128x512xf32, #tpu.memory_space<vmem>>, vector<16x512xf32>
    %20 = arith.addf %17, %19 : vector<16x512xf32>
    %21 = vector.extract_strided_slice %20 {offsets = [0, 0], sizes = [16, 128], strides = [1, 1]} : vector<16x512xf32> to vector<16x128xf32>
    %cst_18 = arith.constant 5.000000e-01 : f32
    %22 = vector.broadcast %cst_18 : f32 to vector<16x128xf32>
    %23 = arith.mulf %22, %21 : vector<16x128xf32>
    %24 = math.tanh %23 : vector<16x128xf32>
    %cst_19 = arith.constant 5.000000e-01 : f32
    %25 = vector.broadcast %cst_19 : f32 to vector<16x128xf32>
    %26 = arith.mulf %25, %24 : vector<16x128xf32>
    %cst_20 = arith.constant 5.000000e-01 : f32
    %27 = vector.broadcast %cst_20 : f32 to vector<16x128xf32>
    %28 = arith.addf %26, %27 : vector<16x128xf32>
    %29 = vector.extract_strided_slice %20 {offsets = [0, 128], sizes = [16, 128], strides = [1, 1]} : vector<16x512xf32> to vector<16x128xf32>
    %cst_21 = arith.constant 5.000000e-01 : f32
    %30 = vector.broadcast %cst_21 : f32 to vector<16x128xf32>
    %31 = arith.mulf %30, %29 : vector<16x128xf32>
    %32 = math.tanh %31 : vector<16x128xf32>
    %cst_22 = arith.constant 5.000000e-01 : f32
    %33 = vector.broadcast %cst_22 : f32 to vector<16x128xf32>
    %34 = arith.mulf %33, %32 : vector<16x128xf32>
    %cst_23 = arith.constant 5.000000e-01 : f32
    %35 = vector.broadcast %cst_23 : f32 to vector<16x128xf32>
    %36 = arith.addf %34, %35 : vector<16x128xf32>
    %37 = vector.extract_strided_slice %20 {offsets = [0, 256], sizes = [16, 128], strides = [1, 1]} : vector<16x512xf32> to vector<16x128xf32>
    %38 = math.tanh %37 : vector<16x128xf32>
    %39 = vector.extract_strided_slice %20 {offsets = [0, 384], sizes = [16, 128], strides = [1, 1]} : vector<16x512xf32> to vector<16x128xf32>
    %cst_24 = arith.constant 5.000000e-01 : f32
    %40 = vector.broadcast %cst_24 : f32 to vector<16x128xf32>
    %41 = arith.mulf %40, %39 : vector<16x128xf32>
    %42 = math.tanh %41 : vector<16x128xf32>
    %cst_25 = arith.constant 5.000000e-01 : f32
    %43 = vector.broadcast %cst_25 : f32 to vector<16x128xf32>
    %44 = arith.mulf %43, %42 : vector<16x128xf32>
    %cst_26 = arith.constant 5.000000e-01 : f32
    %45 = vector.broadcast %cst_26 : f32 to vector<16x128xf32>
    %46 = arith.addf %44, %45 : vector<16x128xf32>
    %47 = arith.mulf %36, %12 : vector<16x128xf32>
    %48 = arith.mulf %28, %38 : vector<16x128xf32>
    %49 = arith.addf %47, %48 : vector<16x128xf32>
    %50 = math.tanh %49 : vector<16x128xf32>
    %51 = arith.mulf %46, %50 : vector<16x128xf32>
    %c0_27 = arith.constant 0 : index
    %52 = arith.index_cast %14 : i32 to index
    %c0_28 = arith.constant 0 : index
    %53 = vector.load %arg8[%c0_27, %52, %c0_28] : memref<1x128x128xf32, #tpu.memory_space<vmem>>, vector<1x16x128xf32>
    %54 = vector.shape_cast %53 : vector<1x16x128xf32> to vector<16x128xf32>
    %55 = vector.shape_cast %51 : vector<16x128xf32> to vector<1x16x128xf32>
    tpu.vector_store %arg8[%c0_27, %52, %c0_28], %55 {strides = array<i32>} : memref<1x128x128xf32, #tpu.memory_space<vmem>>, vector<1x16x128xf32>,
    %c0_29 = arith.constant 0 : index
    %c0_30 = arith.constant 0 : index
    %56 = vector.load %arg11[%c0_29, %c0_30] : memref<16x128xf32, #tpu.memory_space<vmem>>, vector<16x128xf32>
    tpu.vector_store %arg11[%c0_29, %c0_30], %51 {strides = array<i32>} : memref<16x128xf32, #tpu.memory_space<vmem>>, vector<16x128xf32>,
    %c0_31 = arith.constant 0 : index
    %c0_32 = arith.constant 0 : index
    %57 = vector.load %arg12[%c0_31, %c0_32] : memref<16x128xf32, #tpu.memory_space<vmem>>, vector<16x128xf32>
    tpu.vector_store %arg12[%c0_31, %c0_32], %49 {strides = array<i32>} : memref<16x128xf32, #tpu.memory_space<vmem>>, vector<16x128xf32>,
    %c1_i32 = arith.constant 1 : i32
    %c0_33 = arith.constant 0 : index
    %c0_34 = arith.constant 0 : index
    %58 = vector.load %arg11[%c0_33, %c0_34] : memref<16x128xf32, #tpu.memory_space<vmem>>, vector<16x128xf32>
    %c0_35 = arith.constant 0 : index
    %c0_36 = arith.constant 0 : index
    %59 = vector.load %arg12[%c0_35, %c0_36] : memref<16x128xf32, #tpu.memory_space<vmem>>, vector<16x128xf32>
    %c16_i32_37 = arith.constant 16 : i32
    %60 = arith.muli %c1_i32, %c16_i32_37 : i32
    %61 = tpu.assume_multiple %60, 16 : i32
    %62 = arith.truncf %58 : vector<16x128xf32> to vector<16x128xbf16>
    %c0_38 = arith.constant 0 : index
    %c0_39 = arith.constant 0 : index
    %63 = vector.load %arg6[%c0_38, %c0_39] : memref<128x512xbf16, #tpu.memory_space<vmem>>, vector<128x512xbf16>
    %cst_40 = arith.constant dense<0.000000e+00> : vector<16x512xf32>
    %64 = tpu.matmul %62, %63, %cst_40 {dimension_numbers = #tpu.dot_dimension_numbers<[1], [0], [0], [1], [0, 0, 1, 1], [], []>} : vector<16x128xbf16>, vector<128x512xbf16>, vector<16x512xf32> -> vector<16x512xf32>
    %65 = arith.index_cast %61 : i32 to index
    %c0_41 = arith.constant 0 : index
    %66 = vector.load %arg13[%65, %c0_41] : memref<128x512xf32, #tpu.memory_space<vmem>>, vector<16x512xf32>
    %67 = arith.addf %64, %66 : vector<16x512xf32>
    %68 = vector.extract_strided_slice %67 {offsets = [0, 0], sizes = [16, 128], strides = [1, 1]} : vector<16x512xf32> to vector<16x128xf32>
    %cst_42 = arith.constant 5.000000e-01 : f32
    %69 = vector.broadcast %cst_42 : f32 to vector<16x128xf32>
    %70 = arith.mulf %69, %68 : vector<16x128xf32>
    %71 = math.tanh %70 : vector<16x128xf32>
    %cst_43 = arith.constant 5.000000e-01 : f32
    %72 = vector.broadcast %cst_43 : f32 to vector<16x128xf32>
    %73 = arith.mulf %72, %71 : vector<16x128xf32>
    %cst_44 = arith.constant 5.000000e-01 : f32
    %74 = vector.broadcast %cst_44 : f32 to vector<16x128xf32>
    %75 = arith.addf %73, %74 : vector<16x128xf32>
    %76 = vector.extract_strided_slice %67 {offsets = [0, 128], sizes = [16, 128], strides = [1, 1]} : vector<16x512xf32> to vector<16x128xf32>
    %cst_45 = arith.constant 5.000000e-01 : f32
    %77 = vector.broadcast %cst_45 : f32 to vector<16x128xf32>
    %78 = arith.mulf %77, %76 : vector<16x128xf32>
    %79 = math.tanh %78 : vector<16x128xf32>
    %cst_46 = arith.constant 5.000000e-01 : f32
    %80 = vector.broadcast %cst_46 : f32 to vector<16x128xf32>
    %81 = arith.mulf %80, %79 : vector<16x128xf32>
    %cst_47 = arith.constant 5.000000e-01 : f32
    %82 = vector.broadcast %cst_47 : f32 to vector<16x128xf32>
    %83 = arith.addf %81, %82 : vector<16x128xf32>
    %84 = vector.extract_strided_slice %67 {offsets = [0, 256], sizes = [16, 128], strides = [1, 1]} : vector<16x512xf32> to vector<16x128xf32>
    %85 = math.tanh %84 : vector<16x128xf32>
    %86 = vector.extract_strided_slice %67 {offsets = [0, 384], sizes = [16, 128], strides = [1, 1]} : vector<16x512xf32> to vector<16x128xf32>
    %cst_48 = arith.constant 5.000000e-01 : f32
    %87 = vector.broadcast %cst_48 : f32 to vector<16x128xf32>
    %88 = arith.mulf %87, %86 : vector<16x128xf32>
    %89 = math.tanh %88 : vector<16x128xf32>
    %cst_49 = arith.constant 5.000000e-01 : f32
    %90 = vector.broadcast %cst_49 : f32 to vector<16x128xf32>
    %91 = arith.mulf %90, %89 : vector<16x128xf32>
    %cst_50 = arith.constant 5.000000e-01 : f32
    %92 = vector.broadcast %cst_50 : f32 to vector<16x128xf32>
    %93 = arith.addf %91, %92 : vector<16x128xf32>
    %94 = arith.mulf %83, %59 : vector<16x128xf32>
    %95 = arith.mulf %75, %85 : vector<16x128xf32>
    %96 = arith.addf %94, %95 : vector<16x128xf32>
    %97 = math.tanh %96 : vector<16x128xf32>
    %98 = arith.mulf %93, %97 : vector<16x128xf32>
    %c0_51 = arith.constant 0 : index
    %99 = arith.index_cast %61 : i32 to index
    %c0_52 = arith.constant 0 : index
    %100 = vector.load %arg8[%c0_51, %99, %c0_52] : memref<1x128x128xf32, #tpu.memory_space<vmem>>, vector<1x16x128xf32>
    %101 = vector.shape_cast %100 : vector<1x16x128xf32> to vector<16x128xf32>
    %102 = vector.shape_cast %98 : vector<16x128xf32> to vector<1x16x128xf32>
    tpu.vector_store %arg8[%c0_51, %99, %c0_52], %102 {strides = array<i32>} : memref<1x128x128xf32, #tpu.memory_space<vmem>>, vector<1x16x128xf32>,
    %c0_53 = arith.constant 0 : index
    %c0_54 = arith.constant 0 : index
    %103 = vector.load %arg11[%c0_53, %c0_54] : memref<16x128xf32, #tpu.memory_space<vmem>>, vector<16x128xf32>
    tpu.vector_store %arg11[%c0_53, %c0_54], %98 {strides = array<i32>} : memref<16x128xf32, #tpu.memory_space<vmem>>, vector<16x128xf32>,
    %c0_55 = arith.constant 0 : index
    %c0_56 = arith.constant 0 : index
    %104 = vector.load %arg12[%c0_55, %c0_56] : memref<16x128xf32, #tpu.memory_space<vmem>>, vector<16x128xf32>
    tpu.vector_store %arg12[%c0_55, %c0_56], %96 {strides = array<i32>} : memref<16x128xf32, #tpu.memory_space<vmem>>, vector<16x128xf32>,
    %c2_i32 = arith.constant 2 : i32
    %c0_57 = arith.constant 0 : index
    %c0_58 = arith.constant 0 : index
    %105 = vector.load %arg11[%c0_57, %c0_58] : memref<16x128xf32, #tpu.memory_space<vmem>>, vector<16x128xf32>
    %c0_59 = arith.constant 0 : index
    %c0_60 = arith.constant 0 : index
    %106 = vector.load %arg12[%c0_59, %c0_60] : memref<16x128xf32, #tpu.memory_space<vmem>>, vector<16x128xf32>
    %c16_i32_61 = arith.constant 16 : i32
    %107 = arith.muli %c2_i32, %c16_i32_61 : i32
    %108 = tpu.assume_multiple %107, 16 : i32
    %109 = arith.truncf %105 : vector<16x128xf32> to vector<16x128xbf16>
    %c0_62 = arith.constant 0 : index
    %c0_63 = arith.constant 0 : index
    %110 = vector.load %arg6[%c0_62, %c0_63] : memref<128x512xbf16, #tpu.memory_space<vmem>>, vector<128x512xbf16>
    %cst_64 = arith.constant dense<0.000000e+00> : vector<16x512xf32>
    %111 = tpu.matmul %109, %110, %cst_64 {dimension_numbers = #tpu.dot_dimension_numbers<[1], [0], [0], [1], [0, 0, 1, 1], [], []>} : vector<16x128xbf16>, vector<128x512xbf16>, vector<16x512xf32> -> vector<16x512xf32>
    %112 = arith.index_cast %108 : i32 to index
    %c0_65 = arith.constant 0 : index
    %113 = vector.load %arg13[%112, %c0_65] : memref<128x512xf32, #tpu.memory_space<vmem>>, vector<16x512xf32>
    %114 = arith.addf %111, %113 : vector<16x512xf32>
    %115 = vector.extract_strided_slice %114 {offsets = [0, 0], sizes = [16, 128], strides = [1, 1]} : vector<16x512xf32> to vector<16x128xf32>
    %cst_66 = arith.constant 5.000000e-01 : f32
    %116 = vector.broadcast %cst_66 : f32 to vector<16x128xf32>
    %117 = arith.mulf %116, %115 : vector<16x128xf32>
    %118 = math.tanh %117 : vector<16x128xf32>
    %cst_67 = arith.constant 5.000000e-01 : f32
    %119 = vector.broadcast %cst_67 : f32 to vector<16x128xf32>
    %120 = arith.mulf %119, %118 : vector<16x128xf32>
    %cst_68 = arith.constant 5.000000e-01 : f32
    %121 = vector.broadcast %cst_68 : f32 to vector<16x128xf32>
    %122 = arith.addf %120, %121 : vector<16x128xf32>
    %123 = vector.extract_strided_slice %114 {offsets = [0, 128], sizes = [16, 128], strides = [1, 1]} : vector<16x512xf32> to vector<16x128xf32>
    %cst_69 = arith.constant 5.000000e-01 : f32
    %124 = vector.broadcast %cst_69 : f32 to vector<16x128xf32>
    %125 = arith.mulf %124, %123 : vector<16x128xf32>
    %126 = math.tanh %125 : vector<16x128xf32>
    %cst_70 = arith.constant 5.000000e-01 : f32
    %127 = vector.broadcast %cst_70 : f32 to vector<16x128xf32>
    %128 = arith.mulf %127, %126 : vector<16x128xf32>
    %cst_71 = arith.constant 5.000000e-01 : f32
    %129 = vector.broadcast %cst_71 : f32 to vector<16x128xf32>
    %130 = arith.addf %128, %129 : vector<16x128xf32>
    %131 = vector.extract_strided_slice %114 {offsets = [0, 256], sizes = [16, 128], strides = [1, 1]} : vector<16x512xf32> to vector<16x128xf32>
    %132 = math.tanh %131 : vector<16x128xf32>
    %133 = vector.extract_strided_slice %114 {offsets = [0, 384], sizes = [16, 128], strides = [1, 1]} : vector<16x512xf32> to vector<16x128xf32>
    %cst_72 = arith.constant 5.000000e-01 : f32
    %134 = vector.broadcast %cst_72 : f32 to vector<16x128xf32>
    %135 = arith.mulf %134, %133 : vector<16x128xf32>
    %136 = math.tanh %135 : vector<16x128xf32>
    %cst_73 = arith.constant 5.000000e-01 : f32
    %137 = vector.broadcast %cst_73 : f32 to vector<16x128xf32>
    %138 = arith.mulf %137, %136 : vector<16x128xf32>
    %cst_74 = arith.constant 5.000000e-01 : f32
    %139 = vector.broadcast %cst_74 : f32 to vector<16x128xf32>
    %140 = arith.addf %138, %139 : vector<16x128xf32>
    %141 = arith.mulf %130, %106 : vector<16x128xf32>
    %142 = arith.mulf %122, %132 : vector<16x128xf32>
    %143 = arith.addf %141, %142 : vector<16x128xf32>
    %144 = math.tanh %143 : vector<16x128xf32>
    %145 = arith.mulf %140, %144 : vector<16x128xf32>
    %c0_75 = arith.constant 0 : index
    %146 = arith.index_cast %108 : i32 to index
    %c0_76 = arith.constant 0 : index
    %147 = vector.load %arg8[%c0_75, %146, %c0_76] : memref<1x128x128xf32, #tpu.memory_space<vmem>>, vector<1x16x128xf32>
    %148 = vector.shape_cast %147 : vector<1x16x128xf32> to vector<16x128xf32>
    %149 = vector.shape_cast %145 : vector<16x128xf32> to vector<1x16x128xf32>
    tpu.vector_store %arg8[%c0_75, %146, %c0_76], %149 {strides = array<i32>} : memref<1x128x128xf32, #tpu.memory_space<vmem>>, vector<1x16x128xf32>,
    %c0_77 = arith.constant 0 : index
    %c0_78 = arith.constant 0 : index
    %150 = vector.load %arg11[%c0_77, %c0_78] : memref<16x128xf32, #tpu.memory_space<vmem>>, vector<16x128xf32>
    tpu.vector_store %arg11[%c0_77, %c0_78], %145 {strides = array<i32>} : memref<16x128xf32, #tpu.memory_space<vmem>>, vector<16x128xf32>,
    %c0_79 = arith.constant 0 : index
    %c0_80 = arith.constant 0 : index
    %151 = vector.load %arg12[%c0_79, %c0_80] : memref<16x128xf32, #tpu.memory_space<vmem>>, vector<16x128xf32>
    tpu.vector_store %arg12[%c0_79, %c0_80], %143 {strides = array<i32>} : memref<16x128xf32, #tpu.memory_space<vmem>>, vector<16x128xf32>,
    %c3_i32 = arith.constant 3 : i32
    %c0_81 = arith.constant 0 : index
    %c0_82 = arith.constant 0 : index
    %152 = vector.load %arg11[%c0_81, %c0_82] : memref<16x128xf32, #tpu.memory_space<vmem>>, vector<16x128xf32>
    %c0_83 = arith.constant 0 : index
    %c0_84 = arith.constant 0 : index
    %153 = vector.load %arg12[%c0_83, %c0_84] : memref<16x128xf32, #tpu.memory_space<vmem>>, vector<16x128xf32>
    %c16_i32_85 = arith.constant 16 : i32
    %154 = arith.muli %c3_i32, %c16_i32_85 : i32
    %155 = tpu.assume_multiple %154, 16 : i32
    %156 = arith.truncf %152 : vector<16x128xf32> to vector<16x128xbf16>
    %c0_86 = arith.constant 0 : index
    %c0_87 = arith.constant 0 : index
    %157 = vector.load %arg6[%c0_86, %c0_87] : memref<128x512xbf16, #tpu.memory_space<vmem>>, vector<128x512xbf16>
    %cst_88 = arith.constant dense<0.000000e+00> : vector<16x512xf32>
    %158 = tpu.matmul %156, %157, %cst_88 {dimension_numbers = #tpu.dot_dimension_numbers<[1], [0], [0], [1], [0, 0, 1, 1], [], []>} : vector<16x128xbf16>, vector<128x512xbf16>, vector<16x512xf32> -> vector<16x512xf32>
    %159 = arith.index_cast %155 : i32 to index
    %c0_89 = arith.constant 0 : index
    %160 = vector.load %arg13[%159, %c0_89] : memref<128x512xf32, #tpu.memory_space<vmem>>, vector<16x512xf32>
    %161 = arith.addf %158, %160 : vector<16x512xf32>
    %162 = vector.extract_strided_slice %161 {offsets = [0, 0], sizes = [16, 128], strides = [1, 1]} : vector<16x512xf32> to vector<16x128xf32>
    %cst_90 = arith.constant 5.000000e-01 : f32
    %163 = vector.broadcast %cst_90 : f32 to vector<16x128xf32>
    %164 = arith.mulf %163, %162 : vector<16x128xf32>
    %165 = math.tanh %164 : vector<16x128xf32>
    %cst_91 = arith.constant 5.000000e-01 : f32
    %166 = vector.broadcast %cst_91 : f32 to vector<16x128xf32>
    %167 = arith.mulf %166, %165 : vector<16x128xf32>
    %cst_92 = arith.constant 5.000000e-01 : f32
    %168 = vector.broadcast %cst_92 : f32 to vector<16x128xf32>
    %169 = arith.addf %167, %168 : vector<16x128xf32>
    %170 = vector.extract_strided_slice %161 {offsets = [0, 128], sizes = [16, 128], strides = [1, 1]} : vector<16x512xf32> to vector<16x128xf32>
    %cst_93 = arith.constant 5.000000e-01 : f32
    %171 = vector.broadcast %cst_93 : f32 to vector<16x128xf32>
    %172 = arith.mulf %171, %170 : vector<16x128xf32>
    %173 = math.tanh %172 : vector<16x128xf32>
    %cst_94 = arith.constant 5.000000e-01 : f32
    %174 = vector.broadcast %cst_94 : f32 to vector<16x128xf32>
    %175 = arith.mulf %174, %173 : vector<16x128xf32>
    %cst_95 = arith.constant 5.000000e-01 : f32
    %176 = vector.broadcast %cst_95 : f32 to vector<16x128xf32>
    %177 = arith.addf %175, %176 : vector<16x128xf32>
    %178 = vector.extract_strided_slice %161 {offsets = [0, 256], sizes = [16, 128], strides = [1, 1]} : vector<16x512xf32> to vector<16x128xf32>
    %179 = math.tanh %178 : vector<16x128xf32>
    %180 = vector.extract_strided_slice %161 {offsets = [0, 384], sizes = [16, 128], strides = [1, 1]} : vector<16x512xf32> to vector<16x128xf32>
    %cst_96 = arith.constant 5.000000e-01 : f32
    %181 = vector.broadcast %cst_96 : f32 to vector<16x128xf32>
    %182 = arith.mulf %181, %180 : vector<16x128xf32>
    %183 = math.tanh %182 : vector<16x128xf32>
    %cst_97 = arith.constant 5.000000e-01 : f32
    %184 = vector.broadcast %cst_97 : f32 to vector<16x128xf32>
    %185 = arith.mulf %184, %183 : vector<16x128xf32>
    %cst_98 = arith.constant 5.000000e-01 : f32
    %186 = vector.broadcast %cst_98 : f32 to vector<16x128xf32>
    %187 = arith.addf %185, %186 : vector<16x128xf32>
    %188 = arith.mulf %177, %153 : vector<16x128xf32>
    %189 = arith.mulf %169, %179 : vector<16x128xf32>
    %190 = arith.addf %188, %189 : vector<16x128xf32>
    %191 = math.tanh %190 : vector<16x128xf32>
    %192 = arith.mulf %187, %191 : vector<16x128xf32>
    %c0_99 = arith.constant 0 : index
    %193 = arith.index_cast %155 : i32 to index
    %c0_100 = arith.constant 0 : index
    %194 = vector.load %arg8[%c0_99, %193, %c0_100] : memref<1x128x128xf32, #tpu.memory_space<vmem>>, vector<1x16x128xf32>
    %195 = vector.shape_cast %194 : vector<1x16x128xf32> to vector<16x128xf32>
    %196 = vector.shape_cast %192 : vector<16x128xf32> to vector<1x16x128xf32>
    tpu.vector_store %arg8[%c0_99, %193, %c0_100], %196 {strides = array<i32>} : memref<1x128x128xf32, #tpu.memory_space<vmem>>, vector<1x16x128xf32>,
    %c0_101 = arith.constant 0 : index
    %c0_102 = arith.constant 0 : index
    %197 = vector.load %arg11[%c0_101, %c0_102] : memref<16x128xf32, #tpu.memory_space<vmem>>, vector<16x128xf32>
    tpu.vector_store %arg11[%c0_101, %c0_102], %192 {strides = array<i32>} : memref<16x128xf32, #tpu.memory_space<vmem>>, vector<16x128xf32>,
    %c0_103 = arith.constant 0 : index
    %c0_104 = arith.constant 0 : index
    %198 = vector.load %arg12[%c0_103, %c0_104] : memref<16x128xf32, #tpu.memory_space<vmem>>, vector<16x128xf32>
    tpu.vector_store %arg12[%c0_103, %c0_104], %190 {strides = array<i32>} : memref<16x128xf32, #tpu.memory_space<vmem>>, vector<16x128xf32>,
    %c4_i32 = arith.constant 4 : i32
    %c0_105 = arith.constant 0 : index
    %c0_106 = arith.constant 0 : index
    %199 = vector.load %arg11[%c0_105, %c0_106] : memref<16x128xf32, #tpu.memory_space<vmem>>, vector<16x128xf32>
    %c0_107 = arith.constant 0 : index
    %c0_108 = arith.constant 0 : index
    %200 = vector.load %arg12[%c0_107, %c0_108] : memref<16x128xf32, #tpu.memory_space<vmem>>, vector<16x128xf32>
    %c16_i32_109 = arith.constant 16 : i32
    %201 = arith.muli %c4_i32, %c16_i32_109 : i32
    %202 = tpu.assume_multiple %201, 16 : i32
    %203 = arith.truncf %199 : vector<16x128xf32> to vector<16x128xbf16>
    %c0_110 = arith.constant 0 : index
    %c0_111 = arith.constant 0 : index
    %204 = vector.load %arg6[%c0_110, %c0_111] : memref<128x512xbf16, #tpu.memory_space<vmem>>, vector<128x512xbf16>
    %cst_112 = arith.constant dense<0.000000e+00> : vector<16x512xf32>
    %205 = tpu.matmul %203, %204, %cst_112 {dimension_numbers = #tpu.dot_dimension_numbers<[1], [0], [0], [1], [0, 0, 1, 1], [], []>} : vector<16x128xbf16>, vector<128x512xbf16>, vector<16x512xf32> -> vector<16x512xf32>
    %206 = arith.index_cast %202 : i32 to index
    %c0_113 = arith.constant 0 : index
    %207 = vector.load %arg13[%206, %c0_113] : memref<128x512xf32, #tpu.memory_space<vmem>>, vector<16x512xf32>
    %208 = arith.addf %205, %207 : vector<16x512xf32>
    %209 = vector.extract_strided_slice %208 {offsets = [0, 0], sizes = [16, 128], strides = [1, 1]} : vector<16x512xf32> to vector<16x128xf32>
    %cst_114 = arith.constant 5.000000e-01 : f32
    %210 = vector.broadcast %cst_114 : f32 to vector<16x128xf32>
    %211 = arith.mulf %210, %209 : vector<16x128xf32>
    %212 = math.tanh %211 : vector<16x128xf32>
    %cst_115 = arith.constant 5.000000e-01 : f32
    %213 = vector.broadcast %cst_115 : f32 to vector<16x128xf32>
    %214 = arith.mulf %213, %212 : vector<16x128xf32>
    %cst_116 = arith.constant 5.000000e-01 : f32
    %215 = vector.broadcast %cst_116 : f32 to vector<16x128xf32>
    %216 = arith.addf %214, %215 : vector<16x128xf32>
    %217 = vector.extract_strided_slice %208 {offsets = [0, 128], sizes = [16, 128], strides = [1, 1]} : vector<16x512xf32> to vector<16x128xf32>
    %cst_117 = arith.constant 5.000000e-01 : f32
    %218 = vector.broadcast %cst_117 : f32 to vector<16x128xf32>
    %219 = arith.mulf %218, %217 : vector<16x128xf32>
    %220 = math.tanh %219 : vector<16x128xf32>
    %cst_118 = arith.constant 5.000000e-01 : f32
    %221 = vector.broadcast %cst_118 : f32 to vector<16x128xf32>
    %222 = arith.mulf %221, %220 : vector<16x128xf32>
    %cst_119 = arith.constant 5.000000e-01 : f32
    %223 = vector.broadcast %cst_119 : f32 to vector<16x128xf32>
    %224 = arith.addf %222, %223 : vector<16x128xf32>
    %225 = vector.extract_strided_slice %208 {offsets = [0, 256], sizes = [16, 128], strides = [1, 1]} : vector<16x512xf32> to vector<16x128xf32>
    %226 = math.tanh %225 : vector<16x128xf32>
    %227 = vector.extract_strided_slice %208 {offsets = [0, 384], sizes = [16, 128], strides = [1, 1]} : vector<16x512xf32> to vector<16x128xf32>
    %cst_120 = arith.constant 5.000000e-01 : f32
    %228 = vector.broadcast %cst_120 : f32 to vector<16x128xf32>
    %229 = arith.mulf %228, %227 : vector<16x128xf32>
    %230 = math.tanh %229 : vector<16x128xf32>
    %cst_121 = arith.constant 5.000000e-01 : f32
    %231 = vector.broadcast %cst_121 : f32 to vector<16x128xf32>
    %232 = arith.mulf %231, %230 : vector<16x128xf32>
    %cst_122 = arith.constant 5.000000e-01 : f32
    %233 = vector.broadcast %cst_122 : f32 to vector<16x128xf32>
    %234 = arith.addf %232, %233 : vector<16x128xf32>
    %235 = arith.mulf %224, %200 : vector<16x128xf32>
    %236 = arith.mulf %216, %226 : vector<16x128xf32>
    %237 = arith.addf %235, %236 : vector<16x128xf32>
    %238 = math.tanh %237 : vector<16x128xf32>
    %239 = arith.mulf %234, %238 : vector<16x128xf32>
    %c0_123 = arith.constant 0 : index
    %240 = arith.index_cast %202 : i32 to index
    %c0_124 = arith.constant 0 : index
    %241 = vector.load %arg8[%c0_123, %240, %c0_124] : memref<1x128x128xf32, #tpu.memory_space<vmem>>, vector<1x16x128xf32>
    %242 = vector.shape_cast %241 : vector<1x16x128xf32> to vector<16x128xf32>
    %243 = vector.shape_cast %239 : vector<16x128xf32> to vector<1x16x128xf32>
    tpu.vector_store %arg8[%c0_123, %240, %c0_124], %243 {strides = array<i32>} : memref<1x128x128xf32, #tpu.memory_space<vmem>>, vector<1x16x128xf32>,
    %c0_125 = arith.constant 0 : index
    %c0_126 = arith.constant 0 : index
    %244 = vector.load %arg11[%c0_125, %c0_126] : memref<16x128xf32, #tpu.memory_space<vmem>>, vector<16x128xf32>
    tpu.vector_store %arg11[%c0_125, %c0_126], %239 {strides = array<i32>} : memref<16x128xf32, #tpu.memory_space<vmem>>, vector<16x128xf32>,
    %c0_127 = arith.constant 0 : index
    %c0_128 = arith.constant 0 : index
    %245 = vector.load %arg12[%c0_127, %c0_128] : memref<16x128xf32, #tpu.memory_space<vmem>>, vector<16x128xf32>
    tpu.vector_store %arg12[%c0_127, %c0_128], %237 {strides = array<i32>} : memref<16x128xf32, #tpu.memory_space<vmem>>, vector<16x128xf32>,
    %c5_i32 = arith.constant 5 : i32
    %c0_129 = arith.constant 0 : index
    %c0_130 = arith.constant 0 : index
    %246 = vector.load %arg11[%c0_129, %c0_130] : memref<16x128xf32, #tpu.memory_space<vmem>>, vector<16x128xf32>
    %c0_131 = arith.constant 0 : index
    %c0_132 = arith.constant 0 : index
    %247 = vector.load %arg12[%c0_131, %c0_132] : memref<16x128xf32, #tpu.memory_space<vmem>>, vector<16x128xf32>
    %c16_i32_133 = arith.constant 16 : i32
    %248 = arith.muli %c5_i32, %c16_i32_133 : i32
    %249 = tpu.assume_multiple %248, 16 : i32
    %250 = arith.truncf %246 : vector<16x128xf32> to vector<16x128xbf16>
    %c0_134 = arith.constant 0 : index
    %c0_135 = arith.constant 0 : index
    %251 = vector.load %arg6[%c0_134, %c0_135] : memref<128x512xbf16, #tpu.memory_space<vmem>>, vector<128x512xbf16>
    %cst_136 = arith.constant dense<0.000000e+00> : vector<16x512xf32>
    %252 = tpu.matmul %250, %251, %cst_136 {dimension_numbers = #tpu.dot_dimension_numbers<[1], [0], [0], [1], [0, 0, 1, 1], [], []>} : vector<16x128xbf16>, vector<128x512xbf16>, vector<16x512xf32> -> vector<16x512xf32>
    %253 = arith.index_cast %249 : i32 to index
    %c0_137 = arith.constant 0 : index
    %254 = vector.load %arg13[%253, %c0_137] : memref<128x512xf32, #tpu.memory_space<vmem>>, vector<16x512xf32>
    %255 = arith.addf %252, %254 : vector<16x512xf32>
    %256 = vector.extract_strided_slice %255 {offsets = [0, 0], sizes = [16, 128], strides = [1, 1]} : vector<16x512xf32> to vector<16x128xf32>
    %cst_138 = arith.constant 5.000000e-01 : f32
    %257 = vector.broadcast %cst_138 : f32 to vector<16x128xf32>
    %258 = arith.mulf %257, %256 : vector<16x128xf32>
    %259 = math.tanh %258 : vector<16x128xf32>
    %cst_139 = arith.constant 5.000000e-01 : f32
    %260 = vector.broadcast %cst_139 : f32 to vector<16x128xf32>
    %261 = arith.mulf %260, %259 : vector<16x128xf32>
    %cst_140 = arith.constant 5.000000e-01 : f32
    %262 = vector.broadcast %cst_140 : f32 to vector<16x128xf32>
    %263 = arith.addf %261, %262 : vector<16x128xf32>
    %264 = vector.extract_strided_slice %255 {offsets = [0, 128], sizes = [16, 128], strides = [1, 1]} : vector<16x512xf32> to vector<16x128xf32>
    %cst_141 = arith.constant 5.000000e-01 : f32
    %265 = vector.broadcast %cst_141 : f32 to vector<16x128xf32>
    %266 = arith.mulf %265, %264 : vector<16x128xf32>
    %267 = math.tanh %266 : vector<16x128xf32>
    %cst_142 = arith.constant 5.000000e-01 : f32
    %268 = vector.broadcast %cst_142 : f32 to vector<16x128xf32>
    %269 = arith.mulf %268, %267 : vector<16x128xf32>
    %cst_143 = arith.constant 5.000000e-01 : f32
    %270 = vector.broadcast %cst_143 : f32 to vector<16x128xf32>
    %271 = arith.addf %269, %270 : vector<16x128xf32>
    %272 = vector.extract_strided_slice %255 {offsets = [0, 256], sizes = [16, 128], strides = [1, 1]} : vector<16x512xf32> to vector<16x128xf32>
    %273 = math.tanh %272 : vector<16x128xf32>
    %274 = vector.extract_strided_slice %255 {offsets = [0, 384], sizes = [16, 128], strides = [1, 1]} : vector<16x512xf32> to vector<16x128xf32>
    %cst_144 = arith.constant 5.000000e-01 : f32
    %275 = vector.broadcast %cst_144 : f32 to vector<16x128xf32>
    %276 = arith.mulf %275, %274 : vector<16x128xf32>
    %277 = math.tanh %276 : vector<16x128xf32>
    %cst_145 = arith.constant 5.000000e-01 : f32
    %278 = vector.broadcast %cst_145 : f32 to vector<16x128xf32>
    %279 = arith.mulf %278, %277 : vector<16x128xf32>
    %cst_146 = arith.constant 5.000000e-01 : f32
    %280 = vector.broadcast %cst_146 : f32 to vector<16x128xf32>
    %281 = arith.addf %279, %280 : vector<16x128xf32>
    %282 = arith.mulf %271, %247 : vector<16x128xf32>
    %283 = arith.mulf %263, %273 : vector<16x128xf32>
    %284 = arith.addf %282, %283 : vector<16x128xf32>
    %285 = math.tanh %284 : vector<16x128xf32>
    %286 = arith.mulf %281, %285 : vector<16x128xf32>
    %c0_147 = arith.constant 0 : index
    %287 = arith.index_cast %249 : i32 to index
    %c0_148 = arith.constant 0 : index
    %288 = vector.load %arg8[%c0_147, %287, %c0_148] : memref<1x128x128xf32, #tpu.memory_space<vmem>>, vector<1x16x128xf32>
    %289 = vector.shape_cast %288 : vector<1x16x128xf32> to vector<16x128xf32>
    %290 = vector.shape_cast %286 : vector<16x128xf32> to vector<1x16x128xf32>
    tpu.vector_store %arg8[%c0_147, %287, %c0_148], %290 {strides = array<i32>} : memref<1x128x128xf32, #tpu.memory_space<vmem>>, vector<1x16x128xf32>,
    %c0_149 = arith.constant 0 : index
    %c0_150 = arith.constant 0 : index
    %291 = vector.load %arg11[%c0_149, %c0_150] : memref<16x128xf32, #tpu.memory_space<vmem>>, vector<16x128xf32>
    tpu.vector_store %arg11[%c0_149, %c0_150], %286 {strides = array<i32>} : memref<16x128xf32, #tpu.memory_space<vmem>>, vector<16x128xf32>,
    %c0_151 = arith.constant 0 : index
    %c0_152 = arith.constant 0 : index
    %292 = vector.load %arg12[%c0_151, %c0_152] : memref<16x128xf32, #tpu.memory_space<vmem>>, vector<16x128xf32>
    tpu.vector_store %arg12[%c0_151, %c0_152], %284 {strides = array<i32>} : memref<16x128xf32, #tpu.memory_space<vmem>>, vector<16x128xf32>,
    %c6_i32 = arith.constant 6 : i32
    %c0_153 = arith.constant 0 : index
    %c0_154 = arith.constant 0 : index
    %293 = vector.load %arg11[%c0_153, %c0_154] : memref<16x128xf32, #tpu.memory_space<vmem>>, vector<16x128xf32>
    %c0_155 = arith.constant 0 : index
    %c0_156 = arith.constant 0 : index
    %294 = vector.load %arg12[%c0_155, %c0_156] : memref<16x128xf32, #tpu.memory_space<vmem>>, vector<16x128xf32>
    %c16_i32_157 = arith.constant 16 : i32
    %295 = arith.muli %c6_i32, %c16_i32_157 : i32
    %296 = tpu.assume_multiple %295, 16 : i32
    %297 = arith.truncf %293 : vector<16x128xf32> to vector<16x128xbf16>
    %c0_158 = arith.constant 0 : index
    %c0_159 = arith.constant 0 : index
    %298 = vector.load %arg6[%c0_158, %c0_159] : memref<128x512xbf16, #tpu.memory_space<vmem>>, vector<128x512xbf16>
    %cst_160 = arith.constant dense<0.000000e+00> : vector<16x512xf32>
    %299 = tpu.matmul %297, %298, %cst_160 {dimension_numbers = #tpu.dot_dimension_numbers<[1], [0], [0], [1], [0, 0, 1, 1], [], []>} : vector<16x128xbf16>, vector<128x512xbf16>, vector<16x512xf32> -> vector<16x512xf32>
    %300 = arith.index_cast %296 : i32 to index
    %c0_161 = arith.constant 0 : index
    %301 = vector.load %arg13[%300, %c0_161] : memref<128x512xf32, #tpu.memory_space<vmem>>, vector<16x512xf32>
    %302 = arith.addf %299, %301 : vector<16x512xf32>
    %303 = vector.extract_strided_slice %302 {offsets = [0, 0], sizes = [16, 128], strides = [1, 1]} : vector<16x512xf32> to vector<16x128xf32>
    %cst_162 = arith.constant 5.000000e-01 : f32
    %304 = vector.broadcast %cst_162 : f32 to vector<16x128xf32>
    %305 = arith.mulf %304, %303 : vector<16x128xf32>
    %306 = math.tanh %305 : vector<16x128xf32>
    %cst_163 = arith.constant 5.000000e-01 : f32
    %307 = vector.broadcast %cst_163 : f32 to vector<16x128xf32>
    %308 = arith.mulf %307, %306 : vector<16x128xf32>
    %cst_164 = arith.constant 5.000000e-01 : f32
    %309 = vector.broadcast %cst_164 : f32 to vector<16x128xf32>
    %310 = arith.addf %308, %309 : vector<16x128xf32>
    %311 = vector.extract_strided_slice %302 {offsets = [0, 128], sizes = [16, 128], strides = [1, 1]} : vector<16x512xf32> to vector<16x128xf32>
    %cst_165 = arith.constant 5.000000e-01 : f32
    %312 = vector.broadcast %cst_165 : f32 to vector<16x128xf32>
    %313 = arith.mulf %312, %311 : vector<16x128xf32>
    %314 = math.tanh %313 : vector<16x128xf32>
    %cst_166 = arith.constant 5.000000e-01 : f32
    %315 = vector.broadcast %cst_166 : f32 to vector<16x128xf32>
    %316 = arith.mulf %315, %314 : vector<16x128xf32>
    %cst_167 = arith.constant 5.000000e-01 : f32
    %317 = vector.broadcast %cst_167 : f32 to vector<16x128xf32>
    %318 = arith.addf %316, %317 : vector<16x128xf32>
    %319 = vector.extract_strided_slice %302 {offsets = [0, 256], sizes = [16, 128], strides = [1, 1]} : vector<16x512xf32> to vector<16x128xf32>
    %320 = math.tanh %319 : vector<16x128xf32>
    %321 = vector.extract_strided_slice %302 {offsets = [0, 384], sizes = [16, 128], strides = [1, 1]} : vector<16x512xf32> to vector<16x128xf32>
    %cst_168 = arith.constant 5.000000e-01 : f32
    %322 = vector.broadcast %cst_168 : f32 to vector<16x128xf32>
    %323 = arith.mulf %322, %321 : vector<16x128xf32>
    %324 = math.tanh %323 : vector<16x128xf32>
    %cst_169 = arith.constant 5.000000e-01 : f32
    %325 = vector.broadcast %cst_169 : f32 to vector<16x128xf32>
    %326 = arith.mulf %325, %324 : vector<16x128xf32>
    %cst_170 = arith.constant 5.000000e-01 : f32
    %327 = vector.broadcast %cst_170 : f32 to vector<16x128xf32>
    %328 = arith.addf %326, %327 : vector<16x128xf32>
    %329 = arith.mulf %318, %294 : vector<16x128xf32>
    %330 = arith.mulf %310, %320 : vector<16x128xf32>
    %331 = arith.addf %329, %330 : vector<16x128xf32>
    %332 = math.tanh %331 : vector<16x128xf32>
    %333 = arith.mulf %328, %332 : vector<16x128xf32>
    %c0_171 = arith.constant 0 : index
    %334 = arith.index_cast %296 : i32 to index
    %c0_172 = arith.constant 0 : index
    %335 = vector.load %arg8[%c0_171, %334, %c0_172] : memref<1x128x128xf32, #tpu.memory_space<vmem>>, vector<1x16x128xf32>
    %336 = vector.shape_cast %335 : vector<1x16x128xf32> to vector<16x128xf32>
    %337 = vector.shape_cast %333 : vector<16x128xf32> to vector<1x16x128xf32>
    tpu.vector_store %arg8[%c0_171, %334, %c0_172], %337 {strides = array<i32>} : memref<1x128x128xf32, #tpu.memory_space<vmem>>, vector<1x16x128xf32>,
    %c0_173 = arith.constant 0 : index
    %c0_174 = arith.constant 0 : index
    %338 = vector.load %arg11[%c0_173, %c0_174] : memref<16x128xf32, #tpu.memory_space<vmem>>, vector<16x128xf32>
    tpu.vector_store %arg11[%c0_173, %c0_174], %333 {strides = array<i32>} : memref<16x128xf32, #tpu.memory_space<vmem>>, vector<16x128xf32>,
    %c0_175 = arith.constant 0 : index
    %c0_176 = arith.constant 0 : index
    %339 = vector.load %arg12[%c0_175, %c0_176] : memref<16x128xf32, #tpu.memory_space<vmem>>, vector<16x128xf32>
    tpu.vector_store %arg12[%c0_175, %c0_176], %331 {strides = array<i32>} : memref<16x128xf32, #tpu.memory_space<vmem>>, vector<16x128xf32>,
    %c7_i32 = arith.constant 7 : i32
    %c0_177 = arith.constant 0 : index
    %c0_178 = arith.constant 0 : index
    %340 = vector.load %arg11[%c0_177, %c0_178] : memref<16x128xf32, #tpu.memory_space<vmem>>, vector<16x128xf32>
    %c0_179 = arith.constant 0 : index
    %c0_180 = arith.constant 0 : index
    %341 = vector.load %arg12[%c0_179, %c0_180] : memref<16x128xf32, #tpu.memory_space<vmem>>, vector<16x128xf32>
    %c16_i32_181 = arith.constant 16 : i32
    %342 = arith.muli %c7_i32, %c16_i32_181 : i32
    %343 = tpu.assume_multiple %342, 16 : i32
    %344 = arith.truncf %340 : vector<16x128xf32> to vector<16x128xbf16>
    %c0_182 = arith.constant 0 : index
    %c0_183 = arith.constant 0 : index
    %345 = vector.load %arg6[%c0_182, %c0_183] : memref<128x512xbf16, #tpu.memory_space<vmem>>, vector<128x512xbf16>
    %cst_184 = arith.constant dense<0.000000e+00> : vector<16x512xf32>
    %346 = tpu.matmul %344, %345, %cst_184 {dimension_numbers = #tpu.dot_dimension_numbers<[1], [0], [0], [1], [0, 0, 1, 1], [], []>} : vector<16x128xbf16>, vector<128x512xbf16>, vector<16x512xf32> -> vector<16x512xf32>
    %347 = arith.index_cast %343 : i32 to index
    %c0_185 = arith.constant 0 : index
    %348 = vector.load %arg13[%347, %c0_185] : memref<128x512xf32, #tpu.memory_space<vmem>>, vector<16x512xf32>
    %349 = arith.addf %346, %348 : vector<16x512xf32>
    %350 = vector.extract_strided_slice %349 {offsets = [0, 0], sizes = [16, 128], strides = [1, 1]} : vector<16x512xf32> to vector<16x128xf32>
    %cst_186 = arith.constant 5.000000e-01 : f32
    %351 = vector.broadcast %cst_186 : f32 to vector<16x128xf32>
    %352 = arith.mulf %351, %350 : vector<16x128xf32>
    %353 = math.tanh %352 : vector<16x128xf32>
    %cst_187 = arith.constant 5.000000e-01 : f32
    %354 = vector.broadcast %cst_187 : f32 to vector<16x128xf32>
    %355 = arith.mulf %354, %353 : vector<16x128xf32>
    %cst_188 = arith.constant 5.000000e-01 : f32
    %356 = vector.broadcast %cst_188 : f32 to vector<16x128xf32>
    %357 = arith.addf %355, %356 : vector<16x128xf32>
    %358 = vector.extract_strided_slice %349 {offsets = [0, 128], sizes = [16, 128], strides = [1, 1]} : vector<16x512xf32> to vector<16x128xf32>
    %cst_189 = arith.constant 5.000000e-01 : f32
    %359 = vector.broadcast %cst_189 : f32 to vector<16x128xf32>
    %360 = arith.mulf %359, %358 : vector<16x128xf32>
    %361 = math.tanh %360 : vector<16x128xf32>
    %cst_190 = arith.constant 5.000000e-01 : f32
    %362 = vector.broadcast %cst_190 : f32 to vector<16x128xf32>
    %363 = arith.mulf %362, %361 : vector<16x128xf32>
    %cst_191 = arith.constant 5.000000e-01 : f32
    %364 = vector.broadcast %cst_191 : f32 to vector<16x128xf32>
    %365 = arith.addf %363, %364 : vector<16x128xf32>
    %366 = vector.extract_strided_slice %349 {offsets = [0, 256], sizes = [16, 128], strides = [1, 1]} : vector<16x512xf32> to vector<16x128xf32>
    %367 = math.tanh %366 : vector<16x128xf32>
    %368 = vector.extract_strided_slice %349 {offsets = [0, 384], sizes = [16, 128], strides = [1, 1]} : vector<16x512xf32> to vector<16x128xf32>
    %cst_192 = arith.constant 5.000000e-01 : f32
    %369 = vector.broadcast %cst_192 : f32 to vector<16x128xf32>
    %370 = arith.mulf %369, %368 : vector<16x128xf32>
    %371 = math.tanh %370 : vector<16x128xf32>
    %cst_193 = arith.constant 5.000000e-01 : f32
    %372 = vector.broadcast %cst_193 : f32 to vector<16x128xf32>
    %373 = arith.mulf %372, %371 : vector<16x128xf32>
    %cst_194 = arith.constant 5.000000e-01 : f32
    %374 = vector.broadcast %cst_194 : f32 to vector<16x128xf32>
    %375 = arith.addf %373, %374 : vector<16x128xf32>
    %376 = arith.mulf %365, %341 : vector<16x128xf32>
    %377 = arith.mulf %357, %367 : vector<16x128xf32>
    %378 = arith.addf %376, %377 : vector<16x128xf32>
    %379 = math.tanh %378 : vector<16x128xf32>
    %380 = arith.mulf %375, %379 : vector<16x128xf32>
    %c0_195 = arith.constant 0 : index
    %381 = arith.index_cast %343 : i32 to index
    %c0_196 = arith.constant 0 : index
    %382 = vector.load %arg8[%c0_195, %381, %c0_196] : memref<1x128x128xf32, #tpu.memory_space<vmem>>, vector<1x16x128xf32>
    %383 = vector.shape_cast %382 : vector<1x16x128xf32> to vector<16x128xf32>
    %384 = vector.shape_cast %380 : vector<16x128xf32> to vector<1x16x128xf32>
    tpu.vector_store %arg8[%c0_195, %381, %c0_196], %384 {strides = array<i32>} : memref<1x128x128xf32, #tpu.memory_space<vmem>>, vector<1x16x128xf32>,
    %c0_197 = arith.constant 0 : index
    %c0_198 = arith.constant 0 : index
    %385 = vector.load %arg11[%c0_197, %c0_198] : memref<16x128xf32, #tpu.memory_space<vmem>>, vector<16x128xf32>
    tpu.vector_store %arg11[%c0_197, %c0_198], %380 {strides = array<i32>} : memref<16x128xf32, #tpu.memory_space<vmem>>, vector<16x128xf32>,
    %c0_199 = arith.constant 0 : index
    %c0_200 = arith.constant 0 : index
    %386 = vector.load %arg12[%c0_199, %c0_200] : memref<16x128xf32, #tpu.memory_space<vmem>>, vector<16x128xf32>
    tpu.vector_store %arg12[%c0_199, %c0_200], %378 {strides = array<i32>} : memref<16x128xf32, #tpu.memory_space<vmem>>, vector<16x128xf32>,
    %c8_i32 = arith.constant 8 : i32
    %c0_i32_201 = arith.constant 0 : i32
    %387 = arith.cmpi eq, %arg1, %c0_i32_201 : i32
    %388 = arith.extui %387 : i1 to i32
    %c0_i32_202 = arith.constant 0 : i32
    %389 = arith.cmpi ne, %388, %c0_i32_202 : i32
    scf.if %389 {
      %c0_203 = arith.constant 0 : index
      %c0_204 = arith.constant 0 : index
      %390 = vector.load %arg11[%c0_203, %c0_204] : memref<16x128xf32, #tpu.memory_space<vmem>>, vector<16x128xf32>
      %c0_205 = arith.constant 0 : index
      %c0_206 = arith.constant 0 : index
      %c0_207 = arith.constant 0 : index
      %391 = vector.load %arg9[%c0_205, %c0_206, %c0_207] : memref<1x16x128xf32, #tpu.memory_space<vmem>>, vector<1x16x128xf32>
      %392 = vector.shape_cast %391 : vector<1x16x128xf32> to vector<16x128xf32>
      %393 = vector.shape_cast %390 : vector<16x128xf32> to vector<1x16x128xf32>
      tpu.vector_store %arg9[%c0_205, %c0_206, %c0_207], %393 {strides = array<i32>} : memref<1x16x128xf32, #tpu.memory_space<vmem>>, vector<1x16x128xf32>,
      %c0_208 = arith.constant 0 : index
      %c0_209 = arith.constant 0 : index
      %394 = vector.load %arg12[%c0_208, %c0_209] : memref<16x128xf32, #tpu.memory_space<vmem>>, vector<16x128xf32>
      %c0_210 = arith.constant 0 : index
      %c0_211 = arith.constant 0 : index
      %c0_212 = arith.constant 0 : index
      %395 = vector.load %arg10[%c0_210, %c0_211, %c0_212] : memref<1x16x128xf32, #tpu.memory_space<vmem>>, vector<1x16x128xf32>
      %396 = vector.shape_cast %395 : vector<1x16x128xf32> to vector<16x128xf32>
      %397 = vector.shape_cast %394 : vector<16x128xf32> to vector<1x16x128xf32>
      tpu.vector_store %arg10[%c0_210, %c0_211, %c0_212], %397 {strides = array<i32>} : memref<1x16x128xf32, #tpu.memory_space<vmem>>, vector<1x16x128xf32>,
    } else {
    }
    return
  }
  func.func @transform_0(%arg0: i32, %arg1: i32) -> (i32, i32, i32) {
    %c0_i32 = arith.constant 0 : i32
    %c0_i32_0 = arith.constant 0 : i32
    return %arg0, %arg1, %c0_i32 : i32, i32, i32
  }
  func.func @transform_1(%arg0: i32, %arg1: i32) -> (i32, i32, i32) {
    %c0_i32 = arith.constant 0 : i32
    %c0_i32_0 = arith.constant 0 : i32
    %c0_i32_1 = arith.constant 0 : i32
    return %arg0, %c0_i32, %c0_i32_0 : i32, i32, i32
  }
  func.func @transform_2(%arg0: i32, %arg1: i32) -> (i32, i32, i32) {
    %c0_i32 = arith.constant 0 : i32
    %c0_i32_0 = arith.constant 0 : i32
    %c0_i32_1 = arith.constant 0 : i32
    return %arg0, %c0_i32, %c0_i32_0 : i32, i32, i32
  }
  func.func @transform_3(%arg0: i32, %arg1: i32) -> (i32, i32) {
    %c0_i32 = arith.constant 0 : i32
    %c0_i32_0 = arith.constant 0 : i32
    %c0_i32_1 = arith.constant 0 : i32
    return %c0_i32, %c0_i32_0 : i32, i32
  }
  func.func @transform_4(%arg0: i32, %arg1: i32) -> (i32, i32) {
    %c0_i32 = arith.constant 0 : i32
    %c0_i32_0 = arith.constant 0 : i32
    %c0_i32_1 = arith.constant 0 : i32
    return %c0_i32, %c0_i32_0 : i32, i32
  }
  func.func @transform_5(%arg0: i32, %arg1: i32) -> (i32, i32) {
    %c0_i32 = arith.constant 0 : i32
    %c0_i32_0 = arith.constant 0 : i32
    %c0_i32_1 = arith.constant 0 : i32
    return %c0_i32, %c0_i32_0 : i32, i32
  }
  func.func @transform_6(%arg0: i32, %arg1: i32) -> (i32, i32, i32) {
    %c0_i32 = arith.constant 0 : i32
    %c0_i32_0 = arith.constant 0 : i32
    return %arg0, %arg1, %c0_i32 : i32, i32, i32
  }
  func.func @transform_7(%arg0: i32, %arg1: i32) -> (i32, i32, i32) {
    %c0_i32 = arith.constant 0 : i32
    %c0_i32_0 = arith.constant 0 : i32
    %c0_i32_1 = arith.constant 0 : i32
    return %arg0, %c0_i32, %c0_i32_0 : i32, i32, i32
  }
  func.func @transform_8(%arg0: i32, %arg1: i32) -> (i32, i32, i32) {
    %c0_i32 = arith.constant 0 : i32
    %c0_i32_0 = arith.constant 0 : i32
    %c0_i32_1 = arith.constant 0 : i32
    return %arg0, %c0_i32, %c0_i32_0 : i32, i32, i32
  }
}

module attributes {stable_mosaic.version = 11 : i64} {
  func.func @_lstm_kernel(%arg0: i32, %arg1: i32, %arg2: memref<1x128x16xbf16, #tpu.memory_space<vmem>>, %arg3: memref<1x16x128xf32, #tpu.memory_space<vmem>>, %arg4: memref<1x16x128xf32, #tpu.memory_space<vmem>>, %arg5: memref<16x512xbf16, #tpu.memory_space<vmem>>, %arg6: memref<128x512xbf16, #tpu.memory_space<vmem>>, %arg7: memref<1x512xf32, #tpu.memory_space<vmem>>, %arg8: memref<1x128x128xf32, #tpu.memory_space<vmem>>, %arg9: memref<1x16x128xf32, #tpu.memory_space<vmem>>, %arg10: memref<1x16x128xf32, #tpu.memory_space<vmem>>, %arg11: memref<16x128xf32, #tpu.memory_space<vmem>>, %arg12: memref<16x128xf32, #tpu.memory_space<vmem>>, %arg13: memref<128x512xf32, #tpu.memory_space<vmem>>) attributes {dimension_semantics = [#tpu.dimension_semantics<parallel>, #tpu.dimension_semantics<arbitrary>], iteration_bounds = array<i64: 1, 1>, scalar_prefetch = 0 : i64, scratch_operands = 3 : i64, tpu.core_type = #tpu.core_type<tc>, window_params = [{transform_indices = @transform_0, window_bounds = array<i64: 1, 128, 16>}, {transform_indices = @transform_1, window_bounds = array<i64: 1, 16, 128>}, {transform_indices = @transform_2, window_bounds = array<i64: 1, 16, 128>}, {pipeline_mode = #tpu.pipeline_mode<synchronous>, transform_indices = @transform_3, window_bounds = array<i64: 16, 512>}, {pipeline_mode = #tpu.pipeline_mode<synchronous>, transform_indices = @transform_4, window_bounds = array<i64: 128, 512>}, {pipeline_mode = #tpu.pipeline_mode<synchronous>, transform_indices = @transform_5, window_bounds = array<i64: 1, 512>}, {transform_indices = @transform_6, window_bounds = array<i64: 1, 128, 128>}, {transform_indices = @transform_7, window_bounds = array<i64: 1, 16, 128>}, {transform_indices = @transform_8, window_bounds = array<i64: 1, 16, 128>}]} {
    %c0_i32 = arith.constant 0 : i32
    %0 = arith.cmpi eq, %arg1, %c0_i32 : i32
    %1 = arith.extui %0 : i1 to i32
    %c0_i32_0 = arith.constant 0 : i32
    %2 = arith.cmpi ne, %1, %c0_i32_0 : i32
    scf.if %2 {
      %c0_203 = arith.constant 0 : index
      %c0_204 = arith.constant 0 : index
      %c0_205 = arith.constant 0 : index
      %390 = vector.load %arg3[%c0_203, %c0_204, %c0_205] : memref<1x16x128xf32, #tpu.memory_space<vmem>>, vector<1x16x128xf32>
      %391 = vector.shape_cast %390 : vector<1x16x128xf32> to vector<16x128xf32>
      %c0_206 = arith.constant 0 : index
      %c0_207 = arith.constant 0 : index
      %392 = vector.load %arg11[%c0_206, %c0_207] : memref<16x128xf32, #tpu.memory_space<vmem>>, vector<16x128xf32>
      tpu.vector_store %arg11[%c0_206, %c0_207], %391 {strides = array<i32>} : memref<16x128xf32, #tpu.memory_space<vmem>>, vector<16x128xf32>,
      %c0_208 = arith.constant 0 : index
      %c0_209 = arith.constant 0 : index
      %c0_210 = arith.constant 0 : index
      %393 = vector.load %arg4[%c0_208, %c0_209, %c0_210] : memref<1x16x128xf32, #tpu.memory_space<vmem>>, vector<1x16x128xf32>
      %394 = vector.shape_cast %393 : vector<1x16x128xf32> to vector<16x128xf32>
      %c0_211 = arith.constant 0 : index
      %c0_212 = arith.constant 0 : index
      %395 = vector.load %arg12[%c0_211, %c0_212] : memref<16x128xf32, #tpu.memory_space<vmem>>, vector<16x128xf32>
      tpu.vector_store %arg12[%c0_211, %c0_212], %394 {strides = array<i32>} : memref<16x128xf32, #tpu.memory_space<vmem>>, vector<16x128xf32>,
    } else {
    }
    %c0 = arith.constant 0 : index
    %c0_1 = arith.constant 0 : index
    %c0_2 = arith.constant 0 : index
    %3 = vector.load %arg2[%c0, %c0_1, %c0_2] : memref<1x128x16xbf16, #tpu.memory_space<vmem>>, vector<1x128x16xbf16>
    %4 = vector.shape_cast %3 : vector<1x128x16xbf16> to vector<128x16xbf16>
    %c0_3 = arith.constant 0 : index
    %c0_4 = arith.constant 0 : index
    %5 = vector.load %arg5[%c0_3, %c0_4] : memref<16x512xbf16, #tpu.memory_space<vmem>>, vector<16x512xbf16>
    %cst = arith.constant dense<0.000000e+00> : vector<128x512xf32>
    %6 = tpu.matmul %4, %5, %cst {dimension_numbers = #tpu.dot_dimension_numbers<[1], [0], [0], [1], [0, 0, 1, 1], [], []>} : vector<128x16xbf16>, vector<16x512xbf16>, vector<128x512xf32> -> vector<128x512xf32>
    %c0_5 = arith.constant 0 : index
    %c0_6 = arith.constant 0 : index
    %7 = vector.load %arg7[%c0_5, %c0_6] : memref<1x512xf32, #tpu.memory_space<vmem>>, vector<1x512xf32>
    %8 = vector.broadcast %7 : vector<1x512xf32> to vector<128x512xf32>
    %9 = arith.addf %6, %8 : vector<128x512xf32>
    %c0_7 = arith.constant 0 : index
    %c0_8 = arith.constant 0 : index
    %10 = vector.load %arg13[%c0_7, %c0_8] : memref<128x512xf32, #tpu.memory_space<vmem>>, vector<128x512xf32>
    tpu.vector_store %arg13[%c0_7, %c0_8], %9 {strides = array<i32>} : memref<128x512xf32, #tpu.memory_space<vmem>>, vector<128x512xf32>,
    %c0_i32_9 = arith.constant 0 : i32
    %c0_10 = arith.constant 0 : index
    %c0_11 = arith.constant 0 : index
    %11 = vector.load %arg11[%c0_10, %c0_11] : memref<16x128xf32, #tpu.memory_space<vmem>>, vector<16x128xf32>
    %c0_12 = arith.constant 0 : index
    %c0_13 = arith.constant 0 : index
    %12 = vector.load %arg12[%c0_12, %c0_13] : memref<16x128xf32, #tpu.memory_space<vmem>>, vector<16x128xf32>
    %c16_i32 = arith.constant 16 : i32
    %13 = arith.muli %c0_i32_9, %c16_i32 : i32
    %14 = tpu.assume_multiple %13, 16 : i32
    %15 = arith.truncf %11 : vector<16x128xf32> to vector<16x128xbf16>
    %c0_14 = arith.constant 0 : index
    %c0_15 = arith.constant 0 : index
    %16 = vector.load %arg6[%c0_14, %c0_15] : memref<128x512xbf16, #tpu.memory_space<vmem>>, vector<128x512xbf16>
    %cst_16 = arith.constant dense<0.000000e+00> : vector<16x512xf32>
    %17 = tpu.matmul %15, %16, %cst_16 {dimension_numbers = #tpu.dot_dimension_numbers<[1], [0], [0], [1], [0, 0, 1, 1], [], []>} : vector<16x128xbf16>, vector<128x512xbf16>, vector<16x512xf32> -> vector<16x512xf32>
    %18 = arith.index_cast %14 : i32 to index
    %c0_17 = arith.constant 0 : index
    %19 = vector.load %arg13[%18, %c0_17] : memref<128x512xf32, #tpu.memory_space<vmem>>, vector<16x512xf32>
    %20 = arith.addf %17, %19 : vector<16x512xf32>
    %21 = vector.extract_strided_slice %20 {offsets = [0, 0], sizes = [16, 128], strides = [1, 1]} : vector<16x512xf32> to vector<16x128xf32>
    %cst_18 = arith.constant 5.000000e-01 : f32
    %22 = vector.broadcast %cst_18 : f32 to vector<16x128xf32>
    %23 = arith.mulf %22, %21 : vector<16x128xf32>
    %24 = math.tanh %23 : vector<16x128xf32>
    %cst_19 = arith.constant 5.000000e-01 : f32
    %25 = vector.broadcast %cst_19 : f32 to vector<16x128xf32>
    %26 = arith.mulf %25, %24 : vector<16x128xf32>
    %cst_20 = arith.constant 5.000000e-01 : f32
    %27 = vector.broadcast %cst_20 : f32 to vector<16x128xf32>
    %28 = arith.addf %26, %27 : vector<16x128xf32>
    %29 = vector.extract_strided_slice %20 {offsets = [0, 128], sizes = [16, 128], strides = [1, 1]} : vector<16x512xf32> to vector<16x128xf32>
    %cst_21 = arith.constant 5.000000e-01 : f32
    %30 = vector.broadcast %cst_21 : f32 to vector<16x128xf32>
    %31 = arith.mulf %30, %29 : vector<16x128xf32>
    %32 = math.tanh %31 : vector<16x128xf32>
    %cst_22 = arith.constant 5.000000e-01 : f32
    %33 = vector.broadcast %cst_22 : f32 to vector<16x128xf32>
    %34 = arith.mulf %33, %32 : vector<16x128xf32>
    %cst_23 = arith.constant 5.000000e-01 : f32
    %35 = vector.broadcast %cst_23 : f32 to vector<16x128xf32>
    %36 = arith.addf %34, %35 : vector<16x128xf32>
    %37 = vector.extract_strided_slice %20 {offsets = [0, 256], sizes = [16, 128], strides = [1, 1]} : vector<16x512xf32> to vector<16x128xf32>
    %38 = math.tanh %37 : vector<16x128xf32>
    %39 = vector.extract_strided_slice %20 {offsets = [0, 384], sizes = [16, 128], strides = [1, 1]} : vector<16x512xf32> to vector<16x128xf32>
    %cst_24 = arith.constant 5.000000e-01 : f32
    %40 = vector.broadcast %cst_24 : f32 to vector<16x128xf32>
    %41 = arith.mulf %40, %39 : vector<16x128xf32>
    %42 = math.tanh %41 : vector<16x128xf32>
    %cst_25 = arith.constant 5.000000e-01 : f32
    %43 = vector.broadcast %cst_25 : f32 to vector<16x128xf32>
    %44 = arith.mulf %43, %42 : vector<16x128xf32>
    %cst_26 = arith.constant 5.000000e-01 : f32
    %45 = vector.broadcast %cst_26 : f32 to vector<16x128xf32>
    %46 = arith.addf %44, %45 : vector<16x128xf32>
    %47 = arith.mulf %36, %12 : vector<16x128xf32>
    %48 = arith.mulf %28, %38 : vector<16x128xf32>
    %49 = arith.addf %47, %48 : vector<16x128xf32>
    %50 = math.tanh %49 : vector<16x128xf32>
    %51 = arith.mulf %46, %50 : vector<16x128xf32>
    %c0_27 = arith.constant 0 : index
    %52 = arith.index_cast %14 : i32 to index
    %c0_28 = arith.constant 0 : index
    %53 = vector.load %arg8[%c0_27, %52, %c0_28] : memref<1x128x128xf32, #tpu.memory_space<vmem>>, vector<1x16x128xf32>
    %54 = vector.shape_cast %53 : vector<1x16x128xf32> to vector<16x128xf32>
    %55 = vector.shape_cast %51 : vector<16x128xf32> to vector<1x16x128xf32>
    tpu.vector_store %arg8[%c0_27, %52, %c0_28], %55 {strides = array<i32>} : memref<1x128x128xf32, #tpu.memory_space<vmem>>, vector<1x16x128xf32>,
    %c0_29 = arith.constant 0 : index
    %c0_30 = arith.constant 0 : index
    %56 = vector.load %arg11[%c0_29, %c0_30] : memref<16x128xf32, #tpu.memory_space<vmem>>, vector<16x128xf32>
    tpu.vector_store %arg11[%c0_29, %c0_30], %51 {strides = array<i32>} : memref<16x128xf32, #tpu.memory_space<vmem>>, vector<16x128xf32>,
    %c0_31 = arith.constant 0 : index
    %c0_32 = arith.constant 0 : index
    %57 = vector.load %arg12[%c0_31, %c0_32] : memref<16x128xf32, #tpu.memory_space<vmem>>, vector<16x128xf32>
    tpu.vector_store %arg12[%c0_31, %c0_32], %49 {strides = array<i32>} : memref<16x128xf32, #tpu.memory_space<vmem>>, vector<16x128xf32>,
    %c1_i32 = arith.constant 1 : i32
    %c0_33 = arith.constant 0 : index
    %c0_34 = arith.constant 0 : index
    %58 = vector.load %arg11[%c0_33, %c0_34] : memref<16x128xf32, #tpu.memory_space<vmem>>, vector<16x128xf32>
    %c0_35 = arith.constant 0 : index
    %c0_36 = arith.constant 0 : index
    %59 = vector.load %arg12[%c0_35, %c0_36] : memref<16x128xf32, #tpu.memory_space<vmem>>, vector<16x128xf32>
    %c16_i32_37 = arith.constant 16 : i32
    %60 = arith.muli %c1_i32, %c16_i32_37 : i32
    %61 = tpu.assume_multiple %60, 16 : i32
    %62 = arith.truncf %58 : vector<16x128xf32> to vector<16x128xbf16>
    %c0_38 = arith.constant 0 : index
    %c0_39 = arith.constant 0 : index
    %63 = vector.load %arg6[%c0_38, %c0_39] : memref<128x512xbf16, #tpu.memory_space<vmem>>, vector<128x512xbf16>
    %cst_40 = arith.constant dense<0.000000e+00> : vector<16x512xf32>
    %64 = tpu.matmul %62, %63, %cst_40 {dimension_numbers = #tpu.dot_dimension_numbers<[1], [0], [0], [1], [0, 0, 1, 1], [], []>} : vector<16x128xbf16>, vector<128x512xbf16>, vector<16x512xf32> -> vector<16x512xf32>
    %65 = arith.index_cast %61 : i32 to index
    %c0_41 = arith.constant 0 : index
    %66 = vector.load %arg13[%65, %c0_41] : memref<128x512xf32, #tpu.memory_space<vmem>>, vector<16x512xf32>
    %67 = arith.addf %64, %66 : vector<16x512xf32>
    %68 = vector.extract_strided_slice %67 {offsets = [0, 0], sizes = [16, 128], strides = [1, 1]} : vector<16x512xf32> to vector<16x128xf32>
    %cst_42 = arith.constant 5.000000e-01 : f32
    %69 = vector.broadcast %cst_42 : f32 to vector<16x128xf32>
    %70 = arith.mulf %69, %68 : vector<16x128xf32>
    %71 = math.tanh %70 : vector<16x128xf32>
    %cst_43 = arith.constant 5.000000e-01 : f32
    %72 = vector.broadcast %cst_43 : f32 to vector<16x128xf32>
    %73 = arith.mulf %72, %71 : vector<16x128xf32>
    %cst_44 = arith.constant 5.000000e-01 : f32
    %74 = vector.broadcast %cst_44 : f32 to vector<16x128xf32>
    %75 = arith.addf %73, %74 : vector<16x128xf32>
    %76 = vector.extract_strided_slice %67 {offsets = [0, 128], sizes = [16, 128], strides = [1, 1]} : vector<16x512xf32> to vector<16x128xf32>
    %cst_45 = arith.constant 5.000000e-01 : f32
    %77 = vector.broadcast %cst_45 : f32 to vector<16x128xf32>
    %78 = arith.mulf %77, %76 : vector<16x128xf32>
    %79 = math.tanh %78 : vector<16x128xf32>
    %cst_46 = arith.constant 5.000000e-01 : f32
    %80 = vector.broadcast %cst_46 : f32 to vector<16x128xf32>
    %81 = arith.mulf %80, %79 : vector<16x128xf32>
    %cst_47 = arith.constant 5.000000e-01 : f32
    %82 = vector.broadcast %cst_47 : f32 to vector<16x128xf32>
    %83 = arith.addf %81, %82 : vector<16x128xf32>
    %84 = vector.extract_strided_slice %67 {offsets = [0, 256], sizes = [16, 128], strides = [1, 1]} : vector<16x512xf32> to vector<16x128xf32>
    %85 = math.tanh %84 : vector<16x128xf32>
    %86 = vector.extract_strided_slice %67 {offsets = [0, 384], sizes = [16, 128], strides = [1, 1]} : vector<16x512xf32> to vector<16x128xf32>
    %cst_48 = arith.constant 5.000000e-01 : f32
    %87 = vector.broadcast %cst_48 : f32 to vector<16x128xf32>
    %88 = arith.mulf %87, %86 : vector<16x128xf32>
    %89 = math.tanh %88 : vector<16x128xf32>
    %cst_49 = arith.constant 5.000000e-01 : f32
    %90 = vector.broadcast %cst_49 : f32 to vector<16x128xf32>
    %91 = arith.mulf %90, %89 : vector<16x128xf32>
    %cst_50 = arith.constant 5.000000e-01 : f32
    %92 = vector.broadcast %cst_50 : f32 to vector<16x128xf32>
    %93 = arith.addf %91, %92 : vector<16x128xf32>
    %94 = arith.mulf %83, %59 : vector<16x128xf32>
    %95 = arith.mulf %75, %85 : vector<16x128xf32>
    %96 = arith.addf %94, %95 : vector<16x128xf32>
    %97 = math.tanh %96 : vector<16x128xf32>
    %98 = arith.mulf %93, %97 : vector<16x128xf32>
    %c0_51 = arith.constant 0 : index
    %99 = arith.index_cast %61 : i32 to index
    %c0_52 = arith.constant 0 : index
    %100 = vector.load %arg8[%c0_51, %99, %c0_52] : memref<1x128x128xf32, #tpu.memory_space<vmem>>, vector<1x16x128xf32>
    %101 = vector.shape_cast %100 : vector<1x16x128xf32> to vector<16x128xf32>
    %102 = vector.shape_cast %98 : vector<16x128xf32> to vector<1x16x128xf32>
    tpu.vector_store %arg8[%c0_51, %99, %c0_52], %102 {strides = array<i32>} : memref<1x128x128xf32, #tpu.memory_space<vmem>>, vector<1x16x128xf32>,
    %c0_53 = arith.constant 0 : index
    %c0_54 = arith.constant 0 : index
    %103 = vector.load %arg11[%c0_53, %c0_54] : memref<16x128xf32, #tpu.memory_space<vmem>>, vector<16x128xf32>
    tpu.vector_store %arg11[%c0_53, %c0_54], %98 {strides = array<i32>} : memref<16x128xf32, #tpu.memory_space<vmem>>, vector<16x128xf32>,
    %c0_55 = arith.constant 0 : index
    %c0_56 = arith.constant 0 : index
    %104 = vector.load %arg12[%c0_55, %c0_56] : memref<16x128xf32, #tpu.memory_space<vmem>>, vector<16x128xf32>
    tpu.vector_store %arg12[%c0_55, %c0_56], %96 {strides = array<i32>} : memref<16x128xf32, #tpu.memory_space<vmem>>, vector<16x128xf32>,
    %c2_i32 = arith.constant 2 : i32
    %c0_57 = arith.constant 0 : index
    %c0_58 = arith.constant 0 : index
    %105 = vector.load %arg11[%c0_57, %c0_58] : memref<16x128xf32, #tpu.memory_space<vmem>>, vector<16x128xf32>
    %c0_59 = arith.constant 0 : index
    %c0_60 = arith.constant 0 : index
    %106 = vector.load %arg12[%c0_59, %c0_60] : memref<16x128xf32, #tpu.memory_space<vmem>>, vector<16x128xf32>
    %c16_i32_61 = arith.constant 16 : i32
    %107 = arith.muli %c2_i32, %c16_i32_61 : i32
    %108 = tpu.assume_multiple %107, 16 : i32
    %109 = arith.truncf %105 : vector<16x128xf32> to vector<16x128xbf16>
    %c0_62 = arith.constant 0 : index
    %c0_63 = arith.constant 0 : index
    %110 = vector.load %arg6[%c0_62, %c0_63] : memref<128x512xbf16, #tpu.memory_space<vmem>>, vector<128x512xbf16>
    %cst_64 = arith.constant dense<0.000000e+00> : vector<16x512xf32>
    %111 = tpu.matmul %109, %110, %cst_64 {dimension_numbers = #tpu.dot_dimension_numbers<[1], [0], [0], [1], [0, 0, 1, 1], [], []>} : vector<16x128xbf16>, vector<128x512xbf16>, vector<16x512xf32> -> vector<16x512xf32>
    %112 = arith.index_cast %108 : i32 to index
    %c0_65 = arith.constant 0 : index
    %113 = vector.load %arg13[%112, %c0_65] : memref<128x512xf32, #tpu.memory_space<vmem>>, vector<16x512xf32>
    %114 = arith.addf %111, %113 : vector<16x512xf32>
    %115 = vector.extract_strided_slice %114 {offsets = [0, 0], sizes = [16, 128], strides = [1, 1]} : vector<16x512xf32> to vector<16x128xf32>
    %cst_66 = arith.constant 5.000000e-01 : f32
    %116 = vector.broadcast %cst_66 : f32 to vector<16x128xf32>
    %117 = arith.mulf %116, %115 : vector<16x128xf32>
    %118 = math.tanh %117 : vector<16x128xf32>
    %cst_67 = arith.constant 5.000000e-01 : f32
    %119 = vector.broadcast %cst_67 : f32 to vector<16x128xf32>
    %120 = arith.mulf %119, %118 : vector<16x128xf32>
    %cst_68 = arith.constant 5.000000e-01 : f32
    %121 = vector.broadcast %cst_68 : f32 to vector<16x128xf32>
    %122 = arith.addf %120, %121 : vector<16x128xf32>
    %123 = vector.extract_strided_slice %114 {offsets = [0, 128], sizes = [16, 128], strides = [1, 1]} : vector<16x512xf32> to vector<16x128xf32>
    %cst_69 = arith.constant 5.000000e-01 : f32
    %124 = vector.broadcast %cst_69 : f32 to vector<16x128xf32>
    %125 = arith.mulf %124, %123 : vector<16x128xf32>
    %126 = math.tanh %125 : vector<16x128xf32>
    %cst_70 = arith.constant 5.000000e-01 : f32
    %127 = vector.broadcast %cst_70 : f32 to vector<16x128xf32>
    %128 = arith.mulf %127, %126 : vector<16x128xf32>
    %cst_71 = arith.constant 5.000000e-01 : f32
    %129 = vector.broadcast %cst_71 : f32 to vector<16x128xf32>
    %130 = arith.addf %128, %129 : vector<16x128xf32>
    %131 = vector.extract_strided_slice %114 {offsets = [0, 256], sizes = [16, 128], strides = [1, 1]} : vector<16x512xf32> to vector<16x128xf32>
    %132 = math.tanh %131 : vector<16x128xf32>
    %133 = vector.extract_strided_slice %114 {offsets = [0, 384], sizes = [16, 128], strides = [1, 1]} : vector<16x512xf32> to vector<16x128xf32>
    %cst_72 = arith.constant 5.000000e-01 : f32
    %134 = vector.broadcast %cst_72 : f32 to vector<16x128xf32>
    %135 = arith.mulf %134, %133 : vector<16x128xf32>
    %136 = math.tanh %135 : vector<16x128xf32>
    %cst_73 = arith.constant 5.000000e-01 : f32
    %137 = vector.broadcast %cst_73 : f32 to vector<16x128xf32>
    %138 = arith.mulf %137, %136 : vector<16x128xf32>
    %cst_74 = arith.constant 5.000000e-01 : f32
    %139 = vector.broadcast %cst_74 : f32 to vector<16x128xf32>
    %140 = arith.addf %138, %139 : vector<16x128xf32>
    %141 = arith.mulf %130, %106 : vector<16x128xf32>
    %142 = arith.mulf %122, %132 : vector<16x128xf32>
    %143 = arith.addf %141, %142 : vector<16x128xf32>
    %144 = math.tanh %143 : vector<16x128xf32>
    %145 = arith.mulf %140, %144 : vector<16x128xf32>
    %c0_75 = arith.constant 0 : index
    %146 = arith.index_cast %108 : i32 to index
    %c0_76 = arith.constant 0 : index
    %147 = vector.load %arg8[%c0_75, %146, %c0_76] : memref<1x128x128xf32, #tpu.memory_space<vmem>>, vector<1x16x128xf32>
    %148 = vector.shape_cast %147 : vector<1x16x128xf32> to vector<16x128xf32>
    %149 = vector.shape_cast %145 : vector<16x128xf32> to vector<1x16x128xf32>
    tpu.vector_store %arg8[%c0_75, %146, %c0_76], %149 {strides = array<i32>} : memref<1x128x128xf32, #tpu.memory_space<vmem>>, vector<1x16x128xf32>,
    %c0_77 = arith.constant 0 : index
    %c0_78 = arith.constant 0 : index
    %150 = vector.load %arg11[%c0_77, %c0_78] : memref<16x128xf32, #tpu.memory_space<vmem>>, vector<16x128xf32>
    tpu.vector_store %arg11[%c0_77, %c0_78], %145 {strides = array<i32>} : memref<16x128xf32, #tpu.memory_space<vmem>>, vector<16x128xf32>,
    %c0_79 = arith.constant 0 : index
    %c0_80 = arith.constant 0 : index
    %151 = vector.load %arg12[%c0_79, %c0_80] : memref<16x128xf32, #tpu.memory_space<vmem>>, vector<16x128xf32>
    tpu.vector_store %arg12[%c0_79, %c0_80], %143 {strides = array<i32>} : memref<16x128xf32, #tpu.memory_space<vmem>>, vector<16x128xf32>,
    %c3_i32 = arith.constant 3 : i32
    %c0_81 = arith.constant 0 : index
    %c0_82 = arith.constant 0 : index
    %152 = vector.load %arg11[%c0_81, %c0_82] : memref<16x128xf32, #tpu.memory_space<vmem>>, vector<16x128xf32>
    %c0_83 = arith.constant 0 : index
    %c0_84 = arith.constant 0 : index
    %153 = vector.load %arg12[%c0_83, %c0_84] : memref<16x128xf32, #tpu.memory_space<vmem>>, vector<16x128xf32>
    %c16_i32_85 = arith.constant 16 : i32
    %154 = arith.muli %c3_i32, %c16_i32_85 : i32
    %155 = tpu.assume_multiple %154, 16 : i32
    %156 = arith.truncf %152 : vector<16x128xf32> to vector<16x128xbf16>
    %c0_86 = arith.constant 0 : index
    %c0_87 = arith.constant 0 : index
    %157 = vector.load %arg6[%c0_86, %c0_87] : memref<128x512xbf16, #tpu.memory_space<vmem>>, vector<128x512xbf16>
    %cst_88 = arith.constant dense<0.000000e+00> : vector<16x512xf32>
    %158 = tpu.matmul %156, %157, %cst_88 {dimension_numbers = #tpu.dot_dimension_numbers<[1], [0], [0], [1], [0, 0, 1, 1], [], []>} : vector<16x128xbf16>, vector<128x512xbf16>, vector<16x512xf32> -> vector<16x512xf32>
    %159 = arith.index_cast %155 : i32 to index
    %c0_89 = arith.constant 0 : index
    %160 = vector.load %arg13[%159, %c0_89] : memref<128x512xf32, #tpu.memory_space<vmem>>, vector<16x512xf32>
    %161 = arith.addf %158, %160 : vector<16x512xf32>
    %162 = vector.extract_strided_slice %161 {offsets = [0, 0], sizes = [16, 128], strides = [1, 1]} : vector<16x512xf32> to vector<16x128xf32>
    %cst_90 = arith.constant 5.000000e-01 : f32
    %163 = vector.broadcast %cst_90 : f32 to vector<16x128xf32>
    %164 = arith.mulf %163, %162 : vector<16x128xf32>
    %165 = math.tanh %164 : vector<16x128xf32>
    %cst_91 = arith.constant 5.000000e-01 : f32
    %166 = vector.broadcast %cst_91 : f32 to vector<16x128xf32>
    %167 = arith.mulf %166, %165 : vector<16x128xf32>
    %cst_92 = arith.constant 5.000000e-01 : f32
    %168 = vector.broadcast %cst_92 : f32 to vector<16x128xf32>
    %169 = arith.addf %167, %168 : vector<16x128xf32>
    %170 = vector.extract_strided_slice %161 {offsets = [0, 128], sizes = [16, 128], strides = [1, 1]} : vector<16x512xf32> to vector<16x128xf32>
    %cst_93 = arith.constant 5.000000e-01 : f32
    %171 = vector.broadcast %cst_93 : f32 to vector<16x128xf32>
    %172 = arith.mulf %171, %170 : vector<16x128xf32>
    %173 = math.tanh %172 : vector<16x128xf32>
    %cst_94 = arith.constant 5.000000e-01 : f32
    %174 = vector.broadcast %cst_94 : f32 to vector<16x128xf32>
    %175 = arith.mulf %174, %173 : vector<16x128xf32>
    %cst_95 = arith.constant 5.000000e-01 : f32
    %176 = vector.broadcast %cst_95 : f32 to vector<16x128xf32>
    %177 = arith.addf %175, %176 : vector<16x128xf32>
    %178 = vector.extract_strided_slice %161 {offsets = [0, 256], sizes = [16, 128], strides = [1, 1]} : vector<16x512xf32> to vector<16x128xf32>
    %179 = math.tanh %178 : vector<16x128xf32>
    %180 = vector.extract_strided_slice %161 {offsets = [0, 384], sizes = [16, 128], strides = [1, 1]} : vector<16x512xf32> to vector<16x128xf32>
    %cst_96 = arith.constant 5.000000e-01 : f32
    %181 = vector.broadcast %cst_96 : f32 to vector<16x128xf32>
    %182 = arith.mulf %181, %180 : vector<16x128xf32>
    %183 = math.tanh %182 : vector<16x128xf32>
    %cst_97 = arith.constant 5.000000e-01 : f32
    %184 = vector.broadcast %cst_97 : f32 to vector<16x128xf32>
    %185 = arith.mulf %184, %183 : vector<16x128xf32>
    %cst_98 = arith.constant 5.000000e-01 : f32
    %186 = vector.broadcast %cst_98 : f32 to vector<16x128xf32>
    %187 = arith.addf %185, %186 : vector<16x128xf32>
    %188 = arith.mulf %177, %153 : vector<16x128xf32>
    %189 = arith.mulf %169, %179 : vector<16x128xf32>
    %190 = arith.addf %188, %189 : vector<16x128xf32>
    %191 = math.tanh %190 : vector<16x128xf32>
    %192 = arith.mulf %187, %191 : vector<16x128xf32>
    %c0_99 = arith.constant 0 : index
    %193 = arith.index_cast %155 : i32 to index
    %c0_100 = arith.constant 0 : index
    %194 = vector.load %arg8[%c0_99, %193, %c0_100] : memref<1x128x128xf32, #tpu.memory_space<vmem>>, vector<1x16x128xf32>
    %195 = vector.shape_cast %194 : vector<1x16x128xf32> to vector<16x128xf32>
    %196 = vector.shape_cast %192 : vector<16x128xf32> to vector<1x16x128xf32>
    tpu.vector_store %arg8[%c0_99, %193, %c0_100], %196 {strides = array<i32>} : memref<1x128x128xf32, #tpu.memory_space<vmem>>, vector<1x16x128xf32>,
    %c0_101 = arith.constant 0 : index
    %c0_102 = arith.constant 0 : index
    %197 = vector.load %arg11[%c0_101, %c0_102] : memref<16x128xf32, #tpu.memory_space<vmem>>, vector<16x128xf32>
    tpu.vector_store %arg11[%c0_101, %c0_102], %192 {strides = array<i32>} : memref<16x128xf32, #tpu.memory_space<vmem>>, vector<16x128xf32>,
    %c0_103 = arith.constant 0 : index
    %c0_104 = arith.constant 0 : index
    %198 = vector.load %arg12[%c0_103, %c0_104] : memref<16x128xf32, #tpu.memory_space<vmem>>, vector<16x128xf32>
    tpu.vector_store %arg12[%c0_103, %c0_104], %190 {strides = array<i32>} : memref<16x128xf32, #tpu.memory_space<vmem>>, vector<16x128xf32>,
    %c4_i32 = arith.constant 4 : i32
    %c0_105 = arith.constant 0 : index
    %c0_106 = arith.constant 0 : index
    %199 = vector.load %arg11[%c0_105, %c0_106] : memref<16x128xf32, #tpu.memory_space<vmem>>, vector<16x128xf32>
    %c0_107 = arith.constant 0 : index
    %c0_108 = arith.constant 0 : index
    %200 = vector.load %arg12[%c0_107, %c0_108] : memref<16x128xf32, #tpu.memory_space<vmem>>, vector<16x128xf32>
    %c16_i32_109 = arith.constant 16 : i32
    %201 = arith.muli %c4_i32, %c16_i32_109 : i32
    %202 = tpu.assume_multiple %201, 16 : i32
    %203 = arith.truncf %199 : vector<16x128xf32> to vector<16x128xbf16>
    %c0_110 = arith.constant 0 : index
    %c0_111 = arith.constant 0 : index
    %204 = vector.load %arg6[%c0_110, %c0_111] : memref<128x512xbf16, #tpu.memory_space<vmem>>, vector<128x512xbf16>
    %cst_112 = arith.constant dense<0.000000e+00> : vector<16x512xf32>
    %205 = tpu.matmul %203, %204, %cst_112 {dimension_numbers = #tpu.dot_dimension_numbers<[1], [0], [0], [1], [0, 0, 1, 1], [], []>} : vector<16x128xbf16>, vector<128x512xbf16>, vector<16x512xf32> -> vector<16x512xf32>
    %206 = arith.index_cast %202 : i32 to index
    %c0_113 = arith.constant 0 : index
    %207 = vector.load %arg13[%206, %c0_113] : memref<128x512xf32, #tpu.memory_space<vmem>>, vector<16x512xf32>
    %208 = arith.addf %205, %207 : vector<16x512xf32>
    %209 = vector.extract_strided_slice %208 {offsets = [0, 0], sizes = [16, 128], strides = [1, 1]} : vector<16x512xf32> to vector<16x128xf32>
    %cst_114 = arith.constant 5.000000e-01 : f32
    %210 = vector.broadcast %cst_114 : f32 to vector<16x128xf32>
    %211 = arith.mulf %210, %209 : vector<16x128xf32>
    %212 = math.tanh %211 : vector<16x128xf32>
    %cst_115 = arith.constant 5.000000e-01 : f32
    %213 = vector.broadcast %cst_115 : f32 to vector<16x128xf32>
    %214 = arith.mulf %213, %212 : vector<16x128xf32>
    %cst_116 = arith.constant 5.000000e-01 : f32
    %215 = vector.broadcast %cst_116 : f32 to vector<16x128xf32>
    %216 = arith.addf %214, %215 : vector<16x128xf32>
    %217 = vector.extract_strided_slice %208 {offsets = [0, 128], sizes = [16, 128], strides = [1, 1]} : vector<16x512xf32> to vector<16x128xf32>
    %cst_117 = arith.constant 5.000000e-01 : f32
    %218 = vector.broadcast %cst_117 : f32 to vector<16x128xf32>
    %219 = arith.mulf %218, %217 : vector<16x128xf32>
    %220 = math.tanh %219 : vector<16x128xf32>
    %cst_118 = arith.constant 5.000000e-01 : f32
    %221 = vector.broadcast %cst_118 : f32 to vector<16x128xf32>
    %222 = arith.mulf %221, %220 : vector<16x128xf32>
    %cst_119 = arith.constant 5.000000e-01 : f32
    %223 = vector.broadcast %cst_119 : f32 to vector<16x128xf32>
    %224 = arith.addf %222, %223 : vector<16x128xf32>
    %225 = vector.extract_strided_slice %208 {offsets = [0, 256], sizes = [16, 128], strides = [1, 1]} : vector<16x512xf32> to vector<16x128xf32>
    %226 = math.tanh %225 : vector<16x128xf32>
    %227 = vector.extract_strided_slice %208 {offsets = [0, 384], sizes = [16, 128], strides = [1, 1]} : vector<16x512xf32> to vector<16x128xf32>
    %cst_120 = arith.constant 5.000000e-01 : f32
    %228 = vector.broadcast %cst_120 : f32 to vector<16x128xf32>
    %229 = arith.mulf %228, %227 : vector<16x128xf32>
    %230 = math.tanh %229 : vector<16x128xf32>
    %cst_121 = arith.constant 5.000000e-01 : f32
    %231 = vector.broadcast %cst_121 : f32 to vector<16x128xf32>
    %232 = arith.mulf %231, %230 : vector<16x128xf32>
    %cst_122 = arith.constant 5.000000e-01 : f32
    %233 = vector.broadcast %cst_122 : f32 to vector<16x128xf32>
    %234 = arith.addf %232, %233 : vector<16x128xf32>
    %235 = arith.mulf %224, %200 : vector<16x128xf32>
    %236 = arith.mulf %216, %226 : vector<16x128xf32>
    %237 = arith.addf %235, %236 : vector<16x128xf32>
    %238 = math.tanh %237 : vector<16x128xf32>
    %239 = arith.mulf %234, %238 : vector<16x128xf32>
    %c0_123 = arith.constant 0 : index
    %240 = arith.index_cast %202 : i32 to index
    %c0_124 = arith.constant 0 : index
    %241 = vector.load %arg8[%c0_123, %240, %c0_124] : memref<1x128x128xf32, #tpu.memory_space<vmem>>, vector<1x16x128xf32>
    %242 = vector.shape_cast %241 : vector<1x16x128xf32> to vector<16x128xf32>
    %243 = vector.shape_cast %239 : vector<16x128xf32> to vector<1x16x128xf32>
    tpu.vector_store %arg8[%c0_123, %240, %c0_124], %243 {strides = array<i32>} : memref<1x128x128xf32, #tpu.memory_space<vmem>>, vector<1x16x128xf32>,
    %c0_125 = arith.constant 0 : index
    %c0_126 = arith.constant 0 : index
    %244 = vector.load %arg11[%c0_125, %c0_126] : memref<16x128xf32, #tpu.memory_space<vmem>>, vector<16x128xf32>
    tpu.vector_store %arg11[%c0_125, %c0_126], %239 {strides = array<i32>} : memref<16x128xf32, #tpu.memory_space<vmem>>, vector<16x128xf32>,
    %c0_127 = arith.constant 0 : index
    %c0_128 = arith.constant 0 : index
    %245 = vector.load %arg12[%c0_127, %c0_128] : memref<16x128xf32, #tpu.memory_space<vmem>>, vector<16x128xf32>
    tpu.vector_store %arg12[%c0_127, %c0_128], %237 {strides = array<i32>} : memref<16x128xf32, #tpu.memory_space<vmem>>, vector<16x128xf32>,
    %c5_i32 = arith.constant 5 : i32
    %c0_129 = arith.constant 0 : index
    %c0_130 = arith.constant 0 : index
    %246 = vector.load %arg11[%c0_129, %c0_130] : memref<16x128xf32, #tpu.memory_space<vmem>>, vector<16x128xf32>
    %c0_131 = arith.constant 0 : index
    %c0_132 = arith.constant 0 : index
    %247 = vector.load %arg12[%c0_131, %c0_132] : memref<16x128xf32, #tpu.memory_space<vmem>>, vector<16x128xf32>
    %c16_i32_133 = arith.constant 16 : i32
    %248 = arith.muli %c5_i32, %c16_i32_133 : i32
    %249 = tpu.assume_multiple %248, 16 : i32
    %250 = arith.truncf %246 : vector<16x128xf32> to vector<16x128xbf16>
    %c0_134 = arith.constant 0 : index
    %c0_135 = arith.constant 0 : index
    %251 = vector.load %arg6[%c0_134, %c0_135] : memref<128x512xbf16, #tpu.memory_space<vmem>>, vector<128x512xbf16>
    %cst_136 = arith.constant dense<0.000000e+00> : vector<16x512xf32>
    %252 = tpu.matmul %250, %251, %cst_136 {dimension_numbers = #tpu.dot_dimension_numbers<[1], [0], [0], [1], [0, 0, 1, 1], [], []>} : vector<16x128xbf16>, vector<128x512xbf16>, vector<16x512xf32> -> vector<16x512xf32>
    %253 = arith.index_cast %249 : i32 to index
    %c0_137 = arith.constant 0 : index
    %254 = vector.load %arg13[%253, %c0_137] : memref<128x512xf32, #tpu.memory_space<vmem>>, vector<16x512xf32>
    %255 = arith.addf %252, %254 : vector<16x512xf32>
    %256 = vector.extract_strided_slice %255 {offsets = [0, 0], sizes = [16, 128], strides = [1, 1]} : vector<16x512xf32> to vector<16x128xf32>
    %cst_138 = arith.constant 5.000000e-01 : f32
    %257 = vector.broadcast %cst_138 : f32 to vector<16x128xf32>
    %258 = arith.mulf %257, %256 : vector<16x128xf32>
    %259 = math.tanh %258 : vector<16x128xf32>
    %cst_139 = arith.constant 5.000000e-01 : f32
    %260 = vector.broadcast %cst_139 : f32 to vector<16x128xf32>
    %261 = arith.mulf %260, %259 : vector<16x128xf32>
    %cst_140 = arith.constant 5.000000e-01 : f32
    %262 = vector.broadcast %cst_140 : f32 to vector<16x128xf32>
    %263 = arith.addf %261, %262 : vector<16x128xf32>
    %264 = vector.extract_strided_slice %255 {offsets = [0, 128], sizes = [16, 128], strides = [1, 1]} : vector<16x512xf32> to vector<16x128xf32>
    %cst_141 = arith.constant 5.000000e-01 : f32
    %265 = vector.broadcast %cst_141 : f32 to vector<16x128xf32>
    %266 = arith.mulf %265, %264 : vector<16x128xf32>
    %267 = math.tanh %266 : vector<16x128xf32>
    %cst_142 = arith.constant 5.000000e-01 : f32
    %268 = vector.broadcast %cst_142 : f32 to vector<16x128xf32>
    %269 = arith.mulf %268, %267 : vector<16x128xf32>
    %cst_143 = arith.constant 5.000000e-01 : f32
    %270 = vector.broadcast %cst_143 : f32 to vector<16x128xf32>
    %271 = arith.addf %269, %270 : vector<16x128xf32>
    %272 = vector.extract_strided_slice %255 {offsets = [0, 256], sizes = [16, 128], strides = [1, 1]} : vector<16x512xf32> to vector<16x128xf32>
    %273 = math.tanh %272 : vector<16x128xf32>
    %274 = vector.extract_strided_slice %255 {offsets = [0, 384], sizes = [16, 128], strides = [1, 1]} : vector<16x512xf32> to vector<16x128xf32>
    %cst_144 = arith.constant 5.000000e-01 : f32
    %275 = vector.broadcast %cst_144 : f32 to vector<16x128xf32>
    %276 = arith.mulf %275, %274 : vector<16x128xf32>
    %277 = math.tanh %276 : vector<16x128xf32>
    %cst_145 = arith.constant 5.000000e-01 : f32
    %278 = vector.broadcast %cst_145 : f32 to vector<16x128xf32>
    %279 = arith.mulf %278, %277 : vector<16x128xf32>
    %cst_146 = arith.constant 5.000000e-01 : f32
    %280 = vector.broadcast %cst_146 : f32 to vector<16x128xf32>
    %281 = arith.addf %279, %280 : vector<16x128xf32>
    %282 = arith.mulf %271, %247 : vector<16x128xf32>
    %283 = arith.mulf %263, %273 : vector<16x128xf32>
    %284 = arith.addf %282, %283 : vector<16x128xf32>
    %285 = math.tanh %284 : vector<16x128xf32>
    %286 = arith.mulf %281, %285 : vector<16x128xf32>
    %c0_147 = arith.constant 0 : index
    %287 = arith.index_cast %249 : i32 to index
    %c0_148 = arith.constant 0 : index
    %288 = vector.load %arg8[%c0_147, %287, %c0_148] : memref<1x128x128xf32, #tpu.memory_space<vmem>>, vector<1x16x128xf32>
    %289 = vector.shape_cast %288 : vector<1x16x128xf32> to vector<16x128xf32>
    %290 = vector.shape_cast %286 : vector<16x128xf32> to vector<1x16x128xf32>
    tpu.vector_store %arg8[%c0_147, %287, %c0_148], %290 {strides = array<i32>} : memref<1x128x128xf32, #tpu.memory_space<vmem>>, vector<1x16x128xf32>,
    %c0_149 = arith.constant 0 : index
    %c0_150 = arith.constant 0 : index
    %291 = vector.load %arg11[%c0_149, %c0_150] : memref<16x128xf32, #tpu.memory_space<vmem>>, vector<16x128xf32>
    tpu.vector_store %arg11[%c0_149, %c0_150], %286 {strides = array<i32>} : memref<16x128xf32, #tpu.memory_space<vmem>>, vector<16x128xf32>,
    %c0_151 = arith.constant 0 : index
    %c0_152 = arith.constant 0 : index
    %292 = vector.load %arg12[%c0_151, %c0_152] : memref<16x128xf32, #tpu.memory_space<vmem>>, vector<16x128xf32>
    tpu.vector_store %arg12[%c0_151, %c0_152], %284 {strides = array<i32>} : memref<16x128xf32, #tpu.memory_space<vmem>>, vector<16x128xf32>,
    %c6_i32 = arith.constant 6 : i32
    %c0_153 = arith.constant 0 : index
    %c0_154 = arith.constant 0 : index
    %293 = vector.load %arg11[%c0_153, %c0_154] : memref<16x128xf32, #tpu.memory_space<vmem>>, vector<16x128xf32>
    %c0_155 = arith.constant 0 : index
    %c0_156 = arith.constant 0 : index
    %294 = vector.load %arg12[%c0_155, %c0_156] : memref<16x128xf32, #tpu.memory_space<vmem>>, vector<16x128xf32>
    %c16_i32_157 = arith.constant 16 : i32
    %295 = arith.muli %c6_i32, %c16_i32_157 : i32
    %296 = tpu.assume_multiple %295, 16 : i32
    %297 = arith.truncf %293 : vector<16x128xf32> to vector<16x128xbf16>
    %c0_158 = arith.constant 0 : index
    %c0_159 = arith.constant 0 : index
    %298 = vector.load %arg6[%c0_158, %c0_159] : memref<128x512xbf16, #tpu.memory_space<vmem>>, vector<128x512xbf16>
    %cst_160 = arith.constant dense<0.000000e+00> : vector<16x512xf32>
    %299 = tpu.matmul %297, %298, %cst_160 {dimension_numbers = #tpu.dot_dimension_numbers<[1], [0], [0], [1], [0, 0, 1, 1], [], []>} : vector<16x128xbf16>, vector<128x512xbf16>, vector<16x512xf32> -> vector<16x512xf32>
    %300 = arith.index_cast %296 : i32 to index
    %c0_161 = arith.constant 0 : index
    %301 = vector.load %arg13[%300, %c0_161] : memref<128x512xf32, #tpu.memory_space<vmem>>, vector<16x512xf32>
    %302 = arith.addf %299, %301 : vector<16x512xf32>
    %303 = vector.extract_strided_slice %302 {offsets = [0, 0], sizes = [16, 128], strides = [1, 1]} : vector<16x512xf32> to vector<16x128xf32>
    %cst_162 = arith.constant 5.000000e-01 : f32
    %304 = vector.broadcast %cst_162 : f32 to vector<16x128xf32>
    %305 = arith.mulf %304, %303 : vector<16x128xf32>
    %306 = math.tanh %305 : vector<16x128xf32>
    %cst_163 = arith.constant 5.000000e-01 : f32
    %307 = vector.broadcast %cst_163 : f32 to vector<16x128xf32>
    %308 = arith.mulf %307, %306 : vector<16x128xf32>
    %cst_164 = arith.constant 5.000000e-01 : f32
    %309 = vector.broadcast %cst_164 : f32 to vector<16x128xf32>
    %310 = arith.addf %308, %309 : vector<16x128xf32>
    %311 = vector.extract_strided_slice %302 {offsets = [0, 128], sizes = [16, 128], strides = [1, 1]} : vector<16x512xf32> to vector<16x128xf32>
    %cst_165 = arith.constant 5.000000e-01 : f32
    %312 = vector.broadcast %cst_165 : f32 to vector<16x128xf32>
    %313 = arith.mulf %312, %311 : vector<16x128xf32>
    %314 = math.tanh %313 : vector<16x128xf32>
    %cst_166 = arith.constant 5.000000e-01 : f32
    %315 = vector.broadcast %cst_166 : f32 to vector<16x128xf32>
    %316 = arith.mulf %315, %314 : vector<16x128xf32>
    %cst_167 = arith.constant 5.000000e-01 : f32
    %317 = vector.broadcast %cst_167 : f32 to vector<16x128xf32>
    %318 = arith.addf %316, %317 : vector<16x128xf32>
    %319 = vector.extract_strided_slice %302 {offsets = [0, 256], sizes = [16, 128], strides = [1, 1]} : vector<16x512xf32> to vector<16x128xf32>
    %320 = math.tanh %319 : vector<16x128xf32>
    %321 = vector.extract_strided_slice %302 {offsets = [0, 384], sizes = [16, 128], strides = [1, 1]} : vector<16x512xf32> to vector<16x128xf32>
    %cst_168 = arith.constant 5.000000e-01 : f32
    %322 = vector.broadcast %cst_168 : f32 to vector<16x128xf32>
    %323 = arith.mulf %322, %321 : vector<16x128xf32>
    %324 = math.tanh %323 : vector<16x128xf32>
    %cst_169 = arith.constant 5.000000e-01 : f32
    %325 = vector.broadcast %cst_169 : f32 to vector<16x128xf32>
    %326 = arith.mulf %325, %324 : vector<16x128xf32>
    %cst_170 = arith.constant 5.000000e-01 : f32
    %327 = vector.broadcast %cst_170 : f32 to vector<16x128xf32>
    %328 = arith.addf %326, %327 : vector<16x128xf32>
    %329 = arith.mulf %318, %294 : vector<16x128xf32>
    %330 = arith.mulf %310, %320 : vector<16x128xf32>
    %331 = arith.addf %329, %330 : vector<16x128xf32>
    %332 = math.tanh %331 : vector<16x128xf32>
    %333 = arith.mulf %328, %332 : vector<16x128xf32>
    %c0_171 = arith.constant 0 : index
    %334 = arith.index_cast %296 : i32 to index
    %c0_172 = arith.constant 0 : index
    %335 = vector.load %arg8[%c0_171, %334, %c0_172] : memref<1x128x128xf32, #tpu.memory_space<vmem>>, vector<1x16x128xf32>
    %336 = vector.shape_cast %335 : vector<1x16x128xf32> to vector<16x128xf32>
    %337 = vector.shape_cast %333 : vector<16x128xf32> to vector<1x16x128xf32>
    tpu.vector_store %arg8[%c0_171, %334, %c0_172], %337 {strides = array<i32>} : memref<1x128x128xf32, #tpu.memory_space<vmem>>, vector<1x16x128xf32>,
    %c0_173 = arith.constant 0 : index
    %c0_174 = arith.constant 0 : index
    %338 = vector.load %arg11[%c0_173, %c0_174] : memref<16x128xf32, #tpu.memory_space<vmem>>, vector<16x128xf32>
    tpu.vector_store %arg11[%c0_173, %c0_174], %333 {strides = array<i32>} : memref<16x128xf32, #tpu.memory_space<vmem>>, vector<16x128xf32>,
    %c0_175 = arith.constant 0 : index
    %c0_176 = arith.constant 0 : index
    %339 = vector.load %arg12[%c0_175, %c0_176] : memref<16x128xf32, #tpu.memory_space<vmem>>, vector<16x128xf32>
    tpu.vector_store %arg12[%c0_175, %c0_176], %331 {strides = array<i32>} : memref<16x128xf32, #tpu.memory_space<vmem>>, vector<16x128xf32>,
    %c7_i32 = arith.constant 7 : i32
    %c0_177 = arith.constant 0 : index
    %c0_178 = arith.constant 0 : index
    %340 = vector.load %arg11[%c0_177, %c0_178] : memref<16x128xf32, #tpu.memory_space<vmem>>, vector<16x128xf32>
    %c0_179 = arith.constant 0 : index
    %c0_180 = arith.constant 0 : index
    %341 = vector.load %arg12[%c0_179, %c0_180] : memref<16x128xf32, #tpu.memory_space<vmem>>, vector<16x128xf32>
    %c16_i32_181 = arith.constant 16 : i32
    %342 = arith.muli %c7_i32, %c16_i32_181 : i32
    %343 = tpu.assume_multiple %342, 16 : i32
    %344 = arith.truncf %340 : vector<16x128xf32> to vector<16x128xbf16>
    %c0_182 = arith.constant 0 : index
    %c0_183 = arith.constant 0 : index
    %345 = vector.load %arg6[%c0_182, %c0_183] : memref<128x512xbf16, #tpu.memory_space<vmem>>, vector<128x512xbf16>
    %cst_184 = arith.constant dense<0.000000e+00> : vector<16x512xf32>
    %346 = tpu.matmul %344, %345, %cst_184 {dimension_numbers = #tpu.dot_dimension_numbers<[1], [0], [0], [1], [0, 0, 1, 1], [], []>} : vector<16x128xbf16>, vector<128x512xbf16>, vector<16x512xf32> -> vector<16x512xf32>
    %347 = arith.index_cast %343 : i32 to index
    %c0_185 = arith.constant 0 : index
    %348 = vector.load %arg13[%347, %c0_185] : memref<128x512xf32, #tpu.memory_space<vmem>>, vector<16x512xf32>
    %349 = arith.addf %346, %348 : vector<16x512xf32>
    %350 = vector.extract_strided_slice %349 {offsets = [0, 0], sizes = [16, 128], strides = [1, 1]} : vector<16x512xf32> to vector<16x128xf32>
    %cst_186 = arith.constant 5.000000e-01 : f32
    %351 = vector.broadcast %cst_186 : f32 to vector<16x128xf32>
    %352 = arith.mulf %351, %350 : vector<16x128xf32>
    %353 = math.tanh %352 : vector<16x128xf32>
    %cst_187 = arith.constant 5.000000e-01 : f32
    %354 = vector.broadcast %cst_187 : f32 to vector<16x128xf32>
    %355 = arith.mulf %354, %353 : vector<16x128xf32>
    %cst_188 = arith.constant 5.000000e-01 : f32
    %356 = vector.broadcast %cst_188 : f32 to vector<16x128xf32>
    %357 = arith.addf %355, %356 : vector<16x128xf32>
    %358 = vector.extract_strided_slice %349 {offsets = [0, 128], sizes = [16, 128], strides = [1, 1]} : vector<16x512xf32> to vector<16x128xf32>
    %cst_189 = arith.constant 5.000000e-01 : f32
    %359 = vector.broadcast %cst_189 : f32 to vector<16x128xf32>
    %360 = arith.mulf %359, %358 : vector<16x128xf32>
    %361 = math.tanh %360 : vector<16x128xf32>
    %cst_190 = arith.constant 5.000000e-01 : f32
    %362 = vector.broadcast %cst_190 : f32 to vector<16x128xf32>
    %363 = arith.mulf %362, %361 : vector<16x128xf32>
    %cst_191 = arith.constant 5.000000e-01 : f32
    %364 = vector.broadcast %cst_191 : f32 to vector<16x128xf32>
    %365 = arith.addf %363, %364 : vector<16x128xf32>
    %366 = vector.extract_strided_slice %349 {offsets = [0, 256], sizes = [16, 128], strides = [1, 1]} : vector<16x512xf32> to vector<16x128xf32>
    %367 = math.tanh %366 : vector<16x128xf32>
    %368 = vector.extract_strided_slice %349 {offsets = [0, 384], sizes = [16, 128], strides = [1, 1]} : vector<16x512xf32> to vector<16x128xf32>
    %cst_192 = arith.constant 5.000000e-01 : f32
    %369 = vector.broadcast %cst_192 : f32 to vector<16x128xf32>
    %370 = arith.mulf %369, %368 : vector<16x128xf32>
    %371 = math.tanh %370 : vector<16x128xf32>
    %cst_193 = arith.constant 5.000000e-01 : f32
    %372 = vector.broadcast %cst_193 : f32 to vector<16x128xf32>
    %373 = arith.mulf %372, %371 : vector<16x128xf32>
    %cst_194 = arith.constant 5.000000e-01 : f32
    %374 = vector.broadcast %cst_194 : f32 to vector<16x128xf32>
    %375 = arith.addf %373, %374 : vector<16x128xf32>
    %376 = arith.mulf %365, %341 : vector<16x128xf32>
    %377 = arith.mulf %357, %367 : vector<16x128xf32>
    %378 = arith.addf %376, %377 : vector<16x128xf32>
    %379 = math.tanh %378 : vector<16x128xf32>
    %380 = arith.mulf %375, %379 : vector<16x128xf32>
    %c0_195 = arith.constant 0 : index
    %381 = arith.index_cast %343 : i32 to index
    %c0_196 = arith.constant 0 : index
    %382 = vector.load %arg8[%c0_195, %381, %c0_196] : memref<1x128x128xf32, #tpu.memory_space<vmem>>, vector<1x16x128xf32>
    %383 = vector.shape_cast %382 : vector<1x16x128xf32> to vector<16x128xf32>
    %384 = vector.shape_cast %380 : vector<16x128xf32> to vector<1x16x128xf32>
    tpu.vector_store %arg8[%c0_195, %381, %c0_196], %384 {strides = array<i32>} : memref<1x128x128xf32, #tpu.memory_space<vmem>>, vector<1x16x128xf32>,
    %c0_197 = arith.constant 0 : index
    %c0_198 = arith.constant 0 : index
    %385 = vector.load %arg11[%c0_197, %c0_198] : memref<16x128xf32, #tpu.memory_space<vmem>>, vector<16x128xf32>
    tpu.vector_store %arg11[%c0_197, %c0_198], %380 {strides = array<i32>} : memref<16x128xf32, #tpu.memory_space<vmem>>, vector<16x128xf32>,
    %c0_199 = arith.constant 0 : index
    %c0_200 = arith.constant 0 : index
    %386 = vector.load %arg12[%c0_199, %c0_200] : memref<16x128xf32, #tpu.memory_space<vmem>>, vector<16x128xf32>
    tpu.vector_store %arg12[%c0_199, %c0_200], %378 {strides = array<i32>} : memref<16x128xf32, #tpu.memory_space<vmem>>, vector<16x128xf32>,
    %c8_i32 = arith.constant 8 : i32
    %c0_i32_201 = arith.constant 0 : i32
    %387 = arith.cmpi eq, %arg1, %c0_i32_201 : i32
    %388 = arith.extui %387 : i1 to i32
    %c0_i32_202 = arith.constant 0 : i32
    %389 = arith.cmpi ne, %388, %c0_i32_202 : i32
    scf.if %389 {
      %c0_203 = arith.constant 0 : index
      %c0_204 = arith.constant 0 : index
      %390 = vector.load %arg11[%c0_203, %c0_204] : memref<16x128xf32, #tpu.memory_space<vmem>>, vector<16x128xf32>
      %c0_205 = arith.constant 0 : index
      %c0_206 = arith.constant 0 : index
      %c0_207 = arith.constant 0 : index
      %391 = vector.load %arg9[%c0_205, %c0_206, %c0_207] : memref<1x16x128xf32, #tpu.memory_space<vmem>>, vector<1x16x128xf32>
      %392 = vector.shape_cast %391 : vector<1x16x128xf32> to vector<16x128xf32>
      %393 = vector.shape_cast %390 : vector<16x128xf32> to vector<1x16x128xf32>
      tpu.vector_store %arg9[%c0_205, %c0_206, %c0_207], %393 {strides = array<i32>} : memref<1x16x128xf32, #tpu.memory_space<vmem>>, vector<1x16x128xf32>,
      %c0_208 = arith.constant 0 : index
      %c0_209 = arith.constant 0 : index
      %394 = vector.load %arg12[%c0_208, %c0_209] : memref<16x128xf32, #tpu.memory_space<vmem>>, vector<16x128xf32>
      %c0_210 = arith.constant 0 : index
      %c0_211 = arith.constant 0 : index
      %c0_212 = arith.constant 0 : index
      %395 = vector.load %arg10[%c0_210, %c0_211, %c0_212] : memref<1x16x128xf32, #tpu.memory_space<vmem>>, vector<1x16x128xf32>
      %396 = vector.shape_cast %395 : vector<1x16x128xf32> to vector<16x128xf32>
      %397 = vector.shape_cast %394 : vector<16x128xf32> to vector<1x16x128xf32>
      tpu.vector_store %arg10[%c0_210, %c0_211, %c0_212], %397 {strides = array<i32>} : memref<1x16x128xf32, #tpu.memory_space<vmem>>, vector<1x16x128xf32>,
    } else {
    }
    return
  }
  func.func @transform_0(%arg0: i32, %arg1: i32) -> (i32, i32, i32) {
    %c0_i32 = arith.constant 0 : i32
    %c0_i32_0 = arith.constant 0 : i32
    return %arg0, %arg1, %c0_i32 : i32, i32, i32
  }
  func.func @transform_1(%arg0: i32, %arg1: i32) -> (i32, i32, i32) {
    %c0_i32 = arith.constant 0 : i32
    %c0_i32_0 = arith.constant 0 : i32
    %c0_i32_1 = arith.constant 0 : i32
    return %arg0, %c0_i32, %c0_i32_0 : i32, i32, i32
  }
  func.func @transform_2(%arg0: i32, %arg1: i32) -> (i32, i32, i32) {
    %c0_i32 = arith.constant 0 : i32
    %c0_i32_0 = arith.constant 0 : i32
    %c0_i32_1 = arith.constant 0 : i32
    return %arg0, %c0_i32, %c0_i32_0 : i32, i32, i32
  }
  func.func @transform_3(%arg0: i32, %arg1: i32) -> (i32, i32) {
    %c0_i32 = arith.constant 0 : i32
    %c0_i32_0 = arith.constant 0 : i32
    %c0_i32_1 = arith.constant 0 : i32
    return %c0_i32, %c0_i32_0 : i32, i32
  }
  func.func @transform_4(%arg0: i32, %arg1: i32) -> (i32, i32) {
    %c0_i32 = arith.constant 0 : i32
    %c0_i32_0 = arith.constant 0 : i32
    %c0_i32_1 = arith.constant 0 : i32
    return %c0_i32, %c0_i32_0 : i32, i32
  }
  func.func @transform_5(%arg0: i32, %arg1: i32) -> (i32, i32) {
    %c0_i32 = arith.constant 0 : i32
    %c0_i32_0 = arith.constant 0 : i32
    %c0_i32_1 = arith.constant 0 : i32
    return %c0_i32, %c0_i32_0 : i32, i32
  }
  func.func @transform_6(%arg0: i32, %arg1: i32) -> (i32, i32, i32) {
    %c0_i32 = arith.constant 0 : i32
    %c0_i32_0 = arith.constant 0 : i32
    return %arg0, %arg1, %c0_i32 : i32, i32, i32
  }
  func.func @transform_7(%arg0: i32, %arg1: i32) -> (i32, i32, i32) {
    %c0_i32 = arith.constant 0 : i32
    %c0_i32_0 = arith.constant 0 : i32
    %c0_i32_1 = arith.constant 0 : i32
    return %arg0, %c0_i32, %c0_i32_0 : i32, i32, i32
  }
  func.func @transform_8(%arg0: i32, %arg1: i32) -> (i32, i32, i32) {
    %c0_i32 = arith.constant 0 : i32
    %c0_i32_0 = arith.constant 0 : i32
    %c0_i32_1 = arith.constant 0 : i32
    return %arg0, %c0_i32, %c0_i32_0 : i32, i32, i32
  }
}

</mosaic_0001>

<llo_original>
// kernel: tpu_custom_call.1
$region0: #{tpu_custom_call.1}
  #allocation0 [shape = 'u32[]', space=smem, size = 0x4, offset = 0x4, fixed_abs, tag = 'smem constant byte address 0x4 - core index']
  #allocation1 [shape = 'u32[144,128]{1,0:T(1,128)}', space=vmem, size = 0x12000, scoped, tag = 'internal scratch']
  #allocation2 [shape = 'f32[16,128]{1,0:T(8,128)}', space=vmem, size = 0x2000, scoped, tag = 'scratch operand']
  #allocation3 [shape = 'f32[16,128]{1,0:T(8,128)}', space=vmem, size = 0x2000, scoped, tag = 'scratch operand']
  #allocation4 [shape = 'f32[128,512]{1,0:T(8,128)}', space=vmem, size = 0x40000, scoped, tag = 'scratch operand']
  %s0 = inlined_call_operand.vmem [shape: bf16[1,128,16], index: 0, kind: input, shape index: {}]
  %s1 = inlined_call_operand.vmem [shape: f32[1,16,128], index: 1, kind: input, shape index: {}]
  %s2 = inlined_call_operand.vmem [shape: f32[1,16,128], index: 2, kind: input, shape index: {}]
  %s3 = inlined_call_operand.vmem [shape: bf16[16,512], index: 3, kind: input, shape index: {}]
  %s4 = inlined_call_operand.hbm [shape: bf16[128,512], index: 4, kind: input, shape index: {}]
  %s5 = inlined_call_operand.vmem [shape: f32[1,512], index: 5, kind: input, shape index: {}]
  %s6 = inlined_call_operand.hbm [shape: f32[1,128,128], index: 6, kind: output, shape index: {0}]
  %s7 = inlined_call_operand.hbm [shape: f32[1,16,128], index: 7, kind: output, shape index: {1}]
  %s8 = inlined_call_operand.hbm [shape: f32[1,16,128], index: 8, kind: output, shape index: {2}]
  %9 = xla_tuple %s6, %s7, %s8
  %s10 = sld [smem:[#allocation0]]
  $region62: #{tpu_custom_call.1} parent=0
    _
  %s12 = ssub.s32 1, %s10
  %s13 = scalar_select 0, %s12, %s10
  $region1: #{tpu_custom_call.1} parent=0
    #allocation5 [shape = 'u8[131072]{0}', space=vmem, size = 0x20000, scoped, tag = 'input window, operand 4, single buffered']
    #allocation6 [shape = 's32[1]{0}', space=sflag, size = 0x4, scoped, tag = 'scoped memory for tpu_custom_call.1']
    #allocation7 [shape = 's32[1]{0}', space=sflag, size = 0x4, scoped, tag = 'scoped memory for tpu_custom_call.1']
    #allocation8 [shape = 'u8[65536]{0}', space=vmem, size = 0x10000, scoped, tag = 'output window, operand 0, single buffered']
    #allocation9 [shape = 'u8[8192]{0}', space=vmem, size = 0x2000, scoped, tag = 'output window, operand 1, single buffered']
    #allocation10 [shape = 's32[1]{0}', space=sflag, size = 0x4, scoped, tag = 'scoped memory for tpu_custom_call.1']
    #allocation11 [shape = 'u8[8192]{0}', space=vmem, size = 0x2000, scoped, tag = 'output window, operand 2, single buffered']
    %14 = vsyncpa [#allocation6], 0
    %15 = vsyncpa [#allocation7], 0
    %16 = vsyncpa [#allocation10], 0
    // Predicated region
    $region2: #{tpu_custom_call.1} parent=1 // pred_check
      _
    $region3: #{tpu_custom_call.1} parent=1 // pred_check_branch
      %18 = sbr.rel (0) target = $region5
    $region4: #{tpu_custom_call.1} parent=1 // pred_region
      _
    $region5: #{tpu_custom_call.1} parent=1 // pred_fallthru
      _
    // Predicated region
    $region6: #{tpu_custom_call.1} parent=1 // pred_check
      _
    $region7: #{tpu_custom_call.1} parent=1 // pred_check_branch
      %20 = sbr.rel (0) target = $region9
    $region8: #{tpu_custom_call.1} parent=1 // pred_region
      _
    $region9: #{tpu_custom_call.1} parent=1 // pred_fallthru
      _
    // Predicated region
    $region10: #{tpu_custom_call.1} parent=1 // pred_check
      _
    $region11: #{tpu_custom_call.1} parent=1 // pred_check_branch
      %22 = sbr.rel (0) target = $region13
    $region12: #{tpu_custom_call.1} parent=1 // pred_region
      _
    $region13: #{tpu_custom_call.1} parent=1 // pred_fallthru
      _
    // Predicated region
    $region14: #{tpu_custom_call.1} parent=1 // pred_check
      _
    $region15: #{tpu_custom_call.1} parent=1 // pred_check_branch
      %24 = sbr.rel (0) target = $region17
    $region16: #{tpu_custom_call.1} parent=1 // pred_region
      _
    $region17: #{tpu_custom_call.1} parent=1 // pred_fallthru
      _
    // Predicated region
    $region18: #{tpu_custom_call.1} parent=1 // pred_check
      _
    $region19: #{tpu_custom_call.1} parent=1 // pred_check_branch
      %26 = sbr.rel (0) target = $region21
    $region20: #{tpu_custom_call.1} parent=1 // pred_region
      %s28 = ssub.s32 4096, 4096
      %29 = vsyncadd [#allocation6], %s28
      %s30 = sshll.u32 [#allocation5], 4
      %s31 = int_to_ptr.vmem [resolvable:$true] %s30
      %36 = dma.hbm_to_vmem [thread:$0]  %s4, 4096, %s31, [#allocation6], 256, 256, 16
    $region21: #{tpu_custom_call.1} parent=1 // pred_fallthru
      _
    // Predicated region
    $region22: #{tpu_custom_call.1} parent=1 // pred_check
      _
    $region23: #{tpu_custom_call.1} parent=1 // pred_check_branch
      %38 = sbr.rel (0) target = $region25
    $region24: #{tpu_custom_call.1} parent=1 // pred_region
      _
    $region25: #{tpu_custom_call.1} parent=1 // pred_fallthru
      _
    // Predicated region
    $region26: #{tpu_custom_call.1} parent=1 // pred_check
      _
    $region27: #{tpu_custom_call.1} parent=1 // pred_check_branch
      %40 = sbr.rel (0) target = $region29
    $region28: #{tpu_custom_call.1} parent=1 // pred_region
      %41 = dma.done [#allocation6], 4096
    $region29: #{tpu_custom_call.1} parent=1 // pred_fallthru
      _
    %p43 = scmp.eq.s32.totalorder 0, 0
    // Predicated region
    $region30: #{tpu_custom_call.1} parent=1 // pred_check
      %p44 = pneg %p43
    $region31: #{tpu_custom_call.1} parent=1 // pred_check_branch
      %46 = sbr.rel (%p44) target = $region33
    $region32: #{tpu_custom_call.1} parent=1 // pred_region
      %v47 = vld [vmem:[%s1] sm:$0xff]
      %v48 = vld [vmem:[%s1 + $0x8] sm:$0xff]
      %49 = vst [vmem:[#allocation2] sm:$0xff] %v47
      %50 = vst [vmem:[#allocation2 + $0x8] sm:$0xff] %v48
      %v51 = vld [vmem:[%s2] sm:$0xff]
      %v52 = vld [vmem:[%s2 + $0x8] sm:$0xff]
      %53 = vst [vmem:[#allocation3] sm:$0xff] %v51
      %54 = vst [vmem:[#allocation3 + $0x8] sm:$0xff] %v52
    $region33: #{tpu_custom_call.1} parent=1 // pred_fallthru
      _
    %v55 = vld [vmem:[%s0] sm:$0xf]
    %v56 = vld [vmem:[%s0 + $0x4] sm:$0xf]
    %v57 = vld [vmem:[%s0 + $0x8] sm:$0xf]
    %v58 = vld [vmem:[%s0 + $0xc] sm:$0xf]
    %v59 = vld [vmem:[%s0 + $0x10] sm:$0xf]
    %v60 = vld [vmem:[%s0 + $0x14] sm:$0xf]
    %v61 = vld [vmem:[%s0 + $0x18] sm:$0xf]
    %v62 = vld [vmem:[%s0 + $0x1c] sm:$0xf]
    %v63 = vld [vmem:[%s0 + $0x20] sm:$0xf]
    %v64 = vld [vmem:[%s0 + $0x24] sm:$0xf]
    %v65 = vld [vmem:[%s0 + $0x28] sm:$0xf]
    %v66 = vld [vmem:[%s0 + $0x2c] sm:$0xf]
    %v67 = vld [vmem:[%s0 + $0x30] sm:$0xf]
    %v68 = vld [vmem:[%s0 + $0x34] sm:$0xf]
    %v69 = vld [vmem:[%s0 + $0x38] sm:$0xf]
    %v70 = vld [vmem:[%s0 + $0x3c] sm:$0xf]
    %v71 = vld [vmem:[%s3] sm:$0xff]
    %v72 = vld [vmem:[%s3 + $0x8] sm:$0xff]
    %v73 = vld [vmem:[%s3 + $0x10] sm:$0xff]
    %v74 = vld [vmem:[%s3 + $0x18] sm:$0xff]
    %v75 = vld [vmem:[%s5] sm:$0xf]
    %v77 = vlaneseq
    %v78 = vshrl.u32 %v77, 7
    %v79 = vsub.s32 0, %v78
    %v80 = vrot.slane %v75, %v79
    %v81 = vlaneseq
    %v82 = vshrl.u32 %v81, 7
    %v83 = vsub.s32 1, %v82
    %v84 = vrot.slane %v75, %v83
    %v85 = vlaneseq
    %v86 = vshrl.u32 %v85, 7
    %v87 = vsub.s32 2, %v86
    %v88 = vrot.slane %v75, %v87
    %v89 = vlaneseq
    %v90 = vshrl.u32 %v89, 7
    %v91 = vsub.s32 3, %v90
    %v92 = vrot.slane %v75, %v91
    %v113 = vunpack.c.l.b16 %v55
    %v114 = vunpack.c.l.b16 %v56
    %v115 = vunpack.c.l.b16 %v57
    %v116 = vunpack.c.l.b16 %v58
    %v117 = vunpack.c.l.b16 %v59
    %v118 = vunpack.c.l.b16 %v60
    %v119 = vunpack.c.l.b16 %v61
    %v120 = vunpack.c.l.b16 %v62
    %v121 = vunpack.c.l.b16 %v63
    %v122 = vunpack.c.l.b16 %v64
    %v123 = vunpack.c.l.b16 %v65
    %v124 = vunpack.c.l.b16 %v66
    %v125 = vunpack.c.l.b16 %v67
    %v126 = vunpack.c.l.b16 %v68
    %v127 = vunpack.c.l.b16 %v69
    %v128 = vunpack.c.l.b16 %v70
    %v129 = vpack.c.b16 %v114, %v113
    %v130 = vpack.c.b16 %v116, %v115
    %v131 = vpack.c.b16 %v118, %v117
    %v132 = vpack.c.b16 %v120, %v119
    %v133 = vpack.c.b16 %v122, %v121
    %v134 = vpack.c.b16 %v124, %v123
    %v135 = vpack.c.b16 %v126, %v125
    %v136 = vpack.c.b16 %v128, %v127
    %v141 = vunpack.c.l.b16 %v71
    %v142 = vunpack.c.h.b16 %v71
    %v143 = vunpack.c.l.b16 %v72
    %v144 = vunpack.c.h.b16 %v72
    %v145 = vunpack.c.l.b16 %v73
    %v146 = vunpack.c.h.b16 %v73
    %v147 = vunpack.c.l.b16 %v74
    %v148 = vunpack.c.h.b16 %v74
    %v149 = vpack.c.b16 %v145, %v141
    %v150 = vpack.c.b16 %v146, %v142
    %v151 = vpack.c.b16 %v147, %v143
    %v152 = vpack.c.b16 %v148, %v144
    %vm157 = vcmask 130048
    %v159 = vsel %vm157, %v129, 0
    %v162 = vsel %vm157, %v130, 0
    %v165 = vsel %vm157, %v131, 0
    %v168 = vsel %vm157, %v132, 0
    %v171 = vsel %vm157, %v133, 0
    %v174 = vsel %vm157, %v134, 0
    %v177 = vsel %vm157, %v135, 0
    %v180 = vsel %vm157, %v136, 0
    %182 = vmatprep.subr.bf16.mxu0 %v150
    %183 = vmatpush1.bf16.msra.mxu0 %v149
    %184 = vmatprep.subr.bf16.mxu0 0
    %185 = vmatpush1.bf16.msra.mxu0 0
    %186 = vmatprep.subr.bf16.mxu0 0
    %187 = vmatpush1.bf16.msra.mxu0 0
    %188 = vmatprep.subr.bf16.mxu0 0
    %189 = vmatpush1.bf16.msra.mxu0 0
    %190 = vmatprep.subr.bf16.mxu0 0
    %191 = vmatpush1.bf16.msra.mxu0 0
    %192 = vmatprep.subr.bf16.mxu0 0
    %193 = vmatpush1.bf16.msra.mxu0 0
    %194 = vmatprep.subr.bf16.mxu0 0
    %195 = vmatpush1.bf16.msra.mxu0 0
    %196 = vmatprep.subr.bf16.mxu0 0
    %197 = vmatpush1.bf16.msra.mxu0 0
    %198 = vmatprep.subr.bf16.mxu0 0
    %199 = vmatpush1.bf16.msra.mxu0 0
    %200 = vmatprep.subr.bf16.mxu0 0
    %201 = vmatpush1.bf16.msra.mxu0 0
    %202 = vmatprep.subr.bf16.mxu0 0
    %203 = vmatpush1.bf16.msra.mxu0 0
    %204 = vmatprep.subr.bf16.mxu0 0
    %205 = vmatpush1.bf16.msra.mxu0 0
    %206 = vmatprep.subr.bf16.mxu0 0
    %207 = vmatpush1.bf16.msra.mxu0 0
    %208 = vmatprep.subr.bf16.mxu0 0
    %209 = vmatpush1.bf16.msra.mxu0 0
    %210 = vmatprep.subr.bf16.mxu0 0
    %211 = vmatpush1.bf16.msra.mxu0 0
    %212 = vmatprep.subr.bf16.mxu0 0
    %213 = vmatpush1.bf16.msra.mxu0 0
    %214 = vmatprep.mubr.bf16.mxu0 0
    %215 = vmatmul.mubr.bf16.gmra.mrb[0].mxu0 %v159
    %v216 = vpop.f32.mrb[0].mxu0
    %v217 = vadd.f32 %v80, %v216
    %v218 = vpop.f32.mrb[0].mxu0
    %v219 = vadd.f32 %v84, %v218
    %v220 = vpop.f32.mrb[0].mxu0
    %v221 = vadd.f32 %v80, %v220
    %v222 = vpop.f32.mrb[0].mxu0
    %v223 = vadd.f32 %v84, %v222
    %224 = vmatprep.mubr.bf16.mxu0 0
    %225 = vmatmul.mubr.bf16.gmra.mrb[0].mxu0 %v162
    %v226 = vpop.f32.mrb[0].mxu0
    %v227 = vadd.f32 %v80, %v226
    %v228 = vpop.f32.mrb[0].mxu0
    %v229 = vadd.f32 %v84, %v228
    %v230 = vpop.f32.mrb[0].mxu0
    %v231 = vadd.f32 %v80, %v230
    %v232 = vpop.f32.mrb[0].mxu0
    %v233 = vadd.f32 %v84, %v232
    %234 = vmatprep.mubr.bf16.mxu0 0
    %235 = vmatmul.mubr.bf16.gmra.mrb[0].mxu0 %v165
    %v236 = vpop.f32.mrb[0].mxu0
    %v237 = vadd.f32 %v80, %v236
    %v238 = vpop.f32.mrb[0].mxu0
    %v239 = vadd.f32 %v84, %v238
    %v240 = vpop.f32.mrb[0].mxu0
    %v241 = vadd.f32 %v80, %v240
    %v242 = vpop.f32.mrb[0].mxu0
    %v243 = vadd.f32 %v84, %v242
    %244 = vmatprep.mubr.bf16.mxu0 0
    %245 = vmatmul.mubr.bf16.gmra.mrb[0].mxu0 %v168
    %v246 = vpop.f32.mrb[0].mxu0
    %v247 = vadd.f32 %v80, %v246
    %v248 = vpop.f32.mrb[0].mxu0
    %v249 = vadd.f32 %v84, %v248
    %v250 = vpop.f32.mrb[0].mxu0
    %v251 = vadd.f32 %v80, %v250
    %v252 = vpop.f32.mrb[0].mxu0
    %v253 = vadd.f32 %v84, %v252
    %254 = vmatprep.mubr.bf16.mxu0 0
    %255 = vmatmul.mubr.bf16.gmra.mrb[0].mxu0 %v171
    %v256 = vpop.f32.mrb[0].mxu0
    %v257 = vadd.f32 %v80, %v256
    %v258 = vpop.f32.mrb[0].mxu0
    %v259 = vadd.f32 %v84, %v258
    %v260 = vpop.f32.mrb[0].mxu0
    %v261 = vadd.f32 %v80, %v260
    %v262 = vpop.f32.mrb[0].mxu0
    %v263 = vadd.f32 %v84, %v262
    %264 = vmatprep.mubr.bf16.mxu0 0
    %265 = vmatmul.mubr.bf16.gmra.mrb[0].mxu0 %v174
    %v266 = vpop.f32.mrb[0].mxu0
    %v267 = vadd.f32 %v80, %v266
    %v268 = vpop.f32.mrb[0].mxu0
    %v269 = vadd.f32 %v84, %v268
    %v270 = vpop.f32.mrb[0].mxu0
    %v271 = vadd.f32 %v80, %v270
    %v272 = vpop.f32.mrb[0].mxu0
    %v273 = vadd.f32 %v84, %v272
    %274 = vmatprep.mubr.bf16.mxu0 0
    %275 = vmatmul.mubr.bf16.gmra.mrb[0].mxu0 %v177
    %v276 = vpop.f32.mrb[0].mxu0
    %v277 = vadd.f32 %v80, %v276
    %v278 = vpop.f32.mrb[0].mxu0
    %v279 = vadd.f32 %v84, %v278
    %v280 = vpop.f32.mrb[0].mxu0
    %v281 = vadd.f32 %v80, %v280
    %v282 = vpop.f32.mrb[0].mxu0
    %v283 = vadd.f32 %v84, %v282
    %284 = vmatprep.mubr.bf16.mxu0 0
    %285 = vmatmul.mubr.bf16.gmra.mrb[0].mxu0 %v180
    %v286 = vpop.f32.mrb[0].mxu0
    %v287 = vadd.f32 %v80, %v286
    %v288 = vpop.f32.mrb[0].mxu0
    %v289 = vadd.f32 %v84, %v288
    %v290 = vpop.f32.mrb[0].mxu0
    %v291 = vadd.f32 %v80, %v290
    %v292 = vpop.f32.mrb[0].mxu0
    %v293 = vadd.f32 %v84, %v292
    %294 = vdwg.mxu0
    %295 = vmatprep.subr.bf16.mxu0 %v152
    %296 = vmatpush1.bf16.msra.mxu0 %v151
    %297 = vmatprep.subr.bf16.mxu0 0
    %298 = vmatpush1.bf16.msra.mxu0 0
    %299 = vmatprep.subr.bf16.mxu0 0
    %300 = vmatpush1.bf16.msra.mxu0 0
    %301 = vmatprep.subr.bf16.mxu0 0
    %302 = vmatpush1.bf16.msra.mxu0 0
    %303 = vmatprep.subr.bf16.mxu0 0
    %304 = vmatpush1.bf16.msra.mxu0 0
    %305 = vmatprep.subr.bf16.mxu0 0
    %306 = vmatpush1.bf16.msra.mxu0 0
    %307 = vmatprep.subr.bf16.mxu0 0
    %308 = vmatpush1.bf16.msra.mxu0 0
    %309 = vmatprep.subr.bf16.mxu0 0
    %310 = vmatpush1.bf16.msra.mxu0 0
    %311 = vmatprep.subr.bf16.mxu0 0
    %312 = vmatpush1.bf16.msra.mxu0 0
    %313 = vmatprep.subr.bf16.mxu0 0
    %314 = vmatpush1.bf16.msra.mxu0 0
    %315 = vmatprep.subr.bf16.mxu0 0
    %316 = vmatpush1.bf16.msra.mxu0 0
    %317 = vmatprep.subr.bf16.mxu0 0
    %318 = vmatpush1.bf16.msra.mxu0 0
    %319 = vmatprep.subr.bf16.mxu0 0
    %320 = vmatpush1.bf16.msra.mxu0 0
    %321 = vmatprep.subr.bf16.mxu0 0
    %322 = vmatpush1.bf16.msra.mxu0 0
    %323 = vmatprep.subr.bf16.mxu0 0
    %324 = vmatpush1.bf16.msra.mxu0 0
    %325 = vmatprep.subr.bf16.mxu0 0
    %326 = vmatpush1.bf16.msra.mxu0 0
    %327 = vmatprep.mubr.bf16.mxu0 0
    %328 = vmatmul.mubr.bf16.gmra.mrb[0].mxu0 %v159
    %v329 = vpop.f32.mrb[0].mxu0
    %v330 = vadd.f32 %v88, %v329
    %v331 = vpop.f32.mrb[0].mxu0
    %v332 = vadd.f32 %v92, %v331
    %v333 = vpop.f32.mrb[0].mxu0
    %v334 = vadd.f32 %v88, %v333
    %v335 = vpop.f32.mrb[0].mxu0
    %v336 = vadd.f32 %v92, %v335
    %337 = vmatprep.mubr.bf16.mxu0 0
    %338 = vmatmul.mubr.bf16.gmra.mrb[0].mxu0 %v162
    %v339 = vpop.f32.mrb[0].mxu0
    %v340 = vadd.f32 %v88, %v339
    %v341 = vpop.f32.mrb[0].mxu0
    %v342 = vadd.f32 %v92, %v341
    %v343 = vpop.f32.mrb[0].mxu0
    %v344 = vadd.f32 %v88, %v343
    %v345 = vpop.f32.mrb[0].mxu0
    %v346 = vadd.f32 %v92, %v345
    %347 = vmatprep.mubr.bf16.mxu0 0
    %348 = vmatmul.mubr.bf16.gmra.mrb[0].mxu0 %v165
    %v349 = vpop.f32.mrb[0].mxu0
    %v350 = vadd.f32 %v88, %v349
    %v351 = vpop.f32.mrb[0].mxu0
    %v352 = vadd.f32 %v92, %v351
    %v353 = vpop.f32.mrb[0].mxu0
    %v354 = vadd.f32 %v88, %v353
    %v355 = vpop.f32.mrb[0].mxu0
    %v356 = vadd.f32 %v92, %v355
    %357 = vmatprep.mubr.bf16.mxu0 0
    %358 = vmatmul.mubr.bf16.gmra.mrb[0].mxu0 %v168
    %v359 = vpop.f32.mrb[0].mxu0
    %v360 = vadd.f32 %v88, %v359
    %v361 = vpop.f32.mrb[0].mxu0
    %v362 = vadd.f32 %v92, %v361
    %v363 = vpop.f32.mrb[0].mxu0
    %v364 = vadd.f32 %v88, %v363
    %v365 = vpop.f32.mrb[0].mxu0
    %v366 = vadd.f32 %v92, %v365
    %367 = vmatprep.mubr.bf16.mxu0 0
    %368 = vmatmul.mubr.bf16.gmra.mrb[0].mxu0 %v171
    %v369 = vpop.f32.mrb[0].mxu0
    %v370 = vadd.f32 %v88, %v369
    %v371 = vpop.f32.mrb[0].mxu0
    %v372 = vadd.f32 %v92, %v371
    %v373 = vpop.f32.mrb[0].mxu0
    %v374 = vadd.f32 %v88, %v373
    %v375 = vpop.f32.mrb[0].mxu0
    %v376 = vadd.f32 %v92, %v375
    %377 = vmatprep.mubr.bf16.mxu0 0
    %378 = vmatmul.mubr.bf16.gmra.mrb[0].mxu0 %v174
    %v379 = vpop.f32.mrb[0].mxu0
    %v380 = vadd.f32 %v88, %v379
    %v381 = vpop.f32.mrb[0].mxu0
    %v382 = vadd.f32 %v92, %v381
    %v383 = vpop.f32.mrb[0].mxu0
    %v384 = vadd.f32 %v88, %v383
    %v385 = vpop.f32.mrb[0].mxu0
    %v386 = vadd.f32 %v92, %v385
    %387 = vmatprep.mubr.bf16.mxu0 0
    %388 = vmatmul.mubr.bf16.gmra.mrb[0].mxu0 %v177
    %v389 = vpop.f32.mrb[0].mxu0
    %v390 = vadd.f32 %v88, %v389
    %v391 = vpop.f32.mrb[0].mxu0
    %v392 = vadd.f32 %v92, %v391
    %v393 = vpop.f32.mrb[0].mxu0
    %v394 = vadd.f32 %v88, %v393
    %v395 = vpop.f32.mrb[0].mxu0
    %v396 = vadd.f32 %v92, %v395
    %397 = vmatprep.mubr.bf16.mxu0 0
    %398 = vmatmul.mubr.bf16.gmra.mrb[0].mxu0 %v180
    %v399 = vpop.f32.mrb[0].mxu0
    %v400 = vadd.f32 %v88, %v399
    %v401 = vpop.f32.mrb[0].mxu0
    %v402 = vadd.f32 %v92, %v401
    %v403 = vpop.f32.mrb[0].mxu0
    %v404 = vadd.f32 %v88, %v403
    %v405 = vpop.f32.mrb[0].mxu0
    %v406 = vadd.f32 %v92, %v405
    %407 = vdwg.mxu0
    %408 = vst [vmem:[#allocation4] sm:$0xff] %v217
    %409 = vst [vmem:[#allocation4 + $0x8] sm:$0xff] %v219
    %410 = vst [vmem:[#allocation4 + $0x10] sm:$0xff] %v330
    %411 = vst [vmem:[#allocation4 + $0x18] sm:$0xff] %v332
    %412 = vst [vmem:[#allocation4 + $0x20] sm:$0xff] %v221
    %413 = vst [vmem:[#allocation4 + $0x28] sm:$0xff] %v223
    %414 = vst [vmem:[#allocation4 + $0x30] sm:$0xff] %v334
    %415 = vst [vmem:[#allocation4 + $0x38] sm:$0xff] %v336
    %416 = vst [vmem:[#allocation4 + $0x40] sm:$0xff] %v227
    %417 = vst [vmem:[#allocation4 + $0x48] sm:$0xff] %v229
    %418 = vst [vmem:[#allocation4 + $0x50] sm:$0xff] %v340
    %419 = vst [vmem:[#allocation4 + $0x58] sm:$0xff] %v342
    %420 = vst [vmem:[#allocation4 + $0x60] sm:$0xff] %v231
    %421 = vst [vmem:[#allocation4 + $0x68] sm:$0xff] %v233
    %422 = vst [vmem:[#allocation4 + $0x70] sm:$0xff] %v344
    %423 = vst [vmem:[#allocation4 + $0x78] sm:$0xff] %v346
    %424 = vst [vmem:[#allocation4 + $0x80] sm:$0xff] %v237
    %425 = vst [vmem:[#allocation4 + $0x88] sm:$0xff] %v239
    %426 = vst [vmem:[#allocation4 + $0x90] sm:$0xff] %v350
    %427 = vst [vmem:[#allocation4 + $0x98] sm:$0xff] %v352
    %428 = vst [vmem:[#allocation4 + $0xa0] sm:$0xff] %v241
    %429 = vst [vmem:[#allocation4 + $0xa8] sm:$0xff] %v243
    %430 = vst [vmem:[#allocation4 + $0xb0] sm:$0xff] %v354
    %431 = vst [vmem:[#allocation4 + $0xb8] sm:$0xff] %v356
    %432 = vst [vmem:[#allocation4 + $0xc0] sm:$0xff] %v247
    %433 = vst [vmem:[#allocation4 + $0xc8] sm:$0xff] %v249
    %434 = vst [vmem:[#allocation4 + $0xd0] sm:$0xff] %v360
    %435 = vst [vmem:[#allocation4 + $0xd8] sm:$0xff] %v362
    %436 = vst [vmem:[#allocation4 + $0xe0] sm:$0xff] %v251
    %437 = vst [vmem:[#allocation4 + $0xe8] sm:$0xff] %v253
    %438 = vst [vmem:[#allocation4 + $0xf0] sm:$0xff] %v364
    %439 = vst [vmem:[#allocation4 + $0xf8] sm:$0xff] %v366
    %440 = vst [vmem:[#allocation4 + $0x100] sm:$0xff] %v257
    %441 = vst [vmem:[#allocation4 + $0x108] sm:$0xff] %v259
    %442 = vst [vmem:[#allocation4 + $0x110] sm:$0xff] %v370
    %443 = vst [vmem:[#allocation4 + $0x118] sm:$0xff] %v372
    %444 = vst [vmem:[#allocation4 + $0x120] sm:$0xff] %v261
    %445 = vst [vmem:[#allocation4 + $0x128] sm:$0xff] %v263
    %446 = vst [vmem:[#allocation4 + $0x130] sm:$0xff] %v374
    %447 = vst [vmem:[#allocation4 + $0x138] sm:$0xff] %v376
    %448 = vst [vmem:[#allocation4 + $0x140] sm:$0xff] %v267
    %449 = vst [vmem:[#allocation4 + $0x148] sm:$0xff] %v269
    %450 = vst [vmem:[#allocation4 + $0x150] sm:$0xff] %v380
    %451 = vst [vmem:[#allocation4 + $0x158] sm:$0xff] %v382
    %452 = vst [vmem:[#allocation4 + $0x160] sm:$0xff] %v271
    %453 = vst [vmem:[#allocation4 + $0x168] sm:$0xff] %v273
    %454 = vst [vmem:[#allocation4 + $0x170] sm:$0xff] %v384
    %455 = vst [vmem:[#allocation4 + $0x178] sm:$0xff] %v386
    %456 = vst [vmem:[#allocation4 + $0x180] sm:$0xff] %v277
    %457 = vst [vmem:[#allocation4 + $0x188] sm:$0xff] %v279
    %458 = vst [vmem:[#allocation4 + $0x190] sm:$0xff] %v390
    %459 = vst [vmem:[#allocation4 + $0x198] sm:$0xff] %v392
    %460 = vst [vmem:[#allocation4 + $0x1a0] sm:$0xff] %v281
    %461 = vst [vmem:[#allocation4 + $0x1a8] sm:$0xff] %v283
    %462 = vst [vmem:[#allocation4 + $0x1b0] sm:$0xff] %v394
    %463 = vst [vmem:[#allocation4 + $0x1b8] sm:$0xff] %v396
    %464 = vst [vmem:[#allocation4 + $0x1c0] sm:$0xff] %v287
    %465 = vst [vmem:[#allocation4 + $0x1c8] sm:$0xff] %v289
    %466 = vst [vmem:[#allocation4 + $0x1d0] sm:$0xff] %v400
    %467 = vst [vmem:[#allocation4 + $0x1d8] sm:$0xff] %v402
    %468 = vst [vmem:[#allocation4 + $0x1e0] sm:$0xff] %v291
    %469 = vst [vmem:[#allocation4 + $0x1e8] sm:$0xff] %v293
    %470 = vst [vmem:[#allocation4 + $0x1f0] sm:$0xff] %v404
    %471 = vst [vmem:[#allocation4 + $0x1f8] sm:$0xff] %v406
    %v472 = vld [vmem:[#allocation2] sm:$0xff]
    %v473 = vld [vmem:[#allocation2 + $0x8] sm:$0xff]
    %v474 = vld [vmem:[#allocation3] sm:$0xff]
    %v475 = vld [vmem:[#allocation3 + $0x8] sm:$0xff]
    %v476 = vpack.c.bf16 %v473, %v472
    %v477 = vld [vmem:[#allocation5] sm:$0xff]
    %v478 = vld [vmem:[#allocation5 + $0x8] sm:$0xff]
    %v479 = vld [vmem:[#allocation5 + $0x10] sm:$0xff]
    %v480 = vld [vmem:[#allocation5 + $0x18] sm:$0xff]
    %v481 = vld [vmem:[#allocation5 + $0x20] sm:$0xff]
    %v482 = vld [vmem:[#allocation5 + $0x28] sm:$0xff]
    %v483 = vld [vmem:[#allocation5 + $0x30] sm:$0xff]
    %v484 = vld [vmem:[#allocation5 + $0x38] sm:$0xff]
    %v485 = vld [vmem:[#allocation5 + $0x40] sm:$0xff]
    %v486 = vld [vmem:[#allocation5 + $0x48] sm:$0xff]
    %v487 = vld [vmem:[#allocation5 + $0x50] sm:$0xff]
    %v488 = vld [vmem:[#allocation5 + $0x58] sm:$0xff]
    %v489 = vld [vmem:[#allocation5 + $0x60] sm:$0xff]
    %v490 = vld [vmem:[#allocation5 + $0x68] sm:$0xff]
    %v491 = vld [vmem:[#allocation5 + $0x70] sm:$0xff]
    %v492 = vld [vmem:[#allocation5 + $0x78] sm:$0xff]
    %v493 = vld [vmem:[#allocation5 + $0x80] sm:$0xff]
    %v494 = vld [vmem:[#allocation5 + $0x88] sm:$0xff]
    %v495 = vld [vmem:[#allocation5 + $0x90] sm:$0xff]
    %v496 = vld [vmem:[#allocation5 + $0x98] sm:$0xff]
    %v497 = vld [vmem:[#allocation5 + $0xa0] sm:$0xff]
    %v498 = vld [vmem:[#allocation5 + $0xa8] sm:$0xff]
    %v499 = vld [vmem:[#allocation5 + $0xb0] sm:$0xff]
    %v500 = vld [vmem:[#allocation5 + $0xb8] sm:$0xff]
    %v501 = vld [vmem:[#allocation5 + $0xc0] sm:$0xff]
    %v502 = vld [vmem:[#allocation5 + $0xc8] sm:$0xff]
    %v503 = vld [vmem:[#allocation5 + $0xd0] sm:$0xff]
    %v504 = vld [vmem:[#allocation5 + $0xd8] sm:$0xff]
    %v505 = vld [vmem:[#allocation5 + $0xe0] sm:$0xff]
    %v506 = vld [vmem:[#allocation5 + $0xe8] sm:$0xff]
    %v507 = vld [vmem:[#allocation5 + $0xf0] sm:$0xff]
    %v508 = vld [vmem:[#allocation5 + $0xf8] sm:$0xff]
    %s509 = smul.u32 0, 4
    %s510 = smul.addr %s509, 8
    %s511 = scalar_lea.vmem [#allocation4], %s510
    %v512 = vld [vmem:[%s511] sm:$0xff]
    %v513 = vld [vmem:[%s511 + $0x8] sm:$0xff]
    %v514 = vld [vmem:[%s511 + $0x10] sm:$0xff]
    %v515 = vld [vmem:[%s511 + $0x18] sm:$0xff]
    %v516 = vld [vmem:[%s511 + $0x20] sm:$0xff]
    %v517 = vld [vmem:[%s511 + $0x28] sm:$0xff]
    %v518 = vld [vmem:[%s511 + $0x30] sm:$0xff]
    %v519 = vld [vmem:[%s511 + $0x38] sm:$0xff]
    %v552 = vunpack.c.l.b16 %v477
    %v553 = vunpack.c.h.b16 %v477
    %v554 = vunpack.c.l.b16 %v478
    %v555 = vunpack.c.h.b16 %v478
    %v556 = vunpack.c.l.b16 %v479
    %v557 = vunpack.c.h.b16 %v479
    %v558 = vunpack.c.l.b16 %v480
    %v559 = vunpack.c.h.b16 %v480
    %v560 = vunpack.c.l.b16 %v481
    %v561 = vunpack.c.h.b16 %v481
    %v562 = vunpack.c.l.b16 %v482
    %v563 = vunpack.c.h.b16 %v482
    %v564 = vunpack.c.l.b16 %v483
    %v565 = vunpack.c.h.b16 %v483
    %v566 = vunpack.c.l.b16 %v484
    %v567 = vunpack.c.h.b16 %v484
    %v568 = vunpack.c.l.b16 %v485
    %v569 = vunpack.c.h.b16 %v485
    %v570 = vunpack.c.l.b16 %v486
    %v571 = vunpack.c.h.b16 %v486
    %v572 = vunpack.c.l.b16 %v487
    %v573 = vunpack.c.h.b16 %v487
    %v574 = vunpack.c.l.b16 %v488
    %v575 = vunpack.c.h.b16 %v488
    %v576 = vunpack.c.l.b16 %v489
    %v577 = vunpack.c.h.b16 %v489
    %v578 = vunpack.c.l.b16 %v490
    %v579 = vunpack.c.h.b16 %v490
    %v580 = vunpack.c.l.b16 %v491
    %v581 = vunpack.c.h.b16 %v491
    %v582 = vunpack.c.l.b16 %v492
    %v583 = vunpack.c.h.b16 %v492
    %v584 = vunpack.c.l.b16 %v493
    %v585 = vunpack.c.h.b16 %v493
    %v586 = vunpack.c.l.b16 %v494
    %v587 = vunpack.c.h.b16 %v494
    %v588 = vunpack.c.l.b16 %v495
    %v589 = vunpack.c.h.b16 %v495
    %v590 = vunpack.c.l.b16 %v496
    %v591 = vunpack.c.h.b16 %v496
    %v592 = vunpack.c.l.b16 %v497
    %v593 = vunpack.c.h.b16 %v497
    %v594 = vunpack.c.l.b16 %v498
    %v595 = vunpack.c.h.b16 %v498
    %v596 = vunpack.c.l.b16 %v499
    %v597 = vunpack.c.h.b16 %v499
    %v598 = vunpack.c.l.b16 %v500
    %v599 = vunpack.c.h.b16 %v500
    %v600 = vunpack.c.l.b16 %v501
    %v601 = vunpack.c.h.b16 %v501
    %v602 = vunpack.c.l.b16 %v502
    %v603 = vunpack.c.h.b16 %v502
    %v604 = vunpack.c.l.b16 %v503
    %v605 = vunpack.c.h.b16 %v503
    %v606 = vunpack.c.l.b16 %v504
    %v607 = vunpack.c.h.b16 %v504
    %v608 = vunpack.c.l.b16 %v505
    %v609 = vunpack.c.h.b16 %v505
    %v610 = vunpack.c.l.b16 %v506
    %v611 = vunpack.c.h.b16 %v506
    %v612 = vunpack.c.l.b16 %v507
    %v613 = vunpack.c.h.b16 %v507
    %v614 = vunpack.c.l.b16 %v508
    %v615 = vunpack.c.h.b16 %v508
    %v616 = vpack.c.b16 %v556, %v552
    %v617 = vpack.c.b16 %v557, %v553
    %v618 = vpack.c.b16 %v558, %v554
    %v619 = vpack.c.b16 %v559, %v555
    %v620 = vpack.c.b16 %v564, %v560
    %v621 = vpack.c.b16 %v565, %v561
    %v622 = vpack.c.b16 %v566, %v562
    %v623 = vpack.c.b16 %v567, %v563
    %v624 = vpack.c.b16 %v572, %v568
    %v625 = vpack.c.b16 %v573, %v569
    %v626 = vpack.c.b16 %v574, %v570
    %v627 = vpack.c.b16 %v575, %v571
    %v628 = vpack.c.b16 %v580, %v576
    %v629 = vpack.c.b16 %v581, %v577
    %v630 = vpack.c.b16 %v582, %v578
    %v631 = vpack.c.b16 %v583, %v579
    %v632 = vpack.c.b16 %v588, %v584
    %v633 = vpack.c.b16 %v589, %v585
    %v634 = vpack.c.b16 %v590, %v586
    %v635 = vpack.c.b16 %v591, %v587
    %v636 = vpack.c.b16 %v596, %v592
    %v637 = vpack.c.b16 %v597, %v593
    %v638 = vpack.c.b16 %v598, %v594
    %v639 = vpack.c.b16 %v599, %v595
    %v640 = vpack.c.b16 %v604, %v600
    %v641 = vpack.c.b16 %v605, %v601
    %v642 = vpack.c.b16 %v606, %v602
    %v643 = vpack.c.b16 %v607, %v603
    %v644 = vpack.c.b16 %v612, %v608
    %v645 = vpack.c.b16 %v613, %v609
    %v646 = vpack.c.b16 %v614, %v610
    %v647 = vpack.c.b16 %v615, %v611
    %680 = vmatprep.subr.bf16.mxu0 %v617
    %681 = vmatpush1.bf16.msra.mxu0 %v616
    %682 = vmatprep.subr.bf16.mxu0 %v621
    %683 = vmatpush1.bf16.msra.mxu0 %v620
    %684 = vmatprep.subr.bf16.mxu0 %v625
    %685 = vmatpush1.bf16.msra.mxu0 %v624
    %686 = vmatprep.subr.bf16.mxu0 %v629
    %687 = vmatpush1.bf16.msra.mxu0 %v628
    %688 = vmatprep.subr.bf16.mxu0 %v633
    %689 = vmatpush1.bf16.msra.mxu0 %v632
    %690 = vmatprep.subr.bf16.mxu0 %v637
    %691 = vmatpush1.bf16.msra.mxu0 %v636
    %692 = vmatprep.subr.bf16.mxu0 %v641
    %693 = vmatpush1.bf16.msra.mxu0 %v640
    %694 = vmatprep.subr.bf16.mxu0 %v645
    %695 = vmatpush1.bf16.msra.mxu0 %v644
    %696 = vmatprep.subr.bf16.mxu0 0
    %697 = vmatpush1.bf16.msra.mxu0 0
    %698 = vmatprep.subr.bf16.mxu0 0
    %699 = vmatpush1.bf16.msra.mxu0 0
    %700 = vmatprep.subr.bf16.mxu0 0
    %701 = vmatpush1.bf16.msra.mxu0 0
    %702 = vmatprep.subr.bf16.mxu0 0
    %703 = vmatpush1.bf16.msra.mxu0 0
    %704 = vmatprep.subr.bf16.mxu0 0
    %705 = vmatpush1.bf16.msra.mxu0 0
    %706 = vmatprep.subr.bf16.mxu0 0
    %707 = vmatpush1.bf16.msra.mxu0 0
    %708 = vmatprep.subr.bf16.mxu0 0
    %709 = vmatpush1.bf16.msra.mxu0 0
    %710 = vmatprep.subr.bf16.mxu0 0
    %711 = vmatpush1.bf16.msra.mxu0 0
    %712 = vmatprep.mubr.bf16.mxu0 0
    %713 = vmatmul.mubr.bf16.gmra.mrb[0].mxu0 %v476
    %v714 = vpop.f32.mrb[0].mxu0
    %v715 = vadd.f32 %v512, %v714
    %v716 = vpop.f32.mrb[0].mxu0
    %v717 = vadd.f32 %v513, %v716
    %v718 = vpop.f32.mrb[0].mxu0
    %v719 = vadd.f32 %v516, %v718
    %v720 = vpop.f32.mrb[0].mxu0
    %v721 = vadd.f32 %v517, %v720
    %722 = vdwg.mxu0
    %723 = vmatprep.subr.bf16.mxu0 %v619
    %724 = vmatpush1.bf16.msra.mxu0 %v618
    %725 = vmatprep.subr.bf16.mxu0 %v623
    %726 = vmatpush1.bf16.msra.mxu0 %v622
    %727 = vmatprep.subr.bf16.mxu0 %v627
    %728 = vmatpush1.bf16.msra.mxu0 %v626
    %729 = vmatprep.subr.bf16.mxu0 %v631
    %730 = vmatpush1.bf16.msra.mxu0 %v630
    %731 = vmatprep.subr.bf16.mxu0 %v635
    %732 = vmatpush1.bf16.msra.mxu0 %v634
    %733 = vmatprep.subr.bf16.mxu0 %v639
    %734 = vmatpush1.bf16.msra.mxu0 %v638
    %735 = vmatprep.subr.bf16.mxu0 %v643
    %736 = vmatpush1.bf16.msra.mxu0 %v642
    %737 = vmatprep.subr.bf16.mxu0 %v647
    %738 = vmatpush1.bf16.msra.mxu0 %v646
    %739 = vmatprep.subr.bf16.mxu0 0
    %740 = vmatpush1.bf16.msra.mxu0 0
    %741 = vmatprep.subr.bf16.mxu0 0
    %742 = vmatpush1.bf16.msra.mxu0 0
    %743 = vmatprep.subr.bf16.mxu0 0
    %744 = vmatpush1.bf16.msra.mxu0 0
    %745 = vmatprep.subr.bf16.mxu0 0
    %746 = vmatpush1.bf16.msra.mxu0 0
    %747 = vmatprep.subr.bf16.mxu0 0
    %748 = vmatpush1.bf16.msra.mxu0 0
    %749 = vmatprep.subr.bf16.mxu0 0
    %750 = vmatpush1.bf16.msra.mxu0 0
    %751 = vmatprep.subr.bf16.mxu0 0
    %752 = vmatpush1.bf16.msra.mxu0 0
    %753 = vmatprep.subr.bf16.mxu0 0
    %754 = vmatpush1.bf16.msra.mxu0 0
    %755 = vmatprep.mubr.bf16.mxu0 0
    %756 = vmatmul.mubr.bf16.gmra.mrb[0].mxu0 %v476
    %v757 = vpop.f32.mrb[0].mxu0
    %v758 = vadd.f32 %v514, %v757
    %v759 = vpop.f32.mrb[0].mxu0
    %v760 = vadd.f32 %v515, %v759
    %v761 = vpop.f32.mrb[0].mxu0
    %v762 = vadd.f32 %v518, %v761
    %v763 = vpop.f32.mrb[0].mxu0
    %v764 = vadd.f32 %v519, %v763
    %765 = vdwg.mxu0
    %v766 = vmul.f32 %v715, 0.5
    %v767 = vmul.f32 %v719, 0.5
    %v768 = vtanh.pop %v766
    %v769 = vtanh.pop %v767
    %v770 = vmul.f32 %v768, 0.5
    %v771 = vmul.f32 %v769, 0.5
    %v772 = vadd.f32 %v770, 0.5
    %v773 = vadd.f32 %v771, 0.5
    %v774 = vmul.f32 %v717, 0.5
    %v775 = vmul.f32 %v721, 0.5
    %v776 = vtanh.pop %v774
    %v777 = vtanh.pop %v775
    %v778 = vmul.f32 %v776, 0.5
    %v779 = vmul.f32 %v777, 0.5
    %v780 = vadd.f32 %v778, 0.5
    %v781 = vadd.f32 %v779, 0.5
    %v782 = vtanh.pop %v758
    %v783 = vtanh.pop %v762
    %v784 = vmul.f32 %v760, 0.5
    %v785 = vmul.f32 %v764, 0.5
    %v786 = vtanh.pop %v784
    %v787 = vtanh.pop %v785
    %v788 = vmul.f32 %v786, 0.5
    %v789 = vmul.f32 %v787, 0.5
    %v790 = vadd.f32 %v788, 0.5
    %v791 = vadd.f32 %v789, 0.5
    %v792 = vmul.f32 %v780, %v474
    %v793 = vmul.f32 %v781, %v475
    %v794 = vmul.f32 %v772, %v782
    %v795 = vmul.f32 %v773, %v783
    %v796 = vadd.f32 %v792, %v794
    %v797 = vadd.f32 %v793, %v795
    %v798 = vtanh.pop %v796
    %v799 = vtanh.pop %v797
    %v800 = vmul.f32 %v790, %v798
    %v801 = vmul.f32 %v791, %v799
    %802 = vst [vmem:[#allocation8] sm:$0xff] %v800
    %803 = vst [vmem:[#allocation8 + $0x8] sm:$0xff] %v801
    %804 = vst [vmem:[#allocation2] sm:$0xff] %v800
    %805 = vst [vmem:[#allocation2 + $0x8] sm:$0xff] %v801
    %806 = vst [vmem:[#allocation3] sm:$0xff] %v796
    %807 = vst [vmem:[#allocation3 + $0x8] sm:$0xff] %v797
    %v808 = vld [vmem:[#allocation2] sm:$0xff]
    %v809 = vld [vmem:[#allocation2 + $0x8] sm:$0xff]
    %v810 = vld [vmem:[#allocation3] sm:$0xff]
    %v811 = vld [vmem:[#allocation3 + $0x8] sm:$0xff]
    %v812 = vpack.c.bf16 %v809, %v808
    %v813 = vld [vmem:[#allocation5] sm:$0xff]
    %v814 = vld [vmem:[#allocation5 + $0x8] sm:$0xff]
    %v815 = vld [vmem:[#allocation5 + $0x10] sm:$0xff]
    %v816 = vld [vmem:[#allocation5 + $0x18] sm:$0xff]
    %v817 = vld [vmem:[#allocation5 + $0x20] sm:$0xff]
    %v818 = vld [vmem:[#allocation5 + $0x28] sm:$0xff]
    %v819 = vld [vmem:[#allocation5 + $0x30] sm:$0xff]
    %v820 = vld [vmem:[#allocation5 + $0x38] sm:$0xff]
    %v821 = vld [vmem:[#allocation5 + $0x40] sm:$0xff]
    %v822 = vld [vmem:[#allocation5 + $0x48] sm:$0xff]
    %v823 = vld [vmem:[#allocation5 + $0x50] sm:$0xff]
    %v824 = vld [vmem:[#allocation5 + $0x58] sm:$0xff]
    %v825 = vld [vmem:[#allocation5 + $0x60] sm:$0xff]
    %v826 = vld [vmem:[#allocation5 + $0x68] sm:$0xff]
    %v827 = vld [vmem:[#allocation5 + $0x70] sm:$0xff]
    %v828 = vld [vmem:[#allocation5 + $0x78] sm:$0xff]
    %v829 = vld [vmem:[#allocation5 + $0x80] sm:$0xff]
    %v830 = vld [vmem:[#allocation5 + $0x88] sm:$0xff]
    %v831 = vld [vmem:[#allocation5 + $0x90] sm:$0xff]
    %v832 = vld [vmem:[#allocation5 + $0x98] sm:$0xff]
    %v833 = vld [vmem:[#allocation5 + $0xa0] sm:$0xff]
    %v834 = vld [vmem:[#allocation5 + $0xa8] sm:$0xff]
    %v835 = vld [vmem:[#allocation5 + $0xb0] sm:$0xff]
    %v836 = vld [vmem:[#allocation5 + $0xb8] sm:$0xff]
    %v837 = vld [vmem:[#allocation5 + $0xc0] sm:$0xff]
    %v838 = vld [vmem:[#allocation5 + $0xc8] sm:$0xff]
    %v839 = vld [vmem:[#allocation5 + $0xd0] sm:$0xff]
    %v840 = vld [vmem:[#allocation5 + $0xd8] sm:$0xff]
    %v841 = vld [vmem:[#allocation5 + $0xe0] sm:$0xff]
    %v842 = vld [vmem:[#allocation5 + $0xe8] sm:$0xff]
    %v843 = vld [vmem:[#allocation5 + $0xf0] sm:$0xff]
    %v844 = vld [vmem:[#allocation5 + $0xf8] sm:$0xff]
    %s845 = smul.u32 2, 4
    %s846 = smul.addr %s845, 8
    %s847 = scalar_lea.vmem [#allocation4], %s846
    %v848 = vld [vmem:[%s847] sm:$0xff]
    %v849 = vld [vmem:[%s847 + $0x8] sm:$0xff]
    %v850 = vld [vmem:[%s847 + $0x10] sm:$0xff]
    %v851 = vld [vmem:[%s847 + $0x18] sm:$0xff]
    %v852 = vld [vmem:[%s847 + $0x20] sm:$0xff]
    %v853 = vld [vmem:[%s847 + $0x28] sm:$0xff]
    %v854 = vld [vmem:[%s847 + $0x30] sm:$0xff]
    %v855 = vld [vmem:[%s847 + $0x38] sm:$0xff]
    %v888 = vunpack.c.l.b16 %v813
    %v889 = vunpack.c.h.b16 %v813
    %v890 = vunpack.c.l.b16 %v814
    %v891 = vunpack.c.h.b16 %v814
    %v892 = vunpack.c.l.b16 %v815
    %v893 = vunpack.c.h.b16 %v815
    %v894 = vunpack.c.l.b16 %v816
    %v895 = vunpack.c.h.b16 %v816
    %v896 = vunpack.c.l.b16 %v817
    %v897 = vunpack.c.h.b16 %v817
    %v898 = vunpack.c.l.b16 %v818
    %v899 = vunpack.c.h.b16 %v818
    %v900 = vunpack.c.l.b16 %v819
    %v901 = vunpack.c.h.b16 %v819
    %v902 = vunpack.c.l.b16 %v820
    %v903 = vunpack.c.h.b16 %v820
    %v904 = vunpack.c.l.b16 %v821
    %v905 = vunpack.c.h.b16 %v821
    %v906 = vunpack.c.l.b16 %v822
    %v907 = vunpack.c.h.b16 %v822
    %v908 = vunpack.c.l.b16 %v823
    %v909 = vunpack.c.h.b16 %v823
    %v910 = vunpack.c.l.b16 %v824
    %v911 = vunpack.c.h.b16 %v824
    %v912 = vunpack.c.l.b16 %v825
    %v913 = vunpack.c.h.b16 %v825
    %v914 = vunpack.c.l.b16 %v826
    %v915 = vunpack.c.h.b16 %v826
    %v916 = vunpack.c.l.b16 %v827
    %v917 = vunpack.c.h.b16 %v827
    %v918 = vunpack.c.l.b16 %v828
    %v919 = vunpack.c.h.b16 %v828
    %v920 = vunpack.c.l.b16 %v829
    %v921 = vunpack.c.h.b16 %v829
    %v922 = vunpack.c.l.b16 %v830
    %v923 = vunpack.c.h.b16 %v830
    %v924 = vunpack.c.l.b16 %v831
    %v925 = vunpack.c.h.b16 %v831
    %v926 = vunpack.c.l.b16 %v832
    %v927 = vunpack.c.h.b16 %v832
    %v928 = vunpack.c.l.b16 %v833
    %v929 = vunpack.c.h.b16 %v833
    %v930 = vunpack.c.l.b16 %v834
    %v931 = vunpack.c.h.b16 %v834
    %v932 = vunpack.c.l.b16 %v835
    %v933 = vunpack.c.h.b16 %v835
    %v934 = vunpack.c.l.b16 %v836
    %v935 = vunpack.c.h.b16 %v836
    %v936 = vunpack.c.l.b16 %v837
    %v937 = vunpack.c.h.b16 %v837
    %v938 = vunpack.c.l.b16 %v838
    %v939 = vunpack.c.h.b16 %v838
    %v940 = vunpack.c.l.b16 %v839
    %v941 = vunpack.c.h.b16 %v839
    %v942 = vunpack.c.l.b16 %v840
    %v943 = vunpack.c.h.b16 %v840
    %v944 = vunpack.c.l.b16 %v841
    %v945 = vunpack.c.h.b16 %v841
    %v946 = vunpack.c.l.b16 %v842
    %v947 = vunpack.c.h.b16 %v842
    %v948 = vunpack.c.l.b16 %v843
    %v949 = vunpack.c.h.b16 %v843
    %v950 = vunpack.c.l.b16 %v844
    %v951 = vunpack.c.h.b16 %v844
    %v952 = vpack.c.b16 %v892, %v888
    %v953 = vpack.c.b16 %v893, %v889
    %v954 = vpack.c.b16 %v894, %v890
    %v955 = vpack.c.b16 %v895, %v891
    %v956 = vpack.c.b16 %v900, %v896
    %v957 = vpack.c.b16 %v901, %v897
    %v958 = vpack.c.b16 %v902, %v898
    %v959 = vpack.c.b16 %v903, %v899
    %v960 = vpack.c.b16 %v908, %v904
    %v961 = vpack.c.b16 %v909, %v905
    %v962 = vpack.c.b16 %v910, %v906
    %v963 = vpack.c.b16 %v911, %v907
    %v964 = vpack.c.b16 %v916, %v912
    %v965 = vpack.c.b16 %v917, %v913
    %v966 = vpack.c.b16 %v918, %v914
    %v967 = vpack.c.b16 %v919, %v915
    %v968 = vpack.c.b16 %v924, %v920
    %v969 = vpack.c.b16 %v925, %v921
    %v970 = vpack.c.b16 %v926, %v922
    %v971 = vpack.c.b16 %v927, %v923
    %v972 = vpack.c.b16 %v932, %v928
    %v973 = vpack.c.b16 %v933, %v929
    %v974 = vpack.c.b16 %v934, %v930
    %v975 = vpack.c.b16 %v935, %v931
    %v976 = vpack.c.b16 %v940, %v936
    %v977 = vpack.c.b16 %v941, %v937
    %v978 = vpack.c.b16 %v942, %v938
    %v979 = vpack.c.b16 %v943, %v939
    %v980 = vpack.c.b16 %v948, %v944
    %v981 = vpack.c.b16 %v949, %v945
    %v982 = vpack.c.b16 %v950, %v946
    %v983 = vpack.c.b16 %v951, %v947
    %1016 = vmatprep.subr.bf16.mxu0 %v953
    %1017 = vmatpush1.bf16.msra.mxu0 %v952
    %1018 = vmatprep.subr.bf16.mxu0 %v957
    %1019 = vmatpush1.bf16.msra.mxu0 %v956
    %1020 = vmatprep.subr.bf16.mxu0 %v961
    %1021 = vmatpush1.bf16.msra.mxu0 %v960
    %1022 = vmatprep.subr.bf16.mxu0 %v965
    %1023 = vmatpush1.bf16.msra.mxu0 %v964
    %1024 = vmatprep.subr.bf16.mxu0 %v969
    %1025 = vmatpush1.bf16.msra.mxu0 %v968
    %1026 = vmatprep.subr.bf16.mxu0 %v973
    %1027 = vmatpush1.bf16.msra.mxu0 %v972
    %1028 = vmatprep.subr.bf16.mxu0 %v977
    %1029 = vmatpush1.bf16.msra.mxu0 %v976
    %1030 = vmatprep.subr.bf16.mxu0 %v981
    %1031 = vmatpush1.bf16.msra.mxu0 %v980
    %1032 = vmatprep.subr.bf16.mxu0 0
    %1033 = vmatpush1.bf16.msra.mxu0 0
    %1034 = vmatprep.subr.bf16.mxu0 0
    %1035 = vmatpush1.bf16.msra.mxu0 0
    %1036 = vmatprep.subr.bf16.mxu0 0
    %1037 = vmatpush1.bf16.msra.mxu0 0
    %1038 = vmatprep.subr.bf16.mxu0 0
    %1039 = vmatpush1.bf16.msra.mxu0 0
    %1040 = vmatprep.subr.bf16.mxu0 0
    %1041 = vmatpush1.bf16.msra.mxu0 0
    %1042 = vmatprep.subr.bf16.mxu0 0
    %1043 = vmatpush1.bf16.msra.mxu0 0
    %1044 = vmatprep.subr.bf16.mxu0 0
    %1045 = vmatpush1.bf16.msra.mxu0 0
    %1046 = vmatprep.subr.bf16.mxu0 0
    %1047 = vmatpush1.bf16.msra.mxu0 0
    %1048 = vmatprep.mubr.bf16.mxu0 0
    %1049 = vmatmul.mubr.bf16.gmra.mrb[0].mxu0 %v812
    %v1050 = vpop.f32.mrb[0].mxu0
    %v1051 = vadd.f32 %v848, %v1050
    %v1052 = vpop.f32.mrb[0].mxu0
    %v1053 = vadd.f32 %v849, %v1052
    %v1054 = vpop.f32.mrb[0].mxu0
    %v1055 = vadd.f32 %v852, %v1054
    %v1056 = vpop.f32.mrb[0].mxu0
    %v1057 = vadd.f32 %v853, %v1056
    %1058 = vdwg.mxu0
    %1059 = vmatprep.subr.bf16.mxu0 %v955
    %1060 = vmatpush1.bf16.msra.mxu0 %v954
    %1061 = vmatprep.subr.bf16.mxu0 %v959
    %1062 = vmatpush1.bf16.msra.mxu0 %v958
    %1063 = vmatprep.subr.bf16.mxu0 %v963
    %1064 = vmatpush1.bf16.msra.mxu0 %v962
    %1065 = vmatprep.subr.bf16.mxu0 %v967
    %1066 = vmatpush1.bf16.msra.mxu0 %v966
    %1067 = vmatprep.subr.bf16.mxu0 %v971
    %1068 = vmatpush1.bf16.msra.mxu0 %v970
    %1069 = vmatprep.subr.bf16.mxu0 %v975
    %1070 = vmatpush1.bf16.msra.mxu0 %v974
    %1071 = vmatprep.subr.bf16.mxu0 %v979
    %1072 = vmatpush1.bf16.msra.mxu0 %v978
    %1073 = vmatprep.subr.bf16.mxu0 %v983
    %1074 = vmatpush1.bf16.msra.mxu0 %v982
    %1075 = vmatprep.subr.bf16.mxu0 0
    %1076 = vmatpush1.bf16.msra.mxu0 0
    %1077 = vmatprep.subr.bf16.mxu0 0
    %1078 = vmatpush1.bf16.msra.mxu0 0
    %1079 = vmatprep.subr.bf16.mxu0 0
    %1080 = vmatpush1.bf16.msra.mxu0 0
    %1081 = vmatprep.subr.bf16.mxu0 0
    %1082 = vmatpush1.bf16.msra.mxu0 0
    %1083 = vmatprep.subr.bf16.mxu0 0
    %1084 = vmatpush1.bf16.msra.mxu0 0
    %1085 = vmatprep.subr.bf16.mxu0 0
    %1086 = vmatpush1.bf16.msra.mxu0 0
    %1087 = vmatprep.subr.bf16.mxu0 0
    %1088 = vmatpush1.bf16.msra.mxu0 0
    %1089 = vmatprep.subr.bf16.mxu0 0
    %1090 = vmatpush1.bf16.msra.mxu0 0
    %1091 = vmatprep.mubr.bf16.mxu0 0
    %1092 = vmatmul.mubr.bf16.gmra.mrb[0].mxu0 %v812
    %v1093 = vpop.f32.mrb[0].mxu0
    %v1094 = vadd.f32 %v850, %v1093
    %v1095 = vpop.f32.mrb[0].mxu0
    %v1096 = vadd.f32 %v851, %v1095
    %v1097 = vpop.f32.mrb[0].mxu0
    %v1098 = vadd.f32 %v854, %v1097
    %v1099 = vpop.f32.mrb[0].mxu0
    %v1100 = vadd.f32 %v855, %v1099
    %1101 = vdwg.mxu0
    %v1102 = vmul.f32 %v1051, 0.5
    %v1103 = vmul.f32 %v1055, 0.5
    %v1104 = vtanh.pop %v1102
    %v1105 = vtanh.pop %v1103
    %v1106 = vmul.f32 %v1104, 0.5
    %v1107 = vmul.f32 %v1105, 0.5
    %v1108 = vadd.f32 %v1106, 0.5
    %v1109 = vadd.f32 %v1107, 0.5
    %v1110 = vmul.f32 %v1053, 0.5
    %v1111 = vmul.f32 %v1057, 0.5
    %v1112 = vtanh.pop %v1110
    %v1113 = vtanh.pop %v1111
    %v1114 = vmul.f32 %v1112, 0.5
    %v1115 = vmul.f32 %v1113, 0.5
    %v1116 = vadd.f32 %v1114, 0.5
    %v1117 = vadd.f32 %v1115, 0.5
    %v1118 = vtanh.pop %v1094
    %v1119 = vtanh.pop %v1098
    %v1120 = vmul.f32 %v1096, 0.5
    %v1121 = vmul.f32 %v1100, 0.5
    %v1122 = vtanh.pop %v1120
    %v1123 = vtanh.pop %v1121
    %v1124 = vmul.f32 %v1122, 0.5
    %v1125 = vmul.f32 %v1123, 0.5
    %v1126 = vadd.f32 %v1124, 0.5
    %v1127 = vadd.f32 %v1125, 0.5
    %v1128 = vmul.f32 %v1116, %v810
    %v1129 = vmul.f32 %v1117, %v811
    %v1130 = vmul.f32 %v1108, %v1118
    %v1131 = vmul.f32 %v1109, %v1119
    %v1132 = vadd.f32 %v1128, %v1130
    %v1133 = vadd.f32 %v1129, %v1131
    %v1134 = vtanh.pop %v1132
    %v1135 = vtanh.pop %v1133
    %v1136 = vmul.f32 %v1126, %v1134
    %v1137 = vmul.f32 %v1127, %v1135
    %s1138 = scalar_lea.vmem [#allocation8], 16
    %1139 = vst [vmem:[%s1138] sm:$0xff] %v1136
    %1140 = vst [vmem:[%s1138 + $0x8] sm:$0xff] %v1137
    %1141 = vst [vmem:[#allocation2] sm:$0xff] %v1136
    %1142 = vst [vmem:[#allocation2 + $0x8] sm:$0xff] %v1137
    %1143 = vst [vmem:[#allocation3] sm:$0xff] %v1132
    %1144 = vst [vmem:[#allocation3 + $0x8] sm:$0xff] %v1133
    %v1145 = vld [vmem:[#allocation2] sm:$0xff]
    %v1146 = vld [vmem:[#allocation2 + $0x8] sm:$0xff]
    %v1147 = vld [vmem:[#allocation3] sm:$0xff]
    %v1148 = vld [vmem:[#allocation3 + $0x8] sm:$0xff]
    %v1149 = vpack.c.bf16 %v1146, %v1145
    %v1150 = vld [vmem:[#allocation5] sm:$0xff]
    %v1151 = vld [vmem:[#allocation5 + $0x8] sm:$0xff]
    %v1152 = vld [vmem:[#allocation5 + $0x10] sm:$0xff]
    %v1153 = vld [vmem:[#allocation5 + $0x18] sm:$0xff]
    %v1154 = vld [vmem:[#allocation5 + $0x20] sm:$0xff]
    %v1155 = vld [vmem:[#allocation5 + $0x28] sm:$0xff]
    %v1156 = vld [vmem:[#allocation5 + $0x30] sm:$0xff]
    %v1157 = vld [vmem:[#allocation5 + $0x38] sm:$0xff]
    %v1158 = vld [vmem:[#allocation5 + $0x40] sm:$0xff]
    %v1159 = vld [vmem:[#allocation5 + $0x48] sm:$0xff]
    %v1160 = vld [vmem:[#allocation5 + $0x50] sm:$0xff]
    %v1161 = vld [vmem:[#allocation5 + $0x58] sm:$0xff]
    %v1162 = vld [vmem:[#allocation5 + $0x60] sm:$0xff]
    %v1163 = vld [vmem:[#allocation5 + $0x68] sm:$0xff]
    %v1164 = vld [vmem:[#allocation5 + $0x70] sm:$0xff]
    %v1165 = vld [vmem:[#allocation5 + $0x78] sm:$0xff]
    %v1166 = vld [vmem:[#allocation5 + $0x80] sm:$0xff]
    %v1167 = vld [vmem:[#allocation5 + $0x88] sm:$0xff]
    %v1168 = vld [vmem:[#allocation5 + $0x90] sm:$0xff]
    %v1169 = vld [vmem:[#allocation5 + $0x98] sm:$0xff]
    %v1170 = vld [vmem:[#allocation5 + $0xa0] sm:$0xff]
    %v1171 = vld [vmem:[#allocation5 + $0xa8] sm:$0xff]
    %v1172 = vld [vmem:[#allocation5 + $0xb0] sm:$0xff]
    %v1173 = vld [vmem:[#allocation5 + $0xb8] sm:$0xff]
    %v1174 = vld [vmem:[#allocation5 + $0xc0] sm:$0xff]
    %v1175 = vld [vmem:[#allocation5 + $0xc8] sm:$0xff]
    %v1176 = vld [vmem:[#allocation5 + $0xd0] sm:$0xff]
    %v1177 = vld [vmem:[#allocation5 + $0xd8] sm:$0xff]
    %v1178 = vld [vmem:[#allocation5 + $0xe0] sm:$0xff]
    %v1179 = vld [vmem:[#allocation5 + $0xe8] sm:$0xff]
    %v1180 = vld [vmem:[#allocation5 + $0xf0] sm:$0xff]
    %v1181 = vld [vmem:[#allocation5 + $0xf8] sm:$0xff]
    %s1182 = smul.u32 4, 4
    %s1183 = smul.addr %s1182, 8
    %s1184 = scalar_lea.vmem [#allocation4], %s1183
    %v1185 = vld [vmem:[%s1184] sm:$0xff]
    %v1186 = vld [vmem:[%s1184 + $0x8] sm:$0xff]
    %v1187 = vld [vmem:[%s1184 + $0x10] sm:$0xff]
    %v1188 = vld [vmem:[%s1184 + $0x18] sm:$0xff]
    %v1189 = vld [vmem:[%s1184 + $0x20] sm:$0xff]
    %v1190 = vld [vmem:[%s1184 + $0x28] sm:$0xff]
    %v1191 = vld [vmem:[%s1184 + $0x30] sm:$0xff]
    %v1192 = vld [vmem:[%s1184 + $0x38] sm:$0xff]
    %v1225 = vunpack.c.l.b16 %v1150
    %v1226 = vunpack.c.h.b16 %v1150
    %v1227 = vunpack.c.l.b16 %v1151
    %v1228 = vunpack.c.h.b16 %v1151
    %v1229 = vunpack.c.l.b16 %v1152
    %v1230 = vunpack.c.h.b16 %v1152
    %v1231 = vunpack.c.l.b16 %v1153
    %v1232 = vunpack.c.h.b16 %v1153
    %v1233 = vunpack.c.l.b16 %v1154
    %v1234 = vunpack.c.h.b16 %v1154
    %v1235 = vunpack.c.l.b16 %v1155
    %v1236 = vunpack.c.h.b16 %v1155
    %v1237 = vunpack.c.l.b16 %v1156
    %v1238 = vunpack.c.h.b16 %v1156
    %v1239 = vunpack.c.l.b16 %v1157
    %v1240 = vunpack.c.h.b16 %v1157
    %v1241 = vunpack.c.l.b16 %v1158
    %v1242 = vunpack.c.h.b16 %v1158
    %v1243 = vunpack.c.l.b16 %v1159
    %v1244 = vunpack.c.h.b16 %v1159
    %v1245 = vunpack.c.l.b16 %v1160
    %v1246 = vunpack.c.h.b16 %v1160
    %v1247 = vunpack.c.l.b16 %v1161
    %v1248 = vunpack.c.h.b16 %v1161
    %v1249 = vunpack.c.l.b16 %v1162
    %v1250 = vunpack.c.h.b16 %v1162
    %v1251 = vunpack.c.l.b16 %v1163
    %v1252 = vunpack.c.h.b16 %v1163
    %v1253 = vunpack.c.l.b16 %v1164
    %v1254 = vunpack.c.h.b16 %v1164
    %v1255 = vunpack.c.l.b16 %v1165
    %v1256 = vunpack.c.h.b16 %v1165
    %v1257 = vunpack.c.l.b16 %v1166
    %v1258 = vunpack.c.h.b16 %v1166
    %v1259 = vunpack.c.l.b16 %v1167
    %v1260 = vunpack.c.h.b16 %v1167
    %v1261 = vunpack.c.l.b16 %v1168
    %v1262 = vunpack.c.h.b16 %v1168
    %v1263 = vunpack.c.l.b16 %v1169
    %v1264 = vunpack.c.h.b16 %v1169
    %v1265 = vunpack.c.l.b16 %v1170
    %v1266 = vunpack.c.h.b16 %v1170
    %v1267 = vunpack.c.l.b16 %v1171
    %v1268 = vunpack.c.h.b16 %v1171
    %v1269 = vunpack.c.l.b16 %v1172
    %v1270 = vunpack.c.h.b16 %v1172
    %v1271 = vunpack.c.l.b16 %v1173
    %v1272 = vunpack.c.h.b16 %v1173
    %v1273 = vunpack.c.l.b16 %v1174
    %v1274 = vunpack.c.h.b16 %v1174
    %v1275 = vunpack.c.l.b16 %v1175
    %v1276 = vunpack.c.h.b16 %v1175
    %v1277 = vunpack.c.l.b16 %v1176
    %v1278 = vunpack.c.h.b16 %v1176
    %v1279 = vunpack.c.l.b16 %v1177
    %v1280 = vunpack.c.h.b16 %v1177
    %v1281 = vunpack.c.l.b16 %v1178
    %v1282 = vunpack.c.h.b16 %v1178
    %v1283 = vunpack.c.l.b16 %v1179
    %v1284 = vunpack.c.h.b16 %v1179
    %v1285 = vunpack.c.l.b16 %v1180
    %v1286 = vunpack.c.h.b16 %v1180
    %v1287 = vunpack.c.l.b16 %v1181
    %v1288 = vunpack.c.h.b16 %v1181
    %v1289 = vpack.c.b16 %v1229, %v1225
    %v1290 = vpack.c.b16 %v1230, %v1226
    %v1291 = vpack.c.b16 %v1231, %v1227
    %v1292 = vpack.c.b16 %v1232, %v1228
    %v1293 = vpack.c.b16 %v1237, %v1233
    %v1294 = vpack.c.b16 %v1238, %v1234
    %v1295 = vpack.c.b16 %v1239, %v1235
    %v1296 = vpack.c.b16 %v1240, %v1236
    %v1297 = vpack.c.b16 %v1245, %v1241
    %v1298 = vpack.c.b16 %v1246, %v1242
    %v1299 = vpack.c.b16 %v1247, %v1243
    %v1300 = vpack.c.b16 %v1248, %v1244
    %v1301 = vpack.c.b16 %v1253, %v1249
    %v1302 = vpack.c.b16 %v1254, %v1250
    %v1303 = vpack.c.b16 %v1255, %v1251
    %v1304 = vpack.c.b16 %v1256, %v1252
    %v1305 = vpack.c.b16 %v1261, %v1257
    %v1306 = vpack.c.b16 %v1262, %v1258
    %v1307 = vpack.c.b16 %v1263, %v1259
    %v1308 = vpack.c.b16 %v1264, %v1260
    %v1309 = vpack.c.b16 %v1269, %v1265
    %v1310 = vpack.c.b16 %v1270, %v1266
    %v1311 = vpack.c.b16 %v1271, %v1267
    %v1312 = vpack.c.b16 %v1272, %v1268
    %v1313 = vpack.c.b16 %v1277, %v1273
    %v1314 = vpack.c.b16 %v1278, %v1274
    %v1315 = vpack.c.b16 %v1279, %v1275
    %v1316 = vpack.c.b16 %v1280, %v1276
    %v1317 = vpack.c.b16 %v1285, %v1281
    %v1318 = vpack.c.b16 %v1286, %v1282
    %v1319 = vpack.c.b16 %v1287, %v1283
    %v1320 = vpack.c.b16 %v1288, %v1284
    %1353 = vmatprep.subr.bf16.mxu0 %v1290
    %1354 = vmatpush1.bf16.msra.mxu0 %v1289
    %1355 = vmatprep.subr.bf16.mxu0 %v1294
    %1356 = vmatpush1.bf16.msra.mxu0 %v1293
    %1357 = vmatprep.subr.bf16.mxu0 %v1298
    %1358 = vmatpush1.bf16.msra.mxu0 %v1297
    %1359 = vmatprep.subr.bf16.mxu0 %v1302
    %1360 = vmatpush1.bf16.msra.mxu0 %v1301
    %1361 = vmatprep.subr.bf16.mxu0 %v1306
    %1362 = vmatpush1.bf16.msra.mxu0 %v1305
    %1363 = vmatprep.subr.bf16.mxu0 %v1310
    %1364 = vmatpush1.bf16.msra.mxu0 %v1309
    %1365 = vmatprep.subr.bf16.mxu0 %v1314
    %1366 = vmatpush1.bf16.msra.mxu0 %v1313
    %1367 = vmatprep.subr.bf16.mxu0 %v1318
    %1368 = vmatpush1.bf16.msra.mxu0 %v1317
    %1369 = vmatprep.subr.bf16.mxu0 0
    %1370 = vmatpush1.bf16.msra.mxu0 0
    %1371 = vmatprep.subr.bf16.mxu0 0
    %1372 = vmatpush1.bf16.msra.mxu0 0
    %1373 = vmatprep.subr.bf16.mxu0 0
    %1374 = vmatpush1.bf16.msra.mxu0 0
    %1375 = vmatprep.subr.bf16.mxu0 0
    %1376 = vmatpush1.bf16.msra.mxu0 0
    %1377 = vmatprep.subr.bf16.mxu0 0
    %1378 = vmatpush1.bf16.msra.mxu0 0
    %1379 = vmatprep.subr.bf16.mxu0 0
    %1380 = vmatpush1.bf16.msra.mxu0 0
    %1381 = vmatprep.subr.bf16.mxu0 0
    %1382 = vmatpush1.bf16.msra.mxu0 0
    %1383 = vmatprep.subr.bf16.mxu0 0
    %1384 = vmatpush1.bf16.msra.mxu0 0
    %1385 = vmatprep.mubr.bf16.mxu0 0
    %1386 = vmatmul.mubr.bf16.gmra.mrb[0].mxu0 %v1149
    %v1387 = vpop.f32.mrb[0].mxu0
    %v1388 = vadd.f32 %v1185, %v1387
    %v1389 = vpop.f32.mrb[0].mxu0
    %v1390 = vadd.f32 %v1186, %v1389
    %v1391 = vpop.f32.mrb[0].mxu0
    %v1392 = vadd.f32 %v1189, %v1391
    %v1393 = vpop.f32.mrb[0].mxu0
    %v1394 = vadd.f32 %v1190, %v1393
    %1395 = vdwg.mxu0
    %1396 = vmatprep.subr.bf16.mxu0 %v1292
    %1397 = vmatpush1.bf16.msra.mxu0 %v1291
    %1398 = vmatprep.subr.bf16.mxu0 %v1296
    %1399 = vmatpush1.bf16.msra.mxu0 %v1295
    %1400 = vmatprep.subr.bf16.mxu0 %v1300
    %1401 = vmatpush1.bf16.msra.mxu0 %v1299
    %1402 = vmatprep.subr.bf16.mxu0 %v1304
    %1403 = vmatpush1.bf16.msra.mxu0 %v1303
    %1404 = vmatprep.subr.bf16.mxu0 %v1308
    %1405 = vmatpush1.bf16.msra.mxu0 %v1307
    %1406 = vmatprep.subr.bf16.mxu0 %v1312
    %1407 = vmatpush1.bf16.msra.mxu0 %v1311
    %1408 = vmatprep.subr.bf16.mxu0 %v1316
    %1409 = vmatpush1.bf16.msra.mxu0 %v1315
    %1410 = vmatprep.subr.bf16.mxu0 %v1320
    %1411 = vmatpush1.bf16.msra.mxu0 %v1319
    %1412 = vmatprep.subr.bf16.mxu0 0
    %1413 = vmatpush1.bf16.msra.mxu0 0
    %1414 = vmatprep.subr.bf16.mxu0 0
    %1415 = vmatpush1.bf16.msra.mxu0 0
    %1416 = vmatprep.subr.bf16.mxu0 0
    %1417 = vmatpush1.bf16.msra.mxu0 0
    %1418 = vmatprep.subr.bf16.mxu0 0
    %1419 = vmatpush1.bf16.msra.mxu0 0
    %1420 = vmatprep.subr.bf16.mxu0 0
    %1421 = vmatpush1.bf16.msra.mxu0 0
    %1422 = vmatprep.subr.bf16.mxu0 0
    %1423 = vmatpush1.bf16.msra.mxu0 0
    %1424 = vmatprep.subr.bf16.mxu0 0
    %1425 = vmatpush1.bf16.msra.mxu0 0
    %1426 = vmatprep.subr.bf16.mxu0 0
    %1427 = vmatpush1.bf16.msra.mxu0 0
    %1428 = vmatprep.mubr.bf16.mxu0 0
    %1429 = vmatmul.mubr.bf16.gmra.mrb[0].mxu0 %v1149
    %v1430 = vpop.f32.mrb[0].mxu0
    %v1431 = vadd.f32 %v1187, %v1430
    %v1432 = vpop.f32.mrb[0].mxu0
    %v1433 = vadd.f32 %v1188, %v1432
    %v1434 = vpop.f32.mrb[0].mxu0
    %v1435 = vadd.f32 %v1191, %v1434
    %v1436 = vpop.f32.mrb[0].mxu0
    %v1437 = vadd.f32 %v1192, %v1436
    %1438 = vdwg.mxu0
    %v1439 = vmul.f32 %v1388, 0.5
    %v1440 = vmul.f32 %v1392, 0.5
    %v1441 = vtanh.pop %v1439
    %v1442 = vtanh.pop %v1440
    %v1443 = vmul.f32 %v1441, 0.5
    %v1444 = vmul.f32 %v1442, 0.5
    %v1445 = vadd.f32 %v1443, 0.5
    %v1446 = vadd.f32 %v1444, 0.5
    %v1447 = vmul.f32 %v1390, 0.5
    %v1448 = vmul.f32 %v1394, 0.5
    %v1449 = vtanh.pop %v1447
    %v1450 = vtanh.pop %v1448
    %v1451 = vmul.f32 %v1449, 0.5
    %v1452 = vmul.f32 %v1450, 0.5
    %v1453 = vadd.f32 %v1451, 0.5
    %v1454 = vadd.f32 %v1452, 0.5
    %v1455 = vtanh.pop %v1431
    %v1456 = vtanh.pop %v1435
    %v1457 = vmul.f32 %v1433, 0.5
    %v1458 = vmul.f32 %v1437, 0.5
    %v1459 = vtanh.pop %v1457
    %v1460 = vtanh.pop %v1458
    %v1461 = vmul.f32 %v1459, 0.5
    %v1462 = vmul.f32 %v1460, 0.5
    %v1463 = vadd.f32 %v1461, 0.5
    %v1464 = vadd.f32 %v1462, 0.5
    %v1465 = vmul.f32 %v1453, %v1147
    %v1466 = vmul.f32 %v1454, %v1148
    %v1467 = vmul.f32 %v1445, %v1455
    %v1468 = vmul.f32 %v1446, %v1456
    %v1469 = vadd.f32 %v1465, %v1467
    %v1470 = vadd.f32 %v1466, %v1468
    %v1471 = vtanh.pop %v1469
    %v1472 = vtanh.pop %v1470
    %v1473 = vmul.f32 %v1463, %v1471
    %v1474 = vmul.f32 %v1464, %v1472
    %s1475 = scalar_lea.vmem [#allocation8], 32
    %1476 = vst [vmem:[%s1475] sm:$0xff] %v1473
    %1477 = vst [vmem:[%s1475 + $0x8] sm:$0xff] %v1474
    %1478 = vst [vmem:[#allocation2] sm:$0xff] %v1473
    %1479 = vst [vmem:[#allocation2 + $0x8] sm:$0xff] %v1474
    %1480 = vst [vmem:[#allocation3] sm:$0xff] %v1469
    %1481 = vst [vmem:[#allocation3 + $0x8] sm:$0xff] %v1470
    %v1482 = vld [vmem:[#allocation2] sm:$0xff]
    %v1483 = vld [vmem:[#allocation2 + $0x8] sm:$0xff]
    %v1484 = vld [vmem:[#allocation3] sm:$0xff]
    %v1485 = vld [vmem:[#allocation3 + $0x8] sm:$0xff]
    %v1486 = vpack.c.bf16 %v1483, %v1482
    %v1487 = vld [vmem:[#allocation5] sm:$0xff]
    %v1488 = vld [vmem:[#allocation5 + $0x8] sm:$0xff]
    %v1489 = vld [vmem:[#allocation5 + $0x10] sm:$0xff]
    %v1490 = vld [vmem:[#allocation5 + $0x18] sm:$0xff]
    %v1491 = vld [vmem:[#allocation5 + $0x20] sm:$0xff]
    %v1492 = vld [vmem:[#allocation5 + $0x28] sm:$0xff]
    %v1493 = vld [vmem:[#allocation5 + $0x30] sm:$0xff]
    %v1494 = vld [vmem:[#allocation5 + $0x38] sm:$0xff]
    %v1495 = vld [vmem:[#allocation5 + $0x40] sm:$0xff]
    %v1496 = vld [vmem:[#allocation5 + $0x48] sm:$0xff]
    %v1497 = vld [vmem:[#allocation5 + $0x50] sm:$0xff]
    %v1498 = vld [vmem:[#allocation5 + $0x58] sm:$0xff]
    %v1499 = vld [vmem:[#allocation5 + $0x60] sm:$0xff]
    %v1500 = vld [vmem:[#allocation5 + $0x68] sm:$0xff]
    %v1501 = vld [vmem:[#allocation5 + $0x70] sm:$0xff]
    %v1502 = vld [vmem:[#allocation5 + $0x78] sm:$0xff]
    %v1503 = vld [vmem:[#allocation5 + $0x80] sm:$0xff]
    %v1504 = vld [vmem:[#allocation5 + $0x88] sm:$0xff]
    %v1505 = vld [vmem:[#allocation5 + $0x90] sm:$0xff]
    %v1506 = vld [vmem:[#allocation5 + $0x98] sm:$0xff]
    %v1507 = vld [vmem:[#allocation5 + $0xa0] sm:$0xff]
    %v1508 = vld [vmem:[#allocation5 + $0xa8] sm:$0xff]
    %v1509 = vld [vmem:[#allocation5 + $0xb0] sm:$0xff]
    %v1510 = vld [vmem:[#allocation5 + $0xb8] sm:$0xff]
    %v1511 = vld [vmem:[#allocation5 + $0xc0] sm:$0xff]
    %v1512 = vld [vmem:[#allocation5 + $0xc8] sm:$0xff]
    %v1513 = vld [vmem:[#allocation5 + $0xd0] sm:$0xff]
    %v1514 = vld [vmem:[#allocation5 + $0xd8] sm:$0xff]
    %v1515 = vld [vmem:[#allocation5 + $0xe0] sm:$0xff]
    %v1516 = vld [vmem:[#allocation5 + $0xe8] sm:$0xff]
    %v1517 = vld [vmem:[#allocation5 + $0xf0] sm:$0xff]
    %v1518 = vld [vmem:[#allocation5 + $0xf8] sm:$0xff]
    %s1519 = smul.u32 6, 4
    %s1520 = smul.addr %s1519, 8
    %s1521 = scalar_lea.vmem [#allocation4], %s1520
    %v1522 = vld [vmem:[%s1521] sm:$0xff]
    %v1523 = vld [vmem:[%s1521 + $0x8] sm:$0xff]
    %v1524 = vld [vmem:[%s1521 + $0x10] sm:$0xff]
    %v1525 = vld [vmem:[%s1521 + $0x18] sm:$0xff]
    %v1526 = vld [vmem:[%s1521 + $0x20] sm:$0xff]
    %v1527 = vld [vmem:[%s1521 + $0x28] sm:$0xff]
    %v1528 = vld [vmem:[%s1521 + $0x30] sm:$0xff]
    %v1529 = vld [vmem:[%s1521 + $0x38] sm:$0xff]
    %v1562 = vunpack.c.l.b16 %v1487
    %v1563 = vunpack.c.h.b16 %v1487
    %v1564 = vunpack.c.l.b16 %v1488
    %v1565 = vunpack.c.h.b16 %v1488
    %v1566 = vunpack.c.l.b16 %v1489
    %v1567 = vunpack.c.h.b16 %v1489
    %v1568 = vunpack.c.l.b16 %v1490
    %v1569 = vunpack.c.h.b16 %v1490
    %v1570 = vunpack.c.l.b16 %v1491
    %v1571 = vunpack.c.h.b16 %v1491
    %v1572 = vunpack.c.l.b16 %v1492
    %v1573 = vunpack.c.h.b16 %v1492
    %v1574 = vunpack.c.l.b16 %v1493
    %v1575 = vunpack.c.h.b16 %v1493
    %v1576 = vunpack.c.l.b16 %v1494
    %v1577 = vunpack.c.h.b16 %v1494
    %v1578 = vunpack.c.l.b16 %v1495
    %v1579 = vunpack.c.h.b16 %v1495
    %v1580 = vunpack.c.l.b16 %v1496
    %v1581 = vunpack.c.h.b16 %v1496
    %v1582 = vunpack.c.l.b16 %v1497
    %v1583 = vunpack.c.h.b16 %v1497
    %v1584 = vunpack.c.l.b16 %v1498
    %v1585 = vunpack.c.h.b16 %v1498
    %v1586 = vunpack.c.l.b16 %v1499
    %v1587 = vunpack.c.h.b16 %v1499
    %v1588 = vunpack.c.l.b16 %v1500
    %v1589 = vunpack.c.h.b16 %v1500
    %v1590 = vunpack.c.l.b16 %v1501
    %v1591 = vunpack.c.h.b16 %v1501
    %v1592 = vunpack.c.l.b16 %v1502
    %v1593 = vunpack.c.h.b16 %v1502
    %v1594 = vunpack.c.l.b16 %v1503
    %v1595 = vunpack.c.h.b16 %v1503
    %v1596 = vunpack.c.l.b16 %v1504
    %v1597 = vunpack.c.h.b16 %v1504
    %v1598 = vunpack.c.l.b16 %v1505
    %v1599 = vunpack.c.h.b16 %v1505
    %v1600 = vunpack.c.l.b16 %v1506
    %v1601 = vunpack.c.h.b16 %v1506
    %v1602 = vunpack.c.l.b16 %v1507
    %v1603 = vunpack.c.h.b16 %v1507
    %v1604 = vunpack.c.l.b16 %v1508
    %v1605 = vunpack.c.h.b16 %v1508
    %v1606 = vunpack.c.l.b16 %v1509
    %v1607 = vunpack.c.h.b16 %v1509
    %v1608 = vunpack.c.l.b16 %v1510
    %v1609 = vunpack.c.h.b16 %v1510
    %v1610 = vunpack.c.l.b16 %v1511
    %v1611 = vunpack.c.h.b16 %v1511
    %v1612 = vunpack.c.l.b16 %v1512
    %v1613 = vunpack.c.h.b16 %v1512
    %v1614 = vunpack.c.l.b16 %v1513
    %v1615 = vunpack.c.h.b16 %v1513
    %v1616 = vunpack.c.l.b16 %v1514
    %v1617 = vunpack.c.h.b16 %v1514
    %v1618 = vunpack.c.l.b16 %v1515
    %v1619 = vunpack.c.h.b16 %v1515
    %v1620 = vunpack.c.l.b16 %v1516
    %v1621 = vunpack.c.h.b16 %v1516
    %v1622 = vunpack.c.l.b16 %v1517
    %v1623 = vunpack.c.h.b16 %v1517
    %v1624 = vunpack.c.l.b16 %v1518
    %v1625 = vunpack.c.h.b16 %v1518
    %v1626 = vpack.c.b16 %v1566, %v1562
    %v1627 = vpack.c.b16 %v1567, %v1563
    %v1628 = vpack.c.b16 %v1568, %v1564
    %v1629 = vpack.c.b16 %v1569, %v1565
    %v1630 = vpack.c.b16 %v1574, %v1570
    %v1631 = vpack.c.b16 %v1575, %v1571
    %v1632 = vpack.c.b16 %v1576, %v1572
    %v1633 = vpack.c.b16 %v1577, %v1573
    %v1634 = vpack.c.b16 %v1582, %v1578
    %v1635 = vpack.c.b16 %v1583, %v1579
    %v1636 = vpack.c.b16 %v1584, %v1580
    %v1637 = vpack.c.b16 %v1585, %v1581
    %v1638 = vpack.c.b16 %v1590, %v1586
    %v1639 = vpack.c.b16 %v1591, %v1587
    %v1640 = vpack.c.b16 %v1592, %v1588
    %v1641 = vpack.c.b16 %v1593, %v1589
    %v1642 = vpack.c.b16 %v1598, %v1594
    %v1643 = vpack.c.b16 %v1599, %v1595
    %v1644 = vpack.c.b16 %v1600, %v1596
    %v1645 = vpack.c.b16 %v1601, %v1597
    %v1646 = vpack.c.b16 %v1606, %v1602
    %v1647 = vpack.c.b16 %v1607, %v1603
    %v1648 = vpack.c.b16 %v1608, %v1604
    %v1649 = vpack.c.b16 %v1609, %v1605
    %v1650 = vpack.c.b16 %v1614, %v1610
    %v1651 = vpack.c.b16 %v1615, %v1611
    %v1652 = vpack.c.b16 %v1616, %v1612
    %v1653 = vpack.c.b16 %v1617, %v1613
    %v1654 = vpack.c.b16 %v1622, %v1618
    %v1655 = vpack.c.b16 %v1623, %v1619
    %v1656 = vpack.c.b16 %v1624, %v1620
    %v1657 = vpack.c.b16 %v1625, %v1621
    %1690 = vmatprep.subr.bf16.mxu0 %v1627
    %1691 = vmatpush1.bf16.msra.mxu0 %v1626
    %1692 = vmatprep.subr.bf16.mxu0 %v1631
    %1693 = vmatpush1.bf16.msra.mxu0 %v1630
    %1694 = vmatprep.subr.bf16.mxu0 %v1635
    %1695 = vmatpush1.bf16.msra.mxu0 %v1634
    %1696 = vmatprep.subr.bf16.mxu0 %v1639
    %1697 = vmatpush1.bf16.msra.mxu0 %v1638
    %1698 = vmatprep.subr.bf16.mxu0 %v1643
    %1699 = vmatpush1.bf16.msra.mxu0 %v1642
    %1700 = vmatprep.subr.bf16.mxu0 %v1647
    %1701 = vmatpush1.bf16.msra.mxu0 %v1646
    %1702 = vmatprep.subr.bf16.mxu0 %v1651
    %1703 = vmatpush1.bf16.msra.mxu0 %v1650
    %1704 = vmatprep.subr.bf16.mxu0 %v1655
    %1705 = vmatpush1.bf16.msra.mxu0 %v1654
    %1706 = vmatprep.subr.bf16.mxu0 0
    %1707 = vmatpush1.bf16.msra.mxu0 0
    %1708 = vmatprep.subr.bf16.mxu0 0
    %1709 = vmatpush1.bf16.msra.mxu0 0
    %1710 = vmatprep.subr.bf16.mxu0 0
    %1711 = vmatpush1.bf16.msra.mxu0 0
    %1712 = vmatprep.subr.bf16.mxu0 0
    %1713 = vmatpush1.bf16.msra.mxu0 0
    %1714 = vmatprep.subr.bf16.mxu0 0
    %1715 = vmatpush1.bf16.msra.mxu0 0
    %1716 = vmatprep.subr.bf16.mxu0 0
    %1717 = vmatpush1.bf16.msra.mxu0 0
    %1718 = vmatprep.subr.bf16.mxu0 0
    %1719 = vmatpush1.bf16.msra.mxu0 0
    %1720 = vmatprep.subr.bf16.mxu0 0
    %1721 = vmatpush1.bf16.msra.mxu0 0
    %1722 = vmatprep.mubr.bf16.mxu0 0
    %1723 = vmatmul.mubr.bf16.gmra.mrb[0].mxu0 %v1486
    %v1724 = vpop.f32.mrb[0].mxu0
    %v1725 = vadd.f32 %v1522, %v1724
    %v1726 = vpop.f32.mrb[0].mxu0
    %v1727 = vadd.f32 %v1523, %v1726
    %v1728 = vpop.f32.mrb[0].mxu0
    %v1729 = vadd.f32 %v1526, %v1728
    %v1730 = vpop.f32.mrb[0].mxu0
    %v1731 = vadd.f32 %v1527, %v1730
    %1732 = vdwg.mxu0
    %1733 = vmatprep.subr.bf16.mxu0 %v1629
    %1734 = vmatpush1.bf16.msra.mxu0 %v1628
    %1735 = vmatprep.subr.bf16.mxu0 %v1633
    %1736 = vmatpush1.bf16.msra.mxu0 %v1632
    %1737 = vmatprep.subr.bf16.mxu0 %v1637
    %1738 = vmatpush1.bf16.msra.mxu0 %v1636
    %1739 = vmatprep.subr.bf16.mxu0 %v1641
    %1740 = vmatpush1.bf16.msra.mxu0 %v1640
    %1741 = vmatprep.subr.bf16.mxu0 %v1645
    %1742 = vmatpush1.bf16.msra.mxu0 %v1644
    %1743 = vmatprep.subr.bf16.mxu0 %v1649
    %1744 = vmatpush1.bf16.msra.mxu0 %v1648
    %1745 = vmatprep.subr.bf16.mxu0 %v1653
    %1746 = vmatpush1.bf16.msra.mxu0 %v1652
    %1747 = vmatprep.subr.bf16.mxu0 %v1657
    %1748 = vmatpush1.bf16.msra.mxu0 %v1656
    %1749 = vmatprep.subr.bf16.mxu0 0
    %1750 = vmatpush1.bf16.msra.mxu0 0
    %1751 = vmatprep.subr.bf16.mxu0 0
    %1752 = vmatpush1.bf16.msra.mxu0 0
    %1753 = vmatprep.subr.bf16.mxu0 0
    %1754 = vmatpush1.bf16.msra.mxu0 0
    %1755 = vmatprep.subr.bf16.mxu0 0
    %1756 = vmatpush1.bf16.msra.mxu0 0
    %1757 = vmatprep.subr.bf16.mxu0 0
    %1758 = vmatpush1.bf16.msra.mxu0 0
    %1759 = vmatprep.subr.bf16.mxu0 0
    %1760 = vmatpush1.bf16.msra.mxu0 0
    %1761 = vmatprep.subr.bf16.mxu0 0
    %1762 = vmatpush1.bf16.msra.mxu0 0
    %1763 = vmatprep.subr.bf16.mxu0 0
    %1764 = vmatpush1.bf16.msra.mxu0 0
    %1765 = vmatprep.mubr.bf16.mxu0 0
    %1766 = vmatmul.mubr.bf16.gmra.mrb[0].mxu0 %v1486
    %v1767 = vpop.f32.mrb[0].mxu0
    %v1768 = vadd.f32 %v1524, %v1767
    %v1769 = vpop.f32.mrb[0].mxu0
    %v1770 = vadd.f32 %v1525, %v1769
    %v1771 = vpop.f32.mrb[0].mxu0
    %v1772 = vadd.f32 %v1528, %v1771
    %v1773 = vpop.f32.mrb[0].mxu0
    %v1774 = vadd.f32 %v1529, %v1773
    %1775 = vdwg.mxu0
    %v1776 = vmul.f32 %v1725, 0.5
    %v1777 = vmul.f32 %v1729, 0.5
    %v1778 = vtanh.pop %v1776
    %v1779 = vtanh.pop %v1777
    %v1780 = vmul.f32 %v1778, 0.5
    %v1781 = vmul.f32 %v1779, 0.5
    %v1782 = vadd.f32 %v1780, 0.5
    %v1783 = vadd.f32 %v1781, 0.5
    %v1784 = vmul.f32 %v1727, 0.5
    %v1785 = vmul.f32 %v1731, 0.5
    %v1786 = vtanh.pop %v1784
    %v1787 = vtanh.pop %v1785
    %v1788 = vmul.f32 %v1786, 0.5
    %v1789 = vmul.f32 %v1787, 0.5
    %v1790 = vadd.f32 %v1788, 0.5
    %v1791 = vadd.f32 %v1789, 0.5
    %v1792 = vtanh.pop %v1768
    %v1793 = vtanh.pop %v1772
    %v1794 = vmul.f32 %v1770, 0.5
    %v1795 = vmul.f32 %v1774, 0.5
    %v1796 = vtanh.pop %v1794
    %v1797 = vtanh.pop %v1795
    %v1798 = vmul.f32 %v1796, 0.5
    %v1799 = vmul.f32 %v1797, 0.5
    %v1800 = vadd.f32 %v1798, 0.5
    %v1801 = vadd.f32 %v1799, 0.5
    %v1802 = vmul.f32 %v1790, %v1484
    %v1803 = vmul.f32 %v1791, %v1485
    %v1804 = vmul.f32 %v1782, %v1792
    %v1805 = vmul.f32 %v1783, %v1793
    %v1806 = vadd.f32 %v1802, %v1804
    %v1807 = vadd.f32 %v1803, %v1805
    %v1808 = vtanh.pop %v1806
    %v1809 = vtanh.pop %v1807
    %v1810 = vmul.f32 %v1800, %v1808
    %v1811 = vmul.f32 %v1801, %v1809
    %s1812 = scalar_lea.vmem [#allocation8], 48
    %1813 = vst [vmem:[%s1812] sm:$0xff] %v1810
    %1814 = vst [vmem:[%s1812 + $0x8] sm:$0xff] %v1811
    %1815 = vst [vmem:[#allocation2] sm:$0xff] %v1810
    %1816 = vst [vmem:[#allocation2 + $0x8] sm:$0xff] %v1811
    %1817 = vst [vmem:[#allocation3] sm:$0xff] %v1806
    %1818 = vst [vmem:[#allocation3 + $0x8] sm:$0xff] %v1807
    %v1819 = vld [vmem:[#allocation2] sm:$0xff]
    %v1820 = vld [vmem:[#allocation2 + $0x8] sm:$0xff]
    %v1821 = vld [vmem:[#allocation3] sm:$0xff]
    %v1822 = vld [vmem:[#allocation3 + $0x8] sm:$0xff]
    %v1823 = vpack.c.bf16 %v1820, %v1819
    %v1824 = vld [vmem:[#allocation5] sm:$0xff]
    %v1825 = vld [vmem:[#allocation5 + $0x8] sm:$0xff]
    %v1826 = vld [vmem:[#allocation5 + $0x10] sm:$0xff]
    %v1827 = vld [vmem:[#allocation5 + $0x18] sm:$0xff]
    %v1828 = vld [vmem:[#allocation5 + $0x20] sm:$0xff]
    %v1829 = vld [vmem:[#allocation5 + $0x28] sm:$0xff]
    %v1830 = vld [vmem:[#allocation5 + $0x30] sm:$0xff]
    %v1831 = vld [vmem:[#allocation5 + $0x38] sm:$0xff]
    %v1832 = vld [vmem:[#allocation5 + $0x40] sm:$0xff]
    %v1833 = vld [vmem:[#allocation5 + $0x48] sm:$0xff]
    %v1834 = vld [vmem:[#allocation5 + $0x50] sm:$0xff]
    %v1835 = vld [vmem:[#allocation5 + $0x58] sm:$0xff]
    %v1836 = vld [vmem:[#allocation5 + $0x60] sm:$0xff]
    %v1837 = vld [vmem:[#allocation5 + $0x68] sm:$0xff]
    %v1838 = vld [vmem:[#allocation5 + $0x70] sm:$0xff]
    %v1839 = vld [vmem:[#allocation5 + $0x78] sm:$0xff]
    %v1840 = vld [vmem:[#allocation5 + $0x80] sm:$0xff]
    %v1841 = vld [vmem:[#allocation5 + $0x88] sm:$0xff]
    %v1842 = vld [vmem:[#allocation5 + $0x90] sm:$0xff]
    %v1843 = vld [vmem:[#allocation5 + $0x98] sm:$0xff]
    %v1844 = vld [vmem:[#allocation5 + $0xa0] sm:$0xff]
    %v1845 = vld [vmem:[#allocation5 + $0xa8] sm:$0xff]
    %v1846 = vld [vmem:[#allocation5 + $0xb0] sm:$0xff]
    %v1847 = vld [vmem:[#allocation5 + $0xb8] sm:$0xff]
    %v1848 = vld [vmem:[#allocation5 + $0xc0] sm:$0xff]
    %v1849 = vld [vmem:[#allocation5 + $0xc8] sm:$0xff]
    %v1850 = vld [vmem:[#allocation5 + $0xd0] sm:$0xff]
    %v1851 = vld [vmem:[#allocation5 + $0xd8] sm:$0xff]
    %v1852 = vld [vmem:[#allocation5 + $0xe0] sm:$0xff]
    %v1853 = vld [vmem:[#allocation5 + $0xe8] sm:$0xff]
    %v1854 = vld [vmem:[#allocation5 + $0xf0] sm:$0xff]
    %v1855 = vld [vmem:[#allocation5 + $0xf8] sm:$0xff]
    %s1856 = smul.u32 8, 4
    %s1857 = smul.addr %s1856, 8
    %s1858 = scalar_lea.vmem [#allocation4], %s1857
    %v1859 = vld [vmem:[%s1858] sm:$0xff]
    %v1860 = vld [vmem:[%s1858 + $0x8] sm:$0xff]
    %v1861 = vld [vmem:[%s1858 + $0x10] sm:$0xff]
    %v1862 = vld [vmem:[%s1858 + $0x18] sm:$0xff]
    %v1863 = vld [vmem:[%s1858 + $0x20] sm:$0xff]
    %v1864 = vld [vmem:[%s1858 + $0x28] sm:$0xff]
    %v1865 = vld [vmem:[%s1858 + $0x30] sm:$0xff]
    %v1866 = vld [vmem:[%s1858 + $0x38] sm:$0xff]
    %v1899 = vunpack.c.l.b16 %v1824
    %v1900 = vunpack.c.h.b16 %v1824
    %v1901 = vunpack.c.l.b16 %v1825
    %v1902 = vunpack.c.h.b16 %v1825
    %v1903 = vunpack.c.l.b16 %v1826
    %v1904 = vunpack.c.h.b16 %v1826
    %v1905 = vunpack.c.l.b16 %v1827
    %v1906 = vunpack.c.h.b16 %v1827
    %v1907 = vunpack.c.l.b16 %v1828
    %v1908 = vunpack.c.h.b16 %v1828
    %v1909 = vunpack.c.l.b16 %v1829
    %v1910 = vunpack.c.h.b16 %v1829
    %v1911 = vunpack.c.l.b16 %v1830
    %v1912 = vunpack.c.h.b16 %v1830
    %v1913 = vunpack.c.l.b16 %v1831
    %v1914 = vunpack.c.h.b16 %v1831
    %v1915 = vunpack.c.l.b16 %v1832
    %v1916 = vunpack.c.h.b16 %v1832
    %v1917 = vunpack.c.l.b16 %v1833
    %v1918 = vunpack.c.h.b16 %v1833
    %v1919 = vunpack.c.l.b16 %v1834
    %v1920 = vunpack.c.h.b16 %v1834
    %v1921 = vunpack.c.l.b16 %v1835
    %v1922 = vunpack.c.h.b16 %v1835
    %v1923 = vunpack.c.l.b16 %v1836
    %v1924 = vunpack.c.h.b16 %v1836
    %v1925 = vunpack.c.l.b16 %v1837
    %v1926 = vunpack.c.h.b16 %v1837
    %v1927 = vunpack.c.l.b16 %v1838
    %v1928 = vunpack.c.h.b16 %v1838
    %v1929 = vunpack.c.l.b16 %v1839
    %v1930 = vunpack.c.h.b16 %v1839
    %v1931 = vunpack.c.l.b16 %v1840
    %v1932 = vunpack.c.h.b16 %v1840
    %v1933 = vunpack.c.l.b16 %v1841
    %v1934 = vunpack.c.h.b16 %v1841
    %v1935 = vunpack.c.l.b16 %v1842
    %v1936 = vunpack.c.h.b16 %v1842
    %v1937 = vunpack.c.l.b16 %v1843
    %v1938 = vunpack.c.h.b16 %v1843
    %v1939 = vunpack.c.l.b16 %v1844
    %v1940 = vunpack.c.h.b16 %v1844
    %v1941 = vunpack.c.l.b16 %v1845
    %v1942 = vunpack.c.h.b16 %v1845
    %v1943 = vunpack.c.l.b16 %v1846
    %v1944 = vunpack.c.h.b16 %v1846
    %v1945 = vunpack.c.l.b16 %v1847
    %v1946 = vunpack.c.h.b16 %v1847
    %v1947 = vunpack.c.l.b16 %v1848
    %v1948 = vunpack.c.h.b16 %v1848
    %v1949 = vunpack.c.l.b16 %v1849
    %v1950 = vunpack.c.h.b16 %v1849
    %v1951 = vunpack.c.l.b16 %v1850
    %v1952 = vunpack.c.h.b16 %v1850
    %v1953 = vunpack.c.l.b16 %v1851
    %v1954 = vunpack.c.h.b16 %v1851
    %v1955 = vunpack.c.l.b16 %v1852
    %v1956 = vunpack.c.h.b16 %v1852
    %v1957 = vunpack.c.l.b16 %v1853
    %v1958 = vunpack.c.h.b16 %v1853
    %v1959 = vunpack.c.l.b16 %v1854
    %v1960 = vunpack.c.h.b16 %v1854
    %v1961 = vunpack.c.l.b16 %v1855
    %v1962 = vunpack.c.h.b16 %v1855
    %v1963 = vpack.c.b16 %v1903, %v1899
    %v1964 = vpack.c.b16 %v1904, %v1900
    %v1965 = vpack.c.b16 %v1905, %v1901
    %v1966 = vpack.c.b16 %v1906, %v1902
    %v1967 = vpack.c.b16 %v1911, %v1907
    %v1968 = vpack.c.b16 %v1912, %v1908
    %v1969 = vpack.c.b16 %v1913, %v1909
    %v1970 = vpack.c.b16 %v1914, %v1910
    %v1971 = vpack.c.b16 %v1919, %v1915
    %v1972 = vpack.c.b16 %v1920, %v1916
    %v1973 = vpack.c.b16 %v1921, %v1917
    %v1974 = vpack.c.b16 %v1922, %v1918
    %v1975 = vpack.c.b16 %v1927, %v1923
    %v1976 = vpack.c.b16 %v1928, %v1924
    %v1977 = vpack.c.b16 %v1929, %v1925
    %v1978 = vpack.c.b16 %v1930, %v1926
    %v1979 = vpack.c.b16 %v1935, %v1931
    %v1980 = vpack.c.b16 %v1936, %v1932
    %v1981 = vpack.c.b16 %v1937, %v1933
    %v1982 = vpack.c.b16 %v1938, %v1934
    %v1983 = vpack.c.b16 %v1943, %v1939
    %v1984 = vpack.c.b16 %v1944, %v1940
    %v1985 = vpack.c.b16 %v1945, %v1941
    %v1986 = vpack.c.b16 %v1946, %v1942
    %v1987 = vpack.c.b16 %v1951, %v1947
    %v1988 = vpack.c.b16 %v1952, %v1948
    %v1989 = vpack.c.b16 %v1953, %v1949
    %v1990 = vpack.c.b16 %v1954, %v1950
    %v1991 = vpack.c.b16 %v1959, %v1955
    %v1992 = vpack.c.b16 %v1960, %v1956
    %v1993 = vpack.c.b16 %v1961, %v1957
    %v1994 = vpack.c.b16 %v1962, %v1958
    %2027 = vmatprep.subr.bf16.mxu0 %v1964
    %2028 = vmatpush1.bf16.msra.mxu0 %v1963
    %2029 = vmatprep.subr.bf16.mxu0 %v1968
    %2030 = vmatpush1.bf16.msra.mxu0 %v1967
    %2031 = vmatprep.subr.bf16.mxu0 %v1972
    %2032 = vmatpush1.bf16.msra.mxu0 %v1971
    %2033 = vmatprep.subr.bf16.mxu0 %v1976
    %2034 = vmatpush1.bf16.msra.mxu0 %v1975
    %2035 = vmatprep.subr.bf16.mxu0 %v1980
    %2036 = vmatpush1.bf16.msra.mxu0 %v1979
    %2037 = vmatprep.subr.bf16.mxu0 %v1984
    %2038 = vmatpush1.bf16.msra.mxu0 %v1983
    %2039 = vmatprep.subr.bf16.mxu0 %v1988
    %2040 = vmatpush1.bf16.msra.mxu0 %v1987
    %2041 = vmatprep.subr.bf16.mxu0 %v1992
    %2042 = vmatpush1.bf16.msra.mxu0 %v1991
    %2043 = vmatprep.subr.bf16.mxu0 0
    %2044 = vmatpush1.bf16.msra.mxu0 0
    %2045 = vmatprep.subr.bf16.mxu0 0
    %2046 = vmatpush1.bf16.msra.mxu0 0
    %2047 = vmatprep.subr.bf16.mxu0 0
    %2048 = vmatpush1.bf16.msra.mxu0 0
    %2049 = vmatprep.subr.bf16.mxu0 0
    %2050 = vmatpush1.bf16.msra.mxu0 0
    %2051 = vmatprep.subr.bf16.mxu0 0
    %2052 = vmatpush1.bf16.msra.mxu0 0
    %2053 = vmatprep.subr.bf16.mxu0 0
    %2054 = vmatpush1.bf16.msra.mxu0 0
    %2055 = vmatprep.subr.bf16.mxu0 0
    %2056 = vmatpush1.bf16.msra.mxu0 0
    %2057 = vmatprep.subr.bf16.mxu0 0
    %2058 = vmatpush1.bf16.msra.mxu0 0
    %2059 = vmatprep.mubr.bf16.mxu0 0
    %2060 = vmatmul.mubr.bf16.gmra.mrb[0].mxu0 %v1823
    %v2061 = vpop.f32.mrb[0].mxu0
    %v2062 = vadd.f32 %v1859, %v2061
    %v2063 = vpop.f32.mrb[0].mxu0
    %v2064 = vadd.f32 %v1860, %v2063
    %v2065 = vpop.f32.mrb[0].mxu0
    %v2066 = vadd.f32 %v1863, %v2065
    %v2067 = vpop.f32.mrb[0].mxu0
    %v2068 = vadd.f32 %v1864, %v2067
    %2069 = vdwg.mxu0
    %2070 = vmatprep.subr.bf16.mxu0 %v1966
    %2071 = vmatpush1.bf16.msra.mxu0 %v1965
    %2072 = vmatprep.subr.bf16.mxu0 %v1970
    %2073 = vmatpush1.bf16.msra.mxu0 %v1969
    %2074 = vmatprep.subr.bf16.mxu0 %v1974
    %2075 = vmatpush1.bf16.msra.mxu0 %v1973
    %2076 = vmatprep.subr.bf16.mxu0 %v1978
    %2077 = vmatpush1.bf16.msra.mxu0 %v1977
    %2078 = vmatprep.subr.bf16.mxu0 %v1982
    %2079 = vmatpush1.bf16.msra.mxu0 %v1981
    %2080 = vmatprep.subr.bf16.mxu0 %v1986
    %2081 = vmatpush1.bf16.msra.mxu0 %v1985
    %2082 = vmatprep.subr.bf16.mxu0 %v1990
    %2083 = vmatpush1.bf16.msra.mxu0 %v1989
    %2084 = vmatprep.subr.bf16.mxu0 %v1994
    %2085 = vmatpush1.bf16.msra.mxu0 %v1993
    %2086 = vmatprep.subr.bf16.mxu0 0
    %2087 = vmatpush1.bf16.msra.mxu0 0
    %2088 = vmatprep.subr.bf16.mxu0 0
    %2089 = vmatpush1.bf16.msra.mxu0 0
    %2090 = vmatprep.subr.bf16.mxu0 0
    %2091 = vmatpush1.bf16.msra.mxu0 0
    %2092 = vmatprep.subr.bf16.mxu0 0
    %2093 = vmatpush1.bf16.msra.mxu0 0
    %2094 = vmatprep.subr.bf16.mxu0 0
    %2095 = vmatpush1.bf16.msra.mxu0 0
    %2096 = vmatprep.subr.bf16.mxu0 0
    %2097 = vmatpush1.bf16.msra.mxu0 0
    %2098 = vmatprep.subr.bf16.mxu0 0
    %2099 = vmatpush1.bf16.msra.mxu0 0
    %2100 = vmatprep.subr.bf16.mxu0 0
    %2101 = vmatpush1.bf16.msra.mxu0 0
    %2102 = vmatprep.mubr.bf16.mxu0 0
    %2103 = vmatmul.mubr.bf16.gmra.mrb[0].mxu0 %v1823
    %v2104 = vpop.f32.mrb[0].mxu0
    %v2105 = vadd.f32 %v1861, %v2104
    %v2106 = vpop.f32.mrb[0].mxu0
    %v2107 = vadd.f32 %v1862, %v2106
    %v2108 = vpop.f32.mrb[0].mxu0
    %v2109 = vadd.f32 %v1865, %v2108
    %v2110 = vpop.f32.mrb[0].mxu0
    %v2111 = vadd.f32 %v1866, %v2110
    %2112 = vdwg.mxu0
    %v2113 = vmul.f32 %v2062, 0.5
    %v2114 = vmul.f32 %v2066, 0.5
    %v2115 = vtanh.pop %v2113
    %v2116 = vtanh.pop %v2114
    %v2117 = vmul.f32 %v2115, 0.5
    %v2118 = vmul.f32 %v2116, 0.5
    %v2119 = vadd.f32 %v2117, 0.5
    %v2120 = vadd.f32 %v2118, 0.5
    %v2121 = vmul.f32 %v2064, 0.5
    %v2122 = vmul.f32 %v2068, 0.5
    %v2123 = vtanh.pop %v2121
    %v2124 = vtanh.pop %v2122
    %v2125 = vmul.f32 %v2123, 0.5
    %v2126 = vmul.f32 %v2124, 0.5
    %v2127 = vadd.f32 %v2125, 0.5
    %v2128 = vadd.f32 %v2126, 0.5
    %v2129 = vtanh.pop %v2105
    %v2130 = vtanh.pop %v2109
    %v2131 = vmul.f32 %v2107, 0.5
    %v2132 = vmul.f32 %v2111, 0.5
    %v2133 = vtanh.pop %v2131
    %v2134 = vtanh.pop %v2132
    %v2135 = vmul.f32 %v2133, 0.5
    %v2136 = vmul.f32 %v2134, 0.5
    %v2137 = vadd.f32 %v2135, 0.5
    %v2138 = vadd.f32 %v2136, 0.5
    %v2139 = vmul.f32 %v2127, %v1821
    %v2140 = vmul.f32 %v2128, %v1822
    %v2141 = vmul.f32 %v2119, %v2129
    %v2142 = vmul.f32 %v2120, %v2130
    %v2143 = vadd.f32 %v2139, %v2141
    %v2144 = vadd.f32 %v2140, %v2142
    %v2145 = vtanh.pop %v2143
    %v2146 = vtanh.pop %v2144
    %v2147 = vmul.f32 %v2137, %v2145
    %v2148 = vmul.f32 %v2138, %v2146
    %s2149 = scalar_lea.vmem [#allocation8], 64
    %2150 = vst [vmem:[%s2149] sm:$0xff] %v2147
    %2151 = vst [vmem:[%s2149 + $0x8] sm:$0xff] %v2148
    %2152 = vst [vmem:[#allocation2] sm:$0xff] %v2147
    %2153 = vst [vmem:[#allocation2 + $0x8] sm:$0xff] %v2148
    %2154 = vst [vmem:[#allocation3] sm:$0xff] %v2143
    %2155 = vst [vmem:[#allocation3 + $0x8] sm:$0xff] %v2144
    %v2156 = vld [vmem:[#allocation2] sm:$0xff]
    %v2157 = vld [vmem:[#allocation2 + $0x8] sm:$0xff]
    %v2158 = vld [vmem:[#allocation3] sm:$0xff]
    %v2159 = vld [vmem:[#allocation3 + $0x8] sm:$0xff]
    %v2160 = vpack.c.bf16 %v2157, %v2156
    %v2161 = vld [vmem:[#allocation5] sm:$0xff]
    %v2162 = vld [vmem:[#allocation5 + $0x8] sm:$0xff]
    %v2163 = vld [vmem:[#allocation5 + $0x10] sm:$0xff]
    %v2164 = vld [vmem:[#allocation5 + $0x18] sm:$0xff]
    %v2165 = vld [vmem:[#allocation5 + $0x20] sm:$0xff]
    %v2166 = vld [vmem:[#allocation5 + $0x28] sm:$0xff]
    %v2167 = vld [vmem:[#allocation5 + $0x30] sm:$0xff]
    %v2168 = vld [vmem:[#allocation5 + $0x38] sm:$0xff]
    %v2169 = vld [vmem:[#allocation5 + $0x40] sm:$0xff]
    %v2170 = vld [vmem:[#allocation5 + $0x48] sm:$0xff]
    %v2171 = vld [vmem:[#allocation5 + $0x50] sm:$0xff]
    %v2172 = vld [vmem:[#allocation5 + $0x58] sm:$0xff]
    %v2173 = vld [vmem:[#allocation5 + $0x60] sm:$0xff]
    %v2174 = vld [vmem:[#allocation5 + $0x68] sm:$0xff]
    %v2175 = vld [vmem:[#allocation5 + $0x70] sm:$0xff]
    %v2176 = vld [vmem:[#allocation5 + $0x78] sm:$0xff]
    %v2177 = vld [vmem:[#allocation5 + $0x80] sm:$0xff]
    %v2178 = vld [vmem:[#allocation5 + $0x88] sm:$0xff]
    %v2179 = vld [vmem:[#allocation5 + $0x90] sm:$0xff]
    %v2180 = vld [vmem:[#allocation5 + $0x98] sm:$0xff]
    %v2181 = vld [vmem:[#allocation5 + $0xa0] sm:$0xff]
    %v2182 = vld [vmem:[#allocation5 + $0xa8] sm:$0xff]
    %v2183 = vld [vmem:[#allocation5 + $0xb0] sm:$0xff]
    %v2184 = vld [vmem:[#allocation5 + $0xb8] sm:$0xff]
    %v2185 = vld [vmem:[#allocation5 + $0xc0] sm:$0xff]
    %v2186 = vld [vmem:[#allocation5 + $0xc8] sm:$0xff]
    %v2187 = vld [vmem:[#allocation5 + $0xd0] sm:$0xff]
    %v2188 = vld [vmem:[#allocation5 + $0xd8] sm:$0xff]
    %v2189 = vld [vmem:[#allocation5 + $0xe0] sm:$0xff]
    %v2190 = vld [vmem:[#allocation5 + $0xe8] sm:$0xff]
    %v2191 = vld [vmem:[#allocation5 + $0xf0] sm:$0xff]
    %v2192 = vld [vmem:[#allocation5 + $0xf8] sm:$0xff]
    %s2193 = smul.u32 10, 4
    %s2194 = smul.addr %s2193, 8
    %s2195 = scalar_lea.vmem [#allocation4], %s2194
    %v2196 = vld [vmem:[%s2195] sm:$0xff]
    %v2197 = vld [vmem:[%s2195 + $0x8] sm:$0xff]
    %v2198 = vld [vmem:[%s2195 + $0x10] sm:$0xff]
    %v2199 = vld [vmem:[%s2195 + $0x18] sm:$0xff]
    %v2200 = vld [vmem:[%s2195 + $0x20] sm:$0xff]
    %v2201 = vld [vmem:[%s2195 + $0x28] sm:$0xff]
    %v2202 = vld [vmem:[%s2195 + $0x30] sm:$0xff]
    %v2203 = vld [vmem:[%s2195 + $0x38] sm:$0xff]
    %v2236 = vunpack.c.l.b16 %v2161
    %v2237 = vunpack.c.h.b16 %v2161
    %v2238 = vunpack.c.l.b16 %v2162
    %v2239 = vunpack.c.h.b16 %v2162
    %v2240 = vunpack.c.l.b16 %v2163
    %v2241 = vunpack.c.h.b16 %v2163
    %v2242 = vunpack.c.l.b16 %v2164
    %v2243 = vunpack.c.h.b16 %v2164
    %v2244 = vunpack.c.l.b16 %v2165
    %v2245 = vunpack.c.h.b16 %v2165
    %v2246 = vunpack.c.l.b16 %v2166
    %v2247 = vunpack.c.h.b16 %v2166
    %v2248 = vunpack.c.l.b16 %v2167
    %v2249 = vunpack.c.h.b16 %v2167
    %v2250 = vunpack.c.l.b16 %v2168
    %v2251 = vunpack.c.h.b16 %v2168
    %v2252 = vunpack.c.l.b16 %v2169
    %v2253 = vunpack.c.h.b16 %v2169
    %v2254 = vunpack.c.l.b16 %v2170
    %v2255 = vunpack.c.h.b16 %v2170
    %v2256 = vunpack.c.l.b16 %v2171
    %v2257 = vunpack.c.h.b16 %v2171
    %v2258 = vunpack.c.l.b16 %v2172
    %v2259 = vunpack.c.h.b16 %v2172
    %v2260 = vunpack.c.l.b16 %v2173
    %v2261 = vunpack.c.h.b16 %v2173
    %v2262 = vunpack.c.l.b16 %v2174
    %v2263 = vunpack.c.h.b16 %v2174
    %v2264 = vunpack.c.l.b16 %v2175
    %v2265 = vunpack.c.h.b16 %v2175
    %v2266 = vunpack.c.l.b16 %v2176
    %v2267 = vunpack.c.h.b16 %v2176
    %v2268 = vunpack.c.l.b16 %v2177
    %v2269 = vunpack.c.h.b16 %v2177
    %v2270 = vunpack.c.l.b16 %v2178
    %v2271 = vunpack.c.h.b16 %v2178
    %v2272 = vunpack.c.l.b16 %v2179
    %v2273 = vunpack.c.h.b16 %v2179
    %v2274 = vunpack.c.l.b16 %v2180
    %v2275 = vunpack.c.h.b16 %v2180
    %v2276 = vunpack.c.l.b16 %v2181
    %v2277 = vunpack.c.h.b16 %v2181
    %v2278 = vunpack.c.l.b16 %v2182
    %v2279 = vunpack.c.h.b16 %v2182
    %v2280 = vunpack.c.l.b16 %v2183
    %v2281 = vunpack.c.h.b16 %v2183
    %v2282 = vunpack.c.l.b16 %v2184
    %v2283 = vunpack.c.h.b16 %v2184
    %v2284 = vunpack.c.l.b16 %v2185
    %v2285 = vunpack.c.h.b16 %v2185
    %v2286 = vunpack.c.l.b16 %v2186
    %v2287 = vunpack.c.h.b16 %v2186
    %v2288 = vunpack.c.l.b16 %v2187
    %v2289 = vunpack.c.h.b16 %v2187
    %v2290 = vunpack.c.l.b16 %v2188
    %v2291 = vunpack.c.h.b16 %v2188
    %v2292 = vunpack.c.l.b16 %v2189
    %v2293 = vunpack.c.h.b16 %v2189
    %v2294 = vunpack.c.l.b16 %v2190
    %v2295 = vunpack.c.h.b16 %v2190
    %v2296 = vunpack.c.l.b16 %v2191
    %v2297 = vunpack.c.h.b16 %v2191
    %v2298 = vunpack.c.l.b16 %v2192
    %v2299 = vunpack.c.h.b16 %v2192
    %v2300 = vpack.c.b16 %v2240, %v2236
    %v2301 = vpack.c.b16 %v2241, %v2237
    %v2302 = vpack.c.b16 %v2242, %v2238
    %v2303 = vpack.c.b16 %v2243, %v2239
    %v2304 = vpack.c.b16 %v2248, %v2244
    %v2305 = vpack.c.b16 %v2249, %v2245
    %v2306 = vpack.c.b16 %v2250, %v2246
    %v2307 = vpack.c.b16 %v2251, %v2247
    %v2308 = vpack.c.b16 %v2256, %v2252
    %v2309 = vpack.c.b16 %v2257, %v2253
    %v2310 = vpack.c.b16 %v2258, %v2254
    %v2311 = vpack.c.b16 %v2259, %v2255
    %v2312 = vpack.c.b16 %v2264, %v2260
    %v2313 = vpack.c.b16 %v2265, %v2261
    %v2314 = vpack.c.b16 %v2266, %v2262
    %v2315 = vpack.c.b16 %v2267, %v2263
    %v2316 = vpack.c.b16 %v2272, %v2268
    %v2317 = vpack.c.b16 %v2273, %v2269
    %v2318 = vpack.c.b16 %v2274, %v2270
    %v2319 = vpack.c.b16 %v2275, %v2271
    %v2320 = vpack.c.b16 %v2280, %v2276
    %v2321 = vpack.c.b16 %v2281, %v2277
    %v2322 = vpack.c.b16 %v2282, %v2278
    %v2323 = vpack.c.b16 %v2283, %v2279
    %v2324 = vpack.c.b16 %v2288, %v2284
    %v2325 = vpack.c.b16 %v2289, %v2285
    %v2326 = vpack.c.b16 %v2290, %v2286
    %v2327 = vpack.c.b16 %v2291, %v2287
    %v2328 = vpack.c.b16 %v2296, %v2292
    %v2329 = vpack.c.b16 %v2297, %v2293
    %v2330 = vpack.c.b16 %v2298, %v2294
    %v2331 = vpack.c.b16 %v2299, %v2295
    %2364 = vmatprep.subr.bf16.mxu0 %v2301
    %2365 = vmatpush1.bf16.msra.mxu0 %v2300
    %2366 = vmatprep.subr.bf16.mxu0 %v2305
    %2367 = vmatpush1.bf16.msra.mxu0 %v2304
    %2368 = vmatprep.subr.bf16.mxu0 %v2309
    %2369 = vmatpush1.bf16.msra.mxu0 %v2308
    %2370 = vmatprep.subr.bf16.mxu0 %v2313
    %2371 = vmatpush1.bf16.msra.mxu0 %v2312
    %2372 = vmatprep.subr.bf16.mxu0 %v2317
    %2373 = vmatpush1.bf16.msra.mxu0 %v2316
    %2374 = vmatprep.subr.bf16.mxu0 %v2321
    %2375 = vmatpush1.bf16.msra.mxu0 %v2320
    %2376 = vmatprep.subr.bf16.mxu0 %v2325
    %2377 = vmatpush1.bf16.msra.mxu0 %v2324
    %2378 = vmatprep.subr.bf16.mxu0 %v2329
    %2379 = vmatpush1.bf16.msra.mxu0 %v2328
    %2380 = vmatprep.subr.bf16.mxu0 0
    %2381 = vmatpush1.bf16.msra.mxu0 0
    %2382 = vmatprep.subr.bf16.mxu0 0
    %2383 = vmatpush1.bf16.msra.mxu0 0
    %2384 = vmatprep.subr.bf16.mxu0 0
    %2385 = vmatpush1.bf16.msra.mxu0 0
    %2386 = vmatprep.subr.bf16.mxu0 0
    %2387 = vmatpush1.bf16.msra.mxu0 0
    %2388 = vmatprep.subr.bf16.mxu0 0
    %2389 = vmatpush1.bf16.msra.mxu0 0
    %2390 = vmatprep.subr.bf16.mxu0 0
    %2391 = vmatpush1.bf16.msra.mxu0 0
    %2392 = vmatprep.subr.bf16.mxu0 0
    %2393 = vmatpush1.bf16.msra.mxu0 0
    %2394 = vmatprep.subr.bf16.mxu0 0
    %2395 = vmatpush1.bf16.msra.mxu0 0
    %2396 = vmatprep.mubr.bf16.mxu0 0
    %2397 = vmatmul.mubr.bf16.gmra.mrb[0].mxu0 %v2160
    %v2398 = vpop.f32.mrb[0].mxu0
    %v2399 = vadd.f32 %v2196, %v2398
    %v2400 = vpop.f32.mrb[0].mxu0
    %v2401 = vadd.f32 %v2197, %v2400
    %v2402 = vpop.f32.mrb[0].mxu0
    %v2403 = vadd.f32 %v2200, %v2402
    %v2404 = vpop.f32.mrb[0].mxu0
    %v2405 = vadd.f32 %v2201, %v2404
    %2406 = vdwg.mxu0
    %2407 = vmatprep.subr.bf16.mxu0 %v2303
    %2408 = vmatpush1.bf16.msra.mxu0 %v2302
    %2409 = vmatprep.subr.bf16.mxu0 %v2307
    %2410 = vmatpush1.bf16.msra.mxu0 %v2306
    %2411 = vmatprep.subr.bf16.mxu0 %v2311
    %2412 = vmatpush1.bf16.msra.mxu0 %v2310
    %2413 = vmatprep.subr.bf16.mxu0 %v2315
    %2414 = vmatpush1.bf16.msra.mxu0 %v2314
    %2415 = vmatprep.subr.bf16.mxu0 %v2319
    %2416 = vmatpush1.bf16.msra.mxu0 %v2318
    %2417 = vmatprep.subr.bf16.mxu0 %v2323
    %2418 = vmatpush1.bf16.msra.mxu0 %v2322
    %2419 = vmatprep.subr.bf16.mxu0 %v2327
    %2420 = vmatpush1.bf16.msra.mxu0 %v2326
    %2421 = vmatprep.subr.bf16.mxu0 %v2331
    %2422 = vmatpush1.bf16.msra.mxu0 %v2330
    %2423 = vmatprep.subr.bf16.mxu0 0
    %2424 = vmatpush1.bf16.msra.mxu0 0
    %2425 = vmatprep.subr.bf16.mxu0 0
    %2426 = vmatpush1.bf16.msra.mxu0 0
    %2427 = vmatprep.subr.bf16.mxu0 0
    %2428 = vmatpush1.bf16.msra.mxu0 0
    %2429 = vmatprep.subr.bf16.mxu0 0
    %2430 = vmatpush1.bf16.msra.mxu0 0
    %2431 = vmatprep.subr.bf16.mxu0 0
    %2432 = vmatpush1.bf16.msra.mxu0 0
    %2433 = vmatprep.subr.bf16.mxu0 0
    %2434 = vmatpush1.bf16.msra.mxu0 0
    %2435 = vmatprep.subr.bf16.mxu0 0
    %2436 = vmatpush1.bf16.msra.mxu0 0
    %2437 = vmatprep.subr.bf16.mxu0 0
    %2438 = vmatpush1.bf16.msra.mxu0 0
    %2439 = vmatprep.mubr.bf16.mxu0 0
    %2440 = vmatmul.mubr.bf16.gmra.mrb[0].mxu0 %v2160
    %v2441 = vpop.f32.mrb[0].mxu0
    %v2442 = vadd.f32 %v2198, %v2441
    %v2443 = vpop.f32.mrb[0].mxu0
    %v2444 = vadd.f32 %v2199, %v2443
    %v2445 = vpop.f32.mrb[0].mxu0
    %v2446 = vadd.f32 %v2202, %v2445
    %v2447 = vpop.f32.mrb[0].mxu0
    %v2448 = vadd.f32 %v2203, %v2447
    %2449 = vdwg.mxu0
    %v2450 = vmul.f32 %v2399, 0.5
    %v2451 = vmul.f32 %v2403, 0.5
    %v2452 = vtanh.pop %v2450
    %v2453 = vtanh.pop %v2451
    %v2454 = vmul.f32 %v2452, 0.5
    %v2455 = vmul.f32 %v2453, 0.5
    %v2456 = vadd.f32 %v2454, 0.5
    %v2457 = vadd.f32 %v2455, 0.5
    %v2458 = vmul.f32 %v2401, 0.5
    %v2459 = vmul.f32 %v2405, 0.5
    %v2460 = vtanh.pop %v2458
    %v2461 = vtanh.pop %v2459
    %v2462 = vmul.f32 %v2460, 0.5
    %v2463 = vmul.f32 %v2461, 0.5
    %v2464 = vadd.f32 %v2462, 0.5
    %v2465 = vadd.f32 %v2463, 0.5
    %v2466 = vtanh.pop %v2442
    %v2467 = vtanh.pop %v2446
    %v2468 = vmul.f32 %v2444, 0.5
    %v2469 = vmul.f32 %v2448, 0.5
    %v2470 = vtanh.pop %v2468
    %v2471 = vtanh.pop %v2469
    %v2472 = vmul.f32 %v2470, 0.5
    %v2473 = vmul.f32 %v2471, 0.5
    %v2474 = vadd.f32 %v2472, 0.5
    %v2475 = vadd.f32 %v2473, 0.5
    %v2476 = vmul.f32 %v2464, %v2158
    %v2477 = vmul.f32 %v2465, %v2159
    %v2478 = vmul.f32 %v2456, %v2466
    %v2479 = vmul.f32 %v2457, %v2467
    %v2480 = vadd.f32 %v2476, %v2478
    %v2481 = vadd.f32 %v2477, %v2479
    %v2482 = vtanh.pop %v2480
    %v2483 = vtanh.pop %v2481
    %v2484 = vmul.f32 %v2474, %v2482
    %v2485 = vmul.f32 %v2475, %v2483
    %s2486 = scalar_lea.vmem [#allocation8], 80
    %2487 = vst [vmem:[%s2486] sm:$0xff] %v2484
    %2488 = vst [vmem:[%s2486 + $0x8] sm:$0xff] %v2485
    %2489 = vst [vmem:[#allocation2] sm:$0xff] %v2484
    %2490 = vst [vmem:[#allocation2 + $0x8] sm:$0xff] %v2485
    %2491 = vst [vmem:[#allocation3] sm:$0xff] %v2480
    %2492 = vst [vmem:[#allocation3 + $0x8] sm:$0xff] %v2481
    %v2493 = vld [vmem:[#allocation2] sm:$0xff]
    %v2494 = vld [vmem:[#allocation2 + $0x8] sm:$0xff]
    %v2495 = vld [vmem:[#allocation3] sm:$0xff]
    %v2496 = vld [vmem:[#allocation3 + $0x8] sm:$0xff]
    %v2497 = vpack.c.bf16 %v2494, %v2493
    %v2498 = vld [vmem:[#allocation5] sm:$0xff]
    %v2499 = vld [vmem:[#allocation5 + $0x8] sm:$0xff]
    %v2500 = vld [vmem:[#allocation5 + $0x10] sm:$0xff]
    %v2501 = vld [vmem:[#allocation5 + $0x18] sm:$0xff]
    %v2502 = vld [vmem:[#allocation5 + $0x20] sm:$0xff]
    %v2503 = vld [vmem:[#allocation5 + $0x28] sm:$0xff]
    %v2504 = vld [vmem:[#allocation5 + $0x30] sm:$0xff]
    %v2505 = vld [vmem:[#allocation5 + $0x38] sm:$0xff]
    %v2506 = vld [vmem:[#allocation5 + $0x40] sm:$0xff]
    %v2507 = vld [vmem:[#allocation5 + $0x48] sm:$0xff]
    %v2508 = vld [vmem:[#allocation5 + $0x50] sm:$0xff]
    %v2509 = vld [vmem:[#allocation5 + $0x58] sm:$0xff]
    %v2510 = vld [vmem:[#allocation5 + $0x60] sm:$0xff]
    %v2511 = vld [vmem:[#allocation5 + $0x68] sm:$0xff]
    %v2512 = vld [vmem:[#allocation5 + $0x70] sm:$0xff]
    %v2513 = vld [vmem:[#allocation5 + $0x78] sm:$0xff]
    %v2514 = vld [vmem:[#allocation5 + $0x80] sm:$0xff]
    %v2515 = vld [vmem:[#allocation5 + $0x88] sm:$0xff]
    %v2516 = vld [vmem:[#allocation5 + $0x90] sm:$0xff]
    %v2517 = vld [vmem:[#allocation5 + $0x98] sm:$0xff]
    %v2518 = vld [vmem:[#allocation5 + $0xa0] sm:$0xff]
    %v2519 = vld [vmem:[#allocation5 + $0xa8] sm:$0xff]
    %v2520 = vld [vmem:[#allocation5 + $0xb0] sm:$0xff]
    %v2521 = vld [vmem:[#allocation5 + $0xb8] sm:$0xff]
    %v2522 = vld [vmem:[#allocation5 + $0xc0] sm:$0xff]
    %v2523 = vld [vmem:[#allocation5 + $0xc8] sm:$0xff]
    %v2524 = vld [vmem:[#allocation5 + $0xd0] sm:$0xff]
    %v2525 = vld [vmem:[#allocation5 + $0xd8] sm:$0xff]
    %v2526 = vld [vmem:[#allocation5 + $0xe0] sm:$0xff]
    %v2527 = vld [vmem:[#allocation5 + $0xe8] sm:$0xff]
    %v2528 = vld [vmem:[#allocation5 + $0xf0] sm:$0xff]
    %v2529 = vld [vmem:[#allocation5 + $0xf8] sm:$0xff]
    %s2530 = smul.u32 12, 4
    %s2531 = smul.addr %s2530, 8
    %s2532 = scalar_lea.vmem [#allocation4], %s2531
    %v2533 = vld [vmem:[%s2532] sm:$0xff]
    %v2534 = vld [vmem:[%s2532 + $0x8] sm:$0xff]
    %v2535 = vld [vmem:[%s2532 + $0x10] sm:$0xff]
    %v2536 = vld [vmem:[%s2532 + $0x18] sm:$0xff]
    %v2537 = vld [vmem:[%s2532 + $0x20] sm:$0xff]
    %v2538 = vld [vmem:[%s2532 + $0x28] sm:$0xff]
    %v2539 = vld [vmem:[%s2532 + $0x30] sm:$0xff]
    %v2540 = vld [vmem:[%s2532 + $0x38] sm:$0xff]
    %v2573 = vunpack.c.l.b16 %v2498
    %v2574 = vunpack.c.h.b16 %v2498
    %v2575 = vunpack.c.l.b16 %v2499
    %v2576 = vunpack.c.h.b16 %v2499
    %v2577 = vunpack.c.l.b16 %v2500
    %v2578 = vunpack.c.h.b16 %v2500
    %v2579 = vunpack.c.l.b16 %v2501
    %v2580 = vunpack.c.h.b16 %v2501
    %v2581 = vunpack.c.l.b16 %v2502
    %v2582 = vunpack.c.h.b16 %v2502
    %v2583 = vunpack.c.l.b16 %v2503
    %v2584 = vunpack.c.h.b16 %v2503
    %v2585 = vunpack.c.l.b16 %v2504
    %v2586 = vunpack.c.h.b16 %v2504
    %v2587 = vunpack.c.l.b16 %v2505
    %v2588 = vunpack.c.h.b16 %v2505
    %v2589 = vunpack.c.l.b16 %v2506
    %v2590 = vunpack.c.h.b16 %v2506
    %v2591 = vunpack.c.l.b16 %v2507
    %v2592 = vunpack.c.h.b16 %v2507
    %v2593 = vunpack.c.l.b16 %v2508
    %v2594 = vunpack.c.h.b16 %v2508
    %v2595 = vunpack.c.l.b16 %v2509
    %v2596 = vunpack.c.h.b16 %v2509
    %v2597 = vunpack.c.l.b16 %v2510
    %v2598 = vunpack.c.h.b16 %v2510
    %v2599 = vunpack.c.l.b16 %v2511
    %v2600 = vunpack.c.h.b16 %v2511
    %v2601 = vunpack.c.l.b16 %v2512
    %v2602 = vunpack.c.h.b16 %v2512
    %v2603 = vunpack.c.l.b16 %v2513
    %v2604 = vunpack.c.h.b16 %v2513
    %v2605 = vunpack.c.l.b16 %v2514
    %v2606 = vunpack.c.h.b16 %v2514
    %v2607 = vunpack.c.l.b16 %v2515
    %v2608 = vunpack.c.h.b16 %v2515
    %v2609 = vunpack.c.l.b16 %v2516
    %v2610 = vunpack.c.h.b16 %v2516
    %v2611 = vunpack.c.l.b16 %v2517
    %v2612 = vunpack.c.h.b16 %v2517
    %v2613 = vunpack.c.l.b16 %v2518
    %v2614 = vunpack.c.h.b16 %v2518
    %v2615 = vunpack.c.l.b16 %v2519
    %v2616 = vunpack.c.h.b16 %v2519
    %v2617 = vunpack.c.l.b16 %v2520
    %v2618 = vunpack.c.h.b16 %v2520
    %v2619 = vunpack.c.l.b16 %v2521
    %v2620 = vunpack.c.h.b16 %v2521
    %v2621 = vunpack.c.l.b16 %v2522
    %v2622 = vunpack.c.h.b16 %v2522
    %v2623 = vunpack.c.l.b16 %v2523
    %v2624 = vunpack.c.h.b16 %v2523
    %v2625 = vunpack.c.l.b16 %v2524
    %v2626 = vunpack.c.h.b16 %v2524
    %v2627 = vunpack.c.l.b16 %v2525
    %v2628 = vunpack.c.h.b16 %v2525
    %v2629 = vunpack.c.l.b16 %v2526
    %v2630 = vunpack.c.h.b16 %v2526
    %v2631 = vunpack.c.l.b16 %v2527
    %v2632 = vunpack.c.h.b16 %v2527
    %v2633 = vunpack.c.l.b16 %v2528
    %v2634 = vunpack.c.h.b16 %v2528
    %v2635 = vunpack.c.l.b16 %v2529
    %v2636 = vunpack.c.h.b16 %v2529
    %v2637 = vpack.c.b16 %v2577, %v2573
    %v2638 = vpack.c.b16 %v2578, %v2574
    %v2639 = vpack.c.b16 %v2579, %v2575
    %v2640 = vpack.c.b16 %v2580, %v2576
    %v2641 = vpack.c.b16 %v2585, %v2581
    %v2642 = vpack.c.b16 %v2586, %v2582
    %v2643 = vpack.c.b16 %v2587, %v2583
    %v2644 = vpack.c.b16 %v2588, %v2584
    %v2645 = vpack.c.b16 %v2593, %v2589
    %v2646 = vpack.c.b16 %v2594, %v2590
    %v2647 = vpack.c.b16 %v2595, %v2591
    %v2648 = vpack.c.b16 %v2596, %v2592
    %v2649 = vpack.c.b16 %v2601, %v2597
    %v2650 = vpack.c.b16 %v2602, %v2598
    %v2651 = vpack.c.b16 %v2603, %v2599
    %v2652 = vpack.c.b16 %v2604, %v2600
    %v2653 = vpack.c.b16 %v2609, %v2605
    %v2654 = vpack.c.b16 %v2610, %v2606
    %v2655 = vpack.c.b16 %v2611, %v2607
    %v2656 = vpack.c.b16 %v2612, %v2608
    %v2657 = vpack.c.b16 %v2617, %v2613
    %v2658 = vpack.c.b16 %v2618, %v2614
    %v2659 = vpack.c.b16 %v2619, %v2615
    %v2660 = vpack.c.b16 %v2620, %v2616
    %v2661 = vpack.c.b16 %v2625, %v2621
    %v2662 = vpack.c.b16 %v2626, %v2622
    %v2663 = vpack.c.b16 %v2627, %v2623
    %v2664 = vpack.c.b16 %v2628, %v2624
    %v2665 = vpack.c.b16 %v2633, %v2629
    %v2666 = vpack.c.b16 %v2634, %v2630
    %v2667 = vpack.c.b16 %v2635, %v2631
    %v2668 = vpack.c.b16 %v2636, %v2632
    %2701 = vmatprep.subr.bf16.mxu0 %v2638
    %2702 = vmatpush1.bf16.msra.mxu0 %v2637
    %2703 = vmatprep.subr.bf16.mxu0 %v2642
    %2704 = vmatpush1.bf16.msra.mxu0 %v2641
    %2705 = vmatprep.subr.bf16.mxu0 %v2646
    %2706 = vmatpush1.bf16.msra.mxu0 %v2645
    %2707 = vmatprep.subr.bf16.mxu0 %v2650
    %2708 = vmatpush1.bf16.msra.mxu0 %v2649
    %2709 = vmatprep.subr.bf16.mxu0 %v2654
    %2710 = vmatpush1.bf16.msra.mxu0 %v2653
    %2711 = vmatprep.subr.bf16.mxu0 %v2658
    %2712 = vmatpush1.bf16.msra.mxu0 %v2657
    %2713 = vmatprep.subr.bf16.mxu0 %v2662
    %2714 = vmatpush1.bf16.msra.mxu0 %v2661
    %2715 = vmatprep.subr.bf16.mxu0 %v2666
    %2716 = vmatpush1.bf16.msra.mxu0 %v2665
    %2717 = vmatprep.subr.bf16.mxu0 0
    %2718 = vmatpush1.bf16.msra.mxu0 0
    %2719 = vmatprep.subr.bf16.mxu0 0
    %2720 = vmatpush1.bf16.msra.mxu0 0
    %2721 = vmatprep.subr.bf16.mxu0 0
    %2722 = vmatpush1.bf16.msra.mxu0 0
    %2723 = vmatprep.subr.bf16.mxu0 0
    %2724 = vmatpush1.bf16.msra.mxu0 0
    %2725 = vmatprep.subr.bf16.mxu0 0
    %2726 = vmatpush1.bf16.msra.mxu0 0
    %2727 = vmatprep.subr.bf16.mxu0 0
    %2728 = vmatpush1.bf16.msra.mxu0 0
    %2729 = vmatprep.subr.bf16.mxu0 0
    %2730 = vmatpush1.bf16.msra.mxu0 0
    %2731 = vmatprep.subr.bf16.mxu0 0
    %2732 = vmatpush1.bf16.msra.mxu0 0
    %2733 = vmatprep.mubr.bf16.mxu0 0
    %2734 = vmatmul.mubr.bf16.gmra.mrb[0].mxu0 %v2497
    %v2735 = vpop.f32.mrb[0].mxu0
    %v2736 = vadd.f32 %v2533, %v2735
    %v2737 = vpop.f32.mrb[0].mxu0
    %v2738 = vadd.f32 %v2534, %v2737
    %v2739 = vpop.f32.mrb[0].mxu0
    %v2740 = vadd.f32 %v2537, %v2739
    %v2741 = vpop.f32.mrb[0].mxu0
    %v2742 = vadd.f32 %v2538, %v2741
    %2743 = vdwg.mxu0
    %2744 = vmatprep.subr.bf16.mxu0 %v2640
    %2745 = vmatpush1.bf16.msra.mxu0 %v2639
    %2746 = vmatprep.subr.bf16.mxu0 %v2644
    %2747 = vmatpush1.bf16.msra.mxu0 %v2643
    %2748 = vmatprep.subr.bf16.mxu0 %v2648
    %2749 = vmatpush1.bf16.msra.mxu0 %v2647
    %2750 = vmatprep.subr.bf16.mxu0 %v2652
    %2751 = vmatpush1.bf16.msra.mxu0 %v2651
    %2752 = vmatprep.subr.bf16.mxu0 %v2656
    %2753 = vmatpush1.bf16.msra.mxu0 %v2655
    %2754 = vmatprep.subr.bf16.mxu0 %v2660
    %2755 = vmatpush1.bf16.msra.mxu0 %v2659
    %2756 = vmatprep.subr.bf16.mxu0 %v2664
    %2757 = vmatpush1.bf16.msra.mxu0 %v2663
    %2758 = vmatprep.subr.bf16.mxu0 %v2668
    %2759 = vmatpush1.bf16.msra.mxu0 %v2667
    %2760 = vmatprep.subr.bf16.mxu0 0
    %2761 = vmatpush1.bf16.msra.mxu0 0
    %2762 = vmatprep.subr.bf16.mxu0 0
    %2763 = vmatpush1.bf16.msra.mxu0 0
    %2764 = vmatprep.subr.bf16.mxu0 0
    %2765 = vmatpush1.bf16.msra.mxu0 0
    %2766 = vmatprep.subr.bf16.mxu0 0
    %2767 = vmatpush1.bf16.msra.mxu0 0
    %2768 = vmatprep.subr.bf16.mxu0 0
    %2769 = vmatpush1.bf16.msra.mxu0 0
    %2770 = vmatprep.subr.bf16.mxu0 0
    %2771 = vmatpush1.bf16.msra.mxu0 0
    %2772 = vmatprep.subr.bf16.mxu0 0
    %2773 = vmatpush1.bf16.msra.mxu0 0
    %2774 = vmatprep.subr.bf16.mxu0 0
    %2775 = vmatpush1.bf16.msra.mxu0 0
    %2776 = vmatprep.mubr.bf16.mxu0 0
    %2777 = vmatmul.mubr.bf16.gmra.mrb[0].mxu0 %v2497
    %v2778 = vpop.f32.mrb[0].mxu0
    %v2779 = vadd.f32 %v2535, %v2778
    %v2780 = vpop.f32.mrb[0].mxu0
    %v2781 = vadd.f32 %v2536, %v2780
    %v2782 = vpop.f32.mrb[0].mxu0
    %v2783 = vadd.f32 %v2539, %v2782
    %v2784 = vpop.f32.mrb[0].mxu0
    %v2785 = vadd.f32 %v2540, %v2784
    %2786 = vdwg.mxu0
    %v2787 = vmul.f32 %v2736, 0.5
    %v2788 = vmul.f32 %v2740, 0.5
    %v2789 = vtanh.pop %v2787
    %v2790 = vtanh.pop %v2788
    %v2791 = vmul.f32 %v2789, 0.5
    %v2792 = vmul.f32 %v2790, 0.5
    %v2793 = vadd.f32 %v2791, 0.5
    %v2794 = vadd.f32 %v2792, 0.5
    %v2795 = vmul.f32 %v2738, 0.5
    %v2796 = vmul.f32 %v2742, 0.5
    %v2797 = vtanh.pop %v2795
    %v2798 = vtanh.pop %v2796
    %v2799 = vmul.f32 %v2797, 0.5
    %v2800 = vmul.f32 %v2798, 0.5
    %v2801 = vadd.f32 %v2799, 0.5
    %v2802 = vadd.f32 %v2800, 0.5
    %v2803 = vtanh.pop %v2779
    %v2804 = vtanh.pop %v2783
    %v2805 = vmul.f32 %v2781, 0.5
    %v2806 = vmul.f32 %v2785, 0.5
    %v2807 = vtanh.pop %v2805
    %v2808 = vtanh.pop %v2806
    %v2809 = vmul.f32 %v2807, 0.5
    %v2810 = vmul.f32 %v2808, 0.5
    %v2811 = vadd.f32 %v2809, 0.5
    %v2812 = vadd.f32 %v2810, 0.5
    %v2813 = vmul.f32 %v2801, %v2495
    %v2814 = vmul.f32 %v2802, %v2496
    %v2815 = vmul.f32 %v2793, %v2803
    %v2816 = vmul.f32 %v2794, %v2804
    %v2817 = vadd.f32 %v2813, %v2815
    %v2818 = vadd.f32 %v2814, %v2816
    %v2819 = vtanh.pop %v2817
    %v2820 = vtanh.pop %v2818
    %v2821 = vmul.f32 %v2811, %v2819
    %v2822 = vmul.f32 %v2812, %v2820
    %s2823 = scalar_lea.vmem [#allocation8], 96
    %2824 = vst [vmem:[%s2823] sm:$0xff] %v2821
    %2825 = vst [vmem:[%s2823 + $0x8] sm:$0xff] %v2822
    %2826 = vst [vmem:[#allocation2] sm:$0xff] %v2821
    %2827 = vst [vmem:[#allocation2 + $0x8] sm:$0xff] %v2822
    %2828 = vst [vmem:[#allocation3] sm:$0xff] %v2817
    %2829 = vst [vmem:[#allocation3 + $0x8] sm:$0xff] %v2818
    %v2830 = vld [vmem:[#allocation2] sm:$0xff]
    %v2831 = vld [vmem:[#allocation2 + $0x8] sm:$0xff]
    %v2832 = vld [vmem:[#allocation3] sm:$0xff]
    %v2833 = vld [vmem:[#allocation3 + $0x8] sm:$0xff]
    %v2834 = vpack.c.bf16 %v2831, %v2830
    %v2835 = vld [vmem:[#allocation5] sm:$0xff]
    %v2836 = vld [vmem:[#allocation5 + $0x8] sm:$0xff]
    %v2837 = vld [vmem:[#allocation5 + $0x10] sm:$0xff]
    %v2838 = vld [vmem:[#allocation5 + $0x18] sm:$0xff]
    %v2839 = vld [vmem:[#allocation5 + $0x20] sm:$0xff]
    %v2840 = vld [vmem:[#allocation5 + $0x28] sm:$0xff]
    %v2841 = vld [vmem:[#allocation5 + $0x30] sm:$0xff]
    %v2842 = vld [vmem:[#allocation5 + $0x38] sm:$0xff]
    %v2843 = vld [vmem:[#allocation5 + $0x40] sm:$0xff]
    %v2844 = vld [vmem:[#allocation5 + $0x48] sm:$0xff]
    %v2845 = vld [vmem:[#allocation5 + $0x50] sm:$0xff]
    %v2846 = vld [vmem:[#allocation5 + $0x58] sm:$0xff]
    %v2847 = vld [vmem:[#allocation5 + $0x60] sm:$0xff]
    %v2848 = vld [vmem:[#allocation5 + $0x68] sm:$0xff]
    %v2849 = vld [vmem:[#allocation5 + $0x70] sm:$0xff]
    %v2850 = vld [vmem:[#allocation5 + $0x78] sm:$0xff]
    %v2851 = vld [vmem:[#allocation5 + $0x80] sm:$0xff]
    %v2852 = vld [vmem:[#allocation5 + $0x88] sm:$0xff]
    %v2853 = vld [vmem:[#allocation5 + $0x90] sm:$0xff]
    %v2854 = vld [vmem:[#allocation5 + $0x98] sm:$0xff]
    %v2855 = vld [vmem:[#allocation5 + $0xa0] sm:$0xff]
    %v2856 = vld [vmem:[#allocation5 + $0xa8] sm:$0xff]
    %v2857 = vld [vmem:[#allocation5 + $0xb0] sm:$0xff]
    %v2858 = vld [vmem:[#allocation5 + $0xb8] sm:$0xff]
    %v2859 = vld [vmem:[#allocation5 + $0xc0] sm:$0xff]
    %v2860 = vld [vmem:[#allocation5 + $0xc8] sm:$0xff]
    %v2861 = vld [vmem:[#allocation5 + $0xd0] sm:$0xff]
    %v2862 = vld [vmem:[#allocation5 + $0xd8] sm:$0xff]
    %v2863 = vld [vmem:[#allocation5 + $0xe0] sm:$0xff]
    %v2864 = vld [vmem:[#allocation5 + $0xe8] sm:$0xff]
    %v2865 = vld [vmem:[#allocation5 + $0xf0] sm:$0xff]
    %v2866 = vld [vmem:[#allocation5 + $0xf8] sm:$0xff]
    %s2867 = smul.u32 14, 4
    %s2868 = smul.addr %s2867, 8
    %s2869 = scalar_lea.vmem [#allocation4], %s2868
    %v2870 = vld [vmem:[%s2869] sm:$0xff]
    %v2871 = vld [vmem:[%s2869 + $0x8] sm:$0xff]
    %v2872 = vld [vmem:[%s2869 + $0x10] sm:$0xff]
    %v2873 = vld [vmem:[%s2869 + $0x18] sm:$0xff]
    %v2874 = vld [vmem:[%s2869 + $0x20] sm:$0xff]
    %v2875 = vld [vmem:[%s2869 + $0x28] sm:$0xff]
    %v2876 = vld [vmem:[%s2869 + $0x30] sm:$0xff]
    %v2877 = vld [vmem:[%s2869 + $0x38] sm:$0xff]
    %v2910 = vunpack.c.l.b16 %v2835
    %v2911 = vunpack.c.h.b16 %v2835
    %v2912 = vunpack.c.l.b16 %v2836
    %v2913 = vunpack.c.h.b16 %v2836
    %v2914 = vunpack.c.l.b16 %v2837
    %v2915 = vunpack.c.h.b16 %v2837
    %v2916 = vunpack.c.l.b16 %v2838
    %v2917 = vunpack.c.h.b16 %v2838
    %v2918 = vunpack.c.l.b16 %v2839
    %v2919 = vunpack.c.h.b16 %v2839
    %v2920 = vunpack.c.l.b16 %v2840
    %v2921 = vunpack.c.h.b16 %v2840
    %v2922 = vunpack.c.l.b16 %v2841
    %v2923 = vunpack.c.h.b16 %v2841
    %v2924 = vunpack.c.l.b16 %v2842
    %v2925 = vunpack.c.h.b16 %v2842
    %v2926 = vunpack.c.l.b16 %v2843
    %v2927 = vunpack.c.h.b16 %v2843
    %v2928 = vunpack.c.l.b16 %v2844
    %v2929 = vunpack.c.h.b16 %v2844
    %v2930 = vunpack.c.l.b16 %v2845
    %v2931 = vunpack.c.h.b16 %v2845
    %v2932 = vunpack.c.l.b16 %v2846
    %v2933 = vunpack.c.h.b16 %v2846
    %v2934 = vunpack.c.l.b16 %v2847
    %v2935 = vunpack.c.h.b16 %v2847
    %v2936 = vunpack.c.l.b16 %v2848
    %v2937 = vunpack.c.h.b16 %v2848
    %v2938 = vunpack.c.l.b16 %v2849
    %v2939 = vunpack.c.h.b16 %v2849
    %v2940 = vunpack.c.l.b16 %v2850
    %v2941 = vunpack.c.h.b16 %v2850
    %v2942 = vunpack.c.l.b16 %v2851
    %v2943 = vunpack.c.h.b16 %v2851
    %v2944 = vunpack.c.l.b16 %v2852
    %v2945 = vunpack.c.h.b16 %v2852
    %v2946 = vunpack.c.l.b16 %v2853
    %v2947 = vunpack.c.h.b16 %v2853
    %v2948 = vunpack.c.l.b16 %v2854
    %v2949 = vunpack.c.h.b16 %v2854
    %v2950 = vunpack.c.l.b16 %v2855
    %v2951 = vunpack.c.h.b16 %v2855
    %v2952 = vunpack.c.l.b16 %v2856
    %v2953 = vunpack.c.h.b16 %v2856
    %v2954 = vunpack.c.l.b16 %v2857
    %v2955 = vunpack.c.h.b16 %v2857
    %v2956 = vunpack.c.l.b16 %v2858
    %v2957 = vunpack.c.h.b16 %v2858
    %v2958 = vunpack.c.l.b16 %v2859
    %v2959 = vunpack.c.h.b16 %v2859
    %v2960 = vunpack.c.l.b16 %v2860
    %v2961 = vunpack.c.h.b16 %v2860
    %v2962 = vunpack.c.l.b16 %v2861
    %v2963 = vunpack.c.h.b16 %v2861
    %v2964 = vunpack.c.l.b16 %v2862
    %v2965 = vunpack.c.h.b16 %v2862
    %v2966 = vunpack.c.l.b16 %v2863
    %v2967 = vunpack.c.h.b16 %v2863
    %v2968 = vunpack.c.l.b16 %v2864
    %v2969 = vunpack.c.h.b16 %v2864
    %v2970 = vunpack.c.l.b16 %v2865
    %v2971 = vunpack.c.h.b16 %v2865
    %v2972 = vunpack.c.l.b16 %v2866
    %v2973 = vunpack.c.h.b16 %v2866
    %v2974 = vpack.c.b16 %v2914, %v2910
    %v2975 = vpack.c.b16 %v2915, %v2911
    %v2976 = vpack.c.b16 %v2916, %v2912
    %v2977 = vpack.c.b16 %v2917, %v2913
    %v2978 = vpack.c.b16 %v2922, %v2918
    %v2979 = vpack.c.b16 %v2923, %v2919
    %v2980 = vpack.c.b16 %v2924, %v2920
    %v2981 = vpack.c.b16 %v2925, %v2921
    %v2982 = vpack.c.b16 %v2930, %v2926
    %v2983 = vpack.c.b16 %v2931, %v2927
    %v2984 = vpack.c.b16 %v2932, %v2928
    %v2985 = vpack.c.b16 %v2933, %v2929
    %v2986 = vpack.c.b16 %v2938, %v2934
    %v2987 = vpack.c.b16 %v2939, %v2935
    %v2988 = vpack.c.b16 %v2940, %v2936
    %v2989 = vpack.c.b16 %v2941, %v2937
    %v2990 = vpack.c.b16 %v2946, %v2942
    %v2991 = vpack.c.b16 %v2947, %v2943
    %v2992 = vpack.c.b16 %v2948, %v2944
    %v2993 = vpack.c.b16 %v2949, %v2945
    %v2994 = vpack.c.b16 %v2954, %v2950
    %v2995 = vpack.c.b16 %v2955, %v2951
    %v2996 = vpack.c.b16 %v2956, %v2952
    %v2997 = vpack.c.b16 %v2957, %v2953
    %v2998 = vpack.c.b16 %v2962, %v2958
    %v2999 = vpack.c.b16 %v2963, %v2959
    %v3000 = vpack.c.b16 %v2964, %v2960
    %v3001 = vpack.c.b16 %v2965, %v2961
    %v3002 = vpack.c.b16 %v2970, %v2966
    %v3003 = vpack.c.b16 %v2971, %v2967
    %v3004 = vpack.c.b16 %v2972, %v2968
    %v3005 = vpack.c.b16 %v2973, %v2969
    %3038 = vmatprep.subr.bf16.mxu0 %v2975
    %3039 = vmatpush1.bf16.msra.mxu0 %v2974
    %3040 = vmatprep.subr.bf16.mxu0 %v2979
    %3041 = vmatpush1.bf16.msra.mxu0 %v2978
    %3042 = vmatprep.subr.bf16.mxu0 %v2983
    %3043 = vmatpush1.bf16.msra.mxu0 %v2982
    %3044 = vmatprep.subr.bf16.mxu0 %v2987
    %3045 = vmatpush1.bf16.msra.mxu0 %v2986
    %3046 = vmatprep.subr.bf16.mxu0 %v2991
    %3047 = vmatpush1.bf16.msra.mxu0 %v2990
    %3048 = vmatprep.subr.bf16.mxu0 %v2995
    %3049 = vmatpush1.bf16.msra.mxu0 %v2994
    %3050 = vmatprep.subr.bf16.mxu0 %v2999
    %3051 = vmatpush1.bf16.msra.mxu0 %v2998
    %3052 = vmatprep.subr.bf16.mxu0 %v3003
    %3053 = vmatpush1.bf16.msra.mxu0 %v3002
    %3054 = vmatprep.subr.bf16.mxu0 0
    %3055 = vmatpush1.bf16.msra.mxu0 0
    %3056 = vmatprep.subr.bf16.mxu0 0
    %3057 = vmatpush1.bf16.msra.mxu0 0
    %3058 = vmatprep.subr.bf16.mxu0 0
    %3059 = vmatpush1.bf16.msra.mxu0 0
    %3060 = vmatprep.subr.bf16.mxu0 0
    %3061 = vmatpush1.bf16.msra.mxu0 0
    %3062 = vmatprep.subr.bf16.mxu0 0
    %3063 = vmatpush1.bf16.msra.mxu0 0
    %3064 = vmatprep.subr.bf16.mxu0 0
    %3065 = vmatpush1.bf16.msra.mxu0 0
    %3066 = vmatprep.subr.bf16.mxu0 0
    %3067 = vmatpush1.bf16.msra.mxu0 0
    %3068 = vmatprep.subr.bf16.mxu0 0
    %3069 = vmatpush1.bf16.msra.mxu0 0
    %3070 = vmatprep.mubr.bf16.mxu0 0
    %3071 = vmatmul.mubr.bf16.gmra.mrb[0].mxu0 %v2834
    %v3072 = vpop.f32.mrb[0].mxu0
    %v3073 = vadd.f32 %v2870, %v3072
    %v3074 = vpop.f32.mrb[0].mxu0
    %v3075 = vadd.f32 %v2871, %v3074
    %v3076 = vpop.f32.mrb[0].mxu0
    %v3077 = vadd.f32 %v2874, %v3076
    %v3078 = vpop.f32.mrb[0].mxu0
    %v3079 = vadd.f32 %v2875, %v3078
    %3080 = vdwg.mxu0
    %3081 = vmatprep.subr.bf16.mxu0 %v2977
    %3082 = vmatpush1.bf16.msra.mxu0 %v2976
    %3083 = vmatprep.subr.bf16.mxu0 %v2981
    %3084 = vmatpush1.bf16.msra.mxu0 %v2980
    %3085 = vmatprep.subr.bf16.mxu0 %v2985
    %3086 = vmatpush1.bf16.msra.mxu0 %v2984
    %3087 = vmatprep.subr.bf16.mxu0 %v2989
    %3088 = vmatpush1.bf16.msra.mxu0 %v2988
    %3089 = vmatprep.subr.bf16.mxu0 %v2993
    %3090 = vmatpush1.bf16.msra.mxu0 %v2992
    %3091 = vmatprep.subr.bf16.mxu0 %v2997
    %3092 = vmatpush1.bf16.msra.mxu0 %v2996
    %3093 = vmatprep.subr.bf16.mxu0 %v3001
    %3094 = vmatpush1.bf16.msra.mxu0 %v3000
    %3095 = vmatprep.subr.bf16.mxu0 %v3005
    %3096 = vmatpush1.bf16.msra.mxu0 %v3004
    %3097 = vmatprep.subr.bf16.mxu0 0
    %3098 = vmatpush1.bf16.msra.mxu0 0
    %3099 = vmatprep.subr.bf16.mxu0 0
    %3100 = vmatpush1.bf16.msra.mxu0 0
    %3101 = vmatprep.subr.bf16.mxu0 0
    %3102 = vmatpush1.bf16.msra.mxu0 0
    %3103 = vmatprep.subr.bf16.mxu0 0
    %3104 = vmatpush1.bf16.msra.mxu0 0
    %3105 = vmatprep.subr.bf16.mxu0 0
    %3106 = vmatpush1.bf16.msra.mxu0 0
    %3107 = vmatprep.subr.bf16.mxu0 0
    %3108 = vmatpush1.bf16.msra.mxu0 0
    %3109 = vmatprep.subr.bf16.mxu0 0
    %3110 = vmatpush1.bf16.msra.mxu0 0
    %3111 = vmatprep.subr.bf16.mxu0 0
    %3112 = vmatpush1.bf16.msra.mxu0 0
    %3113 = vmatprep.mubr.bf16.mxu0 0
    %3114 = vmatmul.mubr.bf16.gmra.mrb[0].mxu0 %v2834
    %v3115 = vpop.f32.mrb[0].mxu0
    %v3116 = vadd.f32 %v2872, %v3115
    %v3117 = vpop.f32.mrb[0].mxu0
    %v3118 = vadd.f32 %v2873, %v3117
    %v3119 = vpop.f32.mrb[0].mxu0
    %v3120 = vadd.f32 %v2876, %v3119
    %v3121 = vpop.f32.mrb[0].mxu0
    %v3122 = vadd.f32 %v2877, %v3121
    %3123 = vdwg.mxu0
    %v3124 = vmul.f32 %v3073, 0.5
    %v3125 = vmul.f32 %v3077, 0.5
    %v3126 = vtanh.pop %v3124
    %v3127 = vtanh.pop %v3125
    %v3128 = vmul.f32 %v3126, 0.5
    %v3129 = vmul.f32 %v3127, 0.5
    %v3130 = vadd.f32 %v3128, 0.5
    %v3131 = vadd.f32 %v3129, 0.5
    %v3132 = vmul.f32 %v3075, 0.5
    %v3133 = vmul.f32 %v3079, 0.5
    %v3134 = vtanh.pop %v3132
    %v3135 = vtanh.pop %v3133
    %v3136 = vmul.f32 %v3134, 0.5
    %v3137 = vmul.f32 %v3135, 0.5
    %v3138 = vadd.f32 %v3136, 0.5
    %v3139 = vadd.f32 %v3137, 0.5
    %v3140 = vtanh.pop %v3116
    %v3141 = vtanh.pop %v3120
    %v3142 = vmul.f32 %v3118, 0.5
    %v3143 = vmul.f32 %v3122, 0.5
    %v3144 = vtanh.pop %v3142
    %v3145 = vtanh.pop %v3143
    %v3146 = vmul.f32 %v3144, 0.5
    %v3147 = vmul.f32 %v3145, 0.5
    %v3148 = vadd.f32 %v3146, 0.5
    %v3149 = vadd.f32 %v3147, 0.5
    %v3150 = vmul.f32 %v3138, %v2832
    %v3151 = vmul.f32 %v3139, %v2833
    %v3152 = vmul.f32 %v3130, %v3140
    %v3153 = vmul.f32 %v3131, %v3141
    %v3154 = vadd.f32 %v3150, %v3152
    %v3155 = vadd.f32 %v3151, %v3153
    %v3156 = vtanh.pop %v3154
    %v3157 = vtanh.pop %v3155
    %v3158 = vmul.f32 %v3148, %v3156
    %v3159 = vmul.f32 %v3149, %v3157
    %s3160 = scalar_lea.vmem [#allocation8], 112
    %3161 = vst [vmem:[%s3160] sm:$0xff] %v3158
    %3162 = vst [vmem:[%s3160 + $0x8] sm:$0xff] %v3159
    %3163 = vst [vmem:[#allocation2] sm:$0xff] %v3158
    %3164 = vst [vmem:[#allocation2 + $0x8] sm:$0xff] %v3159
    %3165 = vst [vmem:[#allocation3] sm:$0xff] %v3154
    %3166 = vst [vmem:[#allocation3 + $0x8] sm:$0xff] %v3155
    // Predicated region
    $region34: #{tpu_custom_call.1} parent=1 // pred_check
      %p3167 = pneg %p43
    $region35: #{tpu_custom_call.1} parent=1 // pred_check_branch
      %3169 = sbr.rel (%p3167) target = $region37
    $region36: #{tpu_custom_call.1} parent=1 // pred_region
      %v3170 = vld [vmem:[#allocation2] sm:$0xff]
      %v3171 = vld [vmem:[#allocation2 + $0x8] sm:$0xff]
      %3172 = vst [vmem:[#allocation9] sm:$0xff] %v3170
      %3173 = vst [vmem:[#allocation9 + $0x8] sm:$0xff] %v3171
      %v3174 = vld [vmem:[#allocation3] sm:$0xff]
      %v3175 = vld [vmem:[#allocation3 + $0x8] sm:$0xff]
      %3176 = vst [vmem:[#allocation11] sm:$0xff] %v3174
      %3177 = vst [vmem:[#allocation11 + $0x8] sm:$0xff] %v3175
    $region37: #{tpu_custom_call.1} parent=1 // pred_fallthru
      _
    // Predicated region
    $region38: #{tpu_custom_call.1} parent=1 // pred_check
      _
    $region39: #{tpu_custom_call.1} parent=1 // pred_check_branch
      %3179 = sbr.rel (0) target = $region41
    $region40: #{tpu_custom_call.1} parent=1 // pred_region
      %s3181 = ssub.s32 2048, 2048
      %3182 = vsyncadd [#allocation7], %s3181
      %s3183 = sshll.u32 [#allocation8], 4
      %s3184 = int_to_ptr.vmem [resolvable:$true] %s3183
      %3189 = dma.vmem_to_hbm [thread:$0]  %s3184, 2048, %s6, [#allocation7], 128, 128, 8
    $region41: #{tpu_custom_call.1} parent=1 // pred_fallthru
      _
    // Predicated region
    $region42: #{tpu_custom_call.1} parent=1 // pred_check
      _
    $region43: #{tpu_custom_call.1} parent=1 // pred_check_branch
      %3191 = sbr.rel (0) target = $region45
    $region44: #{tpu_custom_call.1} parent=1 // pred_region
      %s3193 = ssub.s32 256, 256
      %3194 = vsyncadd [#allocation10], %s3193
      %s3195 = sshll.u32 [#allocation9], 4
      %s3196 = int_to_ptr.vmem [resolvable:$true] %s3195
      %3201 = dma.vmem_to_hbm [thread:$0]  %s3196, 256, %s7, [#allocation10], 128, 128, 8
    $region45: #{tpu_custom_call.1} parent=1 // pred_fallthru
      _
    // Predicated region
    $region46: #{tpu_custom_call.1} parent=1 // pred_check
      _
    $region47: #{tpu_custom_call.1} parent=1 // pred_check_branch
      %3203 = sbr.rel (0) target = $region49
    $region48: #{tpu_custom_call.1} parent=1 // pred_region
      %s3205 = ssub.s32 256, 256
      %3206 = vsyncadd [#allocation10], %s3205
      %s3207 = sshll.u32 [#allocation11], 4
      %s3208 = int_to_ptr.vmem [resolvable:$true] %s3207
      %3213 = dma.vmem_to_hbm [thread:$0]  %s3208, 256, %s8, [#allocation10], 128, 128, 8
    $region49: #{tpu_custom_call.1} parent=1 // pred_fallthru
      _
    // Predicated region
    $region50: #{tpu_custom_call.1} parent=1 // pred_check
      _
    $region51: #{tpu_custom_call.1} parent=1 // pred_check_branch
      %3215 = sbr.rel (0) target = $region53
    $region52: #{tpu_custom_call.1} parent=1 // pred_region
      %3216 = dma.done [#allocation7], 2048
    $region53: #{tpu_custom_call.1} parent=1 // pred_fallthru
      _
    // Predicated region
    $region54: #{tpu_custom_call.1} parent=1 // pred_check
      _
    $region55: #{tpu_custom_call.1} parent=1 // pred_check_branch
      %3218 = sbr.rel (0) target = $region57
    $region56: #{tpu_custom_call.1} parent=1 // pred_region
      %3219 = dma.done [#allocation10], 256
    $region57: #{tpu_custom_call.1} parent=1 // pred_fallthru
      _
    // Predicated region
    $region58: #{tpu_custom_call.1} parent=1 // pred_check
      _
    $region59: #{tpu_custom_call.1} parent=1 // pred_check_branch
      %3221 = sbr.rel (0) target = $region61
    $region60: #{tpu_custom_call.1} parent=1 // pred_region
      %3222 = dma.done [#allocation10], 256
    $region61: #{tpu_custom_call.1} parent=1 // pred_fallthru
      _
    %3223 = vsyncpa [#allocation6], 1
    %3224 = vsyncpa [#allocation7], 1
    %3225 = vsyncpa [#allocation10], 1

// kernel: tpu_custom_call.1
$region0: #{tpu_custom_call.1}
  #allocation0 [shape = 'u32[]', space=smem, size = 0x4, offset = 0x4, fixed_abs, tag = 'smem constant byte address 0x4 - core index']
  #allocation1 [shape = 'u32[144,128]{1,0:T(1,128)}', space=vmem, size = 0x12000, scoped, tag = 'internal scratch']
  #allocation2 [shape = 'f32[16,128]{1,0:T(8,128)}', space=vmem, size = 0x2000, scoped, tag = 'scratch operand']
  #allocation3 [shape = 'f32[16,128]{1,0:T(8,128)}', space=vmem, size = 0x2000, scoped, tag = 'scratch operand']
  #allocation4 [shape = 'f32[128,512]{1,0:T(8,128)}', space=vmem, size = 0x40000, scoped, tag = 'scratch operand']
  %s0 = inlined_call_operand.vmem [shape: bf16[1,128,16], index: 0, kind: input, shape index: {}]
  %s1 = inlined_call_operand.vmem [shape: f32[1,16,128], index: 1, kind: input, shape index: {}]
  %s2 = inlined_call_operand.vmem [shape: f32[1,16,128], index: 2, kind: input, shape index: {}]
  %s3 = inlined_call_operand.vmem [shape: bf16[16,512], index: 3, kind: input, shape index: {}]
  %s4 = inlined_call_operand.hbm [shape: bf16[128,512], index: 4, kind: input, shape index: {}]
  %s5 = inlined_call_operand.vmem [shape: f32[1,512], index: 5, kind: input, shape index: {}]
  %s6 = inlined_call_operand.hbm [shape: f32[1,128,128], index: 6, kind: output, shape index: {0}]
  %s7 = inlined_call_operand.hbm [shape: f32[1,16,128], index: 7, kind: output, shape index: {1}]
  %s8 = inlined_call_operand.hbm [shape: f32[1,16,128], index: 8, kind: output, shape index: {2}]
  %9 = xla_tuple %s6, %s7, %s8
  %s10 = sld [smem:[#allocation0]]
  $region62: #{tpu_custom_call.1} parent=0
    _
  %s12 = ssub.s32 1, %s10
  %s13 = scalar_select 0, %s12, %s10
  $region1: #{tpu_custom_call.1} parent=0
    #allocation5 [shape = 'u8[131072]{0}', space=vmem, size = 0x20000, scoped, tag = 'input window, operand 4, single buffered']
    #allocation6 [shape = 's32[1]{0}', space=sflag, size = 0x4, scoped, tag = 'scoped memory for tpu_custom_call.1']
    #allocation7 [shape = 's32[1]{0}', space=sflag, size = 0x4, scoped, tag = 'scoped memory for tpu_custom_call.1']
    #allocation8 [shape = 'u8[65536]{0}', space=vmem, size = 0x10000, scoped, tag = 'output window, operand 0, single buffered']
    #allocation9 [shape = 'u8[8192]{0}', space=vmem, size = 0x2000, scoped, tag = 'output window, operand 1, single buffered']
    #allocation10 [shape = 's32[1]{0}', space=sflag, size = 0x4, scoped, tag = 'scoped memory for tpu_custom_call.1']
    #allocation11 [shape = 'u8[8192]{0}', space=vmem, size = 0x2000, scoped, tag = 'output window, operand 2, single buffered']
    %14 = vsyncpa [#allocation6], 0
    %15 = vsyncpa [#allocation7], 0
    %16 = vsyncpa [#allocation10], 0
    // Predicated region
    $region2: #{tpu_custom_call.1} parent=1 // pred_check
      _
    $region3: #{tpu_custom_call.1} parent=1 // pred_check_branch
      %18 = sbr.rel (0) target = $region5
    $region4: #{tpu_custom_call.1} parent=1 // pred_region
      _
    $region5: #{tpu_custom_call.1} parent=1 // pred_fallthru
      _
    // Predicated region
    $region6: #{tpu_custom_call.1} parent=1 // pred_check
      _
    $region7: #{tpu_custom_call.1} parent=1 // pred_check_branch
      %20 = sbr.rel (0) target = $region9
    $region8: #{tpu_custom_call.1} parent=1 // pred_region
      _
    $region9: #{tpu_custom_call.1} parent=1 // pred_fallthru
      _
    // Predicated region
    $region10: #{tpu_custom_call.1} parent=1 // pred_check
      _
    $region11: #{tpu_custom_call.1} parent=1 // pred_check_branch
      %22 = sbr.rel (0) target = $region13
    $region12: #{tpu_custom_call.1} parent=1 // pred_region
      _
    $region13: #{tpu_custom_call.1} parent=1 // pred_fallthru
      _
    // Predicated region
    $region14: #{tpu_custom_call.1} parent=1 // pred_check
      _
    $region15: #{tpu_custom_call.1} parent=1 // pred_check_branch
      %24 = sbr.rel (0) target = $region17
    $region16: #{tpu_custom_call.1} parent=1 // pred_region
      _
    $region17: #{tpu_custom_call.1} parent=1 // pred_fallthru
      _
    // Predicated region
    $region18: #{tpu_custom_call.1} parent=1 // pred_check
      _
    $region19: #{tpu_custom_call.1} parent=1 // pred_check_branch
      %26 = sbr.rel (0) target = $region21
    $region20: #{tpu_custom_call.1} parent=1 // pred_region
      %s28 = ssub.s32 4096, 4096
      %29 = vsyncadd [#allocation6], %s28
      %s30 = sshll.u32 [#allocation5], 4
      %s31 = int_to_ptr.vmem [resolvable:$true] %s30
      %36 = dma.hbm_to_vmem [thread:$0]  %s4, 4096, %s31, [#allocation6], 256, 256, 16
    $region21: #{tpu_custom_call.1} parent=1 // pred_fallthru
      _
    // Predicated region
    $region22: #{tpu_custom_call.1} parent=1 // pred_check
      _
    $region23: #{tpu_custom_call.1} parent=1 // pred_check_branch
      %38 = sbr.rel (0) target = $region25
    $region24: #{tpu_custom_call.1} parent=1 // pred_region
      _
    $region25: #{tpu_custom_call.1} parent=1 // pred_fallthru
      _
    // Predicated region
    $region26: #{tpu_custom_call.1} parent=1 // pred_check
      _
    $region27: #{tpu_custom_call.1} parent=1 // pred_check_branch
      %40 = sbr.rel (0) target = $region29
    $region28: #{tpu_custom_call.1} parent=1 // pred_region
      %41 = dma.done [#allocation6], 4096
    $region29: #{tpu_custom_call.1} parent=1 // pred_fallthru
      _
    %p43 = scmp.eq.s32.totalorder 0, 0
    // Predicated region
    $region30: #{tpu_custom_call.1} parent=1 // pred_check
      %p44 = pneg %p43
    $region31: #{tpu_custom_call.1} parent=1 // pred_check_branch
      %46 = sbr.rel (%p44) target = $region33
    $region32: #{tpu_custom_call.1} parent=1 // pred_region
      %v47 = vld [vmem:[%s1] sm:$0xff]
      %v48 = vld [vmem:[%s1 + $0x8] sm:$0xff]
      %49 = vst [vmem:[#allocation2] sm:$0xff] %v47
      %50 = vst [vmem:[#allocation2 + $0x8] sm:$0xff] %v48
      %v51 = vld [vmem:[%s2] sm:$0xff]
      %v52 = vld [vmem:[%s2 + $0x8] sm:$0xff]
      %53 = vst [vmem:[#allocation3] sm:$0xff] %v51
      %54 = vst [vmem:[#allocation3 + $0x8] sm:$0xff] %v52
    $region33: #{tpu_custom_call.1} parent=1 // pred_fallthru
      _
    %v55 = vld [vmem:[%s0] sm:$0xf]
    %v56 = vld [vmem:[%s0 + $0x4] sm:$0xf]
    %v57 = vld [vmem:[%s0 + $0x8] sm:$0xf]
    %v58 = vld [vmem:[%s0 + $0xc] sm:$0xf]
    %v59 = vld [vmem:[%s0 + $0x10] sm:$0xf]
    %v60 = vld [vmem:[%s0 + $0x14] sm:$0xf]
    %v61 = vld [vmem:[%s0 + $0x18] sm:$0xf]
    %v62 = vld [vmem:[%s0 + $0x1c] sm:$0xf]
    %v63 = vld [vmem:[%s0 + $0x20] sm:$0xf]
    %v64 = vld [vmem:[%s0 + $0x24] sm:$0xf]
    %v65 = vld [vmem:[%s0 + $0x28] sm:$0xf]
    %v66 = vld [vmem:[%s0 + $0x2c] sm:$0xf]
    %v67 = vld [vmem:[%s0 + $0x30] sm:$0xf]
    %v68 = vld [vmem:[%s0 + $0x34] sm:$0xf]
    %v69 = vld [vmem:[%s0 + $0x38] sm:$0xf]
    %v70 = vld [vmem:[%s0 + $0x3c] sm:$0xf]
    %v71 = vld [vmem:[%s3] sm:$0xff]
    %v72 = vld [vmem:[%s3 + $0x8] sm:$0xff]
    %v73 = vld [vmem:[%s3 + $0x10] sm:$0xff]
    %v74 = vld [vmem:[%s3 + $0x18] sm:$0xff]
    %v75 = vld [vmem:[%s5] sm:$0xf]
    %v77 = vlaneseq
    %v78 = vshrl.u32 %v77, 7
    %v79 = vsub.s32 0, %v78
    %v80 = vrot.slane %v75, %v79
    %v81 = vlaneseq
    %v82 = vshrl.u32 %v81, 7
    %v83 = vsub.s32 1, %v82
    %v84 = vrot.slane %v75, %v83
    %v85 = vlaneseq
    %v86 = vshrl.u32 %v85, 7
    %v87 = vsub.s32 2, %v86
    %v88 = vrot.slane %v75, %v87
    %v89 = vlaneseq
    %v90 = vshrl.u32 %v89, 7
    %v91 = vsub.s32 3, %v90
    %v92 = vrot.slane %v75, %v91
    %v113 = vunpack.c.l.b16 %v55
    %v114 = vunpack.c.l.b16 %v56
    %v115 = vunpack.c.l.b16 %v57
    %v116 = vunpack.c.l.b16 %v58
    %v117 = vunpack.c.l.b16 %v59
    %v118 = vunpack.c.l.b16 %v60
    %v119 = vunpack.c.l.b16 %v61
    %v120 = vunpack.c.l.b16 %v62
    %v121 = vunpack.c.l.b16 %v63
    %v122 = vunpack.c.l.b16 %v64
    %v123 = vunpack.c.l.b16 %v65
    %v124 = vunpack.c.l.b16 %v66
    %v125 = vunpack.c.l.b16 %v67
    %v126 = vunpack.c.l.b16 %v68
    %v127 = vunpack.c.l.b16 %v69
    %v128 = vunpack.c.l.b16 %v70
    %v129 = vpack.c.b16 %v114, %v113
    %v130 = vpack.c.b16 %v116, %v115
    %v131 = vpack.c.b16 %v118, %v117
    %v132 = vpack.c.b16 %v120, %v119
    %v133 = vpack.c.b16 %v122, %v121
    %v134 = vpack.c.b16 %v124, %v123
    %v135 = vpack.c.b16 %v126, %v125
    %v136 = vpack.c.b16 %v128, %v127
    %v141 = vunpack.c.l.b16 %v71
    %v142 = vunpack.c.h.b16 %v71
    %v143 = vunpack.c.l.b16 %v72
    %v144 = vunpack.c.h.b16 %v72
    %v145 = vunpack.c.l.b16 %v73
    %v146 = vunpack.c.h.b16 %v73
    %v147 = vunpack.c.l.b16 %v74
    %v148 = vunpack.c.h.b16 %v74
    %v149 = vpack.c.b16 %v145, %v141
    %v150 = vpack.c.b16 %v146, %v142
    %v151 = vpack.c.b16 %v147, %v143
    %v152 = vpack.c.b16 %v148, %v144
    %vm157 = vcmask 130048
    %v159 = vsel %vm157, %v129, 0
    %v162 = vsel %vm157, %v130, 0
    %v165 = vsel %vm157, %v131, 0
    %v168 = vsel %vm157, %v132, 0
    %v171 = vsel %vm157, %v133, 0
    %v174 = vsel %vm157, %v134, 0
    %v177 = vsel %vm157, %v135, 0
    %v180 = vsel %vm157, %v136, 0
    %182 = vmatprep.subr.bf16.mxu0 %v150
    %183 = vmatpush1.bf16.msra.mxu0 %v149
    %184 = vmatprep.subr.bf16.mxu0 0
    %185 = vmatpush1.bf16.msra.mxu0 0
    %186 = vmatprep.subr.bf16.mxu0 0
    %187 = vmatpush1.bf16.msra.mxu0 0
    %188 = vmatprep.subr.bf16.mxu0 0
    %189 = vmatpush1.bf16.msra.mxu0 0
    %190 = vmatprep.subr.bf16.mxu0 0
    %191 = vmatpush1.bf16.msra.mxu0 0
    %192 = vmatprep.subr.bf16.mxu0 0
    %193 = vmatpush1.bf16.msra.mxu0 0
    %194 = vmatprep.subr.bf16.mxu0 0
    %195 = vmatpush1.bf16.msra.mxu0 0
    %196 = vmatprep.subr.bf16.mxu0 0
    %197 = vmatpush1.bf16.msra.mxu0 0
    %198 = vmatprep.subr.bf16.mxu0 0
    %199 = vmatpush1.bf16.msra.mxu0 0
    %200 = vmatprep.subr.bf16.mxu0 0
    %201 = vmatpush1.bf16.msra.mxu0 0
    %202 = vmatprep.subr.bf16.mxu0 0
    %203 = vmatpush1.bf16.msra.mxu0 0
    %204 = vmatprep.subr.bf16.mxu0 0
    %205 = vmatpush1.bf16.msra.mxu0 0
    %206 = vmatprep.subr.bf16.mxu0 0
    %207 = vmatpush1.bf16.msra.mxu0 0
    %208 = vmatprep.subr.bf16.mxu0 0
    %209 = vmatpush1.bf16.msra.mxu0 0
    %210 = vmatprep.subr.bf16.mxu0 0
    %211 = vmatpush1.bf16.msra.mxu0 0
    %212 = vmatprep.subr.bf16.mxu0 0
    %213 = vmatpush1.bf16.msra.mxu0 0
    %214 = vmatprep.mubr.bf16.mxu0 0
    %215 = vmatmul.mubr.bf16.gmra.mrb[0].mxu0 %v159
    %v216 = vpop.f32.mrb[0].mxu0
    %v217 = vadd.f32 %v80, %v216
    %v218 = vpop.f32.mrb[0].mxu0
    %v219 = vadd.f32 %v84, %v218
    %v220 = vpop.f32.mrb[0].mxu0
    %v221 = vadd.f32 %v80, %v220
    %v222 = vpop.f32.mrb[0].mxu0
    %v223 = vadd.f32 %v84, %v222
    %224 = vmatprep.mubr.bf16.mxu0 0
    %225 = vmatmul.mubr.bf16.gmra.mrb[0].mxu0 %v162
    %v226 = vpop.f32.mrb[0].mxu0
    %v227 = vadd.f32 %v80, %v226
    %v228 = vpop.f32.mrb[0].mxu0
    %v229 = vadd.f32 %v84, %v228
    %v230 = vpop.f32.mrb[0].mxu0
    %v231 = vadd.f32 %v80, %v230
    %v232 = vpop.f32.mrb[0].mxu0
    %v233 = vadd.f32 %v84, %v232
    %234 = vmatprep.mubr.bf16.mxu0 0
    %235 = vmatmul.mubr.bf16.gmra.mrb[0].mxu0 %v165
    %v236 = vpop.f32.mrb[0].mxu0
    %v237 = vadd.f32 %v80, %v236
    %v238 = vpop.f32.mrb[0].mxu0
    %v239 = vadd.f32 %v84, %v238
    %v240 = vpop.f32.mrb[0].mxu0
    %v241 = vadd.f32 %v80, %v240
    %v242 = vpop.f32.mrb[0].mxu0
    %v243 = vadd.f32 %v84, %v242
    %244 = vmatprep.mubr.bf16.mxu0 0
    %245 = vmatmul.mubr.bf16.gmra.mrb[0].mxu0 %v168
    %v246 = vpop.f32.mrb[0].mxu0
    %v247 = vadd.f32 %v80, %v246
    %v248 = vpop.f32.mrb[0].mxu0
    %v249 = vadd.f32 %v84, %v248
    %v250 = vpop.f32.mrb[0].mxu0
    %v251 = vadd.f32 %v80, %v250
    %v252 = vpop.f32.mrb[0].mxu0
    %v253 = vadd.f32 %v84, %v252
    %254 = vmatprep.mubr.bf16.mxu0 0
    %255 = vmatmul.mubr.bf16.gmra.mrb[0].mxu0 %v171
    %v256 = vpop.f32.mrb[0].mxu0
    %v257 = vadd.f32 %v80, %v256
    %v258 = vpop.f32.mrb[0].mxu0
    %v259 = vadd.f32 %v84, %v258
    %v260 = vpop.f32.mrb[0].mxu0
    %v261 = vadd.f32 %v80, %v260
    %v262 = vpop.f32.mrb[0].mxu0
    %v263 = vadd.f32 %v84, %v262
    %264 = vmatprep.mubr.bf16.mxu0 0
    %265 = vmatmul.mubr.bf16.gmra.mrb[0].mxu0 %v174
    %v266 = vpop.f32.mrb[0].mxu0
    %v267 = vadd.f32 %v80, %v266
    %v268 = vpop.f32.mrb[0].mxu0
    %v269 = vadd.f32 %v84, %v268
    %v270 = vpop.f32.mrb[0].mxu0
    %v271 = vadd.f32 %v80, %v270
    %v272 = vpop.f32.mrb[0].mxu0
    %v273 = vadd.f32 %v84, %v272
    %274 = vmatprep.mubr.bf16.mxu0 0
    %275 = vmatmul.mubr.bf16.gmra.mrb[0].mxu0 %v177
    %v276 = vpop.f32.mrb[0].mxu0
    %v277 = vadd.f32 %v80, %v276
    %v278 = vpop.f32.mrb[0].mxu0
    %v279 = vadd.f32 %v84, %v278
    %v280 = vpop.f32.mrb[0].mxu0
    %v281 = vadd.f32 %v80, %v280
    %v282 = vpop.f32.mrb[0].mxu0
    %v283 = vadd.f32 %v84, %v282
    %284 = vmatprep.mubr.bf16.mxu0 0
    %285 = vmatmul.mubr.bf16.gmra.mrb[0].mxu0 %v180
    %v286 = vpop.f32.mrb[0].mxu0
    %v287 = vadd.f32 %v80, %v286
    %v288 = vpop.f32.mrb[0].mxu0
    %v289 = vadd.f32 %v84, %v288
    %v290 = vpop.f32.mrb[0].mxu0
    %v291 = vadd.f32 %v80, %v290
    %v292 = vpop.f32.mrb[0].mxu0
    %v293 = vadd.f32 %v84, %v292
    %294 = vdwg.mxu0
    %295 = vmatprep.subr.bf16.mxu0 %v152
    %296 = vmatpush1.bf16.msra.mxu0 %v151
    %297 = vmatprep.subr.bf16.mxu0 0
    %298 = vmatpush1.bf16.msra.mxu0 0
    %299 = vmatprep.subr.bf16.mxu0 0
    %300 = vmatpush1.bf16.msra.mxu0 0
    %301 = vmatprep.subr.bf16.mxu0 0
    %302 = vmatpush1.bf16.msra.mxu0 0
    %303 = vmatprep.subr.bf16.mxu0 0
    %304 = vmatpush1.bf16.msra.mxu0 0
    %305 = vmatprep.subr.bf16.mxu0 0
    %306 = vmatpush1.bf16.msra.mxu0 0
    %307 = vmatprep.subr.bf16.mxu0 0
    %308 = vmatpush1.bf16.msra.mxu0 0
    %309 = vmatprep.subr.bf16.mxu0 0
    %310 = vmatpush1.bf16.msra.mxu0 0
    %311 = vmatprep.subr.bf16.mxu0 0
    %312 = vmatpush1.bf16.msra.mxu0 0
    %313 = vmatprep.subr.bf16.mxu0 0
    %314 = vmatpush1.bf16.msra.mxu0 0
    %315 = vmatprep.subr.bf16.mxu0 0
    %316 = vmatpush1.bf16.msra.mxu0 0
    %317 = vmatprep.subr.bf16.mxu0 0
    %318 = vmatpush1.bf16.msra.mxu0 0
    %319 = vmatprep.subr.bf16.mxu0 0
    %320 = vmatpush1.bf16.msra.mxu0 0
    %321 = vmatprep.subr.bf16.mxu0 0
    %322 = vmatpush1.bf16.msra.mxu0 0
    %323 = vmatprep.subr.bf16.mxu0 0
    %324 = vmatpush1.bf16.msra.mxu0 0
    %325 = vmatprep.subr.bf16.mxu0 0
    %326 = vmatpush1.bf16.msra.mxu0 0
    %327 = vmatprep.mubr.bf16.mxu0 0
    %328 = vmatmul.mubr.bf16.gmra.mrb[0].mxu0 %v159
    %v329 = vpop.f32.mrb[0].mxu0
    %v330 = vadd.f32 %v88, %v329
    %v331 = vpop.f32.mrb[0].mxu0
    %v332 = vadd.f32 %v92, %v331
    %v333 = vpop.f32.mrb[0].mxu0
    %v334 = vadd.f32 %v88, %v333
    %v335 = vpop.f32.mrb[0].mxu0
    %v336 = vadd.f32 %v92, %v335
    %337 = vmatprep.mubr.bf16.mxu0 0
    %338 = vmatmul.mubr.bf16.gmra.mrb[0].mxu0 %v162
    %v339 = vpop.f32.mrb[0].mxu0
    %v340 = vadd.f32 %v88, %v339
    %v341 = vpop.f32.mrb[0].mxu0
    %v342 = vadd.f32 %v92, %v341
    %v343 = vpop.f32.mrb[0].mxu0
    %v344 = vadd.f32 %v88, %v343
    %v345 = vpop.f32.mrb[0].mxu0
    %v346 = vadd.f32 %v92, %v345
    %347 = vmatprep.mubr.bf16.mxu0 0
    %348 = vmatmul.mubr.bf16.gmra.mrb[0].mxu0 %v165
    %v349 = vpop.f32.mrb[0].mxu0
    %v350 = vadd.f32 %v88, %v349
    %v351 = vpop.f32.mrb[0].mxu0
    %v352 = vadd.f32 %v92, %v351
    %v353 = vpop.f32.mrb[0].mxu0
    %v354 = vadd.f32 %v88, %v353
    %v355 = vpop.f32.mrb[0].mxu0
    %v356 = vadd.f32 %v92, %v355
    %357 = vmatprep.mubr.bf16.mxu0 0
    %358 = vmatmul.mubr.bf16.gmra.mrb[0].mxu0 %v168
    %v359 = vpop.f32.mrb[0].mxu0
    %v360 = vadd.f32 %v88, %v359
    %v361 = vpop.f32.mrb[0].mxu0
    %v362 = vadd.f32 %v92, %v361
    %v363 = vpop.f32.mrb[0].mxu0
    %v364 = vadd.f32 %v88, %v363
    %v365 = vpop.f32.mrb[0].mxu0
    %v366 = vadd.f32 %v92, %v365
    %367 = vmatprep.mubr.bf16.mxu0 0
    %368 = vmatmul.mubr.bf16.gmra.mrb[0].mxu0 %v171
    %v369 = vpop.f32.mrb[0].mxu0
    %v370 = vadd.f32 %v88, %v369
    %v371 = vpop.f32.mrb[0].mxu0
    %v372 = vadd.f32 %v92, %v371
    %v373 = vpop.f32.mrb[0].mxu0
    %v374 = vadd.f32 %v88, %v373
    %v375 = vpop.f32.mrb[0].mxu0
    %v376 = vadd.f32 %v92, %v375
    %377 = vmatprep.mubr.bf16.mxu0 0
    %378 = vmatmul.mubr.bf16.gmra.mrb[0].mxu0 %v174
    %v379 = vpop.f32.mrb[0].mxu0
    %v380 = vadd.f32 %v88, %v379
    %v381 = vpop.f32.mrb[0].mxu0
    %v382 = vadd.f32 %v92, %v381
    %v383 = vpop.f32.mrb[0].mxu0
    %v384 = vadd.f32 %v88, %v383
    %v385 = vpop.f32.mrb[0].mxu0
    %v386 = vadd.f32 %v92, %v385
    %387 = vmatprep.mubr.bf16.mxu0 0
    %388 = vmatmul.mubr.bf16.gmra.mrb[0].mxu0 %v177
    %v389 = vpop.f32.mrb[0].mxu0
    %v390 = vadd.f32 %v88, %v389
    %v391 = vpop.f32.mrb[0].mxu0
    %v392 = vadd.f32 %v92, %v391
    %v393 = vpop.f32.mrb[0].mxu0
    %v394 = vadd.f32 %v88, %v393
    %v395 = vpop.f32.mrb[0].mxu0
    %v396 = vadd.f32 %v92, %v395
    %397 = vmatprep.mubr.bf16.mxu0 0
    %398 = vmatmul.mubr.bf16.gmra.mrb[0].mxu0 %v180
    %v399 = vpop.f32.mrb[0].mxu0
    %v400 = vadd.f32 %v88, %v399
    %v401 = vpop.f32.mrb[0].mxu0
    %v402 = vadd.f32 %v92, %v401
    %v403 = vpop.f32.mrb[0].mxu0
    %v404 = vadd.f32 %v88, %v403
    %v405 = vpop.f32.mrb[0].mxu0
    %v406 = vadd.f32 %v92, %v405
    %407 = vdwg.mxu0
    %408 = vst [vmem:[#allocation4] sm:$0xff] %v217
    %409 = vst [vmem:[#allocation4 + $0x8] sm:$0xff] %v219
    %410 = vst [vmem:[#allocation4 + $0x10] sm:$0xff] %v330
    %411 = vst [vmem:[#allocation4 + $0x18] sm:$0xff] %v332
    %412 = vst [vmem:[#allocation4 + $0x20] sm:$0xff] %v221
    %413 = vst [vmem:[#allocation4 + $0x28] sm:$0xff] %v223
    %414 = vst [vmem:[#allocation4 + $0x30] sm:$0xff] %v334
    %415 = vst [vmem:[#allocation4 + $0x38] sm:$0xff] %v336
    %416 = vst [vmem:[#allocation4 + $0x40] sm:$0xff] %v227
    %417 = vst [vmem:[#allocation4 + $0x48] sm:$0xff] %v229
    %418 = vst [vmem:[#allocation4 + $0x50] sm:$0xff] %v340
    %419 = vst [vmem:[#allocation4 + $0x58] sm:$0xff] %v342
    %420 = vst [vmem:[#allocation4 + $0x60] sm:$0xff] %v231
    %421 = vst [vmem:[#allocation4 + $0x68] sm:$0xff] %v233
    %422 = vst [vmem:[#allocation4 + $0x70] sm:$0xff] %v344
    %423 = vst [vmem:[#allocation4 + $0x78] sm:$0xff] %v346
    %424 = vst [vmem:[#allocation4 + $0x80] sm:$0xff] %v237
    %425 = vst [vmem:[#allocation4 + $0x88] sm:$0xff] %v239
    %426 = vst [vmem:[#allocation4 + $0x90] sm:$0xff] %v350
    %427 = vst [vmem:[#allocation4 + $0x98] sm:$0xff] %v352
    %428 = vst [vmem:[#allocation4 + $0xa0] sm:$0xff] %v241
    %429 = vst [vmem:[#allocation4 + $0xa8] sm:$0xff] %v243
    %430 = vst [vmem:[#allocation4 + $0xb0] sm:$0xff] %v354
    %431 = vst [vmem:[#allocation4 + $0xb8] sm:$0xff] %v356
    %432 = vst [vmem:[#allocation4 + $0xc0] sm:$0xff] %v247
    %433 = vst [vmem:[#allocation4 + $0xc8] sm:$0xff] %v249
    %434 = vst [vmem:[#allocation4 + $0xd0] sm:$0xff] %v360
    %435 = vst [vmem:[#allocation4 + $0xd8] sm:$0xff] %v362
    %436 = vst [vmem:[#allocation4 + $0xe0] sm:$0xff] %v251
    %437 = vst [vmem:[#allocation4 + $0xe8] sm:$0xff] %v253
    %438 = vst [vmem:[#allocation4 + $0xf0] sm:$0xff] %v364
    %439 = vst [vmem:[#allocation4 + $0xf8] sm:$0xff] %v366
    %440 = vst [vmem:[#allocation4 + $0x100] sm:$0xff] %v257
    %441 = vst [vmem:[#allocation4 + $0x108] sm:$0xff] %v259
    %442 = vst [vmem:[#allocation4 + $0x110] sm:$0xff] %v370
    %443 = vst [vmem:[#allocation4 + $0x118] sm:$0xff] %v372
    %444 = vst [vmem:[#allocation4 + $0x120] sm:$0xff] %v261
    %445 = vst [vmem:[#allocation4 + $0x128] sm:$0xff] %v263
    %446 = vst [vmem:[#allocation4 + $0x130] sm:$0xff] %v374
    %447 = vst [vmem:[#allocation4 + $0x138] sm:$0xff] %v376
    %448 = vst [vmem:[#allocation4 + $0x140] sm:$0xff] %v267
    %449 = vst [vmem:[#allocation4 + $0x148] sm:$0xff] %v269
    %450 = vst [vmem:[#allocation4 + $0x150] sm:$0xff] %v380
    %451 = vst [vmem:[#allocation4 + $0x158] sm:$0xff] %v382
    %452 = vst [vmem:[#allocation4 + $0x160] sm:$0xff] %v271
    %453 = vst [vmem:[#allocation4 + $0x168] sm:$0xff] %v273
    %454 = vst [vmem:[#allocation4 + $0x170] sm:$0xff] %v384
    %455 = vst [vmem:[#allocation4 + $0x178] sm:$0xff] %v386
    %456 = vst [vmem:[#allocation4 + $0x180] sm:$0xff] %v277
    %457 = vst [vmem:[#allocation4 + $0x188] sm:$0xff] %v279
    %458 = vst [vmem:[#allocation4 + $0x190] sm:$0xff] %v390
    %459 = vst [vmem:[#allocation4 + $0x198] sm:$0xff] %v392
    %460 = vst [vmem:[#allocation4 + $0x1a0] sm:$0xff] %v281
    %461 = vst [vmem:[#allocation4 + $0x1a8] sm:$0xff] %v283
    %462 = vst [vmem:[#allocation4 + $0x1b0] sm:$0xff] %v394
    %463 = vst [vmem:[#allocation4 + $0x1b8] sm:$0xff] %v396
    %464 = vst [vmem:[#allocation4 + $0x1c0] sm:$0xff] %v287
    %465 = vst [vmem:[#allocation4 + $0x1c8] sm:$0xff] %v289
    %466 = vst [vmem:[#allocation4 + $0x1d0] sm:$0xff] %v400
    %467 = vst [vmem:[#allocation4 + $0x1d8] sm:$0xff] %v402
    %468 = vst [vmem:[#allocation4 + $0x1e0] sm:$0xff] %v291
    %469 = vst [vmem:[#allocation4 + $0x1e8] sm:$0xff] %v293
    %470 = vst [vmem:[#allocation4 + $0x1f0] sm:$0xff] %v404
    %471 = vst [vmem:[#allocation4 + $0x1f8] sm:$0xff] %v406
    %v472 = vld [vmem:[#allocation2] sm:$0xff]
    %v473 = vld [vmem:[#allocation2 + $0x8] sm:$0xff]
    %v474 = vld [vmem:[#allocation3] sm:$0xff]
    %v475 = vld [vmem:[#allocation3 + $0x8] sm:$0xff]
    %v476 = vpack.c.bf16 %v473, %v472
    %v477 = vld [vmem:[#allocation5] sm:$0xff]
    %v478 = vld [vmem:[#allocation5 + $0x8] sm:$0xff]
    %v479 = vld [vmem:[#allocation5 + $0x10] sm:$0xff]
    %v480 = vld [vmem:[#allocation5 + $0x18] sm:$0xff]
    %v481 = vld [vmem:[#allocation5 + $0x20] sm:$0xff]
    %v482 = vld [vmem:[#allocation5 + $0x28] sm:$0xff]
    %v483 = vld [vmem:[#allocation5 + $0x30] sm:$0xff]
    %v484 = vld [vmem:[#allocation5 + $0x38] sm:$0xff]
    %v485 = vld [vmem:[#allocation5 + $0x40] sm:$0xff]
    %v486 = vld [vmem:[#allocation5 + $0x48] sm:$0xff]
    %v487 = vld [vmem:[#allocation5 + $0x50] sm:$0xff]
    %v488 = vld [vmem:[#allocation5 + $0x58] sm:$0xff]
    %v489 = vld [vmem:[#allocation5 + $0x60] sm:$0xff]
    %v490 = vld [vmem:[#allocation5 + $0x68] sm:$0xff]
    %v491 = vld [vmem:[#allocation5 + $0x70] sm:$0xff]
    %v492 = vld [vmem:[#allocation5 + $0x78] sm:$0xff]
    %v493 = vld [vmem:[#allocation5 + $0x80] sm:$0xff]
    %v494 = vld [vmem:[#allocation5 + $0x88] sm:$0xff]
    %v495 = vld [vmem:[#allocation5 + $0x90] sm:$0xff]
    %v496 = vld [vmem:[#allocation5 + $0x98] sm:$0xff]
    %v497 = vld [vmem:[#allocation5 + $0xa0] sm:$0xff]
    %v498 = vld [vmem:[#allocation5 + $0xa8] sm:$0xff]
    %v499 = vld [vmem:[#allocation5 + $0xb0] sm:$0xff]
    %v500 = vld [vmem:[#allocation5 + $0xb8] sm:$0xff]
    %v501 = vld [vmem:[#allocation5 + $0xc0] sm:$0xff]
    %v502 = vld [vmem:[#allocation5 + $0xc8] sm:$0xff]
    %v503 = vld [vmem:[#allocation5 + $0xd0] sm:$0xff]
    %v504 = vld [vmem:[#allocation5 + $0xd8] sm:$0xff]
    %v505 = vld [vmem:[#allocation5 + $0xe0] sm:$0xff]
    %v506 = vld [vmem:[#allocation5 + $0xe8] sm:$0xff]
    %v507 = vld [vmem:[#allocation5 + $0xf0] sm:$0xff]
    %v508 = vld [vmem:[#allocation5 + $0xf8] sm:$0xff]
    %s509 = smul.u32 0, 4
    %s510 = smul.addr %s509, 8
    %s511 = scalar_lea.vmem [#allocation4], %s510
    %v512 = vld [vmem:[%s511] sm:$0xff]
    %v513 = vld [vmem:[%s511 + $0x8] sm:$0xff]
    %v514 = vld [vmem:[%s511 + $0x10] sm:$0xff]
    %v515 = vld [vmem:[%s511 + $0x18] sm:$0xff]
    %v516 = vld [vmem:[%s511 + $0x20] sm:$0xff]
    %v517 = vld [vmem:[%s511 + $0x28] sm:$0xff]
    %v518 = vld [vmem:[%s511 + $0x30] sm:$0xff]
    %v519 = vld [vmem:[%s511 + $0x38] sm:$0xff]
    %v552 = vunpack.c.l.b16 %v477
    %v553 = vunpack.c.h.b16 %v477
    %v554 = vunpack.c.l.b16 %v478
    %v555 = vunpack.c.h.b16 %v478
    %v556 = vunpack.c.l.b16 %v479
    %v557 = vunpack.c.h.b16 %v479
    %v558 = vunpack.c.l.b16 %v480
    %v559 = vunpack.c.h.b16 %v480
    %v560 = vunpack.c.l.b16 %v481
    %v561 = vunpack.c.h.b16 %v481
    %v562 = vunpack.c.l.b16 %v482
    %v563 = vunpack.c.h.b16 %v482
    %v564 = vunpack.c.l.b16 %v483
    %v565 = vunpack.c.h.b16 %v483
    %v566 = vunpack.c.l.b16 %v484
    %v567 = vunpack.c.h.b16 %v484
    %v568 = vunpack.c.l.b16 %v485
    %v569 = vunpack.c.h.b16 %v485
    %v570 = vunpack.c.l.b16 %v486
    %v571 = vunpack.c.h.b16 %v486
    %v572 = vunpack.c.l.b16 %v487
    %v573 = vunpack.c.h.b16 %v487
    %v574 = vunpack.c.l.b16 %v488
    %v575 = vunpack.c.h.b16 %v488
    %v576 = vunpack.c.l.b16 %v489
    %v577 = vunpack.c.h.b16 %v489
    %v578 = vunpack.c.l.b16 %v490
    %v579 = vunpack.c.h.b16 %v490
    %v580 = vunpack.c.l.b16 %v491
    %v581 = vunpack.c.h.b16 %v491
    %v582 = vunpack.c.l.b16 %v492
    %v583 = vunpack.c.h.b16 %v492
    %v584 = vunpack.c.l.b16 %v493
    %v585 = vunpack.c.h.b16 %v493
    %v586 = vunpack.c.l.b16 %v494
    %v587 = vunpack.c.h.b16 %v494
    %v588 = vunpack.c.l.b16 %v495
    %v589 = vunpack.c.h.b16 %v495
    %v590 = vunpack.c.l.b16 %v496
    %v591 = vunpack.c.h.b16 %v496
    %v592 = vunpack.c.l.b16 %v497
    %v593 = vunpack.c.h.b16 %v497
    %v594 = vunpack.c.l.b16 %v498
    %v595 = vunpack.c.h.b16 %v498
    %v596 = vunpack.c.l.b16 %v499
    %v597 = vunpack.c.h.b16 %v499
    %v598 = vunpack.c.l.b16 %v500
    %v599 = vunpack.c.h.b16 %v500
    %v600 = vunpack.c.l.b16 %v501
    %v601 = vunpack.c.h.b16 %v501
    %v602 = vunpack.c.l.b16 %v502
    %v603 = vunpack.c.h.b16 %v502
    %v604 = vunpack.c.l.b16 %v503
    %v605 = vunpack.c.h.b16 %v503
    %v606 = vunpack.c.l.b16 %v504
    %v607 = vunpack.c.h.b16 %v504
    %v608 = vunpack.c.l.b16 %v505
    %v609 = vunpack.c.h.b16 %v505
    %v610 = vunpack.c.l.b16 %v506
    %v611 = vunpack.c.h.b16 %v506
    %v612 = vunpack.c.l.b16 %v507
    %v613 = vunpack.c.h.b16 %v507
    %v614 = vunpack.c.l.b16 %v508
    %v615 = vunpack.c.h.b16 %v508
    %v616 = vpack.c.b16 %v556, %v552
    %v617 = vpack.c.b16 %v557, %v553
    %v618 = vpack.c.b16 %v558, %v554
    %v619 = vpack.c.b16 %v559, %v555
    %v620 = vpack.c.b16 %v564, %v560
    %v621 = vpack.c.b16 %v565, %v561
    %v622 = vpack.c.b16 %v566, %v562
    %v623 = vpack.c.b16 %v567, %v563
    %v624 = vpack.c.b16 %v572, %v568
    %v625 = vpack.c.b16 %v573, %v569
    %v626 = vpack.c.b16 %v574, %v570
    %v627 = vpack.c.b16 %v575, %v571
    %v628 = vpack.c.b16 %v580, %v576
    %v629 = vpack.c.b16 %v581, %v577
    %v630 = vpack.c.b16 %v582, %v578
    %v631 = vpack.c.b16 %v583, %v579
    %v632 = vpack.c.b16 %v588, %v584
    %v633 = vpack.c.b16 %v589, %v585
    %v634 = vpack.c.b16 %v590, %v586
    %v635 = vpack.c.b16 %v591, %v587
    %v636 = vpack.c.b16 %v596, %v592
    %v637 = vpack.c.b16 %v597, %v593
    %v638 = vpack.c.b16 %v598, %v594
    %v639 = vpack.c.b16 %v599, %v595
    %v640 = vpack.c.b16 %v604, %v600
    %v641 = vpack.c.b16 %v605, %v601
    %v642 = vpack.c.b16 %v606, %v602
    %v643 = vpack.c.b16 %v607, %v603
    %v644 = vpack.c.b16 %v612, %v608
    %v645 = vpack.c.b16 %v613, %v609
    %v646 = vpack.c.b16 %v614, %v610
    %v647 = vpack.c.b16 %v615, %v611
    %680 = vmatprep.subr.bf16.mxu0 %v617
    %681 = vmatpush1.bf16.msra.mxu0 %v616
    %682 = vmatprep.subr.bf16.mxu0 %v621
    %683 = vmatpush1.bf16.msra.mxu0 %v620
    %684 = vmatprep.subr.bf16.mxu0 %v625
    %685 = vmatpush1.bf16.msra.mxu0 %v624
    %686 = vmatprep.subr.bf16.mxu0 %v629
    %687 = vmatpush1.bf16.msra.mxu0 %v628
    %688 = vmatprep.subr.bf16.mxu0 %v633
    %689 = vmatpush1.bf16.msra.mxu0 %v632
    %690 = vmatprep.subr.bf16.mxu0 %v637
    %691 = vmatpush1.bf16.msra.mxu0 %v636
    %692 = vmatprep.subr.bf16.mxu0 %v641
    %693 = vmatpush1.bf16.msra.mxu0 %v640
    %694 = vmatprep.subr.bf16.mxu0 %v645
    %695 = vmatpush1.bf16.msra.mxu0 %v644
    %696 = vmatprep.subr.bf16.mxu0 0
    %697 = vmatpush1.bf16.msra.mxu0 0
    %698 = vmatprep.subr.bf16.mxu0 0
    %699 = vmatpush1.bf16.msra.mxu0 0
    %700 = vmatprep.subr.bf16.mxu0 0
    %701 = vmatpush1.bf16.msra.mxu0 0
    %702 = vmatprep.subr.bf16.mxu0 0
    %703 = vmatpush1.bf16.msra.mxu0 0
    %704 = vmatprep.subr.bf16.mxu0 0
    %705 = vmatpush1.bf16.msra.mxu0 0
    %706 = vmatprep.subr.bf16.mxu0 0
    %707 = vmatpush1.bf16.msra.mxu0 0
    %708 = vmatprep.subr.bf16.mxu0 0
    %709 = vmatpush1.bf16.msra.mxu0 0
    %710 = vmatprep.subr.bf16.mxu0 0
    %711 = vmatpush1.bf16.msra.mxu0 0
    %712 = vmatprep.mubr.bf16.mxu0 0
    %713 = vmatmul.mubr.bf16.gmra.mrb[0].mxu0 %v476
    %v714 = vpop.f32.mrb[0].mxu0
    %v715 = vadd.f32 %v512, %v714
    %v716 = vpop.f32.mrb[0].mxu0
    %v717 = vadd.f32 %v513, %v716
    %v718 = vpop.f32.mrb[0].mxu0
    %v719 = vadd.f32 %v516, %v718
    %v720 = vpop.f32.mrb[0].mxu0
    %v721 = vadd.f32 %v517, %v720
    %722 = vdwg.mxu0
    %723 = vmatprep.subr.bf16.mxu0 %v619
    %724 = vmatpush1.bf16.msra.mxu0 %v618
    %725 = vmatprep.subr.bf16.mxu0 %v623
    %726 = vmatpush1.bf16.msra.mxu0 %v622
    %727 = vmatprep.subr.bf16.mxu0 %v627
    %728 = vmatpush1.bf16.msra.mxu0 %v626
    %729 = vmatprep.subr.bf16.mxu0 %v631
    %730 = vmatpush1.bf16.msra.mxu0 %v630
    %731 = vmatprep.subr.bf16.mxu0 %v635
    %732 = vmatpush1.bf16.msra.mxu0 %v634
    %733 = vmatprep.subr.bf16.mxu0 %v639
    %734 = vmatpush1.bf16.msra.mxu0 %v638
    %735 = vmatprep.subr.bf16.mxu0 %v643
    %736 = vmatpush1.bf16.msra.mxu0 %v642
    %737 = vmatprep.subr.bf16.mxu0 %v647
    %738 = vmatpush1.bf16.msra.mxu0 %v646
    %739 = vmatprep.subr.bf16.mxu0 0
    %740 = vmatpush1.bf16.msra.mxu0 0
    %741 = vmatprep.subr.bf16.mxu0 0
    %742 = vmatpush1.bf16.msra.mxu0 0
    %743 = vmatprep.subr.bf16.mxu0 0
    %744 = vmatpush1.bf16.msra.mxu0 0
    %745 = vmatprep.subr.bf16.mxu0 0
    %746 = vmatpush1.bf16.msra.mxu0 0
    %747 = vmatprep.subr.bf16.mxu0 0
    %748 = vmatpush1.bf16.msra.mxu0 0
    %749 = vmatprep.subr.bf16.mxu0 0
    %750 = vmatpush1.bf16.msra.mxu0 0
    %751 = vmatprep.subr.bf16.mxu0 0
    %752 = vmatpush1.bf16.msra.mxu0 0
    %753 = vmatprep.subr.bf16.mxu0 0
    %754 = vmatpush1.bf16.msra.mxu0 0
    %755 = vmatprep.mubr.bf16.mxu0 0
    %756 = vmatmul.mubr.bf16.gmra.mrb[0].mxu0 %v476
    %v757 = vpop.f32.mrb[0].mxu0
    %v758 = vadd.f32 %v514, %v757
    %v759 = vpop.f32.mrb[0].mxu0
    %v760 = vadd.f32 %v515, %v759
    %v761 = vpop.f32.mrb[0].mxu0
    %v762 = vadd.f32 %v518, %v761
    %v763 = vpop.f32.mrb[0].mxu0
    %v764 = vadd.f32 %v519, %v763
    %765 = vdwg.mxu0
    %v766 = vmul.f32 %v715, 0.5
    %v767 = vmul.f32 %v719, 0.5
    %v768 = vtanh.pop %v766
    %v769 = vtanh.pop %v767
    %v770 = vmul.f32 %v768, 0.5
    %v771 = vmul.f32 %v769, 0.5
    %v772 = vadd.f32 %v770, 0.5
    %v773 = vadd.f32 %v771, 0.5
    %v774 = vmul.f32 %v717, 0.5
    %v775 = vmul.f32 %v721, 0.5
    %v776 = vtanh.pop %v774
    %v777 = vtanh.pop %v775
    %v778 = vmul.f32 %v776, 0.5
    %v779 = vmul.f32 %v777, 0.5
    %v780 = vadd.f32 %v778, 0.5
    %v781 = vadd.f32 %v779, 0.5
    %v782 = vtanh.pop %v758
    %v783 = vtanh.pop %v762
    %v784 = vmul.f32 %v760, 0.5
    %v785 = vmul.f32 %v764, 0.5
    %v786 = vtanh.pop %v784
    %v787 = vtanh.pop %v785
    %v788 = vmul.f32 %v786, 0.5
    %v789 = vmul.f32 %v787, 0.5
    %v790 = vadd.f32 %v788, 0.5
    %v791 = vadd.f32 %v789, 0.5
    %v792 = vmul.f32 %v780, %v474
    %v793 = vmul.f32 %v781, %v475
    %v794 = vmul.f32 %v772, %v782
    %v795 = vmul.f32 %v773, %v783
    %v796 = vadd.f32 %v792, %v794
    %v797 = vadd.f32 %v793, %v795
    %v798 = vtanh.pop %v796
    %v799 = vtanh.pop %v797
    %v800 = vmul.f32 %v790, %v798
    %v801 = vmul.f32 %v791, %v799
    %802 = vst [vmem:[#allocation8] sm:$0xff] %v800
    %803 = vst [vmem:[#allocation8 + $0x8] sm:$0xff] %v801
    %804 = vst [vmem:[#allocation2] sm:$0xff] %v800
    %805 = vst [vmem:[#allocation2 + $0x8] sm:$0xff] %v801
    %806 = vst [vmem:[#allocation3] sm:$0xff] %v796
    %807 = vst [vmem:[#allocation3 + $0x8] sm:$0xff] %v797
    %v808 = vld [vmem:[#allocation2] sm:$0xff]
    %v809 = vld [vmem:[#allocation2 + $0x8] sm:$0xff]
    %v810 = vld [vmem:[#allocation3] sm:$0xff]
    %v811 = vld [vmem:[#allocation3 + $0x8] sm:$0xff]
    %v812 = vpack.c.bf16 %v809, %v808
    %v813 = vld [vmem:[#allocation5] sm:$0xff]
    %v814 = vld [vmem:[#allocation5 + $0x8] sm:$0xff]
    %v815 = vld [vmem:[#allocation5 + $0x10] sm:$0xff]
    %v816 = vld [vmem:[#allocation5 + $0x18] sm:$0xff]
    %v817 = vld [vmem:[#allocation5 + $0x20] sm:$0xff]
    %v818 = vld [vmem:[#allocation5 + $0x28] sm:$0xff]
    %v819 = vld [vmem:[#allocation5 + $0x30] sm:$0xff]
    %v820 = vld [vmem:[#allocation5 + $0x38] sm:$0xff]
    %v821 = vld [vmem:[#allocation5 + $0x40] sm:$0xff]
    %v822 = vld [vmem:[#allocation5 + $0x48] sm:$0xff]
    %v823 = vld [vmem:[#allocation5 + $0x50] sm:$0xff]
    %v824 = vld [vmem:[#allocation5 + $0x58] sm:$0xff]
    %v825 = vld [vmem:[#allocation5 + $0x60] sm:$0xff]
    %v826 = vld [vmem:[#allocation5 + $0x68] sm:$0xff]
    %v827 = vld [vmem:[#allocation5 + $0x70] sm:$0xff]
    %v828 = vld [vmem:[#allocation5 + $0x78] sm:$0xff]
    %v829 = vld [vmem:[#allocation5 + $0x80] sm:$0xff]
    %v830 = vld [vmem:[#allocation5 + $0x88] sm:$0xff]
    %v831 = vld [vmem:[#allocation5 + $0x90] sm:$0xff]
    %v832 = vld [vmem:[#allocation5 + $0x98] sm:$0xff]
    %v833 = vld [vmem:[#allocation5 + $0xa0] sm:$0xff]
    %v834 = vld [vmem:[#allocation5 + $0xa8] sm:$0xff]
    %v835 = vld [vmem:[#allocation5 + $0xb0] sm:$0xff]
    %v836 = vld [vmem:[#allocation5 + $0xb8] sm:$0xff]
    %v837 = vld [vmem:[#allocation5 + $0xc0] sm:$0xff]
    %v838 = vld [vmem:[#allocation5 + $0xc8] sm:$0xff]
    %v839 = vld [vmem:[#allocation5 + $0xd0] sm:$0xff]
    %v840 = vld [vmem:[#allocation5 + $0xd8] sm:$0xff]
    %v841 = vld [vmem:[#allocation5 + $0xe0] sm:$0xff]
    %v842 = vld [vmem:[#allocation5 + $0xe8] sm:$0xff]
    %v843 = vld [vmem:[#allocation5 + $0xf0] sm:$0xff]
    %v844 = vld [vmem:[#allocation5 + $0xf8] sm:$0xff]
    %s845 = smul.u32 2, 4
    %s846 = smul.addr %s845, 8
    %s847 = scalar_lea.vmem [#allocation4], %s846
    %v848 = vld [vmem:[%s847] sm:$0xff]
    %v849 = vld [vmem:[%s847 + $0x8] sm:$0xff]
    %v850 = vld [vmem:[%s847 + $0x10] sm:$0xff]
    %v851 = vld [vmem:[%s847 + $0x18] sm:$0xff]
    %v852 = vld [vmem:[%s847 + $0x20] sm:$0xff]
    %v853 = vld [vmem:[%s847 + $0x28] sm:$0xff]
    %v854 = vld [vmem:[%s847 + $0x30] sm:$0xff]
    %v855 = vld [vmem:[%s847 + $0x38] sm:$0xff]
    %v888 = vunpack.c.l.b16 %v813
    %v889 = vunpack.c.h.b16 %v813
    %v890 = vunpack.c.l.b16 %v814
    %v891 = vunpack.c.h.b16 %v814
    %v892 = vunpack.c.l.b16 %v815
    %v893 = vunpack.c.h.b16 %v815
    %v894 = vunpack.c.l.b16 %v816
    %v895 = vunpack.c.h.b16 %v816
    %v896 = vunpack.c.l.b16 %v817
    %v897 = vunpack.c.h.b16 %v817
    %v898 = vunpack.c.l.b16 %v818
    %v899 = vunpack.c.h.b16 %v818
    %v900 = vunpack.c.l.b16 %v819
    %v901 = vunpack.c.h.b16 %v819
    %v902 = vunpack.c.l.b16 %v820
    %v903 = vunpack.c.h.b16 %v820
    %v904 = vunpack.c.l.b16 %v821
    %v905 = vunpack.c.h.b16 %v821
    %v906 = vunpack.c.l.b16 %v822
    %v907 = vunpack.c.h.b16 %v822
    %v908 = vunpack.c.l.b16 %v823
    %v909 = vunpack.c.h.b16 %v823
    %v910 = vunpack.c.l.b16 %v824
    %v911 = vunpack.c.h.b16 %v824
    %v912 = vunpack.c.l.b16 %v825
    %v913 = vunpack.c.h.b16 %v825
    %v914 = vunpack.c.l.b16 %v826
    %v915 = vunpack.c.h.b16 %v826
    %v916 = vunpack.c.l.b16 %v827
    %v917 = vunpack.c.h.b16 %v827
    %v918 = vunpack.c.l.b16 %v828
    %v919 = vunpack.c.h.b16 %v828
    %v920 = vunpack.c.l.b16 %v829
    %v921 = vunpack.c.h.b16 %v829
    %v922 = vunpack.c.l.b16 %v830
    %v923 = vunpack.c.h.b16 %v830
    %v924 = vunpack.c.l.b16 %v831
    %v925 = vunpack.c.h.b16 %v831
    %v926 = vunpack.c.l.b16 %v832
    %v927 = vunpack.c.h.b16 %v832
    %v928 = vunpack.c.l.b16 %v833
    %v929 = vunpack.c.h.b16 %v833
    %v930 = vunpack.c.l.b16 %v834
    %v931 = vunpack.c.h.b16 %v834
    %v932 = vunpack.c.l.b16 %v835
    %v933 = vunpack.c.h.b16 %v835
    %v934 = vunpack.c.l.b16 %v836
    %v935 = vunpack.c.h.b16 %v836
    %v936 = vunpack.c.l.b16 %v837
    %v937 = vunpack.c.h.b16 %v837
    %v938 = vunpack.c.l.b16 %v838
    %v939 = vunpack.c.h.b16 %v838
    %v940 = vunpack.c.l.b16 %v839
    %v941 = vunpack.c.h.b16 %v839
    %v942 = vunpack.c.l.b16 %v840
    %v943 = vunpack.c.h.b16 %v840
    %v944 = vunpack.c.l.b16 %v841
    %v945 = vunpack.c.h.b16 %v841
    %v946 = vunpack.c.l.b16 %v842
    %v947 = vunpack.c.h.b16 %v842
    %v948 = vunpack.c.l.b16 %v843
    %v949 = vunpack.c.h.b16 %v843
    %v950 = vunpack.c.l.b16 %v844
    %v951 = vunpack.c.h.b16 %v844
    %v952 = vpack.c.b16 %v892, %v888
    %v953 = vpack.c.b16 %v893, %v889
    %v954 = vpack.c.b16 %v894, %v890
    %v955 = vpack.c.b16 %v895, %v891
    %v956 = vpack.c.b16 %v900, %v896
    %v957 = vpack.c.b16 %v901, %v897
    %v958 = vpack.c.b16 %v902, %v898
    %v959 = vpack.c.b16 %v903, %v899
    %v960 = vpack.c.b16 %v908, %v904
    %v961 = vpack.c.b16 %v909, %v905
    %v962 = vpack.c.b16 %v910, %v906
    %v963 = vpack.c.b16 %v911, %v907
    %v964 = vpack.c.b16 %v916, %v912
    %v965 = vpack.c.b16 %v917, %v913
    %v966 = vpack.c.b16 %v918, %v914
    %v967 = vpack.c.b16 %v919, %v915
    %v968 = vpack.c.b16 %v924, %v920
    %v969 = vpack.c.b16 %v925, %v921
    %v970 = vpack.c.b16 %v926, %v922
    %v971 = vpack.c.b16 %v927, %v923
    %v972 = vpack.c.b16 %v932, %v928
    %v973 = vpack.c.b16 %v933, %v929
    %v974 = vpack.c.b16 %v934, %v930
    %v975 = vpack.c.b16 %v935, %v931
    %v976 = vpack.c.b16 %v940, %v936
    %v977 = vpack.c.b16 %v941, %v937
    %v978 = vpack.c.b16 %v942, %v938
    %v979 = vpack.c.b16 %v943, %v939
    %v980 = vpack.c.b16 %v948, %v944
    %v981 = vpack.c.b16 %v949, %v945
    %v982 = vpack.c.b16 %v950, %v946
    %v983 = vpack.c.b16 %v951, %v947
    %1016 = vmatprep.subr.bf16.mxu0 %v953
    %1017 = vmatpush1.bf16.msra.mxu0 %v952
    %1018 = vmatprep.subr.bf16.mxu0 %v957
    %1019 = vmatpush1.bf16.msra.mxu0 %v956
    %1020 = vmatprep.subr.bf16.mxu0 %v961
    %1021 = vmatpush1.bf16.msra.mxu0 %v960
    %1022 = vmatprep.subr.bf16.mxu0 %v965
    %1023 = vmatpush1.bf16.msra.mxu0 %v964
    %1024 = vmatprep.subr.bf16.mxu0 %v969
    %1025 = vmatpush1.bf16.msra.mxu0 %v968
    %1026 = vmatprep.subr.bf16.mxu0 %v973
    %1027 = vmatpush1.bf16.msra.mxu0 %v972
    %1028 = vmatprep.subr.bf16.mxu0 %v977
    %1029 = vmatpush1.bf16.msra.mxu0 %v976
    %1030 = vmatprep.subr.bf16.mxu0 %v981
    %1031 = vmatpush1.bf16.msra.mxu0 %v980
    %1032 = vmatprep.subr.bf16.mxu0 0
    %1033 = vmatpush1.bf16.msra.mxu0 0
    %1034 = vmatprep.subr.bf16.mxu0 0
    %1035 = vmatpush1.bf16.msra.mxu0 0
    %1036 = vmatprep.subr.bf16.mxu0 0
    %1037 = vmatpush1.bf16.msra.mxu0 0
    %1038 = vmatprep.subr.bf16.mxu0 0
    %1039 = vmatpush1.bf16.msra.mxu0 0
    %1040 = vmatprep.subr.bf16.mxu0 0
    %1041 = vmatpush1.bf16.msra.mxu0 0
    %1042 = vmatprep.subr.bf16.mxu0 0
    %1043 = vmatpush1.bf16.msra.mxu0 0
    %1044 = vmatprep.subr.bf16.mxu0 0
    %1045 = vmatpush1.bf16.msra.mxu0 0
    %1046 = vmatprep.subr.bf16.mxu0 0
    %1047 = vmatpush1.bf16.msra.mxu0 0
    %1048 = vmatprep.mubr.bf16.mxu0 0
    %1049 = vmatmul.mubr.bf16.gmra.mrb[0].mxu0 %v812
    %v1050 = vpop.f32.mrb[0].mxu0
    %v1051 = vadd.f32 %v848, %v1050
    %v1052 = vpop.f32.mrb[0].mxu0
    %v1053 = vadd.f32 %v849, %v1052
    %v1054 = vpop.f32.mrb[0].mxu0
    %v1055 = vadd.f32 %v852, %v1054
    %v1056 = vpop.f32.mrb[0].mxu0
    %v1057 = vadd.f32 %v853, %v1056
    %1058 = vdwg.mxu0
    %1059 = vmatprep.subr.bf16.mxu0 %v955
    %1060 = vmatpush1.bf16.msra.mxu0 %v954
    %1061 = vmatprep.subr.bf16.mxu0 %v959
    %1062 = vmatpush1.bf16.msra.mxu0 %v958
    %1063 = vmatprep.subr.bf16.mxu0 %v963
    %1064 = vmatpush1.bf16.msra.mxu0 %v962
    %1065 = vmatprep.subr.bf16.mxu0 %v967
    %1066 = vmatpush1.bf16.msra.mxu0 %v966
    %1067 = vmatprep.subr.bf16.mxu0 %v971
    %1068 = vmatpush1.bf16.msra.mxu0 %v970
    %1069 = vmatprep.subr.bf16.mxu0 %v975
    %1070 = vmatpush1.bf16.msra.mxu0 %v974
    %1071 = vmatprep.subr.bf16.mxu0 %v979
    %1072 = vmatpush1.bf16.msra.mxu0 %v978
    %1073 = vmatprep.subr.bf16.mxu0 %v983
    %1074 = vmatpush1.bf16.msra.mxu0 %v982
    %1075 = vmatprep.subr.bf16.mxu0 0
    %1076 = vmatpush1.bf16.msra.mxu0 0
    %1077 = vmatprep.subr.bf16.mxu0 0
    %1078 = vmatpush1.bf16.msra.mxu0 0
    %1079 = vmatprep.subr.bf16.mxu0 0
    %1080 = vmatpush1.bf16.msra.mxu0 0
    %1081 = vmatprep.subr.bf16.mxu0 0
    %1082 = vmatpush1.bf16.msra.mxu0 0
    %1083 = vmatprep.subr.bf16.mxu0 0
    %1084 = vmatpush1.bf16.msra.mxu0 0
    %1085 = vmatprep.subr.bf16.mxu0 0
    %1086 = vmatpush1.bf16.msra.mxu0 0
    %1087 = vmatprep.subr.bf16.mxu0 0
    %1088 = vmatpush1.bf16.msra.mxu0 0
    %1089 = vmatprep.subr.bf16.mxu0 0
    %1090 = vmatpush1.bf16.msra.mxu0 0
    %1091 = vmatprep.mubr.bf16.mxu0 0
    %1092 = vmatmul.mubr.bf16.gmra.mrb[0].mxu0 %v812
    %v1093 = vpop.f32.mrb[0].mxu0
    %v1094 = vadd.f32 %v850, %v1093
    %v1095 = vpop.f32.mrb[0].mxu0
    %v1096 = vadd.f32 %v851, %v1095
    %v1097 = vpop.f32.mrb[0].mxu0
    %v1098 = vadd.f32 %v854, %v1097
    %v1099 = vpop.f32.mrb[0].mxu0
    %v1100 = vadd.f32 %v855, %v1099
    %1101 = vdwg.mxu0
    %v1102 = vmul.f32 %v1051, 0.5
    %v1103 = vmul.f32 %v1055, 0.5
    %v1104 = vtanh.pop %v1102
    %v1105 = vtanh.pop %v1103
    %v1106 = vmul.f32 %v1104, 0.5
    %v1107 = vmul.f32 %v1105, 0.5
    %v1108 = vadd.f32 %v1106, 0.5
    %v1109 = vadd.f32 %v1107, 0.5
    %v1110 = vmul.f32 %v1053, 0.5
    %v1111 = vmul.f32 %v1057, 0.5
    %v1112 = vtanh.pop %v1110
    %v1113 = vtanh.pop %v1111
    %v1114 = vmul.f32 %v1112, 0.5
    %v1115 = vmul.f32 %v1113, 0.5
    %v1116 = vadd.f32 %v1114, 0.5
    %v1117 = vadd.f32 %v1115, 0.5
    %v1118 = vtanh.pop %v1094
    %v1119 = vtanh.pop %v1098
    %v1120 = vmul.f32 %v1096, 0.5
    %v1121 = vmul.f32 %v1100, 0.5
    %v1122 = vtanh.pop %v1120
    %v1123 = vtanh.pop %v1121
    %v1124 = vmul.f32 %v1122, 0.5
    %v1125 = vmul.f32 %v1123, 0.5
    %v1126 = vadd.f32 %v1124, 0.5
    %v1127 = vadd.f32 %v1125, 0.5
    %v1128 = vmul.f32 %v1116, %v810
    %v1129 = vmul.f32 %v1117, %v811
    %v1130 = vmul.f32 %v1108, %v1118
    %v1131 = vmul.f32 %v1109, %v1119
    %v1132 = vadd.f32 %v1128, %v1130
    %v1133 = vadd.f32 %v1129, %v1131
    %v1134 = vtanh.pop %v1132
    %v1135 = vtanh.pop %v1133
    %v1136 = vmul.f32 %v1126, %v1134
    %v1137 = vmul.f32 %v1127, %v1135
    %s1138 = scalar_lea.vmem [#allocation8], 16
    %1139 = vst [vmem:[%s1138] sm:$0xff] %v1136
    %1140 = vst [vmem:[%s1138 + $0x8] sm:$0xff] %v1137
    %1141 = vst [vmem:[#allocation2] sm:$0xff] %v1136
    %1142 = vst [vmem:[#allocation2 + $0x8] sm:$0xff] %v1137
    %1143 = vst [vmem:[#allocation3] sm:$0xff] %v1132
    %1144 = vst [vmem:[#allocation3 + $0x8] sm:$0xff] %v1133
    %v1145 = vld [vmem:[#allocation2] sm:$0xff]
    %v1146 = vld [vmem:[#allocation2 + $0x8] sm:$0xff]
    %v1147 = vld [vmem:[#allocation3] sm:$0xff]
    %v1148 = vld [vmem:[#allocation3 + $0x8] sm:$0xff]
    %v1149 = vpack.c.bf16 %v1146, %v1145
    %v1150 = vld [vmem:[#allocation5] sm:$0xff]
    %v1151 = vld [vmem:[#allocation5 + $0x8] sm:$0xff]
    %v1152 = vld [vmem:[#allocation5 + $0x10] sm:$0xff]
    %v1153 = vld [vmem:[#allocation5 + $0x18] sm:$0xff]
    %v1154 = vld [vmem:[#allocation5 + $0x20] sm:$0xff]
    %v1155 = vld [vmem:[#allocation5 + $0x28] sm:$0xff]
    %v1156 = vld [vmem:[#allocation5 + $0x30] sm:$0xff]
    %v1157 = vld [vmem:[#allocation5 + $0x38] sm:$0xff]
    %v1158 = vld [vmem:[#allocation5 + $0x40] sm:$0xff]
    %v1159 = vld [vmem:[#allocation5 + $0x48] sm:$0xff]
    %v1160 = vld [vmem:[#allocation5 + $0x50] sm:$0xff]
    %v1161 = vld [vmem:[#allocation5 + $0x58] sm:$0xff]
    %v1162 = vld [vmem:[#allocation5 + $0x60] sm:$0xff]
    %v1163 = vld [vmem:[#allocation5 + $0x68] sm:$0xff]
    %v1164 = vld [vmem:[#allocation5 + $0x70] sm:$0xff]
    %v1165 = vld [vmem:[#allocation5 + $0x78] sm:$0xff]
    %v1166 = vld [vmem:[#allocation5 + $0x80] sm:$0xff]
    %v1167 = vld [vmem:[#allocation5 + $0x88] sm:$0xff]
    %v1168 = vld [vmem:[#allocation5 + $0x90] sm:$0xff]
    %v1169 = vld [vmem:[#allocation5 + $0x98] sm:$0xff]
    %v1170 = vld [vmem:[#allocation5 + $0xa0] sm:$0xff]
    %v1171 = vld [vmem:[#allocation5 + $0xa8] sm:$0xff]
    %v1172 = vld [vmem:[#allocation5 + $0xb0] sm:$0xff]
    %v1173 = vld [vmem:[#allocation5 + $0xb8] sm:$0xff]
    %v1174 = vld [vmem:[#allocation5 + $0xc0] sm:$0xff]
    %v1175 = vld [vmem:[#allocation5 + $0xc8] sm:$0xff]
    %v1176 = vld [vmem:[#allocation5 + $0xd0] sm:$0xff]
    %v1177 = vld [vmem:[#allocation5 + $0xd8] sm:$0xff]
    %v1178 = vld [vmem:[#allocation5 + $0xe0] sm:$0xff]
    %v1179 = vld [vmem:[#allocation5 + $0xe8] sm:$0xff]
    %v1180 = vld [vmem:[#allocation5 + $0xf0] sm:$0xff]
    %v1181 = vld [vmem:[#allocation5 + $0xf8] sm:$0xff]
    %s1182 = smul.u32 4, 4
    %s1183 = smul.addr %s1182, 8
    %s1184 = scalar_lea.vmem [#allocation4], %s1183
    %v1185 = vld [vmem:[%s1184] sm:$0xff]
    %v1186 = vld [vmem:[%s1184 + $0x8] sm:$0xff]
    %v1187 = vld [vmem:[%s1184 + $0x10] sm:$0xff]
    %v1188 = vld [vmem:[%s1184 + $0x18] sm:$0xff]
    %v1189 = vld [vmem:[%s1184 + $0x20] sm:$0xff]
    %v1190 = vld [vmem:[%s1184 + $0x28] sm:$0xff]
    %v1191 = vld [vmem:[%s1184 + $0x30] sm:$0xff]
    %v1192 = vld [vmem:[%s1184 + $0x38] sm:$0xff]
    %v1225 = vunpack.c.l.b16 %v1150
    %v1226 = vunpack.c.h.b16 %v1150
    %v1227 = vunpack.c.l.b16 %v1151
    %v1228 = vunpack.c.h.b16 %v1151
    %v1229 = vunpack.c.l.b16 %v1152
    %v1230 = vunpack.c.h.b16 %v1152
    %v1231 = vunpack.c.l.b16 %v1153
    %v1232 = vunpack.c.h.b16 %v1153
    %v1233 = vunpack.c.l.b16 %v1154
    %v1234 = vunpack.c.h.b16 %v1154
    %v1235 = vunpack.c.l.b16 %v1155
    %v1236 = vunpack.c.h.b16 %v1155
    %v1237 = vunpack.c.l.b16 %v1156
    %v1238 = vunpack.c.h.b16 %v1156
    %v1239 = vunpack.c.l.b16 %v1157
    %v1240 = vunpack.c.h.b16 %v1157
    %v1241 = vunpack.c.l.b16 %v1158
    %v1242 = vunpack.c.h.b16 %v1158
    %v1243 = vunpack.c.l.b16 %v1159
    %v1244 = vunpack.c.h.b16 %v1159
    %v1245 = vunpack.c.l.b16 %v1160
    %v1246 = vunpack.c.h.b16 %v1160
    %v1247 = vunpack.c.l.b16 %v1161
    %v1248 = vunpack.c.h.b16 %v1161
    %v1249 = vunpack.c.l.b16 %v1162
    %v1250 = vunpack.c.h.b16 %v1162
    %v1251 = vunpack.c.l.b16 %v1163
    %v1252 = vunpack.c.h.b16 %v1163
    %v1253 = vunpack.c.l.b16 %v1164
    %v1254 = vunpack.c.h.b16 %v1164
    %v1255 = vunpack.c.l.b16 %v1165
    %v1256 = vunpack.c.h.b16 %v1165
    %v1257 = vunpack.c.l.b16 %v1166
    %v1258 = vunpack.c.h.b16 %v1166
    %v1259 = vunpack.c.l.b16 %v1167
    %v1260 = vunpack.c.h.b16 %v1167
    %v1261 = vunpack.c.l.b16 %v1168
    %v1262 = vunpack.c.h.b16 %v1168
    %v1263 = vunpack.c.l.b16 %v1169
    %v1264 = vunpack.c.h.b16 %v1169
    %v1265 = vunpack.c.l.b16 %v1170
    %v1266 = vunpack.c.h.b16 %v1170
    %v1267 = vunpack.c.l.b16 %v1171
    %v1268 = vunpack.c.h.b16 %v1171
    %v1269 = vunpack.c.l.b16 %v1172
    %v1270 = vunpack.c.h.b16 %v1172
    %v1271 = vunpack.c.l.b16 %v1173
    %v1272 = vunpack.c.h.b16 %v1173
    %v1273 = vunpack.c.l.b16 %v1174
    %v1274 = vunpack.c.h.b16 %v1174
    %v1275 = vunpack.c.l.b16 %v1175
    %v1276 = vunpack.c.h.b16 %v1175
    %v1277 = vunpack.c.l.b16 %v1176
    %v1278 = vunpack.c.h.b16 %v1176
    %v1279 = vunpack.c.l.b16 %v1177
    %v1280 = vunpack.c.h.b16 %v1177
    %v1281 = vunpack.c.l.b16 %v1178
    %v1282 = vunpack.c.h.b16 %v1178
    %v1283 = vunpack.c.l.b16 %v1179
    %v1284 = vunpack.c.h.b16 %v1179
    %v1285 = vunpack.c.l.b16 %v1180
    %v1286 = vunpack.c.h.b16 %v1180
    %v1287 = vunpack.c.l.b16 %v1181
    %v1288 = vunpack.c.h.b16 %v1181
    %v1289 = vpack.c.b16 %v1229, %v1225
    %v1290 = vpack.c.b16 %v1230, %v1226
    %v1291 = vpack.c.b16 %v1231, %v1227
    %v1292 = vpack.c.b16 %v1232, %v1228
    %v1293 = vpack.c.b16 %v1237, %v1233
    %v1294 = vpack.c.b16 %v1238, %v1234
    %v1295 = vpack.c.b16 %v1239, %v1235
    %v1296 = vpack.c.b16 %v1240, %v1236
    %v1297 = vpack.c.b16 %v1245, %v1241
    %v1298 = vpack.c.b16 %v1246, %v1242
    %v1299 = vpack.c.b16 %v1247, %v1243
    %v1300 = vpack.c.b16 %v1248, %v1244
    %v1301 = vpack.c.b16 %v1253, %v1249
    %v1302 = vpack.c.b16 %v1254, %v1250
    %v1303 = vpack.c.b16 %v1255, %v1251
    %v1304 = vpack.c.b16 %v1256, %v1252
    %v1305 = vpack.c.b16 %v1261, %v1257
    %v1306 = vpack.c.b16 %v1262, %v1258
    %v1307 = vpack.c.b16 %v1263, %v1259
    %v1308 = vpack.c.b16 %v1264, %v1260
    %v1309 = vpack.c.b16 %v1269, %v1265
    %v1310 = vpack.c.b16 %v1270, %v1266
    %v1311 = vpack.c.b16 %v1271, %v1267
    %v1312 = vpack.c.b16 %v1272, %v1268
    %v1313 = vpack.c.b16 %v1277, %v1273
    %v1314 = vpack.c.b16 %v1278, %v1274
    %v1315 = vpack.c.b16 %v1279, %v1275
    %v1316 = vpack.c.b16 %v1280, %v1276
    %v1317 = vpack.c.b16 %v1285, %v1281
    %v1318 = vpack.c.b16 %v1286, %v1282
    %v1319 = vpack.c.b16 %v1287, %v1283
    %v1320 = vpack.c.b16 %v1288, %v1284
    %1353 = vmatprep.subr.bf16.mxu0 %v1290
    %1354 = vmatpush1.bf16.msra.mxu0 %v1289
    %1355 = vmatprep.subr.bf16.mxu0 %v1294
    %1356 = vmatpush1.bf16.msra.mxu0 %v1293
    %1357 = vmatprep.subr.bf16.mxu0 %v1298
    %1358 = vmatpush1.bf16.msra.mxu0 %v1297
    %1359 = vmatprep.subr.bf16.mxu0 %v1302
    %1360 = vmatpush1.bf16.msra.mxu0 %v1301
    %1361 = vmatprep.subr.bf16.mxu0 %v1306
    %1362 = vmatpush1.bf16.msra.mxu0 %v1305
    %1363 = vmatprep.subr.bf16.mxu0 %v1310
    %1364 = vmatpush1.bf16.msra.mxu0 %v1309
    %1365 = vmatprep.subr.bf16.mxu0 %v1314
    %1366 = vmatpush1.bf16.msra.mxu0 %v1313
    %1367 = vmatprep.subr.bf16.mxu0 %v1318
    %1368 = vmatpush1.bf16.msra.mxu0 %v1317
    %1369 = vmatprep.subr.bf16.mxu0 0
    %1370 = vmatpush1.bf16.msra.mxu0 0
    %1371 = vmatprep.subr.bf16.mxu0 0
    %1372 = vmatpush1.bf16.msra.mxu0 0
    %1373 = vmatprep.subr.bf16.mxu0 0
    %1374 = vmatpush1.bf16.msra.mxu0 0
    %1375 = vmatprep.subr.bf16.mxu0 0
    %1376 = vmatpush1.bf16.msra.mxu0 0
    %1377 = vmatprep.subr.bf16.mxu0 0
    %1378 = vmatpush1.bf16.msra.mxu0 0
    %1379 = vmatprep.subr.bf16.mxu0 0
    %1380 = vmatpush1.bf16.msra.mxu0 0
    %1381 = vmatprep.subr.bf16.mxu0 0
    %1382 = vmatpush1.bf16.msra.mxu0 0
    %1383 = vmatprep.subr.bf16.mxu0 0
    %1384 = vmatpush1.bf16.msra.mxu0 0
    %1385 = vmatprep.mubr.bf16.mxu0 0
    %1386 = vmatmul.mubr.bf16.gmra.mrb[0].mxu0 %v1149
    %v1387 = vpop.f32.mrb[0].mxu0
    %v1388 = vadd.f32 %v1185, %v1387
    %v1389 = vpop.f32.mrb[0].mxu0
    %v1390 = vadd.f32 %v1186, %v1389
    %v1391 = vpop.f32.mrb[0].mxu0
    %v1392 = vadd.f32 %v1189, %v1391
    %v1393 = vpop.f32.mrb[0].mxu0
    %v1394 = vadd.f32 %v1190, %v1393
    %1395 = vdwg.mxu0
    %1396 = vmatprep.subr.bf16.mxu0 %v1292
    %1397 = vmatpush1.bf16.msra.mxu0 %v1291
    %1398 = vmatprep.subr.bf16.mxu0 %v1296
    %1399 = vmatpush1.bf16.msra.mxu0 %v1295
    %1400 = vmatprep.subr.bf16.mxu0 %v1300
    %1401 = vmatpush1.bf16.msra.mxu0 %v1299
    %1402 = vmatprep.subr.bf16.mxu0 %v1304
    %1403 = vmatpush1.bf16.msra.mxu0 %v1303
    %1404 = vmatprep.subr.bf16.mxu0 %v1308
    %1405 = vmatpush1.bf16.msra.mxu0 %v1307
    %1406 = vmatprep.subr.bf16.mxu0 %v1312
    %1407 = vmatpush1.bf16.msra.mxu0 %v1311
    %1408 = vmatprep.subr.bf16.mxu0 %v1316
    %1409 = vmatpush1.bf16.msra.mxu0 %v1315
    %1410 = vmatprep.subr.bf16.mxu0 %v1320
    %1411 = vmatpush1.bf16.msra.mxu0 %v1319
    %1412 = vmatprep.subr.bf16.mxu0 0
    %1413 = vmatpush1.bf16.msra.mxu0 0
    %1414 = vmatprep.subr.bf16.mxu0 0
    %1415 = vmatpush1.bf16.msra.mxu0 0
    %1416 = vmatprep.subr.bf16.mxu0 0
    %1417 = vmatpush1.bf16.msra.mxu0 0
    %1418 = vmatprep.subr.bf16.mxu0 0
    %1419 = vmatpush1.bf16.msra.mxu0 0
    %1420 = vmatprep.subr.bf16.mxu0 0
    %1421 = vmatpush1.bf16.msra.mxu0 0
    %1422 = vmatprep.subr.bf16.mxu0 0
    %1423 = vmatpush1.bf16.msra.mxu0 0
    %1424 = vmatprep.subr.bf16.mxu0 0
    %1425 = vmatpush1.bf16.msra.mxu0 0
    %1426 = vmatprep.subr.bf16.mxu0 0
    %1427 = vmatpush1.bf16.msra.mxu0 0
    %1428 = vmatprep.mubr.bf16.mxu0 0
    %1429 = vmatmul.mubr.bf16.gmra.mrb[0].mxu0 %v1149
    %v1430 = vpop.f32.mrb[0].mxu0
    %v1431 = vadd.f32 %v1187, %v1430
    %v1432 = vpop.f32.mrb[0].mxu0
    %v1433 = vadd.f32 %v1188, %v1432
    %v1434 = vpop.f32.mrb[0].mxu0
    %v1435 = vadd.f32 %v1191, %v1434
    %v1436 = vpop.f32.mrb[0].mxu0
    %v1437 = vadd.f32 %v1192, %v1436
    %1438 = vdwg.mxu0
    %v1439 = vmul.f32 %v1388, 0.5
    %v1440 = vmul.f32 %v1392, 0.5
    %v1441 = vtanh.pop %v1439
    %v1442 = vtanh.pop %v1440
    %v1443 = vmul.f32 %v1441, 0.5
    %v1444 = vmul.f32 %v1442, 0.5
    %v1445 = vadd.f32 %v1443, 0.5
    %v1446 = vadd.f32 %v1444, 0.5
    %v1447 = vmul.f32 %v1390, 0.5
    %v1448 = vmul.f32 %v1394, 0.5
    %v1449 = vtanh.pop %v1447
    %v1450 = vtanh.pop %v1448
    %v1451 = vmul.f32 %v1449, 0.5
    %v1452 = vmul.f32 %v1450, 0.5
    %v1453 = vadd.f32 %v1451, 0.5
    %v1454 = vadd.f32 %v1452, 0.5
    %v1455 = vtanh.pop %v1431
    %v1456 = vtanh.pop %v1435
    %v1457 = vmul.f32 %v1433, 0.5
    %v1458 = vmul.f32 %v1437, 0.5
    %v1459 = vtanh.pop %v1457
    %v1460 = vtanh.pop %v1458
    %v1461 = vmul.f32 %v1459, 0.5
    %v1462 = vmul.f32 %v1460, 0.5
    %v1463 = vadd.f32 %v1461, 0.5
    %v1464 = vadd.f32 %v1462, 0.5
    %v1465 = vmul.f32 %v1453, %v1147
    %v1466 = vmul.f32 %v1454, %v1148
    %v1467 = vmul.f32 %v1445, %v1455
    %v1468 = vmul.f32 %v1446, %v1456
    %v1469 = vadd.f32 %v1465, %v1467
    %v1470 = vadd.f32 %v1466, %v1468
    %v1471 = vtanh.pop %v1469
    %v1472 = vtanh.pop %v1470
    %v1473 = vmul.f32 %v1463, %v1471
    %v1474 = vmul.f32 %v1464, %v1472
    %s1475 = scalar_lea.vmem [#allocation8], 32
    %1476 = vst [vmem:[%s1475] sm:$0xff] %v1473
    %1477 = vst [vmem:[%s1475 + $0x8] sm:$0xff] %v1474
    %1478 = vst [vmem:[#allocation2] sm:$0xff] %v1473
    %1479 = vst [vmem:[#allocation2 + $0x8] sm:$0xff] %v1474
    %1480 = vst [vmem:[#allocation3] sm:$0xff] %v1469
    %1481 = vst [vmem:[#allocation3 + $0x8] sm:$0xff] %v1470
    %v1482 = vld [vmem:[#allocation2] sm:$0xff]
    %v1483 = vld [vmem:[#allocation2 + $0x8] sm:$0xff]
    %v1484 = vld [vmem:[#allocation3] sm:$0xff]
    %v1485 = vld [vmem:[#allocation3 + $0x8] sm:$0xff]
    %v1486 = vpack.c.bf16 %v1483, %v1482
    %v1487 = vld [vmem:[#allocation5] sm:$0xff]
    %v1488 = vld [vmem:[#allocation5 + $0x8] sm:$0xff]
    %v1489 = vld [vmem:[#allocation5 + $0x10] sm:$0xff]
    %v1490 = vld [vmem:[#allocation5 + $0x18] sm:$0xff]
    %v1491 = vld [vmem:[#allocation5 + $0x20] sm:$0xff]
    %v1492 = vld [vmem:[#allocation5 + $0x28] sm:$0xff]
    %v1493 = vld [vmem:[#allocation5 + $0x30] sm:$0xff]
    %v1494 = vld [vmem:[#allocation5 + $0x38] sm:$0xff]
    %v1495 = vld [vmem:[#allocation5 + $0x40] sm:$0xff]
    %v1496 = vld [vmem:[#allocation5 + $0x48] sm:$0xff]
    %v1497 = vld [vmem:[#allocation5 + $0x50] sm:$0xff]
    %v1498 = vld [vmem:[#allocation5 + $0x58] sm:$0xff]
    %v1499 = vld [vmem:[#allocation5 + $0x60] sm:$0xff]
    %v1500 = vld [vmem:[#allocation5 + $0x68] sm:$0xff]
    %v1501 = vld [vmem:[#allocation5 + $0x70] sm:$0xff]
    %v1502 = vld [vmem:[#allocation5 + $0x78] sm:$0xff]
    %v1503 = vld [vmem:[#allocation5 + $0x80] sm:$0xff]
    %v1504 = vld [vmem:[#allocation5 + $0x88] sm:$0xff]
    %v1505 = vld [vmem:[#allocation5 + $0x90] sm:$0xff]
    %v1506 = vld [vmem:[#allocation5 + $0x98] sm:$0xff]
    %v1507 = vld [vmem:[#allocation5 + $0xa0] sm:$0xff]
    %v1508 = vld [vmem:[#allocation5 + $0xa8] sm:$0xff]
    %v1509 = vld [vmem:[#allocation5 + $0xb0] sm:$0xff]
    %v1510 = vld [vmem:[#allocation5 + $0xb8] sm:$0xff]
    %v1511 = vld [vmem:[#allocation5 + $0xc0] sm:$0xff]
    %v1512 = vld [vmem:[#allocation5 + $0xc8] sm:$0xff]
    %v1513 = vld [vmem:[#allocation5 + $0xd0] sm:$0xff]
    %v1514 = vld [vmem:[#allocation5 + $0xd8] sm:$0xff]
    %v1515 = vld [vmem:[#allocation5 + $0xe0] sm:$0xff]
    %v1516 = vld [vmem:[#allocation5 + $0xe8] sm:$0xff]
    %v1517 = vld [vmem:[#allocation5 + $0xf0] sm:$0xff]
    %v1518 = vld [vmem:[#allocation5 + $0xf8] sm:$0xff]
    %s1519 = smul.u32 6, 4
    %s1520 = smul.addr %s1519, 8
    %s1521 = scalar_lea.vmem [#allocation4], %s1520
    %v1522 = vld [vmem:[%s1521] sm:$0xff]
    %v1523 = vld [vmem:[%s1521 + $0x8] sm:$0xff]
    %v1524 = vld [vmem:[%s1521 + $0x10] sm:$0xff]
    %v1525 = vld [vmem:[%s1521 + $0x18] sm:$0xff]
    %v1526 = vld [vmem:[%s1521 + $0x20] sm:$0xff]
    %v1527 = vld [vmem:[%s1521 + $0x28] sm:$0xff]
    %v1528 = vld [vmem:[%s1521 + $0x30] sm:$0xff]
    %v1529 = vld [vmem:[%s1521 + $0x38] sm:$0xff]
    %v1562 = vunpack.c.l.b16 %v1487
    %v1563 = vunpack.c.h.b16 %v1487
    %v1564 = vunpack.c.l.b16 %v1488
    %v1565 = vunpack.c.h.b16 %v1488
    %v1566 = vunpack.c.l.b16 %v1489
    %v1567 = vunpack.c.h.b16 %v1489
    %v1568 = vunpack.c.l.b16 %v1490
    %v1569 = vunpack.c.h.b16 %v1490
    %v1570 = vunpack.c.l.b16 %v1491
    %v1571 = vunpack.c.h.b16 %v1491
    %v1572 = vunpack.c.l.b16 %v1492
    %v1573 = vunpack.c.h.b16 %v1492
    %v1574 = vunpack.c.l.b16 %v1493
    %v1575 = vunpack.c.h.b16 %v1493
    %v1576 = vunpack.c.l.b16 %v1494
    %v1577 = vunpack.c.h.b16 %v1494
    %v1578 = vunpack.c.l.b16 %v1495
    %v1579 = vunpack.c.h.b16 %v1495
    %v1580 = vunpack.c.l.b16 %v1496
    %v1581 = vunpack.c.h.b16 %v1496
    %v1582 = vunpack.c.l.b16 %v1497
    %v1583 = vunpack.c.h.b16 %v1497
    %v1584 = vunpack.c.l.b16 %v1498
    %v1585 = vunpack.c.h.b16 %v1498
    %v1586 = vunpack.c.l.b16 %v1499
    %v1587 = vunpack.c.h.b16 %v1499
    %v1588 = vunpack.c.l.b16 %v1500
    %v1589 = vunpack.c.h.b16 %v1500
    %v1590 = vunpack.c.l.b16 %v1501
    %v1591 = vunpack.c.h.b16 %v1501
    %v1592 = vunpack.c.l.b16 %v1502
    %v1593 = vunpack.c.h.b16 %v1502
    %v1594 = vunpack.c.l.b16 %v1503
    %v1595 = vunpack.c.h.b16 %v1503
    %v1596 = vunpack.c.l.b16 %v1504
    %v1597 = vunpack.c.h.b16 %v1504
    %v1598 = vunpack.c.l.b16 %v1505
    %v1599 = vunpack.c.h.b16 %v1505
    %v1600 = vunpack.c.l.b16 %v1506
    %v1601 = vunpack.c.h.b16 %v1506
    %v1602 = vunpack.c.l.b16 %v1507
    %v1603 = vunpack.c.h.b16 %v1507
    %v1604 = vunpack.c.l.b16 %v1508
    %v1605 = vunpack.c.h.b16 %v1508
    %v1606 = vunpack.c.l.b16 %v1509
    %v1607 = vunpack.c.h.b16 %v1509
    %v1608 = vunpack.c.l.b16 %v1510
    %v1609 = vunpack.c.h.b16 %v1510
    %v1610 = vunpack.c.l.b16 %v1511
    %v1611 = vunpack.c.h.b16 %v1511
    %v1612 = vunpack.c.l.b16 %v1512
    %v1613 = vunpack.c.h.b16 %v1512
    %v1614 = vunpack.c.l.b16 %v1513
    %v1615 = vunpack.c.h.b16 %v1513
    %v1616 = vunpack.c.l.b16 %v1514
    %v1617 = vunpack.c.h.b16 %v1514
    %v1618 = vunpack.c.l.b16 %v1515
    %v1619 = vunpack.c.h.b16 %v1515
    %v1620 = vunpack.c.l.b16 %v1516
    %v1621 = vunpack.c.h.b16 %v1516
    %v1622 = vunpack.c.l.b16 %v1517
    %v1623 = vunpack.c.h.b16 %v1517
    %v1624 = vunpack.c.l.b16 %v1518
    %v1625 = vunpack.c.h.b16 %v1518
    %v1626 = vpack.c.b16 %v1566, %v1562
    %v1627 = vpack.c.b16 %v1567, %v1563
    %v1628 = vpack.c.b16 %v1568, %v1564
    %v1629 = vpack.c.b16 %v1569, %v1565
    %v1630 = vpack.c.b16 %v1574, %v1570
    %v1631 = vpack.c.b16 %v1575, %v1571
    %v1632 = vpack.c.b16 %v1576, %v1572
    %v1633 = vpack.c.b16 %v1577, %v1573
    %v1634 = vpack.c.b16 %v1582, %v1578
    %v1635 = vpack.c.b16 %v1583, %v1579
    %v1636 = vpack.c.b16 %v1584, %v1580
    %v1637 = vpack.c.b16 %v1585, %v1581
    %v1638 = vpack.c.b16 %v1590, %v1586
    %v1639 = vpack.c.b16 %v1591, %v1587
    %v1640 = vpack.c.b16 %v1592, %v1588
    %v1641 = vpack.c.b16 %v1593, %v1589
    %v1642 = vpack.c.b16 %v1598, %v1594
    %v1643 = vpack.c.b16 %v1599, %v1595
    %v1644 = vpack.c.b16 %v1600, %v1596
    %v1645 = vpack.c.b16 %v1601, %v1597
    %v1646 = vpack.c.b16 %v1606, %v1602
    %v1647 = vpack.c.b16 %v1607, %v1603
    %v1648 = vpack.c.b16 %v1608, %v1604
    %v1649 = vpack.c.b16 %v1609, %v1605
    %v1650 = vpack.c.b16 %v1614, %v1610
    %v1651 = vpack.c.b16 %v1615, %v1611
    %v1652 = vpack.c.b16 %v1616, %v1612
    %v1653 = vpack.c.b16 %v1617, %v1613
    %v1654 = vpack.c.b16 %v1622, %v1618
    %v1655 = vpack.c.b16 %v1623, %v1619
    %v1656 = vpack.c.b16 %v1624, %v1620
    %v1657 = vpack.c.b16 %v1625, %v1621
    %1690 = vmatprep.subr.bf16.mxu0 %v1627
    %1691 = vmatpush1.bf16.msra.mxu0 %v1626
    %1692 = vmatprep.subr.bf16.mxu0 %v1631
    %1693 = vmatpush1.bf16.msra.mxu0 %v1630
    %1694 = vmatprep.subr.bf16.mxu0 %v1635
    %1695 = vmatpush1.bf16.msra.mxu0 %v1634
    %1696 = vmatprep.subr.bf16.mxu0 %v1639
    %1697 = vmatpush1.bf16.msra.mxu0 %v1638
    %1698 = vmatprep.subr.bf16.mxu0 %v1643
    %1699 = vmatpush1.bf16.msra.mxu0 %v1642
    %1700 = vmatprep.subr.bf16.mxu0 %v1647
    %1701 = vmatpush1.bf16.msra.mxu0 %v1646
    %1702 = vmatprep.subr.bf16.mxu0 %v1651
    %1703 = vmatpush1.bf16.msra.mxu0 %v1650
    %1704 = vmatprep.subr.bf16.mxu0 %v1655
    %1705 = vmatpush1.bf16.msra.mxu0 %v1654
    %1706 = vmatprep.subr.bf16.mxu0 0
    %1707 = vmatpush1.bf16.msra.mxu0 0
    %1708 = vmatprep.subr.bf16.mxu0 0
    %1709 = vmatpush1.bf16.msra.mxu0 0
    %1710 = vmatprep.subr.bf16.mxu0 0
    %1711 = vmatpush1.bf16.msra.mxu0 0
    %1712 = vmatprep.subr.bf16.mxu0 0
    %1713 = vmatpush1.bf16.msra.mxu0 0
    %1714 = vmatprep.subr.bf16.mxu0 0
    %1715 = vmatpush1.bf16.msra.mxu0 0
    %1716 = vmatprep.subr.bf16.mxu0 0
    %1717 = vmatpush1.bf16.msra.mxu0 0
    %1718 = vmatprep.subr.bf16.mxu0 0
    %1719 = vmatpush1.bf16.msra.mxu0 0
    %1720 = vmatprep.subr.bf16.mxu0 0
    %1721 = vmatpush1.bf16.msra.mxu0 0
    %1722 = vmatprep.mubr.bf16.mxu0 0
    %1723 = vmatmul.mubr.bf16.gmra.mrb[0].mxu0 %v1486
    %v1724 = vpop.f32.mrb[0].mxu0
    %v1725 = vadd.f32 %v1522, %v1724
    %v1726 = vpop.f32.mrb[0].mxu0
    %v1727 = vadd.f32 %v1523, %v1726
    %v1728 = vpop.f32.mrb[0].mxu0
    %v1729 = vadd.f32 %v1526, %v1728
    %v1730 = vpop.f32.mrb[0].mxu0
    %v1731 = vadd.f32 %v1527, %v1730
    %1732 = vdwg.mxu0
    %1733 = vmatprep.subr.bf16.mxu0 %v1629
    %1734 = vmatpush1.bf16.msra.mxu0 %v1628
    %1735 = vmatprep.subr.bf16.mxu0 %v1633
    %1736 = vmatpush1.bf16.msra.mxu0 %v1632
    %1737 = vmatprep.subr.bf16.mxu0 %v1637
    %1738 = vmatpush1.bf16.msra.mxu0 %v1636
    %1739 = vmatprep.subr.bf16.mxu0 %v1641
    %1740 = vmatpush1.bf16.msra.mxu0 %v1640
    %1741 = vmatprep.subr.bf16.mxu0 %v1645
    %1742 = vmatpush1.bf16.msra.mxu0 %v1644
    %1743 = vmatprep.subr.bf16.mxu0 %v1649
    %1744 = vmatpush1.bf16.msra.mxu0 %v1648
    %1745 = vmatprep.subr.bf16.mxu0 %v1653
    %1746 = vmatpush1.bf16.msra.mxu0 %v1652
    %1747 = vmatprep.subr.bf16.mxu0 %v1657
    %1748 = vmatpush1.bf16.msra.mxu0 %v1656
    %1749 = vmatprep.subr.bf16.mxu0 0
    %1750 = vmatpush1.bf16.msra.mxu0 0
    %1751 = vmatprep.subr.bf16.mxu0 0
    %1752 = vmatpush1.bf16.msra.mxu0 0
    %1753 = vmatprep.subr.bf16.mxu0 0
    %1754 = vmatpush1.bf16.msra.mxu0 0
    %1755 = vmatprep.subr.bf16.mxu0 0
    %1756 = vmatpush1.bf16.msra.mxu0 0
    %1757 = vmatprep.subr.bf16.mxu0 0
    %1758 = vmatpush1.bf16.msra.mxu0 0
    %1759 = vmatprep.subr.bf16.mxu0 0
    %1760 = vmatpush1.bf16.msra.mxu0 0
    %1761 = vmatprep.subr.bf16.mxu0 0
    %1762 = vmatpush1.bf16.msra.mxu0 0
    %1763 = vmatprep.subr.bf16.mxu0 0
    %1764 = vmatpush1.bf16.msra.mxu0 0
    %1765 = vmatprep.mubr.bf16.mxu0 0
    %1766 = vmatmul.mubr.bf16.gmra.mrb[0].mxu0 %v1486
    %v1767 = vpop.f32.mrb[0].mxu0
    %v1768 = vadd.f32 %v1524, %v1767
    %v1769 = vpop.f32.mrb[0].mxu0
    %v1770 = vadd.f32 %v1525, %v1769
    %v1771 = vpop.f32.mrb[0].mxu0
    %v1772 = vadd.f32 %v1528, %v1771
    %v1773 = vpop.f32.mrb[0].mxu0
    %v1774 = vadd.f32 %v1529, %v1773
    %1775 = vdwg.mxu0
    %v1776 = vmul.f32 %v1725, 0.5
    %v1777 = vmul.f32 %v1729, 0.5
    %v1778 = vtanh.pop %v1776
    %v1779 = vtanh.pop %v1777
    %v1780 = vmul.f32 %v1778, 0.5
    %v1781 = vmul.f32 %v1779, 0.5
    %v1782 = vadd.f32 %v1780, 0.5
    %v1783 = vadd.f32 %v1781, 0.5
    %v1784 = vmul.f32 %v1727, 0.5
    %v1785 = vmul.f32 %v1731, 0.5
    %v1786 = vtanh.pop %v1784
    %v1787 = vtanh.pop %v1785
    %v1788 = vmul.f32 %v1786, 0.5
    %v1789 = vmul.f32 %v1787, 0.5
    %v1790 = vadd.f32 %v1788, 0.5
    %v1791 = vadd.f32 %v1789, 0.5
    %v1792 = vtanh.pop %v1768
    %v1793 = vtanh.pop %v1772
    %v1794 = vmul.f32 %v1770, 0.5
    %v1795 = vmul.f32 %v1774, 0.5
    %v1796 = vtanh.pop %v1794
    %v1797 = vtanh.pop %v1795
    %v1798 = vmul.f32 %v1796, 0.5
    %v1799 = vmul.f32 %v1797, 0.5
    %v1800 = vadd.f32 %v1798, 0.5
    %v1801 = vadd.f32 %v1799, 0.5
    %v1802 = vmul.f32 %v1790, %v1484
    %v1803 = vmul.f32 %v1791, %v1485
    %v1804 = vmul.f32 %v1782, %v1792
    %v1805 = vmul.f32 %v1783, %v1793
    %v1806 = vadd.f32 %v1802, %v1804
    %v1807 = vadd.f32 %v1803, %v1805
    %v1808 = vtanh.pop %v1806
    %v1809 = vtanh.pop %v1807
    %v1810 = vmul.f32 %v1800, %v1808
    %v1811 = vmul.f32 %v1801, %v1809
    %s1812 = scalar_lea.vmem [#allocation8], 48
    %1813 = vst [vmem:[%s1812] sm:$0xff] %v1810
    %1814 = vst [vmem:[%s1812 + $0x8] sm:$0xff] %v1811
    %1815 = vst [vmem:[#allocation2] sm:$0xff] %v1810
    %1816 = vst [vmem:[#allocation2 + $0x8] sm:$0xff] %v1811
    %1817 = vst [vmem:[#allocation3] sm:$0xff] %v1806
    %1818 = vst [vmem:[#allocation3 + $0x8] sm:$0xff] %v1807
    %v1819 = vld [vmem:[#allocation2] sm:$0xff]
    %v1820 = vld [vmem:[#allocation2 + $0x8] sm:$0xff]
    %v1821 = vld [vmem:[#allocation3] sm:$0xff]
    %v1822 = vld [vmem:[#allocation3 + $0x8] sm:$0xff]
    %v1823 = vpack.c.bf16 %v1820, %v1819
    %v1824 = vld [vmem:[#allocation5] sm:$0xff]
    %v1825 = vld [vmem:[#allocation5 + $0x8] sm:$0xff]
    %v1826 = vld [vmem:[#allocation5 + $0x10] sm:$0xff]
    %v1827 = vld [vmem:[#allocation5 + $0x18] sm:$0xff]
    %v1828 = vld [vmem:[#allocation5 + $0x20] sm:$0xff]
    %v1829 = vld [vmem:[#allocation5 + $0x28] sm:$0xff]
    %v1830 = vld [vmem:[#allocation5 + $0x30] sm:$0xff]
    %v1831 = vld [vmem:[#allocation5 + $0x38] sm:$0xff]
    %v1832 = vld [vmem:[#allocation5 + $0x40] sm:$0xff]
    %v1833 = vld [vmem:[#allocation5 + $0x48] sm:$0xff]
    %v1834 = vld [vmem:[#allocation5 + $0x50] sm:$0xff]
    %v1835 = vld [vmem:[#allocation5 + $0x58] sm:$0xff]
    %v1836 = vld [vmem:[#allocation5 + $0x60] sm:$0xff]
    %v1837 = vld [vmem:[#allocation5 + $0x68] sm:$0xff]
    %v1838 = vld [vmem:[#allocation5 + $0x70] sm:$0xff]
    %v1839 = vld [vmem:[#allocation5 + $0x78] sm:$0xff]
    %v1840 = vld [vmem:[#allocation5 + $0x80] sm:$0xff]
    %v1841 = vld [vmem:[#allocation5 + $0x88] sm:$0xff]
    %v1842 = vld [vmem:[#allocation5 + $0x90] sm:$0xff]
    %v1843 = vld [vmem:[#allocation5 + $0x98] sm:$0xff]
    %v1844 = vld [vmem:[#allocation5 + $0xa0] sm:$0xff]
    %v1845 = vld [vmem:[#allocation5 + $0xa8] sm:$0xff]
    %v1846 = vld [vmem:[#allocation5 + $0xb0] sm:$0xff]
    %v1847 = vld [vmem:[#allocation5 + $0xb8] sm:$0xff]
    %v1848 = vld [vmem:[#allocation5 + $0xc0] sm:$0xff]
    %v1849 = vld [vmem:[#allocation5 + $0xc8] sm:$0xff]
    %v1850 = vld [vmem:[#allocation5 + $0xd0] sm:$0xff]
    %v1851 = vld [vmem:[#allocation5 + $0xd8] sm:$0xff]
    %v1852 = vld [vmem:[#allocation5 + $0xe0] sm:$0xff]
    %v1853 = vld [vmem:[#allocation5 + $0xe8] sm:$0xff]
    %v1854 = vld [vmem:[#allocation5 + $0xf0] sm:$0xff]
    %v1855 = vld [vmem:[#allocation5 + $0xf8] sm:$0xff]
    %s1856 = smul.u32 8, 4
    %s1857 = smul.addr %s1856, 8
    %s1858 = scalar_lea.vmem [#allocation4], %s1857
    %v1859 = vld [vmem:[%s1858] sm:$0xff]
    %v1860 = vld [vmem:[%s1858 + $0x8] sm:$0xff]
    %v1861 = vld [vmem:[%s1858 + $0x10] sm:$0xff]
    %v1862 = vld [vmem:[%s1858 + $0x18] sm:$0xff]
    %v1863 = vld [vmem:[%s1858 + $0x20] sm:$0xff]
    %v1864 = vld [vmem:[%s1858 + $0x28] sm:$0xff]
    %v1865 = vld [vmem:[%s1858 + $0x30] sm:$0xff]
    %v1866 = vld [vmem:[%s1858 + $0x38] sm:$0xff]
    %v1899 = vunpack.c.l.b16 %v1824
    %v1900 = vunpack.c.h.b16 %v1824
    %v1901 = vunpack.c.l.b16 %v1825
    %v1902 = vunpack.c.h.b16 %v1825
    %v1903 = vunpack.c.l.b16 %v1826
    %v1904 = vunpack.c.h.b16 %v1826
    %v1905 = vunpack.c.l.b16 %v1827
    %v1906 = vunpack.c.h.b16 %v1827
    %v1907 = vunpack.c.l.b16 %v1828
    %v1908 = vunpack.c.h.b16 %v1828
    %v1909 = vunpack.c.l.b16 %v1829
    %v1910 = vunpack.c.h.b16 %v1829
    %v1911 = vunpack.c.l.b16 %v1830
    %v1912 = vunpack.c.h.b16 %v1830
    %v1913 = vunpack.c.l.b16 %v1831
    %v1914 = vunpack.c.h.b16 %v1831
    %v1915 = vunpack.c.l.b16 %v1832
    %v1916 = vunpack.c.h.b16 %v1832
    %v1917 = vunpack.c.l.b16 %v1833
    %v1918 = vunpack.c.h.b16 %v1833
    %v1919 = vunpack.c.l.b16 %v1834
    %v1920 = vunpack.c.h.b16 %v1834
    %v1921 = vunpack.c.l.b16 %v1835
    %v1922 = vunpack.c.h.b16 %v1835
    %v1923 = vunpack.c.l.b16 %v1836
    %v1924 = vunpack.c.h.b16 %v1836
    %v1925 = vunpack.c.l.b16 %v1837
    %v1926 = vunpack.c.h.b16 %v1837
    %v1927 = vunpack.c.l.b16 %v1838
    %v1928 = vunpack.c.h.b16 %v1838
    %v1929 = vunpack.c.l.b16 %v1839
    %v1930 = vunpack.c.h.b16 %v1839
    %v1931 = vunpack.c.l.b16 %v1840
    %v1932 = vunpack.c.h.b16 %v1840
    %v1933 = vunpack.c.l.b16 %v1841
    %v1934 = vunpack.c.h.b16 %v1841
    %v1935 = vunpack.c.l.b16 %v1842
    %v1936 = vunpack.c.h.b16 %v1842
    %v1937 = vunpack.c.l.b16 %v1843
    %v1938 = vunpack.c.h.b16 %v1843
    %v1939 = vunpack.c.l.b16 %v1844
    %v1940 = vunpack.c.h.b16 %v1844
    %v1941 = vunpack.c.l.b16 %v1845
    %v1942 = vunpack.c.h.b16 %v1845
    %v1943 = vunpack.c.l.b16 %v1846
    %v1944 = vunpack.c.h.b16 %v1846
    %v1945 = vunpack.c.l.b16 %v1847
    %v1946 = vunpack.c.h.b16 %v1847
    %v1947 = vunpack.c.l.b16 %v1848
    %v1948 = vunpack.c.h.b16 %v1848
    %v1949 = vunpack.c.l.b16 %v1849
    %v1950 = vunpack.c.h.b16 %v1849
    %v1951 = vunpack.c.l.b16 %v1850
    %v1952 = vunpack.c.h.b16 %v1850
    %v1953 = vunpack.c.l.b16 %v1851
    %v1954 = vunpack.c.h.b16 %v1851
    %v1955 = vunpack.c.l.b16 %v1852
    %v1956 = vunpack.c.h.b16 %v1852
    %v1957 = vunpack.c.l.b16 %v1853
    %v1958 = vunpack.c.h.b16 %v1853
    %v1959 = vunpack.c.l.b16 %v1854
    %v1960 = vunpack.c.h.b16 %v1854
    %v1961 = vunpack.c.l.b16 %v1855
    %v1962 = vunpack.c.h.b16 %v1855
    %v1963 = vpack.c.b16 %v1903, %v1899
    %v1964 = vpack.c.b16 %v1904, %v1900
    %v1965 = vpack.c.b16 %v1905, %v1901
    %v1966 = vpack.c.b16 %v1906, %v1902
    %v1967 = vpack.c.b16 %v1911, %v1907
    %v1968 = vpack.c.b16 %v1912, %v1908
    %v1969 = vpack.c.b16 %v1913, %v1909
    %v1970 = vpack.c.b16 %v1914, %v1910
    %v1971 = vpack.c.b16 %v1919, %v1915
    %v1972 = vpack.c.b16 %v1920, %v1916
    %v1973 = vpack.c.b16 %v1921, %v1917
    %v1974 = vpack.c.b16 %v1922, %v1918
    %v1975 = vpack.c.b16 %v1927, %v1923
    %v1976 = vpack.c.b16 %v1928, %v1924
    %v1977 = vpack.c.b16 %v1929, %v1925
    %v1978 = vpack.c.b16 %v1930, %v1926
    %v1979 = vpack.c.b16 %v1935, %v1931
    %v1980 = vpack.c.b16 %v1936, %v1932
    %v1981 = vpack.c.b16 %v1937, %v1933
    %v1982 = vpack.c.b16 %v1938, %v1934
    %v1983 = vpack.c.b16 %v1943, %v1939
    %v1984 = vpack.c.b16 %v1944, %v1940
    %v1985 = vpack.c.b16 %v1945, %v1941
    %v1986 = vpack.c.b16 %v1946, %v1942
    %v1987 = vpack.c.b16 %v1951, %v1947
    %v1988 = vpack.c.b16 %v1952, %v1948
    %v1989 = vpack.c.b16 %v1953, %v1949
    %v1990 = vpack.c.b16 %v1954, %v1950
    %v1991 = vpack.c.b16 %v1959, %v1955
    %v1992 = vpack.c.b16 %v1960, %v1956
    %v1993 = vpack.c.b16 %v1961, %v1957
    %v1994 = vpack.c.b16 %v1962, %v1958
    %2027 = vmatprep.subr.bf16.mxu0 %v1964
    %2028 = vmatpush1.bf16.msra.mxu0 %v1963
    %2029 = vmatprep.subr.bf16.mxu0 %v1968
    %2030 = vmatpush1.bf16.msra.mxu0 %v1967
    %2031 = vmatprep.subr.bf16.mxu0 %v1972
    %2032 = vmatpush1.bf16.msra.mxu0 %v1971
    %2033 = vmatprep.subr.bf16.mxu0 %v1976
    %2034 = vmatpush1.bf16.msra.mxu0 %v1975
    %2035 = vmatprep.subr.bf16.mxu0 %v1980
    %2036 = vmatpush1.bf16.msra.mxu0 %v1979
    %2037 = vmatprep.subr.bf16.mxu0 %v1984
    %2038 = vmatpush1.bf16.msra.mxu0 %v1983
    %2039 = vmatprep.subr.bf16.mxu0 %v1988
    %2040 = vmatpush1.bf16.msra.mxu0 %v1987
    %2041 = vmatprep.subr.bf16.mxu0 %v1992
    %2042 = vmatpush1.bf16.msra.mxu0 %v1991
    %2043 = vmatprep.subr.bf16.mxu0 0
    %2044 = vmatpush1.bf16.msra.mxu0 0
    %2045 = vmatprep.subr.bf16.mxu0 0
    %2046 = vmatpush1.bf16.msra.mxu0 0
    %2047 = vmatprep.subr.bf16.mxu0 0
    %2048 = vmatpush1.bf16.msra.mxu0 0
    %2049 = vmatprep.subr.bf16.mxu0 0
    %2050 = vmatpush1.bf16.msra.mxu0 0
    %2051 = vmatprep.subr.bf16.mxu0 0
    %2052 = vmatpush1.bf16.msra.mxu0 0
    %2053 = vmatprep.subr.bf16.mxu0 0
    %2054 = vmatpush1.bf16.msra.mxu0 0
    %2055 = vmatprep.subr.bf16.mxu0 0
    %2056 = vmatpush1.bf16.msra.mxu0 0
    %2057 = vmatprep.subr.bf16.mxu0 0
    %2058 = vmatpush1.bf16.msra.mxu0 0
    %2059 = vmatprep.mubr.bf16.mxu0 0
    %2060 = vmatmul.mubr.bf16.gmra.mrb[0].mxu0 %v1823
    %v2061 = vpop.f32.mrb[0].mxu0
    %v2062 = vadd.f32 %v1859, %v2061
    %v2063 = vpop.f32.mrb[0].mxu0
    %v2064 = vadd.f32 %v1860, %v2063
    %v2065 = vpop.f32.mrb[0].mxu0
    %v2066 = vadd.f32 %v1863, %v2065
    %v2067 = vpop.f32.mrb[0].mxu0
    %v2068 = vadd.f32 %v1864, %v2067
    %2069 = vdwg.mxu0
    %2070 = vmatprep.subr.bf16.mxu0 %v1966
    %2071 = vmatpush1.bf16.msra.mxu0 %v1965
    %2072 = vmatprep.subr.bf16.mxu0 %v1970
    %2073 = vmatpush1.bf16.msra.mxu0 %v1969
    %2074 = vmatprep.subr.bf16.mxu0 %v1974
    %2075 = vmatpush1.bf16.msra.mxu0 %v1973
    %2076 = vmatprep.subr.bf16.mxu0 %v1978
    %2077 = vmatpush1.bf16.msra.mxu0 %v1977
    %2078 = vmatprep.subr.bf16.mxu0 %v1982
    %2079 = vmatpush1.bf16.msra.mxu0 %v1981
    %2080 = vmatprep.subr.bf16.mxu0 %v1986
    %2081 = vmatpush1.bf16.msra.mxu0 %v1985
    %2082 = vmatprep.subr.bf16.mxu0 %v1990
    %2083 = vmatpush1.bf16.msra.mxu0 %v1989
    %2084 = vmatprep.subr.bf16.mxu0 %v1994
    %2085 = vmatpush1.bf16.msra.mxu0 %v1993
    %2086 = vmatprep.subr.bf16.mxu0 0
    %2087 = vmatpush1.bf16.msra.mxu0 0
    %2088 = vmatprep.subr.bf16.mxu0 0
    %2089 = vmatpush1.bf16.msra.mxu0 0
    %2090 = vmatprep.subr.bf16.mxu0 0
    %2091 = vmatpush1.bf16.msra.mxu0 0
    %2092 = vmatprep.subr.bf16.mxu0 0
    %2093 = vmatpush1.bf16.msra.mxu0 0
    %2094 = vmatprep.subr.bf16.mxu0 0
    %2095 = vmatpush1.bf16.msra.mxu0 0
    %2096 = vmatprep.subr.bf16.mxu0 0
    %2097 = vmatpush1.bf16.msra.mxu0 0
    %2098 = vmatprep.subr.bf16.mxu0 0
    %2099 = vmatpush1.bf16.msra.mxu0 0
    %2100 = vmatprep.subr.bf16.mxu0 0
    %2101 = vmatpush1.bf16.msra.mxu0 0
    %2102 = vmatprep.mubr.bf16.mxu0 0
    %2103 = vmatmul.mubr.bf16.gmra.mrb[0].mxu0 %v1823
    %v2104 = vpop.f32.mrb[0].mxu0
    %v2105 = vadd.f32 %v1861, %v2104
    %v2106 = vpop.f32.mrb[0].mxu0
    %v2107 = vadd.f32 %v1862, %v2106
    %v2108 = vpop.f32.mrb[0].mxu0
    %v2109 = vadd.f32 %v1865, %v2108
    %v2110 = vpop.f32.mrb[0].mxu0
    %v2111 = vadd.f32 %v1866, %v2110
    %2112 = vdwg.mxu0
    %v2113 = vmul.f32 %v2062, 0.5
    %v2114 = vmul.f32 %v2066, 0.5
    %v2115 = vtanh.pop %v2113
    %v2116 = vtanh.pop %v2114
    %v2117 = vmul.f32 %v2115, 0.5
    %v2118 = vmul.f32 %v2116, 0.5
    %v2119 = vadd.f32 %v2117, 0.5
    %v2120 = vadd.f32 %v2118, 0.5
    %v2121 = vmul.f32 %v2064, 0.5
    %v2122 = vmul.f32 %v2068, 0.5
    %v2123 = vtanh.pop %v2121
    %v2124 = vtanh.pop %v2122
    %v2125 = vmul.f32 %v2123, 0.5
    %v2126 = vmul.f32 %v2124, 0.5
    %v2127 = vadd.f32 %v2125, 0.5
    %v2128 = vadd.f32 %v2126, 0.5
    %v2129 = vtanh.pop %v2105
    %v2130 = vtanh.pop %v2109
    %v2131 = vmul.f32 %v2107, 0.5
    %v2132 = vmul.f32 %v2111, 0.5
    %v2133 = vtanh.pop %v2131
    %v2134 = vtanh.pop %v2132
    %v2135 = vmul.f32 %v2133, 0.5
    %v2136 = vmul.f32 %v2134, 0.5
    %v2137 = vadd.f32 %v2135, 0.5
    %v2138 = vadd.f32 %v2136, 0.5
    %v2139 = vmul.f32 %v2127, %v1821
    %v2140 = vmul.f32 %v2128, %v1822
    %v2141 = vmul.f32 %v2119, %v2129
    %v2142 = vmul.f32 %v2120, %v2130
    %v2143 = vadd.f32 %v2139, %v2141
    %v2144 = vadd.f32 %v2140, %v2142
    %v2145 = vtanh.pop %v2143
    %v2146 = vtanh.pop %v2144
    %v2147 = vmul.f32 %v2137, %v2145
    %v2148 = vmul.f32 %v2138, %v2146
    %s2149 = scalar_lea.vmem [#allocation8], 64
    %2150 = vst [vmem:[%s2149] sm:$0xff] %v2147
    %2151 = vst [vmem:[%s2149 + $0x8] sm:$0xff] %v2148
    %2152 = vst [vmem:[#allocation2] sm:$0xff] %v2147
    %2153 = vst [vmem:[#allocation2 + $0x8] sm:$0xff] %v2148
    %2154 = vst [vmem:[#allocation3] sm:$0xff] %v2143
    %2155 = vst [vmem:[#allocation3 + $0x8] sm:$0xff] %v2144
    %v2156 = vld [vmem:[#allocation2] sm:$0xff]
    %v2157 = vld [vmem:[#allocation2 + $0x8] sm:$0xff]
    %v2158 = vld [vmem:[#allocation3] sm:$0xff]
    %v2159 = vld [vmem:[#allocation3 + $0x8] sm:$0xff]
    %v2160 = vpack.c.bf16 %v2157, %v2156
    %v2161 = vld [vmem:[#allocation5] sm:$0xff]
    %v2162 = vld [vmem:[#allocation5 + $0x8] sm:$0xff]
    %v2163 = vld [vmem:[#allocation5 + $0x10] sm:$0xff]
    %v2164 = vld [vmem:[#allocation5 + $0x18] sm:$0xff]
    %v2165 = vld [vmem:[#allocation5 + $0x20] sm:$0xff]
    %v2166 = vld [vmem:[#allocation5 + $0x28] sm:$0xff]
    %v2167 = vld [vmem:[#allocation5 + $0x30] sm:$0xff]
    %v2168 = vld [vmem:[#allocation5 + $0x38] sm:$0xff]
    %v2169 = vld [vmem:[#allocation5 + $0x40] sm:$0xff]
    %v2170 = vld [vmem:[#allocation5 + $0x48] sm:$0xff]
    %v2171 = vld [vmem:[#allocation5 + $0x50] sm:$0xff]
    %v2172 = vld [vmem:[#allocation5 + $0x58] sm:$0xff]
    %v2173 = vld [vmem:[#allocation5 + $0x60] sm:$0xff]
    %v2174 = vld [vmem:[#allocation5 + $0x68] sm:$0xff]
    %v2175 = vld [vmem:[#allocation5 + $0x70] sm:$0xff]
    %v2176 = vld [vmem:[#allocation5 + $0x78] sm:$0xff]
    %v2177 = vld [vmem:[#allocation5 + $0x80] sm:$0xff]
    %v2178 = vld [vmem:[#allocation5 + $0x88] sm:$0xff]
    %v2179 = vld [vmem:[#allocation5 + $0x90] sm:$0xff]
    %v2180 = vld [vmem:[#allocation5 + $0x98] sm:$0xff]
    %v2181 = vld [vmem:[#allocation5 + $0xa0] sm:$0xff]
    %v2182 = vld [vmem:[#allocation5 + $0xa8] sm:$0xff]
    %v2183 = vld [vmem:[#allocation5 + $0xb0] sm:$0xff]
    %v2184 = vld [vmem:[#allocation5 + $0xb8] sm:$0xff]
    %v2185 = vld [vmem:[#allocation5 + $0xc0] sm:$0xff]
    %v2186 = vld [vmem:[#allocation5 + $0xc8] sm:$0xff]
    %v2187 = vld [vmem:[#allocation5 + $0xd0] sm:$0xff]
    %v2188 = vld [vmem:[#allocation5 + $0xd8] sm:$0xff]
    %v2189 = vld [vmem:[#allocation5 + $0xe0] sm:$0xff]
    %v2190 = vld [vmem:[#allocation5 + $0xe8] sm:$0xff]
    %v2191 = vld [vmem:[#allocation5 + $0xf0] sm:$0xff]
    %v2192 = vld [vmem:[#allocation5 + $0xf8] sm:$0xff]
    %s2193 = smul.u32 10, 4
    %s2194 = smul.addr %s2193, 8
    %s2195 = scalar_lea.vmem [#allocation4], %s2194
    %v2196 = vld [vmem:[%s2195] sm:$0xff]
    %v2197 = vld [vmem:[%s2195 + $0x8] sm:$0xff]
    %v2198 = vld [vmem:[%s2195 + $0x10] sm:$0xff]
    %v2199 = vld [vmem:[%s2195 + $0x18] sm:$0xff]
    %v2200 = vld [vmem:[%s2195 + $0x20] sm:$0xff]
    %v2201 = vld [vmem:[%s2195 + $0x28] sm:$0xff]
    %v2202 = vld [vmem:[%s2195 + $0x30] sm:$0xff]
    %v2203 = vld [vmem:[%s2195 + $0x38] sm:$0xff]
    %v2236 = vunpack.c.l.b16 %v2161
    %v2237 = vunpack.c.h.b16 %v2161
    %v2238 = vunpack.c.l.b16 %v2162
    %v2239 = vunpack.c.h.b16 %v2162
    %v2240 = vunpack.c.l.b16 %v2163
    %v2241 = vunpack.c.h.b16 %v2163
    %v2242 = vunpack.c.l.b16 %v2164
    %v2243 = vunpack.c.h.b16 %v2164
    %v2244 = vunpack.c.l.b16 %v2165
    %v2245 = vunpack.c.h.b16 %v2165
    %v2246 = vunpack.c.l.b16 %v2166
    %v2247 = vunpack.c.h.b16 %v2166
    %v2248 = vunpack.c.l.b16 %v2167
    %v2249 = vunpack.c.h.b16 %v2167
    %v2250 = vunpack.c.l.b16 %v2168
    %v2251 = vunpack.c.h.b16 %v2168
    %v2252 = vunpack.c.l.b16 %v2169
    %v2253 = vunpack.c.h.b16 %v2169
    %v2254 = vunpack.c.l.b16 %v2170
    %v2255 = vunpack.c.h.b16 %v2170
    %v2256 = vunpack.c.l.b16 %v2171
    %v2257 = vunpack.c.h.b16 %v2171
    %v2258 = vunpack.c.l.b16 %v2172
    %v2259 = vunpack.c.h.b16 %v2172
    %v2260 = vunpack.c.l.b16 %v2173
    %v2261 = vunpack.c.h.b16 %v2173
    %v2262 = vunpack.c.l.b16 %v2174
    %v2263 = vunpack.c.h.b16 %v2174
    %v2264 = vunpack.c.l.b16 %v2175
    %v2265 = vunpack.c.h.b16 %v2175
    %v2266 = vunpack.c.l.b16 %v2176
    %v2267 = vunpack.c.h.b16 %v2176
    %v2268 = vunpack.c.l.b16 %v2177
    %v2269 = vunpack.c.h.b16 %v2177
    %v2270 = vunpack.c.l.b16 %v2178
    %v2271 = vunpack.c.h.b16 %v2178
    %v2272 = vunpack.c.l.b16 %v2179
    %v2273 = vunpack.c.h.b16 %v2179
    %v2274 = vunpack.c.l.b16 %v2180
    %v2275 = vunpack.c.h.b16 %v2180
    %v2276 = vunpack.c.l.b16 %v2181
    %v2277 = vunpack.c.h.b16 %v2181
    %v2278 = vunpack.c.l.b16 %v2182
    %v2279 = vunpack.c.h.b16 %v2182
    %v2280 = vunpack.c.l.b16 %v2183
    %v2281 = vunpack.c.h.b16 %v2183
    %v2282 = vunpack.c.l.b16 %v2184
    %v2283 = vunpack.c.h.b16 %v2184
    %v2284 = vunpack.c.l.b16 %v2185
    %v2285 = vunpack.c.h.b16 %v2185
    %v2286 = vunpack.c.l.b16 %v2186
    %v2287 = vunpack.c.h.b16 %v2186
    %v2288 = vunpack.c.l.b16 %v2187
    %v2289 = vunpack.c.h.b16 %v2187
    %v2290 = vunpack.c.l.b16 %v2188
    %v2291 = vunpack.c.h.b16 %v2188
    %v2292 = vunpack.c.l.b16 %v2189
    %v2293 = vunpack.c.h.b16 %v2189
    %v2294 = vunpack.c.l.b16 %v2190
    %v2295 = vunpack.c.h.b16 %v2190
    %v2296 = vunpack.c.l.b16 %v2191
    %v2297 = vunpack.c.h.b16 %v2191
    %v2298 = vunpack.c.l.b16 %v2192
    %v2299 = vunpack.c.h.b16 %v2192
    %v2300 = vpack.c.b16 %v2240, %v2236
    %v2301 = vpack.c.b16 %v2241, %v2237
    %v2302 = vpack.c.b16 %v2242, %v2238
    %v2303 = vpack.c.b16 %v2243, %v2239
    %v2304 = vpack.c.b16 %v2248, %v2244
    %v2305 = vpack.c.b16 %v2249, %v2245
    %v2306 = vpack.c.b16 %v2250, %v2246
    %v2307 = vpack.c.b16 %v2251, %v2247
    %v2308 = vpack.c.b16 %v2256, %v2252
    %v2309 = vpack.c.b16 %v2257, %v2253
    %v2310 = vpack.c.b16 %v2258, %v2254
    %v2311 = vpack.c.b16 %v2259, %v2255
    %v2312 = vpack.c.b16 %v2264, %v2260
    %v2313 = vpack.c.b16 %v2265, %v2261
    %v2314 = vpack.c.b16 %v2266, %v2262
    %v2315 = vpack.c.b16 %v2267, %v2263
    %v2316 = vpack.c.b16 %v2272, %v2268
    %v2317 = vpack.c.b16 %v2273, %v2269
    %v2318 = vpack.c.b16 %v2274, %v2270
    %v2319 = vpack.c.b16 %v2275, %v2271
    %v2320 = vpack.c.b16 %v2280, %v2276
    %v2321 = vpack.c.b16 %v2281, %v2277
    %v2322 = vpack.c.b16 %v2282, %v2278
    %v2323 = vpack.c.b16 %v2283, %v2279
    %v2324 = vpack.c.b16 %v2288, %v2284
    %v2325 = vpack.c.b16 %v2289, %v2285
    %v2326 = vpack.c.b16 %v2290, %v2286
    %v2327 = vpack.c.b16 %v2291, %v2287
    %v2328 = vpack.c.b16 %v2296, %v2292
    %v2329 = vpack.c.b16 %v2297, %v2293
    %v2330 = vpack.c.b16 %v2298, %v2294
    %v2331 = vpack.c.b16 %v2299, %v2295
    %2364 = vmatprep.subr.bf16.mxu0 %v2301
    %2365 = vmatpush1.bf16.msra.mxu0 %v2300
    %2366 = vmatprep.subr.bf16.mxu0 %v2305
    %2367 = vmatpush1.bf16.msra.mxu0 %v2304
    %2368 = vmatprep.subr.bf16.mxu0 %v2309
    %2369 = vmatpush1.bf16.msra.mxu0 %v2308
    %2370 = vmatprep.subr.bf16.mxu0 %v2313
    %2371 = vmatpush1.bf16.msra.mxu0 %v2312
    %2372 = vmatprep.subr.bf16.mxu0 %v2317
    %2373 = vmatpush1.bf16.msra.mxu0 %v2316
    %2374 = vmatprep.subr.bf16.mxu0 %v2321
    %2375 = vmatpush1.bf16.msra.mxu0 %v2320
    %2376 = vmatprep.subr.bf16.mxu0 %v2325
    %2377 = vmatpush1.bf16.msra.mxu0 %v2324
    %2378 = vmatprep.subr.bf16.mxu0 %v2329
    %2379 = vmatpush1.bf16.msra.mxu0 %v2328
    %2380 = vmatprep.subr.bf16.mxu0 0
    %2381 = vmatpush1.bf16.msra.mxu0 0
    %2382 = vmatprep.subr.bf16.mxu0 0
    %2383 = vmatpush1.bf16.msra.mxu0 0
    %2384 = vmatprep.subr.bf16.mxu0 0
    %2385 = vmatpush1.bf16.msra.mxu0 0
    %2386 = vmatprep.subr.bf16.mxu0 0
    %2387 = vmatpush1.bf16.msra.mxu0 0
    %2388 = vmatprep.subr.bf16.mxu0 0
    %2389 = vmatpush1.bf16.msra.mxu0 0
    %2390 = vmatprep.subr.bf16.mxu0 0
    %2391 = vmatpush1.bf16.msra.mxu0 0
    %2392 = vmatprep.subr.bf16.mxu0 0
    %2393 = vmatpush1.bf16.msra.mxu0 0
    %2394 = vmatprep.subr.bf16.mxu0 0
    %2395 = vmatpush1.bf16.msra.mxu0 0
    %2396 = vmatprep.mubr.bf16.mxu0 0
    %2397 = vmatmul.mubr.bf16.gmra.mrb[0].mxu0 %v2160
    %v2398 = vpop.f32.mrb[0].mxu0
    %v2399 = vadd.f32 %v2196, %v2398
    %v2400 = vpop.f32.mrb[0].mxu0
    %v2401 = vadd.f32 %v2197, %v2400
    %v2402 = vpop.f32.mrb[0].mxu0
    %v2403 = vadd.f32 %v2200, %v2402
    %v2404 = vpop.f32.mrb[0].mxu0
    %v2405 = vadd.f32 %v2201, %v2404
    %2406 = vdwg.mxu0
    %2407 = vmatprep.subr.bf16.mxu0 %v2303
    %2408 = vmatpush1.bf16.msra.mxu0 %v2302
    %2409 = vmatprep.subr.bf16.mxu0 %v2307
    %2410 = vmatpush1.bf16.msra.mxu0 %v2306
    %2411 = vmatprep.subr.bf16.mxu0 %v2311
    %2412 = vmatpush1.bf16.msra.mxu0 %v2310
    %2413 = vmatprep.subr.bf16.mxu0 %v2315
    %2414 = vmatpush1.bf16.msra.mxu0 %v2314
    %2415 = vmatprep.subr.bf16.mxu0 %v2319
    %2416 = vmatpush1.bf16.msra.mxu0 %v2318
    %2417 = vmatprep.subr.bf16.mxu0 %v2323
    %2418 = vmatpush1.bf16.msra.mxu0 %v2322
    %2419 = vmatprep.subr.bf16.mxu0 %v2327
    %2420 = vmatpush1.bf16.msra.mxu0 %v2326
    %2421 = vmatprep.subr.bf16.mxu0 %v2331
    %2422 = vmatpush1.bf16.msra.mxu0 %v2330
    %2423 = vmatprep.subr.bf16.mxu0 0
    %2424 = vmatpush1.bf16.msra.mxu0 0
    %2425 = vmatprep.subr.bf16.mxu0 0
    %2426 = vmatpush1.bf16.msra.mxu0 0
    %2427 = vmatprep.subr.bf16.mxu0 0
    %2428 = vmatpush1.bf16.msra.mxu0 0
    %2429 = vmatprep.subr.bf16.mxu0 0
    %2430 = vmatpush1.bf16.msra.mxu0 0
    %2431 = vmatprep.subr.bf16.mxu0 0
    %2432 = vmatpush1.bf16.msra.mxu0 0
    %2433 = vmatprep.subr.bf16.mxu0 0
    %2434 = vmatpush1.bf16.msra.mxu0 0
    %2435 = vmatprep.subr.bf16.mxu0 0
    %2436 = vmatpush1.bf16.msra.mxu0 0
    %2437 = vmatprep.subr.bf16.mxu0 0
    %2438 = vmatpush1.bf16.msra.mxu0 0
    %2439 = vmatprep.mubr.bf16.mxu0 0
    %2440 = vmatmul.mubr.bf16.gmra.mrb[0].mxu0 %v2160
    %v2441 = vpop.f32.mrb[0].mxu0
    %v2442 = vadd.f32 %v2198, %v2441
    %v2443 = vpop.f32.mrb[0].mxu0
    %v2444 = vadd.f32 %v2199, %v2443
    %v2445 = vpop.f32.mrb[0].mxu0
    %v2446 = vadd.f32 %v2202, %v2445
    %v2447 = vpop.f32.mrb[0].mxu0
    %v2448 = vadd.f32 %v2203, %v2447
    %2449 = vdwg.mxu0
    %v2450 = vmul.f32 %v2399, 0.5
    %v2451 = vmul.f32 %v2403, 0.5
    %v2452 = vtanh.pop %v2450
    %v2453 = vtanh.pop %v2451
    %v2454 = vmul.f32 %v2452, 0.5
    %v2455 = vmul.f32 %v2453, 0.5
    %v2456 = vadd.f32 %v2454, 0.5
    %v2457 = vadd.f32 %v2455, 0.5
    %v2458 = vmul.f32 %v2401, 0.5
    %v2459 = vmul.f32 %v2405, 0.5
    %v2460 = vtanh.pop %v2458
    %v2461 = vtanh.pop %v2459
    %v2462 = vmul.f32 %v2460, 0.5
    %v2463 = vmul.f32 %v2461, 0.5
    %v2464 = vadd.f32 %v2462, 0.5
    %v2465 = vadd.f32 %v2463, 0.5
    %v2466 = vtanh.pop %v2442
    %v2467 = vtanh.pop %v2446
    %v2468 = vmul.f32 %v2444, 0.5
    %v2469 = vmul.f32 %v2448, 0.5
    %v2470 = vtanh.pop %v2468
    %v2471 = vtanh.pop %v2469
    %v2472 = vmul.f32 %v2470, 0.5
    %v2473 = vmul.f32 %v2471, 0.5
    %v2474 = vadd.f32 %v2472, 0.5
    %v2475 = vadd.f32 %v2473, 0.5
    %v2476 = vmul.f32 %v2464, %v2158
    %v2477 = vmul.f32 %v2465, %v2159
    %v2478 = vmul.f32 %v2456, %v2466
    %v2479 = vmul.f32 %v2457, %v2467
    %v2480 = vadd.f32 %v2476, %v2478
    %v2481 = vadd.f32 %v2477, %v2479
    %v2482 = vtanh.pop %v2480
    %v2483 = vtanh.pop %v2481
    %v2484 = vmul.f32 %v2474, %v2482
    %v2485 = vmul.f32 %v2475, %v2483
    %s2486 = scalar_lea.vmem [#allocation8], 80
    %2487 = vst [vmem:[%s2486] sm:$0xff] %v2484
    %2488 = vst [vmem:[%s2486 + $0x8] sm:$0xff] %v2485
    %2489 = vst [vmem:[#allocation2] sm:$0xff] %v2484
    %2490 = vst [vmem:[#allocation2 + $0x8] sm:$0xff] %v2485
    %2491 = vst [vmem:[#allocation3] sm:$0xff] %v2480
    %2492 = vst [vmem:[#allocation3 + $0x8] sm:$0xff] %v2481
    %v2493 = vld [vmem:[#allocation2] sm:$0xff]
    %v2494 = vld [vmem:[#allocation2 + $0x8] sm:$0xff]
    %v2495 = vld [vmem:[#allocation3] sm:$0xff]
    %v2496 = vld [vmem:[#allocation3 + $0x8] sm:$0xff]
    %v2497 = vpack.c.bf16 %v2494, %v2493
    %v2498 = vld [vmem:[#allocation5] sm:$0xff]
    %v2499 = vld [vmem:[#allocation5 + $0x8] sm:$0xff]
    %v2500 = vld [vmem:[#allocation5 + $0x10] sm:$0xff]
    %v2501 = vld [vmem:[#allocation5 + $0x18] sm:$0xff]
    %v2502 = vld [vmem:[#allocation5 + $0x20] sm:$0xff]
    %v2503 = vld [vmem:[#allocation5 + $0x28] sm:$0xff]
    %v2504 = vld [vmem:[#allocation5 + $0x30] sm:$0xff]
    %v2505 = vld [vmem:[#allocation5 + $0x38] sm:$0xff]
    %v2506 = vld [vmem:[#allocation5 + $0x40] sm:$0xff]
    %v2507 = vld [vmem:[#allocation5 + $0x48] sm:$0xff]
    %v2508 = vld [vmem:[#allocation5 + $0x50] sm:$0xff]
    %v2509 = vld [vmem:[#allocation5 + $0x58] sm:$0xff]
    %v2510 = vld [vmem:[#allocation5 + $0x60] sm:$0xff]
    %v2511 = vld [vmem:[#allocation5 + $0x68] sm:$0xff]
    %v2512 = vld [vmem:[#allocation5 + $0x70] sm:$0xff]
    %v2513 = vld [vmem:[#allocation5 + $0x78] sm:$0xff]
    %v2514 = vld [vmem:[#allocation5 + $0x80] sm:$0xff]
    %v2515 = vld [vmem:[#allocation5 + $0x88] sm:$0xff]
    %v2516 = vld [vmem:[#allocation5 + $0x90] sm:$0xff]
    %v2517 = vld [vmem:[#allocation5 + $0x98] sm:$0xff]
    %v2518 = vld [vmem:[#allocation5 + $0xa0] sm:$0xff]
    %v2519 = vld [vmem:[#allocation5 + $0xa8] sm:$0xff]
    %v2520 = vld [vmem:[#allocation5 + $0xb0] sm:$0xff]
    %v2521 = vld [vmem:[#allocation5 + $0xb8] sm:$0xff]
    %v2522 = vld [vmem:[#allocation5 + $0xc0] sm:$0xff]
    %v2523 = vld [vmem:[#allocation5 + $0xc8] sm:$0xff]
    %v2524 = vld [vmem:[#allocation5 + $0xd0] sm:$0xff]
    %v2525 = vld [vmem:[#allocation5 + $0xd8] sm:$0xff]
    %v2526 = vld [vmem:[#allocation5 + $0xe0] sm:$0xff]
    %v2527 = vld [vmem:[#allocation5 + $0xe8] sm:$0xff]
    %v2528 = vld [vmem:[#allocation5 + $0xf0] sm:$0xff]
    %v2529 = vld [vmem:[#allocation5 + $0xf8] sm:$0xff]
    %s2530 = smul.u32 12, 4
    %s2531 = smul.addr %s2530, 8
    %s2532 = scalar_lea.vmem [#allocation4], %s2531
    %v2533 = vld [vmem:[%s2532] sm:$0xff]
    %v2534 = vld [vmem:[%s2532 + $0x8] sm:$0xff]
    %v2535 = vld [vmem:[%s2532 + $0x10] sm:$0xff]
    %v2536 = vld [vmem:[%s2532 + $0x18] sm:$0xff]
    %v2537 = vld [vmem:[%s2532 + $0x20] sm:$0xff]
    %v2538 = vld [vmem:[%s2532 + $0x28] sm:$0xff]
    %v2539 = vld [vmem:[%s2532 + $0x30] sm:$0xff]
    %v2540 = vld [vmem:[%s2532 + $0x38] sm:$0xff]
    %v2573 = vunpack.c.l.b16 %v2498
    %v2574 = vunpack.c.h.b16 %v2498
    %v2575 = vunpack.c.l.b16 %v2499
    %v2576 = vunpack.c.h.b16 %v2499
    %v2577 = vunpack.c.l.b16 %v2500
    %v2578 = vunpack.c.h.b16 %v2500
    %v2579 = vunpack.c.l.b16 %v2501
    %v2580 = vunpack.c.h.b16 %v2501
    %v2581 = vunpack.c.l.b16 %v2502
    %v2582 = vunpack.c.h.b16 %v2502
    %v2583 = vunpack.c.l.b16 %v2503
    %v2584 = vunpack.c.h.b16 %v2503
    %v2585 = vunpack.c.l.b16 %v2504
    %v2586 = vunpack.c.h.b16 %v2504
    %v2587 = vunpack.c.l.b16 %v2505
    %v2588 = vunpack.c.h.b16 %v2505
    %v2589 = vunpack.c.l.b16 %v2506
    %v2590 = vunpack.c.h.b16 %v2506
    %v2591 = vunpack.c.l.b16 %v2507
    %v2592 = vunpack.c.h.b16 %v2507
    %v2593 = vunpack.c.l.b16 %v2508
    %v2594 = vunpack.c.h.b16 %v2508
    %v2595 = vunpack.c.l.b16 %v2509
    %v2596 = vunpack.c.h.b16 %v2509
    %v2597 = vunpack.c.l.b16 %v2510
    %v2598 = vunpack.c.h.b16 %v2510
    %v2599 = vunpack.c.l.b16 %v2511
    %v2600 = vunpack.c.h.b16 %v2511
    %v2601 = vunpack.c.l.b16 %v2512
    %v2602 = vunpack.c.h.b16 %v2512
    %v2603 = vunpack.c.l.b16 %v2513
    %v2604 = vunpack.c.h.b16 %v2513
    %v2605 = vunpack.c.l.b16 %v2514
    %v2606 = vunpack.c.h.b16 %v2514
    %v2607 = vunpack.c.l.b16 %v2515
    %v2608 = vunpack.c.h.b16 %v2515
    %v2609 = vunpack.c.l.b16 %v2516
    %v2610 = vunpack.c.h.b16 %v2516
    %v2611 = vunpack.c.l.b16 %v2517
    %v2612 = vunpack.c.h.b16 %v2517
    %v2613 = vunpack.c.l.b16 %v2518
    %v2614 = vunpack.c.h.b16 %v2518
    %v2615 = vunpack.c.l.b16 %v2519
    %v2616 = vunpack.c.h.b16 %v2519
    %v2617 = vunpack.c.l.b16 %v2520
    %v2618 = vunpack.c.h.b16 %v2520
    %v2619 = vunpack.c.l.b16 %v2521
    %v2620 = vunpack.c.h.b16 %v2521
    %v2621 = vunpack.c.l.b16 %v2522
    %v2622 = vunpack.c.h.b16 %v2522
    %v2623 = vunpack.c.l.b16 %v2523
    %v2624 = vunpack.c.h.b16 %v2523
    %v2625 = vunpack.c.l.b16 %v2524
    %v2626 = vunpack.c.h.b16 %v2524
    %v2627 = vunpack.c.l.b16 %v2525
    %v2628 = vunpack.c.h.b16 %v2525
    %v2629 = vunpack.c.l.b16 %v2526
    %v2630 = vunpack.c.h.b16 %v2526
    %v2631 = vunpack.c.l.b16 %v2527
    %v2632 = vunpack.c.h.b16 %v2527
    %v2633 = vunpack.c.l.b16 %v2528
    %v2634 = vunpack.c.h.b16 %v2528
    %v2635 = vunpack.c.l.b16 %v2529
    %v2636 = vunpack.c.h.b16 %v2529
    %v2637 = vpack.c.b16 %v2577, %v2573
    %v2638 = vpack.c.b16 %v2578, %v2574
    %v2639 = vpack.c.b16 %v2579, %v2575
    %v2640 = vpack.c.b16 %v2580, %v2576
    %v2641 = vpack.c.b16 %v2585, %v2581
    %v2642 = vpack.c.b16 %v2586, %v2582
    %v2643 = vpack.c.b16 %v2587, %v2583
    %v2644 = vpack.c.b16 %v2588, %v2584
    %v2645 = vpack.c.b16 %v2593, %v2589
    %v2646 = vpack.c.b16 %v2594, %v2590
    %v2647 = vpack.c.b16 %v2595, %v2591
    %v2648 = vpack.c.b16 %v2596, %v2592
    %v2649 = vpack.c.b16 %v2601, %v2597
    %v2650 = vpack.c.b16 %v2602, %v2598
    %v2651 = vpack.c.b16 %v2603, %v2599
    %v2652 = vpack.c.b16 %v2604, %v2600
    %v2653 = vpack.c.b16 %v2609, %v2605
    %v2654 = vpack.c.b16 %v2610, %v2606
    %v2655 = vpack.c.b16 %v2611, %v2607
    %v2656 = vpack.c.b16 %v2612, %v2608
    %v2657 = vpack.c.b16 %v2617, %v2613
    %v2658 = vpack.c.b16 %v2618, %v2614
    %v2659 = vpack.c.b16 %v2619, %v2615
    %v2660 = vpack.c.b16 %v2620, %v2616
    %v2661 = vpack.c.b16 %v2625, %v2621
    %v2662 = vpack.c.b16 %v2626, %v2622
    %v2663 = vpack.c.b16 %v2627, %v2623
    %v2664 = vpack.c.b16 %v2628, %v2624
    %v2665 = vpack.c.b16 %v2633, %v2629
    %v2666 = vpack.c.b16 %v2634, %v2630
    %v2667 = vpack.c.b16 %v2635, %v2631
    %v2668 = vpack.c.b16 %v2636, %v2632
    %2701 = vmatprep.subr.bf16.mxu0 %v2638
    %2702 = vmatpush1.bf16.msra.mxu0 %v2637
    %2703 = vmatprep.subr.bf16.mxu0 %v2642
    %2704 = vmatpush1.bf16.msra.mxu0 %v2641
    %2705 = vmatprep.subr.bf16.mxu0 %v2646
    %2706 = vmatpush1.bf16.msra.mxu0 %v2645
    %2707 = vmatprep.subr.bf16.mxu0 %v2650
    %2708 = vmatpush1.bf16.msra.mxu0 %v2649
    %2709 = vmatprep.subr.bf16.mxu0 %v2654
    %2710 = vmatpush1.bf16.msra.mxu0 %v2653
    %2711 = vmatprep.subr.bf16.mxu0 %v2658
    %2712 = vmatpush1.bf16.msra.mxu0 %v2657
    %2713 = vmatprep.subr.bf16.mxu0 %v2662
    %2714 = vmatpush1.bf16.msra.mxu0 %v2661
    %2715 = vmatprep.subr.bf16.mxu0 %v2666
    %2716 = vmatpush1.bf16.msra.mxu0 %v2665
    %2717 = vmatprep.subr.bf16.mxu0 0
    %2718 = vmatpush1.bf16.msra.mxu0 0
    %2719 = vmatprep.subr.bf16.mxu0 0
    %2720 = vmatpush1.bf16.msra.mxu0 0
    %2721 = vmatprep.subr.bf16.mxu0 0
    %2722 = vmatpush1.bf16.msra.mxu0 0
    %2723 = vmatprep.subr.bf16.mxu0 0
    %2724 = vmatpush1.bf16.msra.mxu0 0
    %2725 = vmatprep.subr.bf16.mxu0 0
    %2726 = vmatpush1.bf16.msra.mxu0 0
    %2727 = vmatprep.subr.bf16.mxu0 0
    %2728 = vmatpush1.bf16.msra.mxu0 0
    %2729 = vmatprep.subr.bf16.mxu0 0
    %2730 = vmatpush1.bf16.msra.mxu0 0
    %2731 = vmatprep.subr.bf16.mxu0 0
    %2732 = vmatpush1.bf16.msra.mxu0 0
    %2733 = vmatprep.mubr.bf16.mxu0 0
    %2734 = vmatmul.mubr.bf16.gmra.mrb[0].mxu0 %v2497
    %v2735 = vpop.f32.mrb[0].mxu0
    %v2736 = vadd.f32 %v2533, %v2735
    %v2737 = vpop.f32.mrb[0].mxu0
    %v2738 = vadd.f32 %v2534, %v2737
    %v2739 = vpop.f32.mrb[0].mxu0
    %v2740 = vadd.f32 %v2537, %v2739
    %v2741 = vpop.f32.mrb[0].mxu0
    %v2742 = vadd.f32 %v2538, %v2741
    %2743 = vdwg.mxu0
    %2744 = vmatprep.subr.bf16.mxu0 %v2640
    %2745 = vmatpush1.bf16.msra.mxu0 %v2639
    %2746 = vmatprep.subr.bf16.mxu0 %v2644
    %2747 = vmatpush1.bf16.msra.mxu0 %v2643
    %2748 = vmatprep.subr.bf16.mxu0 %v2648
    %2749 = vmatpush1.bf16.msra.mxu0 %v2647
    %2750 = vmatprep.subr.bf16.mxu0 %v2652
    %2751 = vmatpush1.bf16.msra.mxu0 %v2651
    %2752 = vmatprep.subr.bf16.mxu0 %v2656
    %2753 = vmatpush1.bf16.msra.mxu0 %v2655
    %2754 = vmatprep.subr.bf16.mxu0 %v2660
    %2755 = vmatpush1.bf16.msra.mxu0 %v2659
    %2756 = vmatprep.subr.bf16.mxu0 %v2664
    %2757 = vmatpush1.bf16.msra.mxu0 %v2663
    %2758 = vmatprep.subr.bf16.mxu0 %v2668
    %2759 = vmatpush1.bf16.msra.mxu0 %v2667
    %2760 = vmatprep.subr.bf16.mxu0 0
    %2761 = vmatpush1.bf16.msra.mxu0 0
    %2762 = vmatprep.subr.bf16.mxu0 0
    %2763 = vmatpush1.bf16.msra.mxu0 0
    %2764 = vmatprep.subr.bf16.mxu0 0
    %2765 = vmatpush1.bf16.msra.mxu0 0
    %2766 = vmatprep.subr.bf16.mxu0 0
    %2767 = vmatpush1.bf16.msra.mxu0 0
    %2768 = vmatprep.subr.bf16.mxu0 0
    %2769 = vmatpush1.bf16.msra.mxu0 0
    %2770 = vmatprep.subr.bf16.mxu0 0
    %2771 = vmatpush1.bf16.msra.mxu0 0
    %2772 = vmatprep.subr.bf16.mxu0 0
    %2773 = vmatpush1.bf16.msra.mxu0 0
    %2774 = vmatprep.subr.bf16.mxu0 0
    %2775 = vmatpush1.bf16.msra.mxu0 0
    %2776 = vmatprep.mubr.bf16.mxu0 0
    %2777 = vmatmul.mubr.bf16.gmra.mrb[0].mxu0 %v2497
    %v2778 = vpop.f32.mrb[0].mxu0
    %v2779 = vadd.f32 %v2535, %v2778
    %v2780 = vpop.f32.mrb[0].mxu0
    %v2781 = vadd.f32 %v2536, %v2780
    %v2782 = vpop.f32.mrb[0].mxu0
    %v2783 = vadd.f32 %v2539, %v2782
    %v2784 = vpop.f32.mrb[0].mxu0
    %v2785 = vadd.f32 %v2540, %v2784
    %2786 = vdwg.mxu0
    %v2787 = vmul.f32 %v2736, 0.5
    %v2788 = vmul.f32 %v2740, 0.5
    %v2789 = vtanh.pop %v2787
    %v2790 = vtanh.pop %v2788
    %v2791 = vmul.f32 %v2789, 0.5
    %v2792 = vmul.f32 %v2790, 0.5
    %v2793 = vadd.f32 %v2791, 0.5
    %v2794 = vadd.f32 %v2792, 0.5
    %v2795 = vmul.f32 %v2738, 0.5
    %v2796 = vmul.f32 %v2742, 0.5
    %v2797 = vtanh.pop %v2795
    %v2798 = vtanh.pop %v2796
    %v2799 = vmul.f32 %v2797, 0.5
    %v2800 = vmul.f32 %v2798, 0.5
    %v2801 = vadd.f32 %v2799, 0.5
    %v2802 = vadd.f32 %v2800, 0.5
    %v2803 = vtanh.pop %v2779
    %v2804 = vtanh.pop %v2783
    %v2805 = vmul.f32 %v2781, 0.5
    %v2806 = vmul.f32 %v2785, 0.5
    %v2807 = vtanh.pop %v2805
    %v2808 = vtanh.pop %v2806
    %v2809 = vmul.f32 %v2807, 0.5
    %v2810 = vmul.f32 %v2808, 0.5
    %v2811 = vadd.f32 %v2809, 0.5
    %v2812 = vadd.f32 %v2810, 0.5
    %v2813 = vmul.f32 %v2801, %v2495
    %v2814 = vmul.f32 %v2802, %v2496
    %v2815 = vmul.f32 %v2793, %v2803
    %v2816 = vmul.f32 %v2794, %v2804
    %v2817 = vadd.f32 %v2813, %v2815
    %v2818 = vadd.f32 %v2814, %v2816
    %v2819 = vtanh.pop %v2817
    %v2820 = vtanh.pop %v2818
    %v2821 = vmul.f32 %v2811, %v2819
    %v2822 = vmul.f32 %v2812, %v2820
    %s2823 = scalar_lea.vmem [#allocation8], 96
    %2824 = vst [vmem:[%s2823] sm:$0xff] %v2821
    %2825 = vst [vmem:[%s2823 + $0x8] sm:$0xff] %v2822
    %2826 = vst [vmem:[#allocation2] sm:$0xff] %v2821
    %2827 = vst [vmem:[#allocation2 + $0x8] sm:$0xff] %v2822
    %2828 = vst [vmem:[#allocation3] sm:$0xff] %v2817
    %2829 = vst [vmem:[#allocation3 + $0x8] sm:$0xff] %v2818
    %v2830 = vld [vmem:[#allocation2] sm:$0xff]
    %v2831 = vld [vmem:[#allocation2 + $0x8] sm:$0xff]
    %v2832 = vld [vmem:[#allocation3] sm:$0xff]
    %v2833 = vld [vmem:[#allocation3 + $0x8] sm:$0xff]
    %v2834 = vpack.c.bf16 %v2831, %v2830
    %v2835 = vld [vmem:[#allocation5] sm:$0xff]
    %v2836 = vld [vmem:[#allocation5 + $0x8] sm:$0xff]
    %v2837 = vld [vmem:[#allocation5 + $0x10] sm:$0xff]
    %v2838 = vld [vmem:[#allocation5 + $0x18] sm:$0xff]
    %v2839 = vld [vmem:[#allocation5 + $0x20] sm:$0xff]
    %v2840 = vld [vmem:[#allocation5 + $0x28] sm:$0xff]
    %v2841 = vld [vmem:[#allocation5 + $0x30] sm:$0xff]
    %v2842 = vld [vmem:[#allocation5 + $0x38] sm:$0xff]
    %v2843 = vld [vmem:[#allocation5 + $0x40] sm:$0xff]
    %v2844 = vld [vmem:[#allocation5 + $0x48] sm:$0xff]
    %v2845 = vld [vmem:[#allocation5 + $0x50] sm:$0xff]
    %v2846 = vld [vmem:[#allocation5 + $0x58] sm:$0xff]
    %v2847 = vld [vmem:[#allocation5 + $0x60] sm:$0xff]
    %v2848 = vld [vmem:[#allocation5 + $0x68] sm:$0xff]
    %v2849 = vld [vmem:[#allocation5 + $0x70] sm:$0xff]
    %v2850 = vld [vmem:[#allocation5 + $0x78] sm:$0xff]
    %v2851 = vld [vmem:[#allocation5 + $0x80] sm:$0xff]
    %v2852 = vld [vmem:[#allocation5 + $0x88] sm:$0xff]
    %v2853 = vld [vmem:[#allocation5 + $0x90] sm:$0xff]
    %v2854 = vld [vmem:[#allocation5 + $0x98] sm:$0xff]
    %v2855 = vld [vmem:[#allocation5 + $0xa0] sm:$0xff]
    %v2856 = vld [vmem:[#allocation5 + $0xa8] sm:$0xff]
    %v2857 = vld [vmem:[#allocation5 + $0xb0] sm:$0xff]
    %v2858 = vld [vmem:[#allocation5 + $0xb8] sm:$0xff]
    %v2859 = vld [vmem:[#allocation5 + $0xc0] sm:$0xff]
    %v2860 = vld [vmem:[#allocation5 + $0xc8] sm:$0xff]
    %v2861 = vld [vmem:[#allocation5 + $0xd0] sm:$0xff]
    %v2862 = vld [vmem:[#allocation5 + $0xd8] sm:$0xff]
    %v2863 = vld [vmem:[#allocation5 + $0xe0] sm:$0xff]
    %v2864 = vld [vmem:[#allocation5 + $0xe8] sm:$0xff]
    %v2865 = vld [vmem:[#allocation5 + $0xf0] sm:$0xff]
    %v2866 = vld [vmem:[#allocation5 + $0xf8] sm:$0xff]
    %s2867 = smul.u32 14, 4
    %s2868 = smul.addr %s2867, 8
    %s2869 = scalar_lea.vmem [#allocation4], %s2868
    %v2870 = vld [vmem:[%s2869] sm:$0xff]
    %v2871 = vld [vmem:[%s2869 + $0x8] sm:$0xff]
    %v2872 = vld [vmem:[%s2869 + $0x10] sm:$0xff]
    %v2873 = vld [vmem:[%s2869 + $0x18] sm:$0xff]
    %v2874 = vld [vmem:[%s2869 + $0x20] sm:$0xff]
    %v2875 = vld [vmem:[%s2869 + $0x28] sm:$0xff]
    %v2876 = vld [vmem:[%s2869 + $0x30] sm:$0xff]
    %v2877 = vld [vmem:[%s2869 + $0x38] sm:$0xff]
    %v2910 = vunpack.c.l.b16 %v2835
    %v2911 = vunpack.c.h.b16 %v2835
    %v2912 = vunpack.c.l.b16 %v2836
    %v2913 = vunpack.c.h.b16 %v2836
    %v2914 = vunpack.c.l.b16 %v2837
    %v2915 = vunpack.c.h.b16 %v2837
    %v2916 = vunpack.c.l.b16 %v2838
    %v2917 = vunpack.c.h.b16 %v2838
    %v2918 = vunpack.c.l.b16 %v2839
    %v2919 = vunpack.c.h.b16 %v2839
    %v2920 = vunpack.c.l.b16 %v2840
    %v2921 = vunpack.c.h.b16 %v2840
    %v2922 = vunpack.c.l.b16 %v2841
    %v2923 = vunpack.c.h.b16 %v2841
    %v2924 = vunpack.c.l.b16 %v2842
    %v2925 = vunpack.c.h.b16 %v2842
    %v2926 = vunpack.c.l.b16 %v2843
    %v2927 = vunpack.c.h.b16 %v2843
    %v2928 = vunpack.c.l.b16 %v2844
    %v2929 = vunpack.c.h.b16 %v2844
    %v2930 = vunpack.c.l.b16 %v2845
    %v2931 = vunpack.c.h.b16 %v2845
    %v2932 = vunpack.c.l.b16 %v2846
    %v2933 = vunpack.c.h.b16 %v2846
    %v2934 = vunpack.c.l.b16 %v2847
    %v2935 = vunpack.c.h.b16 %v2847
    %v2936 = vunpack.c.l.b16 %v2848
    %v2937 = vunpack.c.h.b16 %v2848
    %v2938 = vunpack.c.l.b16 %v2849
    %v2939 = vunpack.c.h.b16 %v2849
    %v2940 = vunpack.c.l.b16 %v2850
    %v2941 = vunpack.c.h.b16 %v2850
    %v2942 = vunpack.c.l.b16 %v2851
    %v2943 = vunpack.c.h.b16 %v2851
    %v2944 = vunpack.c.l.b16 %v2852
    %v2945 = vunpack.c.h.b16 %v2852
    %v2946 = vunpack.c.l.b16 %v2853
    %v2947 = vunpack.c.h.b16 %v2853
    %v2948 = vunpack.c.l.b16 %v2854
    %v2949 = vunpack.c.h.b16 %v2854
    %v2950 = vunpack.c.l.b16 %v2855
    %v2951 = vunpack.c.h.b16 %v2855
    %v2952 = vunpack.c.l.b16 %v2856
    %v2953 = vunpack.c.h.b16 %v2856
    %v2954 = vunpack.c.l.b16 %v2857
    %v2955 = vunpack.c.h.b16 %v2857
    %v2956 = vunpack.c.l.b16 %v2858
    %v2957 = vunpack.c.h.b16 %v2858
    %v2958 = vunpack.c.l.b16 %v2859
    %v2959 = vunpack.c.h.b16 %v2859
    %v2960 = vunpack.c.l.b16 %v2860
    %v2961 = vunpack.c.h.b16 %v2860
    %v2962 = vunpack.c.l.b16 %v2861
    %v2963 = vunpack.c.h.b16 %v2861
    %v2964 = vunpack.c.l.b16 %v2862
    %v2965 = vunpack.c.h.b16 %v2862
    %v2966 = vunpack.c.l.b16 %v2863
    %v2967 = vunpack.c.h.b16 %v2863
    %v2968 = vunpack.c.l.b16 %v2864
    %v2969 = vunpack.c.h.b16 %v2864
    %v2970 = vunpack.c.l.b16 %v2865
    %v2971 = vunpack.c.h.b16 %v2865
    %v2972 = vunpack.c.l.b16 %v2866
    %v2973 = vunpack.c.h.b16 %v2866
    %v2974 = vpack.c.b16 %v2914, %v2910
    %v2975 = vpack.c.b16 %v2915, %v2911
    %v2976 = vpack.c.b16 %v2916, %v2912
    %v2977 = vpack.c.b16 %v2917, %v2913
    %v2978 = vpack.c.b16 %v2922, %v2918
    %v2979 = vpack.c.b16 %v2923, %v2919
    %v2980 = vpack.c.b16 %v2924, %v2920
    %v2981 = vpack.c.b16 %v2925, %v2921
    %v2982 = vpack.c.b16 %v2930, %v2926
    %v2983 = vpack.c.b16 %v2931, %v2927
    %v2984 = vpack.c.b16 %v2932, %v2928
    %v2985 = vpack.c.b16 %v2933, %v2929
    %v2986 = vpack.c.b16 %v2938, %v2934
    %v2987 = vpack.c.b16 %v2939, %v2935
    %v2988 = vpack.c.b16 %v2940, %v2936
    %v2989 = vpack.c.b16 %v2941, %v2937
    %v2990 = vpack.c.b16 %v2946, %v2942
    %v2991 = vpack.c.b16 %v2947, %v2943
    %v2992 = vpack.c.b16 %v2948, %v2944
    %v2993 = vpack.c.b16 %v2949, %v2945
    %v2994 = vpack.c.b16 %v2954, %v2950
    %v2995 = vpack.c.b16 %v2955, %v2951
    %v2996 = vpack.c.b16 %v2956, %v2952
    %v2997 = vpack.c.b16 %v2957, %v2953
    %v2998 = vpack.c.b16 %v2962, %v2958
    %v2999 = vpack.c.b16 %v2963, %v2959
    %v3000 = vpack.c.b16 %v2964, %v2960
    %v3001 = vpack.c.b16 %v2965, %v2961
    %v3002 = vpack.c.b16 %v2970, %v2966
    %v3003 = vpack.c.b16 %v2971, %v2967
    %v3004 = vpack.c.b16 %v2972, %v2968
    %v3005 = vpack.c.b16 %v2973, %v2969
    %3038 = vmatprep.subr.bf16.mxu0 %v2975
    %3039 = vmatpush1.bf16.msra.mxu0 %v2974
    %3040 = vmatprep.subr.bf16.mxu0 %v2979
    %3041 = vmatpush1.bf16.msra.mxu0 %v2978
    %3042 = vmatprep.subr.bf16.mxu0 %v2983
    %3043 = vmatpush1.bf16.msra.mxu0 %v2982
    %3044 = vmatprep.subr.bf16.mxu0 %v2987
    %3045 = vmatpush1.bf16.msra.mxu0 %v2986
    %3046 = vmatprep.subr.bf16.mxu0 %v2991
    %3047 = vmatpush1.bf16.msra.mxu0 %v2990
    %3048 = vmatprep.subr.bf16.mxu0 %v2995
    %3049 = vmatpush1.bf16.msra.mxu0 %v2994
    %3050 = vmatprep.subr.bf16.mxu0 %v2999
    %3051 = vmatpush1.bf16.msra.mxu0 %v2998
    %3052 = vmatprep.subr.bf16.mxu0 %v3003
    %3053 = vmatpush1.bf16.msra.mxu0 %v3002
    %3054 = vmatprep.subr.bf16.mxu0 0
    %3055 = vmatpush1.bf16.msra.mxu0 0
    %3056 = vmatprep.subr.bf16.mxu0 0
    %3057 = vmatpush1.bf16.msra.mxu0 0
    %3058 = vmatprep.subr.bf16.mxu0 0
    %3059 = vmatpush1.bf16.msra.mxu0 0
    %3060 = vmatprep.subr.bf16.mxu0 0
    %3061 = vmatpush1.bf16.msra.mxu0 0
    %3062 = vmatprep.subr.bf16.mxu0 0
    %3063 = vmatpush1.bf16.msra.mxu0 0
    %3064 = vmatprep.subr.bf16.mxu0 0
    %3065 = vmatpush1.bf16.msra.mxu0 0
    %3066 = vmatprep.subr.bf16.mxu0 0
    %3067 = vmatpush1.bf16.msra.mxu0 0
    %3068 = vmatprep.subr.bf16.mxu0 0
    %3069 = vmatpush1.bf16.msra.mxu0 0
    %3070 = vmatprep.mubr.bf16.mxu0 0
    %3071 = vmatmul.mubr.bf16.gmra.mrb[0].mxu0 %v2834
    %v3072 = vpop.f32.mrb[0].mxu0
    %v3073 = vadd.f32 %v2870, %v3072
    %v3074 = vpop.f32.mrb[0].mxu0
    %v3075 = vadd.f32 %v2871, %v3074
    %v3076 = vpop.f32.mrb[0].mxu0
    %v3077 = vadd.f32 %v2874, %v3076
    %v3078 = vpop.f32.mrb[0].mxu0
    %v3079 = vadd.f32 %v2875, %v3078
    %3080 = vdwg.mxu0
    %3081 = vmatprep.subr.bf16.mxu0 %v2977
    %3082 = vmatpush1.bf16.msra.mxu0 %v2976
    %3083 = vmatprep.subr.bf16.mxu0 %v2981
    %3084 = vmatpush1.bf16.msra.mxu0 %v2980
    %3085 = vmatprep.subr.bf16.mxu0 %v2985
    %3086 = vmatpush1.bf16.msra.mxu0 %v2984
    %3087 = vmatprep.subr.bf16.mxu0 %v2989
    %3088 = vmatpush1.bf16.msra.mxu0 %v2988
    %3089 = vmatprep.subr.bf16.mxu0 %v2993
    %3090 = vmatpush1.bf16.msra.mxu0 %v2992
    %3091 = vmatprep.subr.bf16.mxu0 %v2997
    %3092 = vmatpush1.bf16.msra.mxu0 %v2996
    %3093 = vmatprep.subr.bf16.mxu0 %v3001
    %3094 = vmatpush1.bf16.msra.mxu0 %v3000
    %3095 = vmatprep.subr.bf16.mxu0 %v3005
    %3096 = vmatpush1.bf16.msra.mxu0 %v3004
    %3097 = vmatprep.subr.bf16.mxu0 0
    %3098 = vmatpush1.bf16.msra.mxu0 0
    %3099 = vmatprep.subr.bf16.mxu0 0
    %3100 = vmatpush1.bf16.msra.mxu0 0
    %3101 = vmatprep.subr.bf16.mxu0 0
    %3102 = vmatpush1.bf16.msra.mxu0 0
    %3103 = vmatprep.subr.bf16.mxu0 0
    %3104 = vmatpush1.bf16.msra.mxu0 0
    %3105 = vmatprep.subr.bf16.mxu0 0
    %3106 = vmatpush1.bf16.msra.mxu0 0
    %3107 = vmatprep.subr.bf16.mxu0 0
    %3108 = vmatpush1.bf16.msra.mxu0 0
    %3109 = vmatprep.subr.bf16.mxu0 0
    %3110 = vmatpush1.bf16.msra.mxu0 0
    %3111 = vmatprep.subr.bf16.mxu0 0
    %3112 = vmatpush1.bf16.msra.mxu0 0
    %3113 = vmatprep.mubr.bf16.mxu0 0
    %3114 = vmatmul.mubr.bf16.gmra.mrb[0].mxu0 %v2834
    %v3115 = vpop.f32.mrb[0].mxu0
    %v3116 = vadd.f32 %v2872, %v3115
    %v3117 = vpop.f32.mrb[0].mxu0
    %v3118 = vadd.f32 %v2873, %v3117
    %v3119 = vpop.f32.mrb[0].mxu0
    %v3120 = vadd.f32 %v2876, %v3119
    %v3121 = vpop.f32.mrb[0].mxu0
    %v3122 = vadd.f32 %v2877, %v3121
    %3123 = vdwg.mxu0
    %v3124 = vmul.f32 %v3073, 0.5
    %v3125 = vmul.f32 %v3077, 0.5
    %v3126 = vtanh.pop %v3124
    %v3127 = vtanh.pop %v3125
    %v3128 = vmul.f32 %v3126, 0.5
    %v3129 = vmul.f32 %v3127, 0.5
    %v3130 = vadd.f32 %v3128, 0.5
    %v3131 = vadd.f32 %v3129, 0.5
    %v3132 = vmul.f32 %v3075, 0.5
    %v3133 = vmul.f32 %v3079, 0.5
    %v3134 = vtanh.pop %v3132
    %v3135 = vtanh.pop %v3133
    %v3136 = vmul.f32 %v3134, 0.5
    %v3137 = vmul.f32 %v3135, 0.5
    %v3138 = vadd.f32 %v3136, 0.5
    %v3139 = vadd.f32 %v3137, 0.5
    %v3140 = vtanh.pop %v3116
    %v3141 = vtanh.pop %v3120
    %v3142 = vmul.f32 %v3118, 0.5
    %v3143 = vmul.f32 %v3122, 0.5
    %v3144 = vtanh.pop %v3142
    %v3145 = vtanh.pop %v3143
    %v3146 = vmul.f32 %v3144, 0.5
    %v3147 = vmul.f32 %v3145, 0.5
    %v3148 = vadd.f32 %v3146, 0.5
    %v3149 = vadd.f32 %v3147, 0.5
    %v3150 = vmul.f32 %v3138, %v2832
    %v3151 = vmul.f32 %v3139, %v2833
    %v3152 = vmul.f32 %v3130, %v3140
    %v3153 = vmul.f32 %v3131, %v3141
    %v3154 = vadd.f32 %v3150, %v3152
    %v3155 = vadd.f32 %v3151, %v3153
    %v3156 = vtanh.pop %v3154
    %v3157 = vtanh.pop %v3155
    %v3158 = vmul.f32 %v3148, %v3156
    %v3159 = vmul.f32 %v3149, %v3157
    %s3160 = scalar_lea.vmem [#allocation8], 112
    %3161 = vst [vmem:[%s3160] sm:$0xff] %v3158
    %3162 = vst [vmem:[%s3160 + $0x8] sm:$0xff] %v3159
    %3163 = vst [vmem:[#allocation2] sm:$0xff] %v3158
    %3164 = vst [vmem:[#allocation2 + $0x8] sm:$0xff] %v3159
    %3165 = vst [vmem:[#allocation3] sm:$0xff] %v3154
    %3166 = vst [vmem:[#allocation3 + $0x8] sm:$0xff] %v3155
    // Predicated region
    $region34: #{tpu_custom_call.1} parent=1 // pred_check
      %p3167 = pneg %p43
    $region35: #{tpu_custom_call.1} parent=1 // pred_check_branch
      %3169 = sbr.rel (%p3167) target = $region37
    $region36: #{tpu_custom_call.1} parent=1 // pred_region
      %v3170 = vld [vmem:[#allocation2] sm:$0xff]
      %v3171 = vld [vmem:[#allocation2 + $0x8] sm:$0xff]
      %3172 = vst [vmem:[#allocation9] sm:$0xff] %v3170
      %3173 = vst [vmem:[#allocation9 + $0x8] sm:$0xff] %v3171
      %v3174 = vld [vmem:[#allocation3] sm:$0xff]
      %v3175 = vld [vmem:[#allocation3 + $0x8] sm:$0xff]
      %3176 = vst [vmem:[#allocation11] sm:$0xff] %v3174
      %3177 = vst [vmem:[#allocation11 + $0x8] sm:$0xff] %v3175
    $region37: #{tpu_custom_call.1} parent=1 // pred_fallthru
      _
    // Predicated region
    $region38: #{tpu_custom_call.1} parent=1 // pred_check
      _
    $region39: #{tpu_custom_call.1} parent=1 // pred_check_branch
      %3179 = sbr.rel (0) target = $region41
    $region40: #{tpu_custom_call.1} parent=1 // pred_region
      %s3181 = ssub.s32 2048, 2048
      %3182 = vsyncadd [#allocation7], %s3181
      %s3183 = sshll.u32 [#allocation8], 4
      %s3184 = int_to_ptr.vmem [resolvable:$true] %s3183
      %3189 = dma.vmem_to_hbm [thread:$0]  %s3184, 2048, %s6, [#allocation7], 128, 128, 8
    $region41: #{tpu_custom_call.1} parent=1 // pred_fallthru
      _
    // Predicated region
    $region42: #{tpu_custom_call.1} parent=1 // pred_check
      _
    $region43: #{tpu_custom_call.1} parent=1 // pred_check_branch
      %3191 = sbr.rel (0) target = $region45
    $region44: #{tpu_custom_call.1} parent=1 // pred_region
      %s3193 = ssub.s32 256, 256
      %3194 = vsyncadd [#allocation10], %s3193
      %s3195 = sshll.u32 [#allocation9], 4
      %s3196 = int_to_ptr.vmem [resolvable:$true] %s3195
      %3201 = dma.vmem_to_hbm [thread:$0]  %s3196, 256, %s7, [#allocation10], 128, 128, 8
    $region45: #{tpu_custom_call.1} parent=1 // pred_fallthru
      _
    // Predicated region
    $region46: #{tpu_custom_call.1} parent=1 // pred_check
      _
    $region47: #{tpu_custom_call.1} parent=1 // pred_check_branch
      %3203 = sbr.rel (0) target = $region49
    $region48: #{tpu_custom_call.1} parent=1 // pred_region
      %s3205 = ssub.s32 256, 256
      %3206 = vsyncadd [#allocation10], %s3205
      %s3207 = sshll.u32 [#allocation11], 4
      %s3208 = int_to_ptr.vmem [resolvable:$true] %s3207
      %3213 = dma.vmem_to_hbm [thread:$0]  %s3208, 256, %s8, [#allocation10], 128, 128, 8
    $region49: #{tpu_custom_call.1} parent=1 // pred_fallthru
      _
    // Predicated region
    $region50: #{tpu_custom_call.1} parent=1 // pred_check
      _
    $region51: #{tpu_custom_call.1} parent=1 // pred_check_branch
      %3215 = sbr.rel (0) target = $region53
    $region52: #{tpu_custom_call.1} parent=1 // pred_region
      %3216 = dma.done [#allocation7], 2048
    $region53: #{tpu_custom_call.1} parent=1 // pred_fallthru
      _
    // Predicated region
    $region54: #{tpu_custom_call.1} parent=1 // pred_check
      _
    $region55: #{tpu_custom_call.1} parent=1 // pred_check_branch
      %3218 = sbr.rel (0) target = $region57
    $region56: #{tpu_custom_call.1} parent=1 // pred_region
      %3219 = dma.done [#allocation10], 256
    $region57: #{tpu_custom_call.1} parent=1 // pred_fallthru
      _
    // Predicated region
    $region58: #{tpu_custom_call.1} parent=1 // pred_check
      _
    $region59: #{tpu_custom_call.1} parent=1 // pred_check_branch
      %3221 = sbr.rel (0) target = $region61
    $region60: #{tpu_custom_call.1} parent=1 // pred_region
      %3222 = dma.done [#allocation10], 256
    $region61: #{tpu_custom_call.1} parent=1 // pred_fallthru
      _
    %3223 = vsyncpa [#allocation6], 1
    %3224 = vsyncpa [#allocation7], 1
    %3225 = vsyncpa [#allocation10], 1

</llo_original>
